<compile_context>
chip_gen: v5e
topology: v5e:2x2
jax: 0.10.0
libtpu: 0.0.40
codegen_flags: <defaults>
</compile_context>

<pallas_src>
import jax
import jax.numpy as jnp
from jax.experimental import pallas as pl
from jax.experimental.pallas import tpu as pltpu

IMG = 32                 # LeNet-5 spatial size (forced by the 16*5*5 fc1 input)
S = IMG * IMG            # 1024: flattened spatial grid (lane axis)
KS = 5                   # conv kernel size
K2 = KS * KS             # 25
LANE_PAD = S + 384       # 1408: padded lane width (max conv2 shift 264 + pool 66)


# ----------------------------- fused Pallas kernel -----------------------------

def _lenet5_kernel(x_ref, w1_ref, b1_ref, w2_ref, b2_ref,
                   wf1_ref, bf1_ref, wf2_ref, bf2_ref, wf3_ref, bf3_ref,
                   out_ref,
                   patches_ref, act1_ref, pool1_ref, act2_ref, p2_ref, fcin_ref):
    """Full LeNet-5 forward for one image (one grid step)."""
    cin = x_ref.shape[1]        # 3
    c1 = w1_ref.shape[0]        # 6
    c2 = w2_ref.shape[0]        # 16

    # ---------------- conv1 (5x5, valid) + tanh ----------------
    # In-kernel im2col: row (i*5+j)*cin + c of the patch matrix is input channel
    # c shifted by kernel offset (i, j) along the flattened 32x32 grid.
    for i in range(KS):
        for j in range(KS):
            ij = i * KS + j
            d = i * IMG + j
            patches_ref[ij * cin:(ij + 1) * cin, :] = x_ref[0, :, d:d + S]
    z1 = jnp.dot(w1_ref[...], patches_ref[0:K2 * cin, :],
                 preferred_element_type=jnp.float32)       # (6, 1024), lane-dense
    h1 = jnp.tanh(z1 + b1_ref[...])                        # tanh on the EUP, free
    act1_ref[:, 0:S] = h1
    act1_ref[:, S:] = jnp.zeros((c1, LANE_PAD - S), jnp.float32)

    # ---------------- maxpool1 (2x2, stride 2), kept dilated ----------------
    # pooled1[c, ph, pw] lands at lane 64*ph + 2*pw of the 32x32 grid.
    p1 = jnp.maximum(
        jnp.maximum(act1_ref[:, 0:S], act1_ref[:, 1:1 + S]),
        jnp.maximum(act1_ref[:, IMG:IMG + S], act1_ref[:, IMG + 1:IMG + 1 + S]))
    pool1_ref[:, 0:S] = p1
    pool1_ref[:, S:] = jnp.zeros((c1, LANE_PAD - S), jnp.float32)

    # ---------------- conv2 (5x5, valid) + tanh ----------------
    # The input grid is dilated by 2, so kernel offsets become 2*(i*32 + j).
    for i in range(KS):
        for j in range(KS):
            ij = i * KS + j
            d = 2 * (i * IMG + j)
            patches_ref[ij * c1:(ij + 1) * c1, :] = pool1_ref[:, d:d + S]
    z2 = jnp.dot(w2_ref[...], patches_ref[0:K2 * c1, :],
                 preferred_element_type=jnp.float32)       # (16, 1024), lane-dense
    h2 = jnp.tanh(z2 + b2_ref[...])
    act2_ref[:, 0:S] = h2
    act2_ref[:, S:] = jnp.zeros((c2, LANE_PAD - S), jnp.float32)

    # ---------------- maxpool2 (2x2, stride 2), dilated by 4 ----------------
    # pooled2[c, qh, qw] lands at lane 128*qh + 4*qw.
    p2_ref[...] = jnp.maximum(
        jnp.maximum(act2_ref[:, 0:S], act2_ref[:, 2:2 + S]),
        jnp.maximum(act2_ref[:, 2 * IMG:2 * IMG + S],
                    act2_ref[:, 2 * IMG + 2:2 * IMG + 2 + S]))

    # ---------------- flatten: gather the 25 valid pooled positions -------------
    # fc1's weight was pre-permuted at init to this (position-major,
    # channel-minor) order, so this is a plain column assembly in VMEM.
    fcin_ref[...] = jnp.zeros((K2 * c2, 128), jnp.float32)
    for u in range(K2):
        qh, qw = u // KS, u % KS
        t = 4 * (qh * IMG + qw)
        fcin_ref[u * c2:(u + 1) * c2, 0:1] = p2_ref[:, t:t + 1]

    # ---------------- classifier: fc1+tanh -> fc2+tanh -> fc3 ----------------
    # Column 0 carries the real sample; the other 127 lanes are dead padding
    # that never mixes with it (matmuls only combine rows).
    h = jnp.tanh(jnp.dot(wf1_ref[...], fcin_ref[...],
                         preferred_element_type=jnp.float32) + bf1_ref[...])
    h = jnp.tanh(jnp.dot(wf2_ref[...], h,
                         preferred_element_type=jnp.float32) + bf2_ref[...])
    logits = jnp.dot(wf3_ref[...], h,
                     preferred_element_type=jnp.float32) + bf3_ref[...]
    out_ref[0, :, :] = logits[:, 0:1]                      # (num_classes, 1)


# --------------------------------- wrapper ---------------------------------

def lenet5_forward(kparams, x):
    """Fused LeNet-5 forward; x is NCHW float32 (B, 3, 32, 32)."""
    B, cin, H, W = x.shape
    assert H == IMG and W == IMG, "classic LeNet-5 requires 32x32 inputs"
    c1 = kparams["w1m"].shape[0]
    c2 = kparams["w2m"].shape[0]
    nc = kparams["wf3"].shape[0]

    # Only input-layout glue left in XLA: flatten HxW onto the lane axis and
    # zero-pad so the in-kernel shifted loads never leave the buffer.
    x2 = jnp.pad(x.reshape(B, cin, S), ((0, 0), (0, 0), (0, LANE_PAD - S)))

    def _full(a):
        return pl.BlockSpec(a.shape, lambda b: (0,) * a.ndim)

    out = pl.pallas_call(
        _lenet5_kernel,
        out_shape=jax.ShapeDtypeStruct((B, nc, 1), jnp.float32),
        grid_spec=pltpu.PrefetchScalarGridSpec(
            num_scalar_prefetch=0,
            grid=(B,),                                 # one image per grid step
            in_specs=[
                pl.BlockSpec((1, cin, LANE_PAD), lambda b: (b, 0, 0)),
                _full(kparams["w1m"]), _full(kparams["b1"]),
                _full(kparams["w2m"]), _full(kparams["b2"]),
                _full(kparams["wf1"]), _full(kparams["bf1"]),
                _full(kparams["wf2"]), _full(kparams["bf2"]),
                _full(kparams["wf3"]), _full(kparams["bf3"]),
            ],
            out_specs=pl.BlockSpec((1, nc, 1), lambda b: (b, 0, 0)),
            scratch_shapes=[
                pltpu.VMEM((K2 * max(cin, c1), S), jnp.float32),  # im2col patches
                pltpu.VMEM((c1, LANE_PAD), jnp.float32),          # conv1 output
                pltpu.VMEM((c1, LANE_PAD), jnp.float32),          # pool1 (dilated)
                pltpu.VMEM((c2, LANE_PAD), jnp.float32),          # conv2 output
                pltpu.VMEM((c2, S), jnp.float32),                 # pool2 (dilated)
                pltpu.VMEM((K2 * c2, 128), jnp.float32),          # fc input column
            ],
        ),
        compiler_params=pltpu.CompilerParams(
            dimension_semantics=("parallel",)),        # v7x: images split across TCs
    )(x2, kparams["w1m"], kparams["b1"], kparams["w2m"], kparams["b2"],
      kparams["wf1"], kparams["bf1"], kparams["wf2"], kparams["bf2"],
      kparams["wf3"], kparams["bf3"])
    return out[:, :, 0]


# ------------------------- parameters (PyTorch layout) -------------------------

def init_params(key, num_classes=10, in_channels=3):
    ks = jax.random.split(key, 10)

    def n(k, shape, scale):
        return scale * jax.random.normal(k, shape, dtype=jnp.float32)

    return dict(
        conv1_w=n(ks[0], (6, in_channels, 5, 5), 0.1),
        conv1_b=n(ks[1], (6,), 0.1),
        conv2_w=n(ks[2], (16, 6, 5, 5), 0.1),
        conv2_b=n(ks[3], (16,), 0.1),
        fc1_w=n(ks[4], (120, 16 * 5 * 5), 0.05),
        fc1_b=n(ks[5], (120,), 0.05),
        fc2_w=n(ks[6], (84, 120), 0.05),
        fc2_b=n(ks[7], (84,), 0.05),
        fc3_w=n(ks[8], (num_classes, 84), 0.05),
        fc3_b=n(ks[9], (num_classes,), 0.05),
    )


def prepare_params(params):
    """One-time re-layout of PyTorch weights into the fused-kernel layout."""
    c1, cin, k, _ = params["conv1_w"].shape
    c2 = params["conv2_w"].shape[0]
    nc = params["fc3_w"].shape[0]
    # conv weights -> (OC, (i, j, c)) matching the in-kernel im2col row order.
    w1m = params["conv1_w"].transpose(0, 2, 3, 1).reshape(c1, k * k * cin)
    w2m = params["conv2_w"].transpose(0, 2, 3, 1).reshape(c2, k * k * c1)
    # fc1: PyTorch flatten order is (c, qh, qw); the kernel assembles
    # (qh*5+qw)-major / c-minor, so permute the weight columns once here.
    wf1 = (params["fc1_w"].reshape(-1, c2, k * k)
           .transpose(0, 2, 1).reshape(-1, k * k * c2))
    return dict(
        w1m=w1m, b1=params["conv1_b"].reshape(c1, 1),
        w2m=w2m, b2=params["conv2_b"].reshape(c2, 1),
        wf1=wf1, bf1=params["fc1_b"].reshape(-1, 1),
        wf2=params["fc2_w"], bf2=params["fc2_b"].reshape(-1, 1),
        wf3=params["fc3_w"], bf3=params["fc3_b"].reshape(nc, 1),
    )


# ----------------------- plain-XLA reference (for checking) -----------------------

def lenet5_reference(params, x):
    hp = jax.lax.Precision.HIGHEST
    h = jax.lax.conv_general_dilated(
        x, params["conv1_w"], window_strides=(1, 1), padding="VALID",
        dimension_numbers=("NCHW", "OIHW", "NCHW"), precision=hp)
    h = jnp.tanh(h + params["conv1_b"][None, :, None, None])
    h = jax.lax.reduce_window(h, -jnp.inf, jax.lax.max,
                              (1, 1, 2, 2), (1, 1, 2, 2), "VALID")
    h = jax.lax.conv_general_dilated(
        h, params["conv2_w"], window_strides=(1, 1), padding="VALID",
        dimension_numbers=("NCHW", "OIHW", "NCHW"), precision=hp)
    h = jnp.tanh(h + params["conv2_b"][None, :, None, None])
    h = jax.lax.reduce_window(h, -jnp.inf, jax.lax.max,
                              (1, 1, 2, 2), (1, 1, 2, 2), "VALID")
    h = h.reshape(h.shape[0], -1)
    h = jnp.tanh(jnp.dot(h, params["fc1_w"].T, precision=hp) + params["fc1_b"])
    h = jnp.tanh(jnp.dot(h, params["fc2_w"].T, precision=hp) + params["fc2_b"])
    return jnp.dot(h, params["fc3_w"].T, precision=hp) + params["fc3_b"]


if __name__ == "__main__":
    key = jax.random.PRNGKey(0)
    pkey, xkey = jax.random.split(key)

    num_classes = 10
    params = init_params(pkey, num_classes=num_classes, in_channels=3)
    kparams = prepare_params(params)        # one-time weight re-layout

    # The classifier's 16*5*5 = 400 input features force the classic 32x32
    # input; grayscale=False -> 3 channels.  Small batch of 2.
    x = jax.random.normal(xkey, (2, 3, 32, 32), dtype=jnp.float32)

    fwd = jax.jit(lenet5_forward)
    logits = fwd(kparams, x)
    jax.block_until_ready(logits)
    assert logits.shape == (2, num_classes)

    # Numerical check against the plain-XLA reference of the PyTorch module.
    ref = lenet5_reference(params, x)
    if not bool(jnp.allclose(logits, ref, atol=2e-2, rtol=2e-2)):
        err = float(jnp.max(jnp.abs(logits - ref)))
        raise AssertionError(f"kernel mismatch vs reference (max abs err {err:.3e})")

    print("KERNEL_OK")
</pallas_src>

<mosaic_0001>
module attributes {stable_mosaic.version = 11 : i64} {
  func.func @_lenet5_kernel(%arg0: i32, %arg1: memref<1x3x1408xf32, #tpu.memory_space<vmem>>, %arg2: memref<6x75xf32, #tpu.memory_space<vmem>>, %arg3: memref<6x1xf32, #tpu.memory_space<vmem>>, %arg4: memref<16x150xf32, #tpu.memory_space<vmem>>, %arg5: memref<16x1xf32, #tpu.memory_space<vmem>>, %arg6: memref<120x400xf32, #tpu.memory_space<vmem>>, %arg7: memref<120x1xf32, #tpu.memory_space<vmem>>, %arg8: memref<84x120xf32, #tpu.memory_space<vmem>>, %arg9: memref<84x1xf32, #tpu.memory_space<vmem>>, %arg10: memref<10x84xf32, #tpu.memory_space<vmem>>, %arg11: memref<10x1xf32, #tpu.memory_space<vmem>>, %arg12: memref<1x10x1xf32, #tpu.memory_space<vmem>>, %arg13: memref<150x1024xf32, #tpu.memory_space<vmem>>, %arg14: memref<6x1408xf32, #tpu.memory_space<vmem>>, %arg15: memref<6x1408xf32, #tpu.memory_space<vmem>>, %arg16: memref<16x1408xf32, #tpu.memory_space<vmem>>, %arg17: memref<16x1024xf32, #tpu.memory_space<vmem>>, %arg18: memref<400x128xf32, #tpu.memory_space<vmem>>) attributes {dimension_semantics = [#tpu.dimension_semantics<parallel>], iteration_bounds = array<i64: 2>, scalar_prefetch = 0 : i64, scratch_operands = 6 : i64, tpu.core_type = #tpu.core_type<tc>, window_params = [{transform_indices = @transform_0, window_bounds = array<i64: 1, 3, 1408>}, {pipeline_mode = #tpu.pipeline_mode<synchronous>, transform_indices = @transform_1, window_bounds = array<i64: 6, 75>}, {pipeline_mode = #tpu.pipeline_mode<synchronous>, transform_indices = @transform_2, window_bounds = array<i64: 6, 1>}, {pipeline_mode = #tpu.pipeline_mode<synchronous>, transform_indices = @transform_3, window_bounds = array<i64: 16, 150>}, {pipeline_mode = #tpu.pipeline_mode<synchronous>, transform_indices = @transform_4, window_bounds = array<i64: 16, 1>}, {pipeline_mode = #tpu.pipeline_mode<synchronous>, transform_indices = @transform_5, window_bounds = array<i64: 120, 400>}, {pipeline_mode = #tpu.pipeline_mode<synchronous>, transform_indices = @transform_6, window_bounds = array<i64: 120, 1>}, {pipeline_mode = #tpu.pipeline_mode<synchronous>, transform_indices = @transform_7, window_bounds = array<i64: 84, 120>}, {pipeline_mode = #tpu.pipeline_mode<synchronous>, transform_indices = @transform_8, window_bounds = array<i64: 84, 1>}, {pipeline_mode = #tpu.pipeline_mode<synchronous>, transform_indices = @transform_9, window_bounds = array<i64: 10, 84>}, {pipeline_mode = #tpu.pipeline_mode<synchronous>, transform_indices = @transform_10, window_bounds = array<i64: 10, 1>}, {transform_indices = @transform_11, window_bounds = array<i64: 1, 10, 1>}]} {
    %c0 = arith.constant 0 : index
    %c0_0 = arith.constant 0 : index
    %c0_1 = arith.constant 0 : index
    %0 = vector.load %arg1[%c0, %c0_0, %c0_1] : memref<1x3x1408xf32, #tpu.memory_space<vmem>>, vector<1x3x1024xf32>
    %1 = vector.shape_cast %0 : vector<1x3x1024xf32> to vector<3x1024xf32>
    %c0_2 = arith.constant 0 : index
    %c0_3 = arith.constant 0 : index
    %2 = vector.load %arg13[%c0_2, %c0_3] : memref<150x1024xf32, #tpu.memory_space<vmem>>, vector<3x1024xf32>
    tpu.vector_store %arg13[%c0_2, %c0_3], %1 {strides = array<i32>} : memref<150x1024xf32, #tpu.memory_space<vmem>>, vector<3x1024xf32>,
    %c0_4 = arith.constant 0 : index
    %c0_5 = arith.constant 0 : index
    %c1 = arith.constant 1 : index
    %3 = vector.load %arg1[%c0_4, %c0_5, %c1] : memref<1x3x1408xf32, #tpu.memory_space<vmem>>, vector<1x3x1024xf32>
    %4 = vector.shape_cast %3 : vector<1x3x1024xf32> to vector<3x1024xf32>
    %c3 = arith.constant 3 : index
    %c0_6 = arith.constant 0 : index
    %5 = vector.load %arg13[%c3, %c0_6] : memref<150x1024xf32, #tpu.memory_space<vmem>>, vector<3x1024xf32>
    tpu.vector_store %arg13[%c3, %c0_6], %4 {strides = array<i32>} : memref<150x1024xf32, #tpu.memory_space<vmem>>, vector<3x1024xf32>,
    %c0_7 = arith.constant 0 : index
    %c0_8 = arith.constant 0 : index
    %c2 = arith.constant 2 : index
    %6 = vector.load %arg1[%c0_7, %c0_8, %c2] : memref<1x3x1408xf32, #tpu.memory_space<vmem>>, vector<1x3x1024xf32>
    %7 = vector.shape_cast %6 : vector<1x3x1024xf32> to vector<3x1024xf32>
    %c6 = arith.constant 6 : index
    %c0_9 = arith.constant 0 : index
    %8 = vector.load %arg13[%c6, %c0_9] : memref<150x1024xf32, #tpu.memory_space<vmem>>, vector<3x1024xf32>
    tpu.vector_store %arg13[%c6, %c0_9], %7 {strides = array<i32>} : memref<150x1024xf32, #tpu.memory_space<vmem>>, vector<3x1024xf32>,
    %c0_10 = arith.constant 0 : index
    %c0_11 = arith.constant 0 : index
    %c3_12 = arith.constant 3 : index
    %9 = vector.load %arg1[%c0_10, %c0_11, %c3_12] : memref<1x3x1408xf32, #tpu.memory_space<vmem>>, vector<1x3x1024xf32>
    %10 = vector.shape_cast %9 : vector<1x3x1024xf32> to vector<3x1024xf32>
    %c9 = arith.constant 9 : index
    %c0_13 = arith.constant 0 : index
    %11 = vector.load %arg13[%c9, %c0_13] : memref<150x1024xf32, #tpu.memory_space<vmem>>, vector<3x1024xf32>
    tpu.vector_store %arg13[%c9, %c0_13], %10 {strides = array<i32>} : memref<150x1024xf32, #tpu.memory_space<vmem>>, vector<3x1024xf32>,
    %c0_14 = arith.constant 0 : index
    %c0_15 = arith.constant 0 : index
    %c4 = arith.constant 4 : index
    %12 = vector.load %arg1[%c0_14, %c0_15, %c4] : memref<1x3x1408xf32, #tpu.memory_space<vmem>>, vector<1x3x1024xf32>
    %13 = vector.shape_cast %12 : vector<1x3x1024xf32> to vector<3x1024xf32>
    %c12 = arith.constant 12 : index
    %c0_16 = arith.constant 0 : index
    %14 = vector.load %arg13[%c12, %c0_16] : memref<150x1024xf32, #tpu.memory_space<vmem>>, vector<3x1024xf32>
    tpu.vector_store %arg13[%c12, %c0_16], %13 {strides = array<i32>} : memref<150x1024xf32, #tpu.memory_space<vmem>>, vector<3x1024xf32>,
    %c0_17 = arith.constant 0 : index
    %c0_18 = arith.constant 0 : index
    %c32 = arith.constant 32 : index
    %15 = vector.load %arg1[%c0_17, %c0_18, %c32] : memref<1x3x1408xf32, #tpu.memory_space<vmem>>, vector<1x3x1024xf32>
    %16 = vector.shape_cast %15 : vector<1x3x1024xf32> to vector<3x1024xf32>
    %c15 = arith.constant 15 : index
    %c0_19 = arith.constant 0 : index
    %17 = vector.load %arg13[%c15, %c0_19] : memref<150x1024xf32, #tpu.memory_space<vmem>>, vector<3x1024xf32>
    tpu.vector_store %arg13[%c15, %c0_19], %16 {strides = array<i32>} : memref<150x1024xf32, #tpu.memory_space<vmem>>, vector<3x1024xf32>,
    %c0_20 = arith.constant 0 : index
    %c0_21 = arith.constant 0 : index
    %c33 = arith.constant 33 : index
    %18 = vector.load %arg1[%c0_20, %c0_21, %c33] : memref<1x3x1408xf32, #tpu.memory_space<vmem>>, vector<1x3x1024xf32>
    %19 = vector.shape_cast %18 : vector<1x3x1024xf32> to vector<3x1024xf32>
    %c18 = arith.constant 18 : index
    %c0_22 = arith.constant 0 : index
    %20 = vector.load %arg13[%c18, %c0_22] : memref<150x1024xf32, #tpu.memory_space<vmem>>, vector<3x1024xf32>
    tpu.vector_store %arg13[%c18, %c0_22], %19 {strides = array<i32>} : memref<150x1024xf32, #tpu.memory_space<vmem>>, vector<3x1024xf32>,
    %c0_23 = arith.constant 0 : index
    %c0_24 = arith.constant 0 : index
    %c34 = arith.constant 34 : index
    %21 = vector.load %arg1[%c0_23, %c0_24, %c34] : memref<1x3x1408xf32, #tpu.memory_space<vmem>>, vector<1x3x1024xf32>
    %22 = vector.shape_cast %21 : vector<1x3x1024xf32> to vector<3x1024xf32>
    %c21 = arith.constant 21 : index
    %c0_25 = arith.constant 0 : index
    %23 = vector.load %arg13[%c21, %c0_25] : memref<150x1024xf32, #tpu.memory_space<vmem>>, vector<3x1024xf32>
    tpu.vector_store %arg13[%c21, %c0_25], %22 {strides = array<i32>} : memref<150x1024xf32, #tpu.memory_space<vmem>>, vector<3x1024xf32>,
    %c0_26 = arith.constant 0 : index
    %c0_27 = arith.constant 0 : index
    %c35 = arith.constant 35 : index
    %24 = vector.load %arg1[%c0_26, %c0_27, %c35] : memref<1x3x1408xf32, #tpu.memory_space<vmem>>, vector<1x3x1024xf32>
    %25 = vector.shape_cast %24 : vector<1x3x1024xf32> to vector<3x1024xf32>
    %c24 = arith.constant 24 : index
    %c0_28 = arith.constant 0 : index
    %26 = vector.load %arg13[%c24, %c0_28] : memref<150x1024xf32, #tpu.memory_space<vmem>>, vector<3x1024xf32>
    tpu.vector_store %arg13[%c24, %c0_28], %25 {strides = array<i32>} : memref<150x1024xf32, #tpu.memory_space<vmem>>, vector<3x1024xf32>,
    %c0_29 = arith.constant 0 : index
    %c0_30 = arith.constant 0 : index
    %c36 = arith.constant 36 : index
    %27 = vector.load %arg1[%c0_29, %c0_30, %c36] : memref<1x3x1408xf32, #tpu.memory_space<vmem>>, vector<1x3x1024xf32>
    %28 = vector.shape_cast %27 : vector<1x3x1024xf32> to vector<3x1024xf32>
    %c27 = arith.constant 27 : index
    %c0_31 = arith.constant 0 : index
    %29 = vector.load %arg13[%c27, %c0_31] : memref<150x1024xf32, #tpu.memory_space<vmem>>, vector<3x1024xf32>
    tpu.vector_store %arg13[%c27, %c0_31], %28 {strides = array<i32>} : memref<150x1024xf32, #tpu.memory_space<vmem>>, vector<3x1024xf32>,
    %c0_32 = arith.constant 0 : index
    %c0_33 = arith.constant 0 : index
    %c64 = arith.constant 64 : index
    %30 = vector.load %arg1[%c0_32, %c0_33, %c64] : memref<1x3x1408xf32, #tpu.memory_space<vmem>>, vector<1x3x1024xf32>
    %31 = vector.shape_cast %30 : vector<1x3x1024xf32> to vector<3x1024xf32>
    %c30 = arith.constant 30 : index
    %c0_34 = arith.constant 0 : index
    %32 = vector.load %arg13[%c30, %c0_34] : memref<150x1024xf32, #tpu.memory_space<vmem>>, vector<3x1024xf32>
    tpu.vector_store %arg13[%c30, %c0_34], %31 {strides = array<i32>} : memref<150x1024xf32, #tpu.memory_space<vmem>>, vector<3x1024xf32>,
    %c0_35 = arith.constant 0 : index
    %c0_36 = arith.constant 0 : index
    %c65 = arith.constant 65 : index
    %33 = vector.load %arg1[%c0_35, %c0_36, %c65] : memref<1x3x1408xf32, #tpu.memory_space<vmem>>, vector<1x3x1024xf32>
    %34 = vector.shape_cast %33 : vector<1x3x1024xf32> to vector<3x1024xf32>
    %c33_37 = arith.constant 33 : index
    %c0_38 = arith.constant 0 : index
    %35 = vector.load %arg13[%c33_37, %c0_38] : memref<150x1024xf32, #tpu.memory_space<vmem>>, vector<3x1024xf32>
    tpu.vector_store %arg13[%c33_37, %c0_38], %34 {strides = array<i32>} : memref<150x1024xf32, #tpu.memory_space<vmem>>, vector<3x1024xf32>,
    %c0_39 = arith.constant 0 : index
    %c0_40 = arith.constant 0 : index
    %c66 = arith.constant 66 : index
    %36 = vector.load %arg1[%c0_39, %c0_40, %c66] : memref<1x3x1408xf32, #tpu.memory_space<vmem>>, vector<1x3x1024xf32>
    %37 = vector.shape_cast %36 : vector<1x3x1024xf32> to vector<3x1024xf32>
    %c36_41 = arith.constant 36 : index
    %c0_42 = arith.constant 0 : index
    %38 = vector.load %arg13[%c36_41, %c0_42] : memref<150x1024xf32, #tpu.memory_space<vmem>>, vector<3x1024xf32>
    tpu.vector_store %arg13[%c36_41, %c0_42], %37 {strides = array<i32>} : memref<150x1024xf32, #tpu.memory_space<vmem>>, vector<3x1024xf32>,
    %c0_43 = arith.constant 0 : index
    %c0_44 = arith.constant 0 : index
    %c67 = arith.constant 67 : index
    %39 = vector.load %arg1[%c0_43, %c0_44, %c67] : memref<1x3x1408xf32, #tpu.memory_space<vmem>>, vector<1x3x1024xf32>
    %40 = vector.shape_cast %39 : vector<1x3x1024xf32> to vector<3x1024xf32>
    %c39 = arith.constant 39 : index
    %c0_45 = arith.constant 0 : index
    %41 = vector.load %arg13[%c39, %c0_45] : memref<150x1024xf32, #tpu.memory_space<vmem>>, vector<3x1024xf32>
    tpu.vector_store %arg13[%c39, %c0_45], %40 {strides = array<i32>} : memref<150x1024xf32, #tpu.memory_space<vmem>>, vector<3x1024xf32>,
    %c0_46 = arith.constant 0 : index
    %c0_47 = arith.constant 0 : index
    %c68 = arith.constant 68 : index
    %42 = vector.load %arg1[%c0_46, %c0_47, %c68] : memref<1x3x1408xf32, #tpu.memory_space<vmem>>, vector<1x3x1024xf32>
    %43 = vector.shape_cast %42 : vector<1x3x1024xf32> to vector<3x1024xf32>
    %c42 = arith.constant 42 : index
    %c0_48 = arith.constant 0 : index
    %44 = vector.load %arg13[%c42, %c0_48] : memref<150x1024xf32, #tpu.memory_space<vmem>>, vector<3x1024xf32>
    tpu.vector_store %arg13[%c42, %c0_48], %43 {strides = array<i32>} : memref<150x1024xf32, #tpu.memory_space<vmem>>, vector<3x1024xf32>,
    %c0_49 = arith.constant 0 : index
    %c0_50 = arith.constant 0 : index
    %c96 = arith.constant 96 : index
    %45 = vector.load %arg1[%c0_49, %c0_50, %c96] : memref<1x3x1408xf32, #tpu.memory_space<vmem>>, vector<1x3x1024xf32>
    %46 = vector.shape_cast %45 : vector<1x3x1024xf32> to vector<3x1024xf32>
    %c45 = arith.constant 45 : index
    %c0_51 = arith.constant 0 : index
    %47 = vector.load %arg13[%c45, %c0_51] : memref<150x1024xf32, #tpu.memory_space<vmem>>, vector<3x1024xf32>
    tpu.vector_store %arg13[%c45, %c0_51], %46 {strides = array<i32>} : memref<150x1024xf32, #tpu.memory_space<vmem>>, vector<3x1024xf32>,
    %c0_52 = arith.constant 0 : index
    %c0_53 = arith.constant 0 : index
    %c97 = arith.constant 97 : index
    %48 = vector.load %arg1[%c0_52, %c0_53, %c97] : memref<1x3x1408xf32, #tpu.memory_space<vmem>>, vector<1x3x1024xf32>
    %49 = vector.shape_cast %48 : vector<1x3x1024xf32> to vector<3x1024xf32>
    %c48 = arith.constant 48 : index
    %c0_54 = arith.constant 0 : index
    %50 = vector.load %arg13[%c48, %c0_54] : memref<150x1024xf32, #tpu.memory_space<vmem>>, vector<3x1024xf32>
    tpu.vector_store %arg13[%c48, %c0_54], %49 {strides = array<i32>} : memref<150x1024xf32, #tpu.memory_space<vmem>>, vector<3x1024xf32>,
    %c0_55 = arith.constant 0 : index
    %c0_56 = arith.constant 0 : index
    %c98 = arith.constant 98 : index
    %51 = vector.load %arg1[%c0_55, %c0_56, %c98] : memref<1x3x1408xf32, #tpu.memory_space<vmem>>, vector<1x3x1024xf32>
    %52 = vector.shape_cast %51 : vector<1x3x1024xf32> to vector<3x1024xf32>
    %c51 = arith.constant 51 : index
    %c0_57 = arith.constant 0 : index
    %53 = vector.load %arg13[%c51, %c0_57] : memref<150x1024xf32, #tpu.memory_space<vmem>>, vector<3x1024xf32>
    tpu.vector_store %arg13[%c51, %c0_57], %52 {strides = array<i32>} : memref<150x1024xf32, #tpu.memory_space<vmem>>, vector<3x1024xf32>,
    %c0_58 = arith.constant 0 : index
    %c0_59 = arith.constant 0 : index
    %c99 = arith.constant 99 : index
    %54 = vector.load %arg1[%c0_58, %c0_59, %c99] : memref<1x3x1408xf32, #tpu.memory_space<vmem>>, vector<1x3x1024xf32>
    %55 = vector.shape_cast %54 : vector<1x3x1024xf32> to vector<3x1024xf32>
    %c54 = arith.constant 54 : index
    %c0_60 = arith.constant 0 : index
    %56 = vector.load %arg13[%c54, %c0_60] : memref<150x1024xf32, #tpu.memory_space<vmem>>, vector<3x1024xf32>
    tpu.vector_store %arg13[%c54, %c0_60], %55 {strides = array<i32>} : memref<150x1024xf32, #tpu.memory_space<vmem>>, vector<3x1024xf32>,
    %c0_61 = arith.constant 0 : index
    %c0_62 = arith.constant 0 : index
    %c100 = arith.constant 100 : index
    %57 = vector.load %arg1[%c0_61, %c0_62, %c100] : memref<1x3x1408xf32, #tpu.memory_space<vmem>>, vector<1x3x1024xf32>
    %58 = vector.shape_cast %57 : vector<1x3x1024xf32> to vector<3x1024xf32>
    %c57 = arith.constant 57 : index
    %c0_63 = arith.constant 0 : index
    %59 = vector.load %arg13[%c57, %c0_63] : memref<150x1024xf32, #tpu.memory_space<vmem>>, vector<3x1024xf32>
    tpu.vector_store %arg13[%c57, %c0_63], %58 {strides = array<i32>} : memref<150x1024xf32, #tpu.memory_space<vmem>>, vector<3x1024xf32>,
    %c0_64 = arith.constant 0 : index
    %c0_65 = arith.constant 0 : index
    %c128 = arith.constant 128 : index
    %60 = vector.load %arg1[%c0_64, %c0_65, %c128] : memref<1x3x1408xf32, #tpu.memory_space<vmem>>, vector<1x3x1024xf32>
    %61 = vector.shape_cast %60 : vector<1x3x1024xf32> to vector<3x1024xf32>
    %c60 = arith.constant 60 : index
    %c0_66 = arith.constant 0 : index
    %62 = vector.load %arg13[%c60, %c0_66] : memref<150x1024xf32, #tpu.memory_space<vmem>>, vector<3x1024xf32>
    tpu.vector_store %arg13[%c60, %c0_66], %61 {strides = array<i32>} : memref<150x1024xf32, #tpu.memory_space<vmem>>, vector<3x1024xf32>,
    %c0_67 = arith.constant 0 : index
    %c0_68 = arith.constant 0 : index
    %c129 = arith.constant 129 : index
    %63 = vector.load %arg1[%c0_67, %c0_68, %c129] : memref<1x3x1408xf32, #tpu.memory_space<vmem>>, vector<1x3x1024xf32>
    %64 = vector.shape_cast %63 : vector<1x3x1024xf32> to vector<3x1024xf32>
    %c63 = arith.constant 63 : index
    %c0_69 = arith.constant 0 : index
    %65 = vector.load %arg13[%c63, %c0_69] : memref<150x1024xf32, #tpu.memory_space<vmem>>, vector<3x1024xf32>
    tpu.vector_store %arg13[%c63, %c0_69], %64 {strides = array<i32>} : memref<150x1024xf32, #tpu.memory_space<vmem>>, vector<3x1024xf32>,
    %c0_70 = arith.constant 0 : index
    %c0_71 = arith.constant 0 : index
    %c130 = arith.constant 130 : index
    %66 = vector.load %arg1[%c0_70, %c0_71, %c130] : memref<1x3x1408xf32, #tpu.memory_space<vmem>>, vector<1x3x1024xf32>
    %67 = vector.shape_cast %66 : vector<1x3x1024xf32> to vector<3x1024xf32>
    %c66_72 = arith.constant 66 : index
    %c0_73 = arith.constant 0 : index
    %68 = vector.load %arg13[%c66_72, %c0_73] : memref<150x1024xf32, #tpu.memory_space<vmem>>, vector<3x1024xf32>
    tpu.vector_store %arg13[%c66_72, %c0_73], %67 {strides = array<i32>} : memref<150x1024xf32, #tpu.memory_space<vmem>>, vector<3x1024xf32>,
    %c0_74 = arith.constant 0 : index
    %c0_75 = arith.constant 0 : index
    %c131 = arith.constant 131 : index
    %69 = vector.load %arg1[%c0_74, %c0_75, %c131] : memref<1x3x1408xf32, #tpu.memory_space<vmem>>, vector<1x3x1024xf32>
    %70 = vector.shape_cast %69 : vector<1x3x1024xf32> to vector<3x1024xf32>
    %c69 = arith.constant 69 : index
    %c0_76 = arith.constant 0 : index
    %71 = vector.load %arg13[%c69, %c0_76] : memref<150x1024xf32, #tpu.memory_space<vmem>>, vector<3x1024xf32>
    tpu.vector_store %arg13[%c69, %c0_76], %70 {strides = array<i32>} : memref<150x1024xf32, #tpu.memory_space<vmem>>, vector<3x1024xf32>,
    %c0_77 = arith.constant 0 : index
    %c0_78 = arith.constant 0 : index
    %c132 = arith.constant 132 : index
    %72 = vector.load %arg1[%c0_77, %c0_78, %c132] : memref<1x3x1408xf32, #tpu.memory_space<vmem>>, vector<1x3x1024xf32>
    %73 = vector.shape_cast %72 : vector<1x3x1024xf32> to vector<3x1024xf32>
    %c72 = arith.constant 72 : index
    %c0_79 = arith.constant 0 : index
    %74 = vector.load %arg13[%c72, %c0_79] : memref<150x1024xf32, #tpu.memory_space<vmem>>, vector<3x1024xf32>
    tpu.vector_store %arg13[%c72, %c0_79], %73 {strides = array<i32>} : memref<150x1024xf32, #tpu.memory_space<vmem>>, vector<3x1024xf32>,
    %c0_80 = arith.constant 0 : index
    %c0_81 = arith.constant 0 : index
    %75 = vector.load %arg2[%c0_80, %c0_81] : memref<6x75xf32, #tpu.memory_space<vmem>>, vector<6x75xf32>
    %c0_82 = arith.constant 0 : index
    %c0_83 = arith.constant 0 : index
    %76 = vector.load %arg13[%c0_82, %c0_83] : memref<150x1024xf32, #tpu.memory_space<vmem>>, vector<75x1024xf32>
    %cst = arith.constant dense<0.000000e+00> : vector<6x1024xf32>
    %77 = tpu.matmul %75, %76, %cst {dimension_numbers = #tpu.dot_dimension_numbers<[1], [0], [0], [1], [0, 0, 1, 1], [], []>} : vector<6x75xf32>, vector<75x1024xf32>, vector<6x1024xf32> -> vector<6x1024xf32>
    %c0_84 = arith.constant 0 : index
    %c0_85 = arith.constant 0 : index
    %78 = vector.load %arg3[%c0_84, %c0_85] : memref<6x1xf32, #tpu.memory_space<vmem>>, vector<6x1xf32>
    %79 = vector.broadcast %78 : vector<6x1xf32> to vector<6x1024xf32>
    %80 = arith.addf %77, %79 : vector<6x1024xf32>
    %81 = math.tanh %80 : vector<6x1024xf32>
    %c0_86 = arith.constant 0 : index
    %c0_87 = arith.constant 0 : index
    %82 = vector.load %arg14[%c0_86, %c0_87] : memref<6x1408xf32, #tpu.memory_space<vmem>>, vector<6x1024xf32>
    tpu.vector_store %arg14[%c0_86, %c0_87], %81 {strides = array<i32>} : memref<6x1408xf32, #tpu.memory_space<vmem>>, vector<6x1024xf32>,
    %cst_88 = arith.constant 0.000000e+00 : f32
    %83 = vector.broadcast %cst_88 : f32 to vector<6x384xf32>
    %c0_89 = arith.constant 0 : index
    %c1024 = arith.constant 1024 : index
    %84 = vector.load %arg14[%c0_89, %c1024] : memref<6x1408xf32, #tpu.memory_space<vmem>>, vector<6x384xf32>
    tpu.vector_store %arg14[%c0_89, %c1024], %83 {strides = array<i32>} : memref<6x1408xf32, #tpu.memory_space<vmem>>, vector<6x384xf32>,
    %c0_90 = arith.constant 0 : index
    %c0_91 = arith.constant 0 : index
    %85 = vector.load %arg14[%c0_90, %c0_91] : memref<6x1408xf32, #tpu.memory_space<vmem>>, vector<6x1024xf32>
    %c0_92 = arith.constant 0 : index
    %c1_93 = arith.constant 1 : index
    %86 = vector.load %arg14[%c0_92, %c1_93] : memref<6x1408xf32, #tpu.memory_space<vmem>>, vector<6x1024xf32>
    %87 = arith.maximumf %85, %86 : vector<6x1024xf32>
    %c0_94 = arith.constant 0 : index
    %c32_95 = arith.constant 32 : index
    %88 = vector.load %arg14[%c0_94, %c32_95] : memref<6x1408xf32, #tpu.memory_space<vmem>>, vector<6x1024xf32>
    %c0_96 = arith.constant 0 : index
    %c33_97 = arith.constant 33 : index
    %89 = vector.load %arg14[%c0_96, %c33_97] : memref<6x1408xf32, #tpu.memory_space<vmem>>, vector<6x1024xf32>
    %90 = arith.maximumf %88, %89 : vector<6x1024xf32>
    %91 = arith.maximumf %87, %90 : vector<6x1024xf32>
    %c0_98 = arith.constant 0 : index
    %c0_99 = arith.constant 0 : index
    %92 = vector.load %arg15[%c0_98, %c0_99] : memref<6x1408xf32, #tpu.memory_space<vmem>>, vector<6x1024xf32>
    tpu.vector_store %arg15[%c0_98, %c0_99], %91 {strides = array<i32>} : memref<6x1408xf32, #tpu.memory_space<vmem>>, vector<6x1024xf32>,
    %cst_100 = arith.constant 0.000000e+00 : f32
    %93 = vector.broadcast %cst_100 : f32 to vector<6x384xf32>
    %c0_101 = arith.constant 0 : index
    %c1024_102 = arith.constant 1024 : index
    %94 = vector.load %arg15[%c0_101, %c1024_102] : memref<6x1408xf32, #tpu.memory_space<vmem>>, vector<6x384xf32>
    tpu.vector_store %arg15[%c0_101, %c1024_102], %93 {strides = array<i32>} : memref<6x1408xf32, #tpu.memory_space<vmem>>, vector<6x384xf32>,
    %c0_103 = arith.constant 0 : index
    %c0_104 = arith.constant 0 : index
    %95 = vector.load %arg15[%c0_103, %c0_104] : memref<6x1408xf32, #tpu.memory_space<vmem>>, vector<6x1024xf32>
    %c0_105 = arith.constant 0 : index
    %c0_106 = arith.constant 0 : index
    %96 = vector.load %arg13[%c0_105, %c0_106] : memref<150x1024xf32, #tpu.memory_space<vmem>>, vector<6x1024xf32>
    tpu.vector_store %arg13[%c0_105, %c0_106], %95 {strides = array<i32>} : memref<150x1024xf32, #tpu.memory_space<vmem>>, vector<6x1024xf32>,
    %c0_107 = arith.constant 0 : index
    %c2_108 = arith.constant 2 : index
    %97 = vector.load %arg15[%c0_107, %c2_108] : memref<6x1408xf32, #tpu.memory_space<vmem>>, vector<6x1024xf32>
    %c6_109 = arith.constant 6 : index
    %c0_110 = arith.constant 0 : index
    %98 = vector.load %arg13[%c6_109, %c0_110] : memref<150x1024xf32, #tpu.memory_space<vmem>>, vector<6x1024xf32>
    tpu.vector_store %arg13[%c6_109, %c0_110], %97 {strides = array<i32>} : memref<150x1024xf32, #tpu.memory_space<vmem>>, vector<6x1024xf32>,
    %c0_111 = arith.constant 0 : index
    %c4_112 = arith.constant 4 : index
    %99 = vector.load %arg15[%c0_111, %c4_112] : memref<6x1408xf32, #tpu.memory_space<vmem>>, vector<6x1024xf32>
    %c12_113 = arith.constant 12 : index
    %c0_114 = arith.constant 0 : index
    %100 = vector.load %arg13[%c12_113, %c0_114] : memref<150x1024xf32, #tpu.memory_space<vmem>>, vector<6x1024xf32>
    tpu.vector_store %arg13[%c12_113, %c0_114], %99 {strides = array<i32>} : memref<150x1024xf32, #tpu.memory_space<vmem>>, vector<6x1024xf32>,
    %c0_115 = arith.constant 0 : index
    %c6_116 = arith.constant 6 : index
    %101 = vector.load %arg15[%c0_115, %c6_116] : memref<6x1408xf32, #tpu.memory_space<vmem>>, vector<6x1024xf32>
    %c18_117 = arith.constant 18 : index
    %c0_118 = arith.constant 0 : index
    %102 = vector.load %arg13[%c18_117, %c0_118] : memref<150x1024xf32, #tpu.memory_space<vmem>>, vector<6x1024xf32>
    tpu.vector_store %arg13[%c18_117, %c0_118], %101 {strides = array<i32>} : memref<150x1024xf32, #tpu.memory_space<vmem>>, vector<6x1024xf32>,
    %c0_119 = arith.constant 0 : index
    %c8 = arith.constant 8 : index
    %103 = vector.load %arg15[%c0_119, %c8] : memref<6x1408xf32, #tpu.memory_space<vmem>>, vector<6x1024xf32>
    %c24_120 = arith.constant 24 : index
    %c0_121 = arith.constant 0 : index
    %104 = vector.load %arg13[%c24_120, %c0_121] : memref<150x1024xf32, #tpu.memory_space<vmem>>, vector<6x1024xf32>
    tpu.vector_store %arg13[%c24_120, %c0_121], %103 {strides = array<i32>} : memref<150x1024xf32, #tpu.memory_space<vmem>>, vector<6x1024xf32>,
    %c0_122 = arith.constant 0 : index
    %c64_123 = arith.constant 64 : index
    %105 = vector.load %arg15[%c0_122, %c64_123] : memref<6x1408xf32, #tpu.memory_space<vmem>>, vector<6x1024xf32>
    %c30_124 = arith.constant 30 : index
    %c0_125 = arith.constant 0 : index
    %106 = vector.load %arg13[%c30_124, %c0_125] : memref<150x1024xf32, #tpu.memory_space<vmem>>, vector<6x1024xf32>
    tpu.vector_store %arg13[%c30_124, %c0_125], %105 {strides = array<i32>} : memref<150x1024xf32, #tpu.memory_space<vmem>>, vector<6x1024xf32>,
    %c0_126 = arith.constant 0 : index
    %c66_127 = arith.constant 66 : index
    %107 = vector.load %arg15[%c0_126, %c66_127] : memref<6x1408xf32, #tpu.memory_space<vmem>>, vector<6x1024xf32>
    %c36_128 = arith.constant 36 : index
    %c0_129 = arith.constant 0 : index
    %108 = vector.load %arg13[%c36_128, %c0_129] : memref<150x1024xf32, #tpu.memory_space<vmem>>, vector<6x1024xf32>
    tpu.vector_store %arg13[%c36_128, %c0_129], %107 {strides = array<i32>} : memref<150x1024xf32, #tpu.memory_space<vmem>>, vector<6x1024xf32>,
    %c0_130 = arith.constant 0 : index
    %c68_131 = arith.constant 68 : index
    %109 = vector.load %arg15[%c0_130, %c68_131] : memref<6x1408xf32, #tpu.memory_space<vmem>>, vector<6x1024xf32>
    %c42_132 = arith.constant 42 : index
    %c0_133 = arith.constant 0 : index
    %110 = vector.load %arg13[%c42_132, %c0_133] : memref<150x1024xf32, #tpu.memory_space<vmem>>, vector<6x1024xf32>
    tpu.vector_store %arg13[%c42_132, %c0_133], %109 {strides = array<i32>} : memref<150x1024xf32, #tpu.memory_space<vmem>>, vector<6x1024xf32>,
    %c0_134 = arith.constant 0 : index
    %c70 = arith.constant 70 : index
    %111 = vector.load %arg15[%c0_134, %c70] : memref<6x1408xf32, #tpu.memory_space<vmem>>, vector<6x1024xf32>
    %c48_135 = arith.constant 48 : index
    %c0_136 = arith.constant 0 : index
    %112 = vector.load %arg13[%c48_135, %c0_136] : memref<150x1024xf32, #tpu.memory_space<vmem>>, vector<6x1024xf32>
    tpu.vector_store %arg13[%c48_135, %c0_136], %111 {strides = array<i32>} : memref<150x1024xf32, #tpu.memory_space<vmem>>, vector<6x1024xf32>,
    %c0_137 = arith.constant 0 : index
    %c72_138 = arith.constant 72 : index
    %113 = vector.load %arg15[%c0_137, %c72_138] : memref<6x1408xf32, #tpu.memory_space<vmem>>, vector<6x1024xf32>
    %c54_139 = arith.constant 54 : index
    %c0_140 = arith.constant 0 : index
    %114 = vector.load %arg13[%c54_139, %c0_140] : memref<150x1024xf32, #tpu.memory_space<vmem>>, vector<6x1024xf32>
    tpu.vector_store %arg13[%c54_139, %c0_140], %113 {strides = array<i32>} : memref<150x1024xf32, #tpu.memory_space<vmem>>, vector<6x1024xf32>,
    %c0_141 = arith.constant 0 : index
    %c128_142 = arith.constant 128 : index
    %115 = vector.load %arg15[%c0_141, %c128_142] : memref<6x1408xf32, #tpu.memory_space<vmem>>, vector<6x1024xf32>
    %c60_143 = arith.constant 60 : index
    %c0_144 = arith.constant 0 : index
    %116 = vector.load %arg13[%c60_143, %c0_144] : memref<150x1024xf32, #tpu.memory_space<vmem>>, vector<6x1024xf32>
    tpu.vector_store %arg13[%c60_143, %c0_144], %115 {strides = array<i32>} : memref<150x1024xf32, #tpu.memory_space<vmem>>, vector<6x1024xf32>,
    %c0_145 = arith.constant 0 : index
    %c130_146 = arith.constant 130 : index
    %117 = vector.load %arg15[%c0_145, %c130_146] : memref<6x1408xf32, #tpu.memory_space<vmem>>, vector<6x1024xf32>
    %c66_147 = arith.constant 66 : index
    %c0_148 = arith.constant 0 : index
    %118 = vector.load %arg13[%c66_147, %c0_148] : memref<150x1024xf32, #tpu.memory_space<vmem>>, vector<6x1024xf32>
    tpu.vector_store %arg13[%c66_147, %c0_148], %117 {strides = array<i32>} : memref<150x1024xf32, #tpu.memory_space<vmem>>, vector<6x1024xf32>,
    %c0_149 = arith.constant 0 : index
    %c132_150 = arith.constant 132 : index
    %119 = vector.load %arg15[%c0_149, %c132_150] : memref<6x1408xf32, #tpu.memory_space<vmem>>, vector<6x1024xf32>
    %c72_151 = arith.constant 72 : index
    %c0_152 = arith.constant 0 : index
    %120 = vector.load %arg13[%c72_151, %c0_152] : memref<150x1024xf32, #tpu.memory_space<vmem>>, vector<6x1024xf32>
    tpu.vector_store %arg13[%c72_151, %c0_152], %119 {strides = array<i32>} : memref<150x1024xf32, #tpu.memory_space<vmem>>, vector<6x1024xf32>,
    %c0_153 = arith.constant 0 : index
    %c134 = arith.constant 134 : index
    %121 = vector.load %arg15[%c0_153, %c134] : memref<6x1408xf32, #tpu.memory_space<vmem>>, vector<6x1024xf32>
    %c78 = arith.constant 78 : index
    %c0_154 = arith.constant 0 : index
    %122 = vector.load %arg13[%c78, %c0_154] : memref<150x1024xf32, #tpu.memory_space<vmem>>, vector<6x1024xf32>
    tpu.vector_store %arg13[%c78, %c0_154], %121 {strides = array<i32>} : memref<150x1024xf32, #tpu.memory_space<vmem>>, vector<6x1024xf32>,
    %c0_155 = arith.constant 0 : index
    %c136 = arith.constant 136 : index
    %123 = vector.load %arg15[%c0_155, %c136] : memref<6x1408xf32, #tpu.memory_space<vmem>>, vector<6x1024xf32>
    %c84 = arith.constant 84 : index
    %c0_156 = arith.constant 0 : index
    %124 = vector.load %arg13[%c84, %c0_156] : memref<150x1024xf32, #tpu.memory_space<vmem>>, vector<6x1024xf32>
    tpu.vector_store %arg13[%c84, %c0_156], %123 {strides = array<i32>} : memref<150x1024xf32, #tpu.memory_space<vmem>>, vector<6x1024xf32>,
    %c0_157 = arith.constant 0 : index
    %c192 = arith.constant 192 : index
    %125 = vector.load %arg15[%c0_157, %c192] : memref<6x1408xf32, #tpu.memory_space<vmem>>, vector<6x1024xf32>
    %c90 = arith.constant 90 : index
    %c0_158 = arith.constant 0 : index
    %126 = vector.load %arg13[%c90, %c0_158] : memref<150x1024xf32, #tpu.memory_space<vmem>>, vector<6x1024xf32>
    tpu.vector_store %arg13[%c90, %c0_158], %125 {strides = array<i32>} : memref<150x1024xf32, #tpu.memory_space<vmem>>, vector<6x1024xf32>,
    %c0_159 = arith.constant 0 : index
    %c194 = arith.constant 194 : index
    %127 = vector.load %arg15[%c0_159, %c194] : memref<6x1408xf32, #tpu.memory_space<vmem>>, vector<6x1024xf32>
    %c96_160 = arith.constant 96 : index
    %c0_161 = arith.constant 0 : index
    %128 = vector.load %arg13[%c96_160, %c0_161] : memref<150x1024xf32, #tpu.memory_space<vmem>>, vector<6x1024xf32>
    tpu.vector_store %arg13[%c96_160, %c0_161], %127 {strides = array<i32>} : memref<150x1024xf32, #tpu.memory_space<vmem>>, vector<6x1024xf32>,
    %c0_162 = arith.constant 0 : index
    %c196 = arith.constant 196 : index
    %129 = vector.load %arg15[%c0_162, %c196] : memref<6x1408xf32, #tpu.memory_space<vmem>>, vector<6x1024xf32>
    %c102 = arith.constant 102 : index
    %c0_163 = arith.constant 0 : index
    %130 = vector.load %arg13[%c102, %c0_163] : memref<150x1024xf32, #tpu.memory_space<vmem>>, vector<6x1024xf32>
    tpu.vector_store %arg13[%c102, %c0_163], %129 {strides = array<i32>} : memref<150x1024xf32, #tpu.memory_space<vmem>>, vector<6x1024xf32>,
    %c0_164 = arith.constant 0 : index
    %c198 = arith.constant 198 : index
    %131 = vector.load %arg15[%c0_164, %c198] : memref<6x1408xf32, #tpu.memory_space<vmem>>, vector<6x1024xf32>
    %c108 = arith.constant 108 : index
    %c0_165 = arith.constant 0 : index
    %132 = vector.load %arg13[%c108, %c0_165] : memref<150x1024xf32, #tpu.memory_space<vmem>>, vector<6x1024xf32>
    tpu.vector_store %arg13[%c108, %c0_165], %131 {strides = array<i32>} : memref<150x1024xf32, #tpu.memory_space<vmem>>, vector<6x1024xf32>,
    %c0_166 = arith.constant 0 : index
    %c200 = arith.constant 200 : index
    %133 = vector.load %arg15[%c0_166, %c200] : memref<6x1408xf32, #tpu.memory_space<vmem>>, vector<6x1024xf32>
    %c114 = arith.constant 114 : index
    %c0_167 = arith.constant 0 : index
    %134 = vector.load %arg13[%c114, %c0_167] : memref<150x1024xf32, #tpu.memory_space<vmem>>, vector<6x1024xf32>
    tpu.vector_store %arg13[%c114, %c0_167], %133 {strides = array<i32>} : memref<150x1024xf32, #tpu.memory_space<vmem>>, vector<6x1024xf32>,
    %c0_168 = arith.constant 0 : index
    %c256 = arith.constant 256 : index
    %135 = vector.load %arg15[%c0_168, %c256] : memref<6x1408xf32, #tpu.memory_space<vmem>>, vector<6x1024xf32>
    %c120 = arith.constant 120 : index
    %c0_169 = arith.constant 0 : index
    %136 = vector.load %arg13[%c120, %c0_169] : memref<150x1024xf32, #tpu.memory_space<vmem>>, vector<6x1024xf32>
    tpu.vector_store %arg13[%c120, %c0_169], %135 {strides = array<i32>} : memref<150x1024xf32, #tpu.memory_space<vmem>>, vector<6x1024xf32>,
    %c0_170 = arith.constant 0 : index
    %c258 = arith.constant 258 : index
    %137 = vector.load %arg15[%c0_170, %c258] : memref<6x1408xf32, #tpu.memory_space<vmem>>, vector<6x1024xf32>
    %c126 = arith.constant 126 : index
    %c0_171 = arith.constant 0 : index
    %138 = vector.load %arg13[%c126, %c0_171] : memref<150x1024xf32, #tpu.memory_space<vmem>>, vector<6x1024xf32>
    tpu.vector_store %arg13[%c126, %c0_171], %137 {strides = array<i32>} : memref<150x1024xf32, #tpu.memory_space<vmem>>, vector<6x1024xf32>,
    %c0_172 = arith.constant 0 : index
    %c260 = arith.constant 260 : index
    %139 = vector.load %arg15[%c0_172, %c260] : memref<6x1408xf32, #tpu.memory_space<vmem>>, vector<6x1024xf32>
    %c132_173 = arith.constant 132 : index
    %c0_174 = arith.constant 0 : index
    %140 = vector.load %arg13[%c132_173, %c0_174] : memref<150x1024xf32, #tpu.memory_space<vmem>>, vector<6x1024xf32>
    tpu.vector_store %arg13[%c132_173, %c0_174], %139 {strides = array<i32>} : memref<150x1024xf32, #tpu.memory_space<vmem>>, vector<6x1024xf32>,
    %c0_175 = arith.constant 0 : index
    %c262 = arith.constant 262 : index
    %141 = vector.load %arg15[%c0_175, %c262] : memref<6x1408xf32, #tpu.memory_space<vmem>>, vector<6x1024xf32>
    %c138 = arith.constant 138 : index
    %c0_176 = arith.constant 0 : index
    %142 = vector.load %arg13[%c138, %c0_176] : memref<150x1024xf32, #tpu.memory_space<vmem>>, vector<6x1024xf32>
    tpu.vector_store %arg13[%c138, %c0_176], %141 {strides = array<i32>} : memref<150x1024xf32, #tpu.memory_space<vmem>>, vector<6x1024xf32>,
    %c0_177 = arith.constant 0 : index
    %c264 = arith.constant 264 : index
    %143 = vector.load %arg15[%c0_177, %c264] : memref<6x1408xf32, #tpu.memory_space<vmem>>, vector<6x1024xf32>
    %c144 = arith.constant 144 : index
    %c0_178 = arith.constant 0 : index
    %144 = vector.load %arg13[%c144, %c0_178] : memref<150x1024xf32, #tpu.memory_space<vmem>>, vector<6x1024xf32>
    tpu.vector_store %arg13[%c144, %c0_178], %143 {strides = array<i32>} : memref<150x1024xf32, #tpu.memory_space<vmem>>, vector<6x1024xf32>,
    %c0_179 = arith.constant 0 : index
    %c0_180 = arith.constant 0 : index
    %145 = vector.load %arg4[%c0_179, %c0_180] : memref<16x150xf32, #tpu.memory_space<vmem>>, vector<16x150xf32>
    %c0_181 = arith.constant 0 : index
    %c0_182 = arith.constant 0 : index
    %146 = vector.load %arg13[%c0_181, %c0_182] : memref<150x1024xf32, #tpu.memory_space<vmem>>, vector<150x1024xf32>
    %cst_183 = arith.constant dense<0.000000e+00> : vector<16x1024xf32>
    %147 = tpu.matmul %145, %146, %cst_183 {dimension_numbers = #tpu.dot_dimension_numbers<[1], [0], [0], [1], [0, 0, 1, 1], [], []>} : vector<16x150xf32>, vector<150x1024xf32>, vector<16x1024xf32> -> vector<16x1024xf32>
    %c0_184 = arith.constant 0 : index
    %c0_185 = arith.constant 0 : index
    %148 = vector.load %arg5[%c0_184, %c0_185] : memref<16x1xf32, #tpu.memory_space<vmem>>, vector<16x1xf32>
    %149 = vector.broadcast %148 : vector<16x1xf32> to vector<16x1024xf32>
    %150 = arith.addf %147, %149 : vector<16x1024xf32>
    %151 = math.tanh %150 : vector<16x1024xf32>
    %c0_186 = arith.constant 0 : index
    %c0_187 = arith.constant 0 : index
    %152 = vector.load %arg16[%c0_186, %c0_187] : memref<16x1408xf32, #tpu.memory_space<vmem>>, vector<16x1024xf32>
    tpu.vector_store %arg16[%c0_186, %c0_187], %151 {strides = array<i32>} : memref<16x1408xf32, #tpu.memory_space<vmem>>, vector<16x1024xf32>,
    %cst_188 = arith.constant 0.000000e+00 : f32
    %153 = vector.broadcast %cst_188 : f32 to vector<16x384xf32>
    %c0_189 = arith.constant 0 : index
    %c1024_190 = arith.constant 1024 : index
    %154 = vector.load %arg16[%c0_189, %c1024_190] : memref<16x1408xf32, #tpu.memory_space<vmem>>, vector<16x384xf32>
    tpu.vector_store %arg16[%c0_189, %c1024_190], %153 {strides = array<i32>} : memref<16x1408xf32, #tpu.memory_space<vmem>>, vector<16x384xf32>,
    %c0_191 = arith.constant 0 : index
    %c0_192 = arith.constant 0 : index
    %155 = vector.load %arg16[%c0_191, %c0_192] : memref<16x1408xf32, #tpu.memory_space<vmem>>, vector<16x1024xf32>
    %c0_193 = arith.constant 0 : index
    %c2_194 = arith.constant 2 : index
    %156 = vector.load %arg16[%c0_193, %c2_194] : memref<16x1408xf32, #tpu.memory_space<vmem>>, vector<16x1024xf32>
    %157 = arith.maximumf %155, %156 : vector<16x1024xf32>
    %c0_195 = arith.constant 0 : index
    %c64_196 = arith.constant 64 : index
    %158 = vector.load %arg16[%c0_195, %c64_196] : memref<16x1408xf32, #tpu.memory_space<vmem>>, vector<16x1024xf32>
    %c0_197 = arith.constant 0 : index
    %c66_198 = arith.constant 66 : index
    %159 = vector.load %arg16[%c0_197, %c66_198] : memref<16x1408xf32, #tpu.memory_space<vmem>>, vector<16x1024xf32>
    %160 = arith.maximumf %158, %159 : vector<16x1024xf32>
    %161 = arith.maximumf %157, %160 : vector<16x1024xf32>
    %c0_199 = arith.constant 0 : index
    %c0_200 = arith.constant 0 : index
    %162 = vector.load %arg17[%c0_199, %c0_200] : memref<16x1024xf32, #tpu.memory_space<vmem>>, vector<16x1024xf32>
    tpu.vector_store %arg17[%c0_199, %c0_200], %161 {strides = array<i32>} : memref<16x1024xf32, #tpu.memory_space<vmem>>, vector<16x1024xf32>,
    %cst_201 = arith.constant 0.000000e+00 : f32
    %163 = vector.broadcast %cst_201 : f32 to vector<400x128xf32>
    %c0_202 = arith.constant 0 : index
    %c0_203 = arith.constant 0 : index
    %164 = vector.load %arg18[%c0_202, %c0_203] : memref<400x128xf32, #tpu.memory_space<vmem>>, vector<400x128xf32>
    tpu.vector_store %arg18[%c0_202, %c0_203], %163 {strides = array<i32>} : memref<400x128xf32, #tpu.memory_space<vmem>>, vector<400x128xf32>,
    %c0_204 = arith.constant 0 : index
    %c0_205 = arith.constant 0 : index
    %165 = vector.load %arg17[%c0_204, %c0_205] : memref<16x1024xf32, #tpu.memory_space<vmem>>, vector<16x1xf32>
    %c0_206 = arith.constant 0 : index
    %c0_207 = arith.constant 0 : index
    %166 = vector.load %arg18[%c0_206, %c0_207] : memref<400x128xf32, #tpu.memory_space<vmem>>, vector<16x1xf32>
    tpu.vector_store %arg18[%c0_206, %c0_207], %165 {strides = array<i32>} : memref<400x128xf32, #tpu.memory_space<vmem>>, vector<16x1xf32>,
    %c0_208 = arith.constant 0 : index
    %c4_209 = arith.constant 4 : index
    %167 = vector.load %arg17[%c0_208, %c4_209] : memref<16x1024xf32, #tpu.memory_space<vmem>>, vector<16x1xf32>
    %c16 = arith.constant 16 : index
    %c0_210 = arith.constant 0 : index
    %168 = vector.load %arg18[%c16, %c0_210] : memref<400x128xf32, #tpu.memory_space<vmem>>, vector<16x1xf32>
    tpu.vector_store %arg18[%c16, %c0_210], %167 {strides = array<i32>} : memref<400x128xf32, #tpu.memory_space<vmem>>, vector<16x1xf32>,
    %c0_211 = arith.constant 0 : index
    %c8_212 = arith.constant 8 : index
    %169 = vector.load %arg17[%c0_211, %c8_212] : memref<16x1024xf32, #tpu.memory_space<vmem>>, vector<16x1xf32>
    %c32_213 = arith.constant 32 : index
    %c0_214 = arith.constant 0 : index
    %170 = vector.load %arg18[%c32_213, %c0_214] : memref<400x128xf32, #tpu.memory_space<vmem>>, vector<16x1xf32>
    tpu.vector_store %arg18[%c32_213, %c0_214], %169 {strides = array<i32>} : memref<400x128xf32, #tpu.memory_space<vmem>>, vector<16x1xf32>,
    %c0_215 = arith.constant 0 : index
    %c12_216 = arith.constant 12 : index
    %171 = vector.load %arg17[%c0_215, %c12_216] : memref<16x1024xf32, #tpu.memory_space<vmem>>, vector<16x1xf32>
    %c48_217 = arith.constant 48 : index
    %c0_218 = arith.constant 0 : index
    %172 = vector.load %arg18[%c48_217, %c0_218] : memref<400x128xf32, #tpu.memory_space<vmem>>, vector<16x1xf32>
    tpu.vector_store %arg18[%c48_217, %c0_218], %171 {strides = array<i32>} : memref<400x128xf32, #tpu.memory_space<vmem>>, vector<16x1xf32>,
    %c0_219 = arith.constant 0 : index
    %c16_220 = arith.constant 16 : index
    %173 = vector.load %arg17[%c0_219, %c16_220] : memref<16x1024xf32, #tpu.memory_space<vmem>>, vector<16x1xf32>
    %c64_221 = arith.constant 64 : index
    %c0_222 = arith.constant 0 : index
    %174 = vector.load %arg18[%c64_221, %c0_222] : memref<400x128xf32, #tpu.memory_space<vmem>>, vector<16x1xf32>
    tpu.vector_store %arg18[%c64_221, %c0_222], %173 {strides = array<i32>} : memref<400x128xf32, #tpu.memory_space<vmem>>, vector<16x1xf32>,
    %c0_223 = arith.constant 0 : index
    %c128_224 = arith.constant 128 : index
    %175 = vector.load %arg17[%c0_223, %c128_224] : memref<16x1024xf32, #tpu.memory_space<vmem>>, vector<16x1xf32>
    %c80 = arith.constant 80 : index
    %c0_225 = arith.constant 0 : index
    %176 = vector.load %arg18[%c80, %c0_225] : memref<400x128xf32, #tpu.memory_space<vmem>>, vector<16x1xf32>
    tpu.vector_store %arg18[%c80, %c0_225], %175 {strides = array<i32>} : memref<400x128xf32, #tpu.memory_space<vmem>>, vector<16x1xf32>,
    %c0_226 = arith.constant 0 : index
    %c132_227 = arith.constant 132 : index
    %177 = vector.load %arg17[%c0_226, %c132_227] : memref<16x1024xf32, #tpu.memory_space<vmem>>, vector<16x1xf32>
    %c96_228 = arith.constant 96 : index
    %c0_229 = arith.constant 0 : index
    %178 = vector.load %arg18[%c96_228, %c0_229] : memref<400x128xf32, #tpu.memory_space<vmem>>, vector<16x1xf32>
    tpu.vector_store %arg18[%c96_228, %c0_229], %177 {strides = array<i32>} : memref<400x128xf32, #tpu.memory_space<vmem>>, vector<16x1xf32>,
    %c0_230 = arith.constant 0 : index
    %c136_231 = arith.constant 136 : index
    %179 = vector.load %arg17[%c0_230, %c136_231] : memref<16x1024xf32, #tpu.memory_space<vmem>>, vector<16x1xf32>
    %c112 = arith.constant 112 : index
    %c0_232 = arith.constant 0 : index
    %180 = vector.load %arg18[%c112, %c0_232] : memref<400x128xf32, #tpu.memory_space<vmem>>, vector<16x1xf32>
    tpu.vector_store %arg18[%c112, %c0_232], %179 {strides = array<i32>} : memref<400x128xf32, #tpu.memory_space<vmem>>, vector<16x1xf32>,
    %c0_233 = arith.constant 0 : index
    %c140 = arith.constant 140 : index
    %181 = vector.load %arg17[%c0_233, %c140] : memref<16x1024xf32, #tpu.memory_space<vmem>>, vector<16x1xf32>
    %c128_234 = arith.constant 128 : index
    %c0_235 = arith.constant 0 : index
    %182 = vector.load %arg18[%c128_234, %c0_235] : memref<400x128xf32, #tpu.memory_space<vmem>>, vector<16x1xf32>
    tpu.vector_store %arg18[%c128_234, %c0_235], %181 {strides = array<i32>} : memref<400x128xf32, #tpu.memory_space<vmem>>, vector<16x1xf32>,
    %c0_236 = arith.constant 0 : index
    %c144_237 = arith.constant 144 : index
    %183 = vector.load %arg17[%c0_236, %c144_237] : memref<16x1024xf32, #tpu.memory_space<vmem>>, vector<16x1xf32>
    %c144_238 = arith.constant 144 : index
    %c0_239 = arith.constant 0 : index
    %184 = vector.load %arg18[%c144_238, %c0_239] : memref<400x128xf32, #tpu.memory_space<vmem>>, vector<16x1xf32>
    tpu.vector_store %arg18[%c144_238, %c0_239], %183 {strides = array<i32>} : memref<400x128xf32, #tpu.memory_space<vmem>>, vector<16x1xf32>,
    %c0_240 = arith.constant 0 : index
    %c256_241 = arith.constant 256 : index
    %185 = vector.load %arg17[%c0_240, %c256_241] : memref<16x1024xf32, #tpu.memory_space<vmem>>, vector<16x1xf32>
    %c160 = arith.constant 160 : index
    %c0_242 = arith.constant 0 : index
    %186 = vector.load %arg18[%c160, %c0_242] : memref<400x128xf32, #tpu.memory_space<vmem>>, vector<16x1xf32>
    tpu.vector_store %arg18[%c160, %c0_242], %185 {strides = array<i32>} : memref<400x128xf32, #tpu.memory_space<vmem>>, vector<16x1xf32>,
    %c0_243 = arith.constant 0 : index
    %c260_244 = arith.constant 260 : index
    %187 = vector.load %arg17[%c0_243, %c260_244] : memref<16x1024xf32, #tpu.memory_space<vmem>>, vector<16x1xf32>
    %c176 = arith.constant 176 : index
    %c0_245 = arith.constant 0 : index
    %188 = vector.load %arg18[%c176, %c0_245] : memref<400x128xf32, #tpu.memory_space<vmem>>, vector<16x1xf32>
    tpu.vector_store %arg18[%c176, %c0_245], %187 {strides = array<i32>} : memref<400x128xf32, #tpu.memory_space<vmem>>, vector<16x1xf32>,
    %c0_246 = arith.constant 0 : index
    %c264_247 = arith.constant 264 : index
    %189 = vector.load %arg17[%c0_246, %c264_247] : memref<16x1024xf32, #tpu.memory_space<vmem>>, vector<16x1xf32>
    %c192_248 = arith.constant 192 : index
    %c0_249 = arith.constant 0 : index
    %190 = vector.load %arg18[%c192_248, %c0_249] : memref<400x128xf32, #tpu.memory_space<vmem>>, vector<16x1xf32>
    tpu.vector_store %arg18[%c192_248, %c0_249], %189 {strides = array<i32>} : memref<400x128xf32, #tpu.memory_space<vmem>>, vector<16x1xf32>,
    %c0_250 = arith.constant 0 : index
    %c268 = arith.constant 268 : index
    %191 = vector.load %arg17[%c0_250, %c268] : memref<16x1024xf32, #tpu.memory_space<vmem>>, vector<16x1xf32>
    %c208 = arith.constant 208 : index
    %c0_251 = arith.constant 0 : index
    %192 = vector.load %arg18[%c208, %c0_251] : memref<400x128xf32, #tpu.memory_space<vmem>>, vector<16x1xf32>
    tpu.vector_store %arg18[%c208, %c0_251], %191 {strides = array<i32>} : memref<400x128xf32, #tpu.memory_space<vmem>>, vector<16x1xf32>,
    %c0_252 = arith.constant 0 : index
    %c272 = arith.constant 272 : index
    %193 = vector.load %arg17[%c0_252, %c272] : memref<16x1024xf32, #tpu.memory_space<vmem>>, vector<16x1xf32>
    %c224 = arith.constant 224 : index
    %c0_253 = arith.constant 0 : index
    %194 = vector.load %arg18[%c224, %c0_253] : memref<400x128xf32, #tpu.memory_space<vmem>>, vector<16x1xf32>
    tpu.vector_store %arg18[%c224, %c0_253], %193 {strides = array<i32>} : memref<400x128xf32, #tpu.memory_space<vmem>>, vector<16x1xf32>,
    %c0_254 = arith.constant 0 : index
    %c384 = arith.constant 384 : index
    %195 = vector.load %arg17[%c0_254, %c384] : memref<16x1024xf32, #tpu.memory_space<vmem>>, vector<16x1xf32>
    %c240 = arith.constant 240 : index
    %c0_255 = arith.constant 0 : index
    %196 = vector.load %arg18[%c240, %c0_255] : memref<400x128xf32, #tpu.memory_space<vmem>>, vector<16x1xf32>
    tpu.vector_store %arg18[%c240, %c0_255], %195 {strides = array<i32>} : memref<400x128xf32, #tpu.memory_space<vmem>>, vector<16x1xf32>,
    %c0_256 = arith.constant 0 : index
    %c388 = arith.constant 388 : index
    %197 = vector.load %arg17[%c0_256, %c388] : memref<16x1024xf32, #tpu.memory_space<vmem>>, vector<16x1xf32>
    %c256_257 = arith.constant 256 : index
    %c0_258 = arith.constant 0 : index
    %198 = vector.load %arg18[%c256_257, %c0_258] : memref<400x128xf32, #tpu.memory_space<vmem>>, vector<16x1xf32>
    tpu.vector_store %arg18[%c256_257, %c0_258], %197 {strides = array<i32>} : memref<400x128xf32, #tpu.memory_space<vmem>>, vector<16x1xf32>,
    %c0_259 = arith.constant 0 : index
    %c392 = arith.constant 392 : index
    %199 = vector.load %arg17[%c0_259, %c392] : memref<16x1024xf32, #tpu.memory_space<vmem>>, vector<16x1xf32>
    %c272_260 = arith.constant 272 : index
    %c0_261 = arith.constant 0 : index
    %200 = vector.load %arg18[%c272_260, %c0_261] : memref<400x128xf32, #tpu.memory_space<vmem>>, vector<16x1xf32>
    tpu.vector_store %arg18[%c272_260, %c0_261], %199 {strides = array<i32>} : memref<400x128xf32, #tpu.memory_space<vmem>>, vector<16x1xf32>,
    %c0_262 = arith.constant 0 : index
    %c396 = arith.constant 396 : index
    %201 = vector.load %arg17[%c0_262, %c396] : memref<16x1024xf32, #tpu.memory_space<vmem>>, vector<16x1xf32>
    %c288 = arith.constant 288 : index
    %c0_263 = arith.constant 0 : index
    %202 = vector.load %arg18[%c288, %c0_263] : memref<400x128xf32, #tpu.memory_space<vmem>>, vector<16x1xf32>
    tpu.vector_store %arg18[%c288, %c0_263], %201 {strides = array<i32>} : memref<400x128xf32, #tpu.memory_space<vmem>>, vector<16x1xf32>,
    %c0_264 = arith.constant 0 : index
    %c400 = arith.constant 400 : index
    %203 = vector.load %arg17[%c0_264, %c400] : memref<16x1024xf32, #tpu.memory_space<vmem>>, vector<16x1xf32>
    %c304 = arith.constant 304 : index
    %c0_265 = arith.constant 0 : index
    %204 = vector.load %arg18[%c304, %c0_265] : memref<400x128xf32, #tpu.memory_space<vmem>>, vector<16x1xf32>
    tpu.vector_store %arg18[%c304, %c0_265], %203 {strides = array<i32>} : memref<400x128xf32, #tpu.memory_space<vmem>>, vector<16x1xf32>,
    %c0_266 = arith.constant 0 : index
    %c512 = arith.constant 512 : index
    %205 = vector.load %arg17[%c0_266, %c512] : memref<16x1024xf32, #tpu.memory_space<vmem>>, vector<16x1xf32>
    %c320 = arith.constant 320 : index
    %c0_267 = arith.constant 0 : index
    %206 = vector.load %arg18[%c320, %c0_267] : memref<400x128xf32, #tpu.memory_space<vmem>>, vector<16x1xf32>
    tpu.vector_store %arg18[%c320, %c0_267], %205 {strides = array<i32>} : memref<400x128xf32, #tpu.memory_space<vmem>>, vector<16x1xf32>,
    %c0_268 = arith.constant 0 : index
    %c516 = arith.constant 516 : index
    %207 = vector.load %arg17[%c0_268, %c516] : memref<16x1024xf32, #tpu.memory_space<vmem>>, vector<16x1xf32>
    %c336 = arith.constant 336 : index
    %c0_269 = arith.constant 0 : index
    %208 = vector.load %arg18[%c336, %c0_269] : memref<400x128xf32, #tpu.memory_space<vmem>>, vector<16x1xf32>
    tpu.vector_store %arg18[%c336, %c0_269], %207 {strides = array<i32>} : memref<400x128xf32, #tpu.memory_space<vmem>>, vector<16x1xf32>,
    %c0_270 = arith.constant 0 : index
    %c520 = arith.constant 520 : index
    %209 = vector.load %arg17[%c0_270, %c520] : memref<16x1024xf32, #tpu.memory_space<vmem>>, vector<16x1xf32>
    %c352 = arith.constant 352 : index
    %c0_271 = arith.constant 0 : index
    %210 = vector.load %arg18[%c352, %c0_271] : memref<400x128xf32, #tpu.memory_space<vmem>>, vector<16x1xf32>
    tpu.vector_store %arg18[%c352, %c0_271], %209 {strides = array<i32>} : memref<400x128xf32, #tpu.memory_space<vmem>>, vector<16x1xf32>,
    %c0_272 = arith.constant 0 : index
    %c524 = arith.constant 524 : index
    %211 = vector.load %arg17[%c0_272, %c524] : memref<16x1024xf32, #tpu.memory_space<vmem>>, vector<16x1xf32>
    %c368 = arith.constant 368 : index
    %c0_273 = arith.constant 0 : index
    %212 = vector.load %arg18[%c368, %c0_273] : memref<400x128xf32, #tpu.memory_space<vmem>>, vector<16x1xf32>
    tpu.vector_store %arg18[%c368, %c0_273], %211 {strides = array<i32>} : memref<400x128xf32, #tpu.memory_space<vmem>>, vector<16x1xf32>,
    %c0_274 = arith.constant 0 : index
    %c528 = arith.constant 528 : index
    %213 = vector.load %arg17[%c0_274, %c528] : memref<16x1024xf32, #tpu.memory_space<vmem>>, vector<16x1xf32>
    %c384_275 = arith.constant 384 : index
    %c0_276 = arith.constant 0 : index
    %214 = vector.load %arg18[%c384_275, %c0_276] : memref<400x128xf32, #tpu.memory_space<vmem>>, vector<16x1xf32>
    tpu.vector_store %arg18[%c384_275, %c0_276], %213 {strides = array<i32>} : memref<400x128xf32, #tpu.memory_space<vmem>>, vector<16x1xf32>,
    %c0_277 = arith.constant 0 : index
    %c0_278 = arith.constant 0 : index
    %215 = vector.load %arg6[%c0_277, %c0_278] : memref<120x400xf32, #tpu.memory_space<vmem>>, vector<120x400xf32>
    %c0_279 = arith.constant 0 : index
    %c0_280 = arith.constant 0 : index
    %216 = vector.load %arg18[%c0_279, %c0_280] : memref<400x128xf32, #tpu.memory_space<vmem>>, vector<400x128xf32>
    %cst_281 = arith.constant dense<0.000000e+00> : vector<120x128xf32>
    %217 = tpu.matmul %215, %216, %cst_281 {dimension_numbers = #tpu.dot_dimension_numbers<[1], [0], [0], [1], [0, 0, 1, 1], [], []>} : vector<120x400xf32>, vector<400x128xf32>, vector<120x128xf32> -> vector<120x128xf32>
    %c0_282 = arith.constant 0 : index
    %c0_283 = arith.constant 0 : index
    %218 = vector.load %arg7[%c0_282, %c0_283] : memref<120x1xf32, #tpu.memory_space<vmem>>, vector<120x1xf32>
    %219 = vector.broadcast %218 : vector<120x1xf32> to vector<120x128xf32>
    %220 = arith.addf %217, %219 : vector<120x128xf32>
    %221 = math.tanh %220 : vector<120x128xf32>
    %c0_284 = arith.constant 0 : index
    %c0_285 = arith.constant 0 : index
    %222 = vector.load %arg8[%c0_284, %c0_285] : memref<84x120xf32, #tpu.memory_space<vmem>>, vector<84x120xf32>
    %cst_286 = arith.constant dense<0.000000e+00> : vector<84x128xf32>
    %223 = tpu.matmul %222, %221, %cst_286 {dimension_numbers = #tpu.dot_dimension_numbers<[1], [0], [0], [1], [0, 0, 1, 1], [], []>} : vector<84x120xf32>, vector<120x128xf32>, vector<84x128xf32> -> vector<84x128xf32>
    %c0_287 = arith.constant 0 : index
    %c0_288 = arith.constant 0 : index
    %224 = vector.load %arg9[%c0_287, %c0_288] : memref<84x1xf32, #tpu.memory_space<vmem>>, vector<84x1xf32>
    %225 = vector.broadcast %224 : vector<84x1xf32> to vector<84x128xf32>
    %226 = arith.addf %223, %225 : vector<84x128xf32>
    %227 = math.tanh %226 : vector<84x128xf32>
    %c0_289 = arith.constant 0 : index
    %c0_290 = arith.constant 0 : index
    %228 = vector.load %arg10[%c0_289, %c0_290] : memref<10x84xf32, #tpu.memory_space<vmem>>, vector<10x84xf32>
    %cst_291 = arith.constant dense<0.000000e+00> : vector<10x128xf32>
    %229 = tpu.matmul %228, %227, %cst_291 {dimension_numbers = #tpu.dot_dimension_numbers<[1], [0], [0], [1], [0, 0, 1, 1], [], []>} : vector<10x84xf32>, vector<84x128xf32>, vector<10x128xf32> -> vector<10x128xf32>
    %c0_292 = arith.constant 0 : index
    %c0_293 = arith.constant 0 : index
    %230 = vector.load %arg11[%c0_292, %c0_293] : memref<10x1xf32, #tpu.memory_space<vmem>>, vector<10x1xf32>
    %231 = vector.broadcast %230 : vector<10x1xf32> to vector<10x128xf32>
    %232 = arith.addf %229, %231 : vector<10x128xf32>
    %233 = vector.extract_strided_slice %232 {offsets = [0, 0], sizes = [10, 1], strides = [1, 1]} : vector<10x128xf32> to vector<10x1xf32>
    %c0_294 = arith.constant 0 : index
    %c0_295 = arith.constant 0 : index
    %c0_296 = arith.constant 0 : index
    %234 = vector.load %arg12[%c0_294, %c0_295, %c0_296] : memref<1x10x1xf32, #tpu.memory_space<vmem>>, vector<1x10x1xf32>
    %235 = vector.shape_cast %234 : vector<1x10x1xf32> to vector<10x1xf32>
    %236 = vector.shape_cast %233 : vector<10x1xf32> to vector<1x10x1xf32>
    tpu.vector_store %arg12[%c0_294, %c0_295, %c0_296], %236 {strides = array<i32>} : memref<1x10x1xf32, #tpu.memory_space<vmem>>, vector<1x10x1xf32>,
    return
  }
  func.func @transform_0(%arg0: i32) -> (i32, i32, i32) {
    %c0_i32 = arith.constant 0 : i32
    %c0_i32_0 = arith.constant 0 : i32
    %c0_i32_1 = arith.constant 0 : i32
    return %arg0, %c0_i32, %c0_i32_0 : i32, i32, i32
  }
  func.func @transform_1(%arg0: i32) -> (i32, i32) {
    %c0_i32 = arith.constant 0 : i32
    %c0_i32_0 = arith.constant 0 : i32
    %c0_i32_1 = arith.constant 0 : i32
    return %c0_i32, %c0_i32_0 : i32, i32
  }
  func.func @transform_2(%arg0: i32) -> (i32, i32) {
    %c0_i32 = arith.constant 0 : i32
    %c0_i32_0 = arith.constant 0 : i32
    %c0_i32_1 = arith.constant 0 : i32
    return %c0_i32, %c0_i32_0 : i32, i32
  }
  func.func @transform_3(%arg0: i32) -> (i32, i32) {
    %c0_i32 = arith.constant 0 : i32
    %c0_i32_0 = arith.constant 0 : i32
    %c0_i32_1 = arith.constant 0 : i32
    return %c0_i32, %c0_i32_0 : i32, i32
  }
  func.func @transform_4(%arg0: i32) -> (i32, i32) {
    %c0_i32 = arith.constant 0 : i32
    %c0_i32_0 = arith.constant 0 : i32
    %c0_i32_1 = arith.constant 0 : i32
    return %c0_i32, %c0_i32_0 : i32, i32
  }
  func.func @transform_5(%arg0: i32) -> (i32, i32) {
    %c0_i32 = arith.constant 0 : i32
    %c0_i32_0 = arith.constant 0 : i32
    %c0_i32_1 = arith.constant 0 : i32
    return %c0_i32, %c0_i32_0 : i32, i32
  }
  func.func @transform_6(%arg0: i32) -> (i32, i32) {
    %c0_i32 = arith.constant 0 : i32
    %c0_i32_0 = arith.constant 0 : i32
    %c0_i32_1 = arith.constant 0 : i32
    return %c0_i32, %c0_i32_0 : i32, i32
  }
  func.func @transform_7(%arg0: i32) -> (i32, i32) {
    %c0_i32 = arith.constant 0 : i32
    %c0_i32_0 = arith.constant 0 : i32
    %c0_i32_1 = arith.constant 0 : i32
    return %c0_i32, %c0_i32_0 : i32, i32
  }
  func.func @transform_8(%arg0: i32) -> (i32, i32) {
    %c0_i32 = arith.constant 0 : i32
    %c0_i32_0 = arith.constant 0 : i32
    %c0_i32_1 = arith.constant 0 : i32
    return %c0_i32, %c0_i32_0 : i32, i32
  }
  func.func @transform_9(%arg0: i32) -> (i32, i32) {
    %c0_i32 = arith.constant 0 : i32
    %c0_i32_0 = arith.constant 0 : i32
    %c0_i32_1 = arith.constant 0 : i32
    return %c0_i32, %c0_i32_0 : i32, i32
  }
  func.func @transform_10(%arg0: i32) -> (i32, i32) {
    %c0_i32 = arith.constant 0 : i32
    %c0_i32_0 = arith.constant 0 : i32
    %c0_i32_1 = arith.constant 0 : i32
    return %c0_i32, %c0_i32_0 : i32, i32
  }
  func.func @transform_11(%arg0: i32) -> (i32, i32, i32) {
    %c0_i32 = arith.constant 0 : i32
    %c0_i32_0 = arith.constant 0 : i32
    %c0_i32_1 = arith.constant 0 : i32
    return %arg0, %c0_i32, %c0_i32_0 : i32, i32, i32
  }
}

</mosaic_0001>

<llo_original>
// kernel: lenet5_forward.1
$region0: #{lenet5_forward.1}
  #allocation0 [shape = 'u32[]', space=smem, size = 0x4, offset = 0x4, fixed_abs, tag = 'smem constant byte address 0x4 - core index']
  #allocation1 [shape = 'u32[72,128]{1,0:T(1,128)}', space=vmem, size = 0x9000, scoped, tag = 'internal scratch']
  #allocation2 [shape = 'f32[150,1024]{1,0:T(8,128)}', space=vmem, size = 0x98000, scoped, tag = 'scratch operand']
  #allocation3 [shape = 'f32[6,1408]{1,0:T(8,128)}', space=vmem, size = 0xb000, scoped, tag = 'scratch operand']
  #allocation4 [shape = 'f32[6,1408]{1,0:T(8,128)}', space=vmem, size = 0xb000, scoped, tag = 'scratch operand']
  #allocation5 [shape = 'f32[16,1408]{1,0:T(8,128)}', space=vmem, size = 0x16000, scoped, tag = 'scratch operand']
  #allocation6 [shape = 'f32[16,1024]{1,0:T(8,128)}', space=vmem, size = 0x10000, scoped, tag = 'scratch operand']
  #allocation7 [shape = 'f32[400,128]{1,0:T(8,128)}', space=vmem, size = 0x32000, scoped, tag = 'scratch operand']
  %s0 = inlined_call_operand.vmem [shape: f32[2,3,1408], index: 0, kind: input, shape index: {}]
  %s1 = inlined_call_operand.vmem [shape: f32[6,75], index: 1, kind: input, shape index: {}]
  %s2 = inlined_call_operand.vmem [shape: f32[6,1], index: 2, kind: input, shape index: {}]
  %s3 = inlined_call_operand.vmem [shape: f32[16,150], index: 3, kind: input, shape index: {}]
  %s4 = inlined_call_operand.vmem [shape: f32[16,1], index: 4, kind: input, shape index: {}]
  %s5 = inlined_call_operand.vmem [shape: f32[120,400], index: 5, kind: input, shape index: {}]
  %s6 = inlined_call_operand.vmem [shape: f32[120,1], index: 6, kind: input, shape index: {}]
  %s7 = inlined_call_operand.vmem [shape: f32[84,120], index: 7, kind: input, shape index: {}]
  %s8 = inlined_call_operand.vmem [shape: f32[84,1], index: 8, kind: input, shape index: {}]
  %s9 = inlined_call_operand.vmem [shape: f32[10,84], index: 9, kind: input, shape index: {}]
  %s10 = inlined_call_operand.vmem [shape: f32[10,1], index: 10, kind: input, shape index: {}]
  %s11 = inlined_call_operand.vmem [shape: f32[2,10,1], index: 11, kind: output, shape index: {}]
  %s12 = sld [smem:[#allocation0]]
  $region77: #{lenet5_forward.1} parent=0
    _
  %s14 = ssub.s32 1, %s12
  %s15 = scalar_select 0, %s14, %s12
  loop: start=0, step=1, limit=4
  $region2: #{lenet5_forward.1} parent=0 // loop_pre_header
    _
  $region3: #{lenet5_forward.1} parent=0 // loop_header
    %s17 = sphi 0, %s21
    %p18 = scmp.ge.s32.totalorder %s17, 4
    %s27 = sphi 0, %s29
    %s30 = sphi 0, %s27
    %s31 = sphi 0, %s30
    %s47 = sphi 0, %s31
    %s51 = sphi 0, %s51
    %s53 = sphi 0, %s51
    %s54 = sphi 0, %s53
    %s68 = sphi 0, %s54
    %s72 = sphi 0, %s72
    %s74 = sphi 0, %s72
    %s75 = sphi 0, %s74
    %s89 = sphi 0, %s75
    %s93 = sphi 0, %s93
    %s95 = sphi 0, %s93
    %s96 = sphi 0, %s95
    %s110 = sphi 0, %s96
    %s114 = sphi 0, %s114
    %s116 = sphi 0, %s114
    %s117 = sphi 0, %s116
    %s131 = sphi 0, %s117
    %s135 = sphi 0, %s135
    %s137 = sphi 0, %s135
    %s138 = sphi 0, %s137
    %s152 = sphi 0, %s138
    %s156 = sphi 0, %s156
    %s158 = sphi 0, %s156
    %s159 = sphi 0, %s158
    %s173 = sphi 0, %s159
    %s177 = sphi 0, %s177
    %s179 = sphi 0, %s177
    %s180 = sphi 0, %s179
    %s194 = sphi 0, %s180
    %s198 = sphi 0, %s198
    %s200 = sphi 0, %s198
    %s201 = sphi 0, %s200
    %s215 = sphi 0, %s201
    %s219 = sphi 0, %s219
    %s221 = sphi 0, %s219
    %s222 = sphi 0, %s221
    %s236 = sphi 0, %s222
    %s240 = sphi 0, %s240
    %s242 = sphi 0, %s240
    %s243 = sphi 0, %s242
    %s257 = sphi 0, %s243
    %s263 = sphi 0, %s265
    %s266 = sphi 0, %s263
    %s267 = sphi 0, %s266
    %s283 = sphi 0, %s267
  $region4: #{lenet5_forward.1} parent=0 // loop_header_branch
    %20 = sbr.rel (%p18) target = $region8
  $region5: #{lenet5_forward.1} parent=0 // loop_body
    %s22 = ssub.s32 %s17, 1
    %s23 = ssub.s32 %s17, 2
    %s24 = sadd.s32 %s17, 1
    %s25 = ssub.s32 %s17, %s24
    %p26 = scmp.eq.s32.totalorder %s25, 0
    %s28 = sadd.s32 %s27, 1
    %s29 = scalar_select %p26, %s27, %s28
    %p32 = pneg %p26
    %p33 = scmp.eq.s32.totalorder %s17, 1
    %p34 = por %p32, %p33
    %p35 = scmp.ne.s32.totalorder %s27, %s30
    %p36 = scmp.eq.s32.totalorder %s17, 0
    %p37 = por %p35, %p36
    %p38 = scmp.ne.s32.totalorder %s27, %s30
    %p39 = scmp.eq.s32.totalorder %s22, 1
    %p40 = por %p38, %p39
    %p41 = scmp.ne.s32.totalorder %s30, %s31
    %p42 = scmp.eq.s32.totalorder %s22, 0
    %p43 = por %p41, %p42
    %p44 = scmp.ne.s32.totalorder %s30, %s31
    %p45 = scmp.eq.s32.totalorder %s23, 1
    %p46 = por %p44, %p45
    %p48 = scmp.ne.s32.totalorder %s31, %s47
    %p49 = scmp.eq.s32.totalorder %s23, 0
    %p50 = por %p48, %p49
    %s52 = sadd.s32 %s51, 1
    %p55 = scmp.eq.s32.totalorder %s17, 1
    %p56 = scmp.ne.s32.totalorder %s51, %s53
    %p57 = scmp.eq.s32.totalorder %s17, 0
    %p58 = por %p56, %p57
    %p59 = scmp.ne.s32.totalorder %s51, %s53
    %p60 = scmp.eq.s32.totalorder %s22, 1
    %p61 = por %p59, %p60
    %p62 = scmp.ne.s32.totalorder %s53, %s54
    %p63 = scmp.eq.s32.totalorder %s22, 0
    %p64 = por %p62, %p63
    %p65 = scmp.ne.s32.totalorder %s53, %s54
    %p66 = scmp.eq.s32.totalorder %s23, 1
    %p67 = por %p65, %p66
    %p69 = scmp.ne.s32.totalorder %s54, %s68
    %p70 = scmp.eq.s32.totalorder %s23, 0
    %p71 = por %p69, %p70
    %s73 = sadd.s32 %s72, 1
    %p76 = scmp.eq.s32.totalorder %s17, 1
    %p77 = scmp.ne.s32.totalorder %s72, %s74
    %p78 = scmp.eq.s32.totalorder %s17, 0
    %p79 = por %p77, %p78
    %p80 = scmp.ne.s32.totalorder %s72, %s74
    %p81 = scmp.eq.s32.totalorder %s22, 1
    %p82 = por %p80, %p81
    %p83 = scmp.ne.s32.totalorder %s74, %s75
    %p84 = scmp.eq.s32.totalorder %s22, 0
    %p85 = por %p83, %p84
    %p86 = scmp.ne.s32.totalorder %s74, %s75
    %p87 = scmp.eq.s32.totalorder %s23, 1
    %p88 = por %p86, %p87
    %p90 = scmp.ne.s32.totalorder %s75, %s89
    %p91 = scmp.eq.s32.totalorder %s23, 0
    %p92 = por %p90, %p91
    %s94 = sadd.s32 %s93, 1
    %p97 = scmp.eq.s32.totalorder %s17, 1
    %p98 = scmp.ne.s32.totalorder %s93, %s95
    %p99 = scmp.eq.s32.totalorder %s17, 0
    %p100 = por %p98, %p99
    %p101 = scmp.ne.s32.totalorder %s93, %s95
    %p102 = scmp.eq.s32.totalorder %s22, 1
    %p103 = por %p101, %p102
    %p104 = scmp.ne.s32.totalorder %s95, %s96
    %p105 = scmp.eq.s32.totalorder %s22, 0
    %p106 = por %p104, %p105
    %p107 = scmp.ne.s32.totalorder %s95, %s96
    %p108 = scmp.eq.s32.totalorder %s23, 1
    %p109 = por %p107, %p108
    %p111 = scmp.ne.s32.totalorder %s96, %s110
    %p112 = scmp.eq.s32.totalorder %s23, 0
    %p113 = por %p111, %p112
    %s115 = sadd.s32 %s114, 1
    %p118 = scmp.eq.s32.totalorder %s17, 1
    %p119 = scmp.ne.s32.totalorder %s114, %s116
    %p120 = scmp.eq.s32.totalorder %s17, 0
    %p121 = por %p119, %p120
    %p122 = scmp.ne.s32.totalorder %s114, %s116
    %p123 = scmp.eq.s32.totalorder %s22, 1
    %p124 = por %p122, %p123
    %p125 = scmp.ne.s32.totalorder %s116, %s117
    %p126 = scmp.eq.s32.totalorder %s22, 0
    %p127 = por %p125, %p126
    %p128 = scmp.ne.s32.totalorder %s116, %s117
    %p129 = scmp.eq.s32.totalorder %s23, 1
    %p130 = por %p128, %p129
    %p132 = scmp.ne.s32.totalorder %s117, %s131
    %p133 = scmp.eq.s32.totalorder %s23, 0
    %p134 = por %p132, %p133
    %s136 = sadd.s32 %s135, 1
    %p139 = scmp.eq.s32.totalorder %s17, 1
    %p140 = scmp.ne.s32.totalorder %s135, %s137
    %p141 = scmp.eq.s32.totalorder %s17, 0
    %p142 = por %p140, %p141
    %p143 = scmp.ne.s32.totalorder %s135, %s137
    %p144 = scmp.eq.s32.totalorder %s22, 1
    %p145 = por %p143, %p144
    %p146 = scmp.ne.s32.totalorder %s137, %s138
    %p147 = scmp.eq.s32.totalorder %s22, 0
    %p148 = por %p146, %p147
    %p149 = scmp.ne.s32.totalorder %s137, %s138
    %p150 = scmp.eq.s32.totalorder %s23, 1
    %p151 = por %p149, %p150
    %p153 = scmp.ne.s32.totalorder %s138, %s152
    %p154 = scmp.eq.s32.totalorder %s23, 0
    %p155 = por %p153, %p154
    %s157 = sadd.s32 %s156, 1
    %p160 = scmp.eq.s32.totalorder %s17, 1
    %p161 = scmp.ne.s32.totalorder %s156, %s158
    %p162 = scmp.eq.s32.totalorder %s17, 0
    %p163 = por %p161, %p162
    %p164 = scmp.ne.s32.totalorder %s156, %s158
    %p165 = scmp.eq.s32.totalorder %s22, 1
    %p166 = por %p164, %p165
    %p167 = scmp.ne.s32.totalorder %s158, %s159
    %p168 = scmp.eq.s32.totalorder %s22, 0
    %p169 = por %p167, %p168
    %p170 = scmp.ne.s32.totalorder %s158, %s159
    %p171 = scmp.eq.s32.totalorder %s23, 1
    %p172 = por %p170, %p171
    %p174 = scmp.ne.s32.totalorder %s159, %s173
    %p175 = scmp.eq.s32.totalorder %s23, 0
    %p176 = por %p174, %p175
    %s178 = sadd.s32 %s177, 1
    %p181 = scmp.eq.s32.totalorder %s17, 1
    %p182 = scmp.ne.s32.totalorder %s177, %s179
    %p183 = scmp.eq.s32.totalorder %s17, 0
    %p184 = por %p182, %p183
    %p185 = scmp.ne.s32.totalorder %s177, %s179
    %p186 = scmp.eq.s32.totalorder %s22, 1
    %p187 = por %p185, %p186
    %p188 = scmp.ne.s32.totalorder %s179, %s180
    %p189 = scmp.eq.s32.totalorder %s22, 0
    %p190 = por %p188, %p189
    %p191 = scmp.ne.s32.totalorder %s179, %s180
    %p192 = scmp.eq.s32.totalorder %s23, 1
    %p193 = por %p191, %p192
    %p195 = scmp.ne.s32.totalorder %s180, %s194
    %p196 = scmp.eq.s32.totalorder %s23, 0
    %p197 = por %p195, %p196
    %s199 = sadd.s32 %s198, 1
    %p202 = scmp.eq.s32.totalorder %s17, 1
    %p203 = scmp.ne.s32.totalorder %s198, %s200
    %p204 = scmp.eq.s32.totalorder %s17, 0
    %p205 = por %p203, %p204
    %p206 = scmp.ne.s32.totalorder %s198, %s200
    %p207 = scmp.eq.s32.totalorder %s22, 1
    %p208 = por %p206, %p207
    %p209 = scmp.ne.s32.totalorder %s200, %s201
    %p210 = scmp.eq.s32.totalorder %s22, 0
    %p211 = por %p209, %p210
    %p212 = scmp.ne.s32.totalorder %s200, %s201
    %p213 = scmp.eq.s32.totalorder %s23, 1
    %p214 = por %p212, %p213
    %p216 = scmp.ne.s32.totalorder %s201, %s215
    %p217 = scmp.eq.s32.totalorder %s23, 0
    %p218 = por %p216, %p217
    %s220 = sadd.s32 %s219, 1
    %p223 = scmp.eq.s32.totalorder %s17, 1
    %p224 = scmp.ne.s32.totalorder %s219, %s221
    %p225 = scmp.eq.s32.totalorder %s17, 0
    %p226 = por %p224, %p225
    %p227 = scmp.ne.s32.totalorder %s219, %s221
    %p228 = scmp.eq.s32.totalorder %s22, 1
    %p229 = por %p227, %p228
    %p230 = scmp.ne.s32.totalorder %s221, %s222
    %p231 = scmp.eq.s32.totalorder %s22, 0
    %p232 = por %p230, %p231
    %p233 = scmp.ne.s32.totalorder %s221, %s222
    %p234 = scmp.eq.s32.totalorder %s23, 1
    %p235 = por %p233, %p234
    %p237 = scmp.ne.s32.totalorder %s222, %s236
    %p238 = scmp.eq.s32.totalorder %s23, 0
    %p239 = por %p237, %p238
    %s241 = sadd.s32 %s240, 1
    %p244 = scmp.eq.s32.totalorder %s17, 1
    %p245 = scmp.ne.s32.totalorder %s240, %s242
    %p246 = scmp.eq.s32.totalorder %s17, 0
    %p247 = por %p245, %p246
    %p248 = scmp.ne.s32.totalorder %s240, %s242
    %p249 = scmp.eq.s32.totalorder %s22, 1
    %p250 = por %p248, %p249
    %p251 = scmp.ne.s32.totalorder %s242, %s243
    %p252 = scmp.eq.s32.totalorder %s22, 0
    %p253 = por %p251, %p252
    %p254 = scmp.ne.s32.totalorder %s242, %s243
    %p255 = scmp.eq.s32.totalorder %s23, 1
    %p256 = por %p254, %p255
    %p258 = scmp.ne.s32.totalorder %s243, %s257
    %p259 = scmp.eq.s32.totalorder %s23, 0
    %p260 = por %p258, %p259
    %s261 = ssub.s32 %s17, %s24
    %p262 = scmp.eq.s32.totalorder %s261, 0
    %s264 = sadd.s32 %s263, 1
    %s265 = scalar_select %p262, %s263, %s264
    %p268 = pneg %p262
    %p269 = scmp.eq.s32.totalorder %s17, 1
    %p270 = por %p268, %p269
    %p271 = scmp.ne.s32.totalorder %s263, %s266
    %p272 = scmp.eq.s32.totalorder %s17, 0
    %p273 = por %p271, %p272
    %p274 = scmp.ne.s32.totalorder %s263, %s266
    %p275 = scmp.eq.s32.totalorder %s22, 1
    %p276 = por %p274, %p275
    %p277 = scmp.ne.s32.totalorder %s266, %s267
    %p278 = scmp.eq.s32.totalorder %s22, 0
    %p279 = por %p277, %p278
    %p280 = scmp.ne.s32.totalorder %s266, %s267
    %p281 = scmp.eq.s32.totalorder %s23, 1
    %p282 = por %p280, %p281
    %p284 = scmp.ne.s32.totalorder %s267, %s283
    %p285 = scmp.eq.s32.totalorder %s23, 0
    %p286 = por %p284, %p285
    %p287 = scmp.le.s32.totalorder 1, %s17
    %p288 = scmp.lt.s32.totalorder %s17, 3
    %p289 = pnand %p287, %p288
    %p290 = pneg %p289
    // Predicated region
    $region9: #{lenet5_forward.1} parent=5 // pred_check
      _
    $region10: #{lenet5_forward.1} parent=5 // pred_check_branch
      %292 = sbr.rel (%p289) target = $region12
    $region11: #{lenet5_forward.1} parent=5 // pred_region
      %s293 = ssub.s32 %s17, 1
      // Predicated region
      $region13: #{lenet5_forward.1} parent=11 // pred_check
        %p294 = pneg %p64
      $region14: #{lenet5_forward.1} parent=11 // pred_check_branch
        %296 = sbr.rel (%p294) target = $region16
      $region15: #{lenet5_forward.1} parent=11 // pred_region
        _
      $region16: #{lenet5_forward.1} parent=11 // pred_fallthru
        _
      // Predicated region
      $region17: #{lenet5_forward.1} parent=11 // pred_check
        %p297 = pneg %p85
      $region18: #{lenet5_forward.1} parent=11 // pred_check_branch
        %299 = sbr.rel (%p297) target = $region20
      $region19: #{lenet5_forward.1} parent=11 // pred_region
        _
      $region20: #{lenet5_forward.1} parent=11 // pred_fallthru
        _
      // Predicated region
      $region21: #{lenet5_forward.1} parent=11 // pred_check
        %p300 = pneg %p106
      $region22: #{lenet5_forward.1} parent=11 // pred_check_branch
        %302 = sbr.rel (%p300) target = $region24
      $region23: #{lenet5_forward.1} parent=11 // pred_region
        _
      $region24: #{lenet5_forward.1} parent=11 // pred_fallthru
        _
      // Predicated region
      $region25: #{lenet5_forward.1} parent=11 // pred_check
        %p303 = pneg %p127
      $region26: #{lenet5_forward.1} parent=11 // pred_check_branch
        %305 = sbr.rel (%p303) target = $region28
      $region27: #{lenet5_forward.1} parent=11 // pred_region
        _
      $region28: #{lenet5_forward.1} parent=11 // pred_fallthru
        _
      // Predicated region
      $region29: #{lenet5_forward.1} parent=11 // pred_check
        %p306 = pneg %p148
      $region30: #{lenet5_forward.1} parent=11 // pred_check_branch
        %308 = sbr.rel (%p306) target = $region32
      $region31: #{lenet5_forward.1} parent=11 // pred_region
        _
      $region32: #{lenet5_forward.1} parent=11 // pred_fallthru
        _
      // Predicated region
      $region33: #{lenet5_forward.1} parent=11 // pred_check
        %p309 = pneg %p169
      $region34: #{lenet5_forward.1} parent=11 // pred_check_branch
        %311 = sbr.rel (%p309) target = $region36
      $region35: #{lenet5_forward.1} parent=11 // pred_region
        _
      $region36: #{lenet5_forward.1} parent=11 // pred_fallthru
        _
      // Predicated region
      $region37: #{lenet5_forward.1} parent=11 // pred_check
        %p312 = pneg %p190
      $region38: #{lenet5_forward.1} parent=11 // pred_check_branch
        %314 = sbr.rel (%p312) target = $region40
      $region39: #{lenet5_forward.1} parent=11 // pred_region
        _
      $region40: #{lenet5_forward.1} parent=11 // pred_fallthru
        _
      // Predicated region
      $region41: #{lenet5_forward.1} parent=11 // pred_check
        %p315 = pneg %p211
      $region42: #{lenet5_forward.1} parent=11 // pred_check_branch
        %317 = sbr.rel (%p315) target = $region44
      $region43: #{lenet5_forward.1} parent=11 // pred_region
        _
      $region44: #{lenet5_forward.1} parent=11 // pred_fallthru
        _
      // Predicated region
      $region45: #{lenet5_forward.1} parent=11 // pred_check
        %p318 = pneg %p232
      $region46: #{lenet5_forward.1} parent=11 // pred_check_branch
        %320 = sbr.rel (%p318) target = $region48
      $region47: #{lenet5_forward.1} parent=11 // pred_region
        _
      $region48: #{lenet5_forward.1} parent=11 // pred_fallthru
        _
      // Predicated region
      $region49: #{lenet5_forward.1} parent=11 // pred_check
        %p321 = pneg %p253
      $region50: #{lenet5_forward.1} parent=11 // pred_check_branch
        %323 = sbr.rel (%p321) target = $region52
      $region51: #{lenet5_forward.1} parent=11 // pred_region
        _
      $region52: #{lenet5_forward.1} parent=11 // pred_fallthru
        _
    $region12: #{lenet5_forward.1} parent=5 // pred_fallthru
      _
    %p324 = scmp.lt.s32.totalorder %s17, 2
    // Predicated region
    $region53: #{lenet5_forward.1} parent=5 // pred_check
      %p325 = pneg %p324
    $region54: #{lenet5_forward.1} parent=5 // pred_check_branch
      %327 = sbr.rel (%p325) target = $region56
    $region55: #{lenet5_forward.1} parent=5 // pred_region
      // Predicated region
      $region57: #{lenet5_forward.1} parent=55 // pred_check
        %p328 = pneg %p37
      $region58: #{lenet5_forward.1} parent=55 // pred_check_branch
        %330 = sbr.rel (%p328) target = $region60
      $region59: #{lenet5_forward.1} parent=55 // pred_region
        %p331 = scmp.lt.s32.totalorder %s17, 1
        %s332 = scalar_select %p331, %s17, 1
        %s333 = smul.addr %s332, 11
        %s334 = smul.addr %s333, 4
        %s335 = scalar_lea.vmem %s0, %s334
      $region60: #{lenet5_forward.1} parent=55 // pred_fallthru
        _
    $region56: #{lenet5_forward.1} parent=5 // pred_fallthru
      _
    %p336 = scmp.le.s32.totalorder 1, %s17
    %p337 = scmp.lt.s32.totalorder %s17, 3
    %p338 = pnand %p336, %p337
    %p339 = pneg %p338
    // Predicated region
    $region61: #{lenet5_forward.1} parent=5 // pred_check
      _
    $region62: #{lenet5_forward.1} parent=5 // pred_check_branch
      %341 = sbr.rel (%p338) target = $region64
    $region63: #{lenet5_forward.1} parent=5 // pred_region
      %s342 = ssub.s32 %s17, 1
      %p343 = scmp.lt.s32.totalorder %s22, 1
      %s344 = scalar_select %p343, %s22, 1
      %s345 = smul.addr %s344, 11
      %s346 = smul.addr %s345, 4
      %s347 = scalar_lea.vmem %s0, %s346
      %p348 = pneg %p43
      %p349 = pneg %p40
      %p350 = pneg %p64
      %p351 = pneg %p61
      %p352 = pneg %p85
      %p353 = pneg %p82
      %p354 = pneg %p106
      %p355 = pneg %p103
      %p356 = pneg %p127
      %p357 = pneg %p124
      %p358 = pneg %p148
      %p359 = pneg %p145
      %p360 = pneg %p169
      %p361 = pneg %p166
      %p362 = pneg %p190
      %p363 = pneg %p187
      %p364 = pneg %p211
      %p365 = pneg %p208
      %p366 = pneg %p232
      %p367 = pneg %p229
      %p368 = pneg %p253
      %p369 = pneg %p250
      %p370 = pneg %p279
      %p371 = pneg %p276
      %p372 = scmp.lt.s32.totalorder %s22, 1
      %s373 = scalar_select %p372, %s22, 1
      %s374 = smul.addr %s373, 2
      %s375 = smul.addr %s374, 8
      %s376 = scalar_lea.vmem %s11, %s375
      %p377 = scmp.lt.s32.totalorder %s22, 1
      %s378 = scalar_select %p377, %s22, 1
      %s379 = smul.addr %s378, 11
      %s380 = smul.addr %s379, 4
      %s381 = scalar_lea.vmem %s0, %s380
      %p382 = scmp.lt.s32.totalorder %s22, 1
      %s383 = scalar_select %p382, %s22, 1
      %s384 = smul.addr %s383, 2
      %s385 = smul.addr %s384, 8
      %s386 = scalar_lea.vmem %s11, %s385
      %v387 = vld [vmem:[%s381] sm:$0x77]
      %v388 = vld [vmem:[%s381 + $0x8] sm:$0x77]
      %v389 = vld [vmem:[%s381 + $0x10] sm:$0x77]
      %v390 = vld [vmem:[%s381 + $0x18] sm:$0x77]
      %395 = vst [vmem:[#allocation1] ss:$2 sm:$0xff] %v387
      %s396 = scalar_lea.vmem [#allocation1], 16
      %397 = vst [vmem:[%s396] ss:$2 sm:$0xff] %v388
      %s398 = scalar_lea.vmem [#allocation1], 32
      %399 = vst [vmem:[%s398] ss:$2 sm:$0xff] %v389
      %s400 = scalar_lea.vmem [#allocation1], 48
      %401 = vst [vmem:[%s400] ss:$2 sm:$0xff] %v390
      %v402 = vld.sshfl [vmem:[#allocation1] sm:$0xff pattern:$0x75316420]
      %v403 = vld.sshfl [vmem:[#allocation1 + $0x8] sm:$0xff pattern:$0x75316420]
      %v404 = vld.sshfl [vmem:[#allocation1 + $0x10] sm:$0xff pattern:$0x75316420]
      %v405 = vld.sshfl [vmem:[#allocation1 + $0x18] sm:$0xff pattern:$0x75316420]
      %v406 = vld.sshfl [vmem:[#allocation1 + $0x20] sm:$0xff pattern:$0x75316420]
      %v407 = vld.sshfl [vmem:[#allocation1 + $0x28] sm:$0xff pattern:$0x75316420]
      %v408 = vld.sshfl [vmem:[#allocation1 + $0x30] sm:$0xff pattern:$0x75316420]
      %v409 = vld.sshfl [vmem:[#allocation1 + $0x38] sm:$0xff pattern:$0x75316420]
      %418 = vst [vmem:[#allocation2] sm:$0x7] %v402
      %419 = vst [vmem:[#allocation2 + $0x8] sm:$0x7] %v403
      %420 = vst [vmem:[#allocation2 + $0x10] sm:$0x7] %v404
      %421 = vst [vmem:[#allocation2 + $0x18] sm:$0x7] %v405
      %422 = vst [vmem:[#allocation2 + $0x20] sm:$0x7] %v406
      %423 = vst [vmem:[#allocation2 + $0x28] sm:$0x7] %v407
      %424 = vst [vmem:[#allocation2 + $0x30] sm:$0x7] %v408
      %425 = vst [vmem:[#allocation2 + $0x38] sm:$0x7] %v409
      %v426 = vld [vmem:[%s381] sm:$0x77]
      %v427 = vld [vmem:[%s381 + $0x8] sm:$0x77]
      %v428 = vld [vmem:[%s381 + $0x10] sm:$0x77]
      %v429 = vld [vmem:[%s381 + $0x18] sm:$0x77]
      %v430 = vld [vmem:[%s381 + $0x20] sm:$0x7]
      %436 = vst [vmem:[#allocation1] ss:$2 sm:$0xff] %v426
      %s437 = scalar_lea.vmem [#allocation1], 16
      %438 = vst [vmem:[%s437] ss:$2 sm:$0xff] %v427
      %s439 = scalar_lea.vmem [#allocation1], 32
      %440 = vst [vmem:[%s439] ss:$2 sm:$0xff] %v428
      %s441 = scalar_lea.vmem [#allocation1], 48
      %442 = vst [vmem:[%s441] ss:$2 sm:$0xff] %v429
      %v443 = vld.sshfl [vmem:[#allocation1] sm:$0xff pattern:$0x75316420]
      %v444 = vld.sshfl [vmem:[#allocation1 + $0x8] sm:$0xff pattern:$0x75316420]
      %v445 = vld.sshfl [vmem:[#allocation1 + $0x10] sm:$0xff pattern:$0x75316420]
      %v446 = vld.sshfl [vmem:[#allocation1 + $0x18] sm:$0xff pattern:$0x75316420]
      %v447 = vld.sshfl [vmem:[#allocation1 + $0x20] sm:$0xff pattern:$0x75316420]
      %v448 = vld.sshfl [vmem:[#allocation1 + $0x28] sm:$0xff pattern:$0x75316420]
      %v449 = vld.sshfl [vmem:[#allocation1 + $0x30] sm:$0xff pattern:$0x75316420]
      %v450 = vld.sshfl [vmem:[#allocation1 + $0x38] sm:$0xff pattern:$0x75316420]
      %451 = vst [vmem:[#allocation1] ss:$2 sm:$0xff] %v430
      %v452 = vld.sshfl [vmem:[#allocation1] sm:$0xff pattern:$0x75316420]
      %v453 = vrot.slane %v443, 5
      %v454 = vrot.slane %v444, 5
      %v455 = vrot.slane %v445, 5
      %v456 = vrot.slane %v446, 5
      %v457 = vrot.slane %v447, 5
      %v458 = vrot.slane %v448, 5
      %v459 = vrot.slane %v449, 5
      %v460 = vrot.slane %v450, 5
      %v461 = vrot.slane %v452, 5
      %462 = vrot.lane.b32.xlu0 %v453, 127
      %v463 = vpop.permute.xlu0 %462
      %464 = vrot.lane.b32.xlu0 %v454, 127
      %v465 = vpop.permute.xlu0 %464
      %466 = vrot.lane.b32.xlu0 %v455, 127
      %v467 = vpop.permute.xlu0 %466
      %468 = vrot.lane.b32.xlu0 %v456, 127
      %v469 = vpop.permute.xlu0 %468
      %470 = vrot.lane.b32.xlu0 %v457, 127
      %v471 = vpop.permute.xlu0 %470
      %472 = vrot.lane.b32.xlu0 %v458, 127
      %v473 = vpop.permute.xlu0 %472
      %474 = vrot.lane.b32.xlu0 %v459, 127
      %v475 = vpop.permute.xlu0 %474
      %476 = vrot.lane.b32.xlu0 %v460, 127
      %v477 = vpop.permute.xlu0 %476
      %478 = vrot.lane.b32.xlu0 %v461, 127
      %v479 = vpop.permute.xlu0 %478
      %vm480 = vcmask 1039360
      %v481 = vsel %vm480, %v463, %v465
      %v482 = vsel %vm480, %v465, %v467
      %v483 = vsel %vm480, %v467, %v469
      %v484 = vsel %vm480, %v469, %v471
      %v485 = vsel %vm480, %v471, %v473
      %v486 = vsel %vm480, %v473, %v475
      %v487 = vsel %vm480, %v475, %v477
      %v488 = vsel %vm480, %v477, %v479
      %497 = vst [vmem:[#allocation2] sm:$0x38] %v481
      %498 = vst [vmem:[#allocation2 + $0x8] sm:$0x38] %v482
      %499 = vst [vmem:[#allocation2 + $0x10] sm:$0x38] %v483
      %500 = vst [vmem:[#allocation2 + $0x18] sm:$0x38] %v484
      %501 = vst [vmem:[#allocation2 + $0x20] sm:$0x38] %v485
      %502 = vst [vmem:[#allocation2 + $0x28] sm:$0x38] %v486
      %503 = vst [vmem:[#allocation2 + $0x30] sm:$0x38] %v487
      %504 = vst [vmem:[#allocation2 + $0x38] sm:$0x38] %v488
      %v505 = vld [vmem:[%s381] sm:$0x77]
      %v506 = vld [vmem:[%s381 + $0x8] sm:$0x77]
      %v507 = vld [vmem:[%s381 + $0x10] sm:$0x77]
      %v508 = vld [vmem:[%s381 + $0x18] sm:$0x77]
      %v509 = vld [vmem:[%s381 + $0x20] sm:$0x7]
      %515 = vst [vmem:[#allocation1] ss:$2 sm:$0xff] %v505
      %s516 = scalar_lea.vmem [#allocation1], 16
      %517 = vst [vmem:[%s516] ss:$2 sm:$0xff] %v506
      %s518 = scalar_lea.vmem [#allocation1], 32
      %519 = vst [vmem:[%s518] ss:$2 sm:$0xff] %v507
      %s520 = scalar_lea.vmem [#allocation1], 48
      %521 = vst [vmem:[%s520] ss:$2 sm:$0xff] %v508
      %v522 = vld.sshfl [vmem:[#allocation1] sm:$0xff pattern:$0x75316420]
      %v523 = vld.sshfl [vmem:[#allocation1 + $0x8] sm:$0xff pattern:$0x75316420]
      %v524 = vld.sshfl [vmem:[#allocation1 + $0x10] sm:$0xff pattern:$0x75316420]
      %v525 = vld.sshfl [vmem:[#allocation1 + $0x18] sm:$0xff pattern:$0x75316420]
      %v526 = vld.sshfl [vmem:[#allocation1 + $0x20] sm:$0xff pattern:$0x75316420]
      %v527 = vld.sshfl [vmem:[#allocation1 + $0x28] sm:$0xff pattern:$0x75316420]
      %v528 = vld.sshfl [vmem:[#allocation1 + $0x30] sm:$0xff pattern:$0x75316420]
      %v529 = vld.sshfl [vmem:[#allocation1 + $0x38] sm:$0xff pattern:$0x75316420]
      %530 = vst [vmem:[#allocation1] ss:$2 sm:$0xff] %v509
      %v531 = vld.sshfl [vmem:[#allocation1] sm:$0xff pattern:$0x75316420]
      %v532 = vrot.slane %v522, 2
      %v533 = vrot.slane %v523, 2
      %v534 = vrot.slane %v524, 2
      %v535 = vrot.slane %v525, 2
      %v536 = vrot.slane %v526, 2
      %v537 = vrot.slane %v527, 2
      %v538 = vrot.slane %v528, 2
      %v539 = vrot.slane %v529, 2
      %v540 = vrot.slane %v531, 2
      %541 = vrot.lane.b32.xlu0 %v532, 126
      %v542 = vpop.permute.xlu0 %541
      %543 = vrot.lane.b32.xlu0 %v533, 126
      %v544 = vpop.permute.xlu0 %543
      %545 = vrot.lane.b32.xlu0 %v534, 126
      %v546 = vpop.permute.xlu0 %545
      %547 = vrot.lane.b32.xlu0 %v535, 126
      %v548 = vpop.permute.xlu0 %547
      %549 = vrot.lane.b32.xlu0 %v536, 126
      %v550 = vpop.permute.xlu0 %549
      %551 = vrot.lane.b32.xlu0 %v537, 126
      %v552 = vpop.permute.xlu0 %551
      %553 = vrot.lane.b32.xlu0 %v538, 126
      %v554 = vpop.permute.xlu0 %553
      %555 = vrot.lane.b32.xlu0 %v539, 126
      %v556 = vpop.permute.xlu0 %555
      %557 = vrot.lane.b32.xlu0 %v540, 126
      %v558 = vpop.permute.xlu0 %557
      %vm559 = vcmask 1031168
      %v560 = vsel %vm559, %v542, %v544
      %v561 = vsel %vm559, %v544, %v546
      %v562 = vsel %vm559, %v546, %v548
      %v563 = vsel %vm559, %v548, %v550
      %v564 = vsel %vm559, %v550, %v552
      %v565 = vsel %vm559, %v552, %v554
      %v566 = vsel %vm559, %v554, %v556
      %v567 = vsel %vm559, %v556, %v558
      %576 = vst [vmem:[#allocation2] sm:$0xc0] %v560
      %577 = vst [vmem:[#allocation2 + $0x8] sm:$0xc0] %v561
      %578 = vst [vmem:[#allocation2 + $0x10] sm:$0xc0] %v562
      %579 = vst [vmem:[#allocation2 + $0x18] sm:$0xc0] %v563
      %580 = vst [vmem:[#allocation2 + $0x20] sm:$0xc0] %v564
      %581 = vst [vmem:[#allocation2 + $0x28] sm:$0xc0] %v565
      %582 = vst [vmem:[#allocation2 + $0x30] sm:$0xc0] %v566
      %583 = vst [vmem:[#allocation2 + $0x38] sm:$0xc0] %v567
      %584 = vst [vmem:[#allocation2 + $0x40] sm:$0x1] %v560
      %585 = vst [vmem:[#allocation2 + $0x48] sm:$0x1] %v561
      %586 = vst [vmem:[#allocation2 + $0x50] sm:$0x1] %v562
      %587 = vst [vmem:[#allocation2 + $0x58] sm:$0x1] %v563
      %588 = vst [vmem:[#allocation2 + $0x60] sm:$0x1] %v564
      %589 = vst [vmem:[#allocation2 + $0x68] sm:$0x1] %v565
      %590 = vst [vmem:[#allocation2 + $0x70] sm:$0x1] %v566
      %591 = vst [vmem:[#allocation2 + $0x78] sm:$0x1] %v567
      %v592 = vld [vmem:[%s381] sm:$0x77]
      %v593 = vld [vmem:[%s381 + $0x8] sm:$0x77]
      %v594 = vld [vmem:[%s381 + $0x10] sm:$0x77]
      %v595 = vld [vmem:[%s381 + $0x18] sm:$0x77]
      %v596 = vld [vmem:[%s381 + $0x20] sm:$0x7]
      %602 = vst [vmem:[#allocation1] ss:$2 sm:$0xff] %v592
      %s603 = scalar_lea.vmem [#allocation1], 16
      %604 = vst [vmem:[%s603] ss:$2 sm:$0xff] %v593
      %s605 = scalar_lea.vmem [#allocation1], 32
      %606 = vst [vmem:[%s605] ss:$2 sm:$0xff] %v594
      %s607 = scalar_lea.vmem [#allocation1], 48
      %608 = vst [vmem:[%s607] ss:$2 sm:$0xff] %v595
      %v609 = vld.sshfl [vmem:[#allocation1] sm:$0xff pattern:$0x75316420]
      %v610 = vld.sshfl [vmem:[#allocation1 + $0x8] sm:$0xff pattern:$0x75316420]
      %v611 = vld.sshfl [vmem:[#allocation1 + $0x10] sm:$0xff pattern:$0x75316420]
      %v612 = vld.sshfl [vmem:[#allocation1 + $0x18] sm:$0xff pattern:$0x75316420]
      %v613 = vld.sshfl [vmem:[#allocation1 + $0x20] sm:$0xff pattern:$0x75316420]
      %v614 = vld.sshfl [vmem:[#allocation1 + $0x28] sm:$0xff pattern:$0x75316420]
      %v615 = vld.sshfl [vmem:[#allocation1 + $0x30] sm:$0xff pattern:$0x75316420]
      %v616 = vld.sshfl [vmem:[#allocation1 + $0x38] sm:$0xff pattern:$0x75316420]
      %617 = vst [vmem:[#allocation1] ss:$2 sm:$0xff] %v596
      %v618 = vld.sshfl [vmem:[#allocation1] sm:$0xff pattern:$0x75316420]
      %v619 = vrot.slane %v609, 7
      %v620 = vrot.slane %v610, 7
      %v621 = vrot.slane %v611, 7
      %v622 = vrot.slane %v612, 7
      %v623 = vrot.slane %v613, 7
      %v624 = vrot.slane %v614, 7
      %v625 = vrot.slane %v615, 7
      %v626 = vrot.slane %v616, 7
      %v627 = vrot.slane %v618, 7
      %628 = vrot.lane.b32.xlu0 %v619, 125
      %v629 = vpop.permute.xlu0 %628
      %630 = vrot.lane.b32.xlu0 %v620, 125
      %v631 = vpop.permute.xlu0 %630
      %632 = vrot.lane.b32.xlu0 %v621, 125
      %v633 = vpop.permute.xlu0 %632
      %634 = vrot.lane.b32.xlu0 %v622, 125
      %v635 = vpop.permute.xlu0 %634
      %636 = vrot.lane.b32.xlu0 %v623, 125
      %v637 = vpop.permute.xlu0 %636
      %638 = vrot.lane.b32.xlu0 %v624, 125
      %v639 = vpop.permute.xlu0 %638
      %640 = vrot.lane.b32.xlu0 %v625, 125
      %v641 = vpop.permute.xlu0 %640
      %642 = vrot.lane.b32.xlu0 %v626, 125
      %v643 = vpop.permute.xlu0 %642
      %644 = vrot.lane.b32.xlu0 %v627, 125
      %v645 = vpop.permute.xlu0 %644
      %vm646 = vcmask 1022976
      %v647 = vsel %vm646, %v629, %v631
      %v648 = vsel %vm646, %v631, %v633
      %v649 = vsel %vm646, %v633, %v635
      %v650 = vsel %vm646, %v635, %v637
      %v651 = vsel %vm646, %v637, %v639
      %v652 = vsel %vm646, %v639, %v641
      %v653 = vsel %vm646, %v641, %v643
      %v654 = vsel %vm646, %v643, %v645
      %663 = vst [vmem:[#allocation2 + $0x40] sm:$0xe] %v647
      %664 = vst [vmem:[#allocation2 + $0x48] sm:$0xe] %v648
      %665 = vst [vmem:[#allocation2 + $0x50] sm:$0xe] %v649
      %666 = vst [vmem:[#allocation2 + $0x58] sm:$0xe] %v650
      %667 = vst [vmem:[#allocation2 + $0x60] sm:$0xe] %v651
      %668 = vst [vmem:[#allocation2 + $0x68] sm:$0xe] %v652
      %669 = vst [vmem:[#allocation2 + $0x70] sm:$0xe] %v653
      %670 = vst [vmem:[#allocation2 + $0x78] sm:$0xe] %v654
      %v671 = vld [vmem:[%s381] sm:$0x77]
      %v672 = vld [vmem:[%s381 + $0x8] sm:$0x77]
      %v673 = vld [vmem:[%s381 + $0x10] sm:$0x77]
      %v674 = vld [vmem:[%s381 + $0x18] sm:$0x77]
      %v675 = vld [vmem:[%s381 + $0x20] sm:$0x7]
      %s681 = scalar_lea.vmem [#allocation1], 1
      %682 = vst [vmem:[%s681] ss:$2 sm:$0xff] %v671
      %s683 = scalar_lea.vmem [#allocation1], 17
      %684 = vst [vmem:[%s683] ss:$2 sm:$0xff] %v672
      %s685 = scalar_lea.vmem [#allocation1], 33
      %686 = vst [vmem:[%s685] ss:$2 sm:$0xff] %v673
      %s687 = scalar_lea.vmem [#allocation1], 49
      %688 = vst [vmem:[%s687] ss:$2 sm:$0xff] %v674
      %v689 = vld.sshfl [vmem:[#allocation1] sm:$0xff pattern:$0x75316420]
      %v690 = vld.sshfl [vmem:[#allocation1 + $0x8] sm:$0xff pattern:$0x75316420]
      %v691 = vld.sshfl [vmem:[#allocation1 + $0x10] sm:$0xff pattern:$0x75316420]
      %v692 = vld.sshfl [vmem:[#allocation1 + $0x18] sm:$0xff pattern:$0x75316420]
      %v693 = vld.sshfl [vmem:[#allocation1 + $0x20] sm:$0xff pattern:$0x75316420]
      %v694 = vld.sshfl [vmem:[#allocation1 + $0x28] sm:$0xff pattern:$0x75316420]
      %v695 = vld.sshfl [vmem:[#allocation1 + $0x30] sm:$0xff pattern:$0x75316420]
      %v696 = vld.sshfl [vmem:[#allocation1 + $0x38] sm:$0xff pattern:$0x75316420]
      %697 = vst [vmem:[%s681] ss:$2 sm:$0xff] %v675
      %v698 = vld.sshfl [vmem:[#allocation1] sm:$0xff pattern:$0x75316420]
      %699 = vrot.lane.b32.xlu0 %v689, 124
      %v700 = vpop.permute.xlu0 %699
      %701 = vrot.lane.b32.xlu0 %v690, 124
      %v702 = vpop.permute.xlu0 %701
      %703 = vrot.lane.b32.xlu0 %v691, 124
      %v704 = vpop.permute.xlu0 %703
      %705 = vrot.lane.b32.xlu0 %v692, 124
      %v706 = vpop.permute.xlu0 %705
      %707 = vrot.lane.b32.xlu0 %v693, 124
      %v708 = vpop.permute.xlu0 %707
      %709 = vrot.lane.b32.xlu0 %v694, 124
      %v710 = vpop.permute.xlu0 %709
      %711 = vrot.lane.b32.xlu0 %v695, 124
      %v712 = vpop.permute.xlu0 %711
      %713 = vrot.lane.b32.xlu0 %v696, 124
      %v714 = vpop.permute.xlu0 %713
      %715 = vrot.lane.b32.xlu0 %v698, 124
      %v716 = vpop.permute.xlu0 %715
      %vm717 = vcmask 1014784
      %v718 = vsel %vm717, %v700, %v702
      %v719 = vsel %vm717, %v702, %v704
      %v720 = vsel %vm717, %v704, %v706
      %v721 = vsel %vm717, %v706, %v708
      %v722 = vsel %vm717, %v708, %v710
      %v723 = vsel %vm717, %v710, %v712
      %v724 = vsel %vm717, %v712, %v714
      %v725 = vsel %vm717, %v714, %v716
      %734 = vst [vmem:[#allocation2 + $0x40] sm:$0x70] %v718
      %735 = vst [vmem:[#allocation2 + $0x48] sm:$0x70] %v719
      %736 = vst [vmem:[#allocation2 + $0x50] sm:$0x70] %v720
      %737 = vst [vmem:[#allocation2 + $0x58] sm:$0x70] %v721
      %738 = vst [vmem:[#allocation2 + $0x60] sm:$0x70] %v722
      %739 = vst [vmem:[#allocation2 + $0x68] sm:$0x70] %v723
      %740 = vst [vmem:[#allocation2 + $0x70] sm:$0x70] %v724
      %741 = vst [vmem:[#allocation2 + $0x78] sm:$0x70] %v725
      %v742 = vld [vmem:[%s381] sm:$0x77]
      %v743 = vld [vmem:[%s381 + $0x8] sm:$0x77]
      %v744 = vld [vmem:[%s381 + $0x10] sm:$0x77]
      %v745 = vld [vmem:[%s381 + $0x18] sm:$0x77]
      %v746 = vld [vmem:[%s381 + $0x20] sm:$0x7]
      %752 = vst [vmem:[#allocation1] ss:$2 sm:$0xff] %v742
      %s753 = scalar_lea.vmem [#allocation1], 16
      %754 = vst [vmem:[%s753] ss:$2 sm:$0xff] %v743
      %s755 = scalar_lea.vmem [#allocation1], 32
      %756 = vst [vmem:[%s755] ss:$2 sm:$0xff] %v744
      %s757 = scalar_lea.vmem [#allocation1], 48
      %758 = vst [vmem:[%s757] ss:$2 sm:$0xff] %v745
      %v759 = vld.sshfl [vmem:[#allocation1] sm:$0xff pattern:$0x75316420]
      %v760 = vld.sshfl [vmem:[#allocation1 + $0x8] sm:$0xff pattern:$0x75316420]
      %v761 = vld.sshfl [vmem:[#allocation1 + $0x10] sm:$0xff pattern:$0x75316420]
      %v762 = vld.sshfl [vmem:[#allocation1 + $0x18] sm:$0xff pattern:$0x75316420]
      %v763 = vld.sshfl [vmem:[#allocation1 + $0x20] sm:$0xff pattern:$0x75316420]
      %v764 = vld.sshfl [vmem:[#allocation1 + $0x28] sm:$0xff pattern:$0x75316420]
      %v765 = vld.sshfl [vmem:[#allocation1 + $0x30] sm:$0xff pattern:$0x75316420]
      %v766 = vld.sshfl [vmem:[#allocation1 + $0x38] sm:$0xff pattern:$0x75316420]
      %767 = vst [vmem:[#allocation1] ss:$2 sm:$0xff] %v746
      %v768 = vld.sshfl [vmem:[#allocation1] sm:$0xff pattern:$0x75316420]
      %v769 = vrot.slane %v759, 1
      %v770 = vrot.slane %v760, 1
      %v771 = vrot.slane %v761, 1
      %v772 = vrot.slane %v762, 1
      %v773 = vrot.slane %v763, 1
      %v774 = vrot.slane %v764, 1
      %v775 = vrot.slane %v765, 1
      %v776 = vrot.slane %v766, 1
      %v777 = vrot.slane %v768, 1
      %778 = vrot.lane.b32.xlu0 %v769, 96
      %v779 = vpop.permute.xlu0 %778
      %780 = vrot.lane.b32.xlu0 %v770, 96
      %v781 = vpop.permute.xlu0 %780
      %782 = vrot.lane.b32.xlu0 %v771, 96
      %v783 = vpop.permute.xlu0 %782
      %784 = vrot.lane.b32.xlu0 %v772, 96
      %v785 = vpop.permute.xlu0 %784
      %786 = vrot.lane.b32.xlu0 %v773, 96
      %v787 = vpop.permute.xlu0 %786
      %788 = vrot.lane.b32.xlu0 %v774, 96
      %v789 = vpop.permute.xlu0 %788
      %790 = vrot.lane.b32.xlu0 %v775, 96
      %v791 = vpop.permute.xlu0 %790
      %792 = vrot.lane.b32.xlu0 %v776, 96
      %v793 = vpop.permute.xlu0 %792
      %794 = vrot.lane.b32.xlu0 %v777, 96
      %v795 = vpop.permute.xlu0 %794
      %vm796 = vcmask 785408
      %v797 = vsel %vm796, %v779, %v781
      %v798 = vsel %vm796, %v781, %v783
      %v799 = vsel %vm796, %v783, %v785
      %v800 = vsel %vm796, %v785, %v787
      %v801 = vsel %vm796, %v787, %v789
      %v802 = vsel %vm796, %v789, %v791
      %v803 = vsel %vm796, %v791, %v793
      %v804 = vsel %vm796, %v793, %v795
      %813 = vst [vmem:[#allocation2 + $0x40] sm:$0x80] %v797
      %814 = vst [vmem:[#allocation2 + $0x48] sm:$0x80] %v798
      %815 = vst [vmem:[#allocation2 + $0x50] sm:$0x80] %v799
      %816 = vst [vmem:[#allocation2 + $0x58] sm:$0x80] %v800
      %817 = vst [vmem:[#allocation2 + $0x60] sm:$0x80] %v801
      %818 = vst [vmem:[#allocation2 + $0x68] sm:$0x80] %v802
      %819 = vst [vmem:[#allocation2 + $0x70] sm:$0x80] %v803
      %820 = vst [vmem:[#allocation2 + $0x78] sm:$0x80] %v804
      %821 = vst [vmem:[#allocation2 + $0x80] sm:$0x3] %v797
      %822 = vst [vmem:[#allocation2 + $0x88] sm:$0x3] %v798
      %823 = vst [vmem:[#allocation2 + $0x90] sm:$0x3] %v799
      %824 = vst [vmem:[#allocation2 + $0x98] sm:$0x3] %v800
      %825 = vst [vmem:[#allocation2 + $0xa0] sm:$0x3] %v801
      %826 = vst [vmem:[#allocation2 + $0xa8] sm:$0x3] %v802
      %827 = vst [vmem:[#allocation2 + $0xb0] sm:$0x3] %v803
      %828 = vst [vmem:[#allocation2 + $0xb8] sm:$0x3] %v804
      %v829 = vld [vmem:[%s381] sm:$0x77]
      %v830 = vld [vmem:[%s381 + $0x8] sm:$0x77]
      %v831 = vld [vmem:[%s381 + $0x10] sm:$0x77]
      %v832 = vld [vmem:[%s381 + $0x18] sm:$0x77]
      %v833 = vld [vmem:[%s381 + $0x20] sm:$0x7]
      %839 = vst [vmem:[#allocation1] ss:$2 sm:$0xff] %v829
      %s840 = scalar_lea.vmem [#allocation1], 16
      %841 = vst [vmem:[%s840] ss:$2 sm:$0xff] %v830
      %s842 = scalar_lea.vmem [#allocation1], 32
      %843 = vst [vmem:[%s842] ss:$2 sm:$0xff] %v831
      %s844 = scalar_lea.vmem [#allocation1], 48
      %845 = vst [vmem:[%s844] ss:$2 sm:$0xff] %v832
      %v846 = vld.sshfl [vmem:[#allocation1] sm:$0xff pattern:$0x75316420]
      %v847 = vld.sshfl [vmem:[#allocation1 + $0x8] sm:$0xff pattern:$0x75316420]
      %v848 = vld.sshfl [vmem:[#allocation1 + $0x10] sm:$0xff pattern:$0x75316420]
      %v849 = vld.sshfl [vmem:[#allocation1 + $0x18] sm:$0xff pattern:$0x75316420]
      %v850 = vld.sshfl [vmem:[#allocation1 + $0x20] sm:$0xff pattern:$0x75316420]
      %v851 = vld.sshfl [vmem:[#allocation1 + $0x28] sm:$0xff pattern:$0x75316420]
      %v852 = vld.sshfl [vmem:[#allocation1 + $0x30] sm:$0xff pattern:$0x75316420]
      %v853 = vld.sshfl [vmem:[#allocation1 + $0x38] sm:$0xff pattern:$0x75316420]
      %854 = vst [vmem:[#allocation1] ss:$2 sm:$0xff] %v833
      %v855 = vld.sshfl [vmem:[#allocation1] sm:$0xff pattern:$0x75316420]
      %v856 = vrot.slane %v846, 6
      %v857 = vrot.slane %v847, 6
      %v858 = vrot.slane %v848, 6
      %v859 = vrot.slane %v849, 6
      %v860 = vrot.slane %v850, 6
      %v861 = vrot.slane %v851, 6
      %v862 = vrot.slane %v852, 6
      %v863 = vrot.slane %v853, 6
      %v864 = vrot.slane %v855, 6
      %865 = vrot.lane.b32.xlu0 %v856, 95
      %v866 = vpop.permute.xlu0 %865
      %867 = vrot.lane.b32.xlu0 %v857, 95
      %v868 = vpop.permute.xlu0 %867
      %869 = vrot.lane.b32.xlu0 %v858, 95
      %v870 = vpop.permute.xlu0 %869
      %871 = vrot.lane.b32.xlu0 %v859, 95
      %v872 = vpop.permute.xlu0 %871
      %873 = vrot.lane.b32.xlu0 %v860, 95
      %v874 = vpop.permute.xlu0 %873
      %875 = vrot.lane.b32.xlu0 %v861, 95
      %v876 = vpop.permute.xlu0 %875
      %877 = vrot.lane.b32.xlu0 %v862, 95
      %v878 = vpop.permute.xlu0 %877
      %879 = vrot.lane.b32.xlu0 %v863, 95
      %v880 = vpop.permute.xlu0 %879
      %881 = vrot.lane.b32.xlu0 %v864, 95
      %v882 = vpop.permute.xlu0 %881
      %vm883 = vcmask 777216
      %v884 = vsel %vm883, %v866, %v868
      %v885 = vsel %vm883, %v868, %v870
      %v886 = vsel %vm883, %v870, %v872
      %v887 = vsel %vm883, %v872, %v874
      %v888 = vsel %vm883, %v874, %v876
      %v889 = vsel %vm883, %v876, %v878
      %v890 = vsel %vm883, %v878, %v880
      %v891 = vsel %vm883, %v880, %v882
      %900 = vst [vmem:[#allocation2 + $0x80] sm:$0x1c] %v884
      %901 = vst [vmem:[#allocation2 + $0x88] sm:$0x1c] %v885
      %902 = vst [vmem:[#allocation2 + $0x90] sm:$0x1c] %v886
      %903 = vst [vmem:[#allocation2 + $0x98] sm:$0x1c] %v887
      %904 = vst [vmem:[#allocation2 + $0xa0] sm:$0x1c] %v888
      %905 = vst [vmem:[#allocation2 + $0xa8] sm:$0x1c] %v889
      %906 = vst [vmem:[#allocation2 + $0xb0] sm:$0x1c] %v890
      %907 = vst [vmem:[#allocation2 + $0xb8] sm:$0x1c] %v891
      %v908 = vld [vmem:[%s381] sm:$0x77]
      %v909 = vld [vmem:[%s381 + $0x8] sm:$0x77]
      %v910 = vld [vmem:[%s381 + $0x10] sm:$0x77]
      %v911 = vld [vmem:[%s381 + $0x18] sm:$0x77]
      %v912 = vld [vmem:[%s381 + $0x20] sm:$0x7]
      %918 = vst [vmem:[#allocation1] ss:$2 sm:$0xff] %v908
      %s919 = scalar_lea.vmem [#allocation1], 16
      %920 = vst [vmem:[%s919] ss:$2 sm:$0xff] %v909
      %s921 = scalar_lea.vmem [#allocation1], 32
      %922 = vst [vmem:[%s921] ss:$2 sm:$0xff] %v910
      %s923 = scalar_lea.vmem [#allocation1], 48
      %924 = vst [vmem:[%s923] ss:$2 sm:$0xff] %v911
      %v925 = vld.sshfl [vmem:[#allocation1] sm:$0xff pattern:$0x75316420]
      %v926 = vld.sshfl [vmem:[#allocation1 + $0x8] sm:$0xff pattern:$0x75316420]
      %v927 = vld.sshfl [vmem:[#allocation1 + $0x10] sm:$0xff pattern:$0x75316420]
      %v928 = vld.sshfl [vmem:[#allocation1 + $0x18] sm:$0xff pattern:$0x75316420]
      %v929 = vld.sshfl [vmem:[#allocation1 + $0x20] sm:$0xff pattern:$0x75316420]
      %v930 = vld.sshfl [vmem:[#allocation1 + $0x28] sm:$0xff pattern:$0x75316420]
      %v931 = vld.sshfl [vmem:[#allocation1 + $0x30] sm:$0xff pattern:$0x75316420]
      %v932 = vld.sshfl [vmem:[#allocation1 + $0x38] sm:$0xff pattern:$0x75316420]
      %933 = vst [vmem:[#allocation1] ss:$2 sm:$0xff] %v912
      %v934 = vld.sshfl [vmem:[#allocation1] sm:$0xff pattern:$0x75316420]
      %v935 = vrot.slane %v925, 3
      %v936 = vrot.slane %v926, 3
      %v937 = vrot.slane %v927, 3
      %v938 = vrot.slane %v928, 3
      %v939 = vrot.slane %v929, 3
      %v940 = vrot.slane %v930, 3
      %v941 = vrot.slane %v931, 3
      %v942 = vrot.slane %v932, 3
      %v943 = vrot.slane %v934, 3
      %944 = vrot.lane.b32.xlu0 %v935, 94
      %v945 = vpop.permute.xlu0 %944
      %946 = vrot.lane.b32.xlu0 %v936, 94
      %v947 = vpop.permute.xlu0 %946
      %948 = vrot.lane.b32.xlu0 %v937, 94
      %v949 = vpop.permute.xlu0 %948
      %950 = vrot.lane.b32.xlu0 %v938, 94
      %v951 = vpop.permute.xlu0 %950
      %952 = vrot.lane.b32.xlu0 %v939, 94
      %v953 = vpop.permute.xlu0 %952
      %954 = vrot.lane.b32.xlu0 %v940, 94
      %v955 = vpop.permute.xlu0 %954
      %956 = vrot.lane.b32.xlu0 %v941, 94
      %v957 = vpop.permute.xlu0 %956
      %958 = vrot.lane.b32.xlu0 %v942, 94
      %v959 = vpop.permute.xlu0 %958
      %960 = vrot.lane.b32.xlu0 %v943, 94
      %v961 = vpop.permute.xlu0 %960
      %vm962 = vcmask 769024
      %v963 = vsel %vm962, %v945, %v947
      %v964 = vsel %vm962, %v947, %v949
      %v965 = vsel %vm962, %v949, %v951
      %v966 = vsel %vm962, %v951, %v953
      %v967 = vsel %vm962, %v953, %v955
      %v968 = vsel %vm962, %v955, %v957
      %v969 = vsel %vm962, %v957, %v959
      %v970 = vsel %vm962, %v959, %v961
      %979 = vst [vmem:[#allocation2 + $0x80] sm:$0xe0] %v963
      %980 = vst [vmem:[#allocation2 + $0x88] sm:$0xe0] %v964
      %981 = vst [vmem:[#allocation2 + $0x90] sm:$0xe0] %v965
      %982 = vst [vmem:[#allocation2 + $0x98] sm:$0xe0] %v966
      %983 = vst [vmem:[#allocation2 + $0xa0] sm:$0xe0] %v967
      %984 = vst [vmem:[#allocation2 + $0xa8] sm:$0xe0] %v968
      %985 = vst [vmem:[#allocation2 + $0xb0] sm:$0xe0] %v969
      %986 = vst [vmem:[#allocation2 + $0xb8] sm:$0xe0] %v970
      %v987 = vld [vmem:[%s381] sm:$0x77]
      %v988 = vld [vmem:[%s381 + $0x8] sm:$0x77]
      %v989 = vld [vmem:[%s381 + $0x10] sm:$0x77]
      %v990 = vld [vmem:[%s381 + $0x18] sm:$0x77]
      %v991 = vld [vmem:[%s381 + $0x20] sm:$0x7]
      %997 = vst [vmem:[#allocation1] ss:$2 sm:$0xff] %v987
      %s998 = scalar_lea.vmem [#allocation1], 16
      %999 = vst [vmem:[%s998] ss:$2 sm:$0xff] %v988
      %s1000 = scalar_lea.vmem [#allocation1], 32
      %1001 = vst [vmem:[%s1000] ss:$2 sm:$0xff] %v989
      %s1002 = scalar_lea.vmem [#allocation1], 48
      %1003 = vst [vmem:[%s1002] ss:$2 sm:$0xff] %v990
      %v1004 = vld.sshfl [vmem:[#allocation1] sm:$0xff pattern:$0x75316420]
      %v1005 = vld.sshfl [vmem:[#allocation1 + $0x8] sm:$0xff pattern:$0x75316420]
      %v1006 = vld.sshfl [vmem:[#allocation1 + $0x10] sm:$0xff pattern:$0x75316420]
      %v1007 = vld.sshfl [vmem:[#allocation1 + $0x18] sm:$0xff pattern:$0x75316420]
      %v1008 = vld.sshfl [vmem:[#allocation1 + $0x20] sm:$0xff pattern:$0x75316420]
      %v1009 = vld.sshfl [vmem:[#allocation1 + $0x28] sm:$0xff pattern:$0x75316420]
      %v1010 = vld.sshfl [vmem:[#allocation1 + $0x30] sm:$0xff pattern:$0x75316420]
      %v1011 = vld.sshfl [vmem:[#allocation1 + $0x38] sm:$0xff pattern:$0x75316420]
      %1012 = vst [vmem:[#allocation1] ss:$2 sm:$0xff] %v991
      %v1013 = vld.sshfl [vmem:[#allocation1] sm:$0xff pattern:$0x75316420]
      %1014 = vrot.lane.b32.xlu0 %v1004, 93
      %v1015 = vpop.permute.xlu0 %1014
      %1016 = vrot.lane.b32.xlu0 %v1005, 93
      %v1017 = vpop.permute.xlu0 %1016
      %1018 = vrot.lane.b32.xlu0 %v1006, 93
      %v1019 = vpop.permute.xlu0 %1018
      %1020 = vrot.lane.b32.xlu0 %v1007, 93
      %v1021 = vpop.permute.xlu0 %1020
      %1022 = vrot.lane.b32.xlu0 %v1008, 93
      %v1023 = vpop.permute.xlu0 %1022
      %1024 = vrot.lane.b32.xlu0 %v1009, 93
      %v1025 = vpop.permute.xlu0 %1024
      %1026 = vrot.lane.b32.xlu0 %v1010, 93
      %v1027 = vpop.permute.xlu0 %1026
      %1028 = vrot.lane.b32.xlu0 %v1011, 93
      %v1029 = vpop.permute.xlu0 %1028
      %1030 = vrot.lane.b32.xlu0 %v1013, 93
      %v1031 = vpop.permute.xlu0 %1030
      %vm1032 = vcmask 760832
      %v1033 = vsel %vm1032, %v1015, %v1017
      %v1034 = vsel %vm1032, %v1017, %v1019
      %v1035 = vsel %vm1032, %v1019, %v1021
      %v1036 = vsel %vm1032, %v1021, %v1023
      %v1037 = vsel %vm1032, %v1023, %v1025
      %v1038 = vsel %vm1032, %v1025, %v1027
      %v1039 = vsel %vm1032, %v1027, %v1029
      %v1040 = vsel %vm1032, %v1029, %v1031
      %1049 = vst [vmem:[#allocation2 + $0xc0] sm:$0x7] %v1033
      %1050 = vst [vmem:[#allocation2 + $0xc8] sm:$0x7] %v1034
      %1051 = vst [vmem:[#allocation2 + $0xd0] sm:$0x7] %v1035
      %1052 = vst [vmem:[#allocation2 + $0xd8] sm:$0x7] %v1036
      %1053 = vst [vmem:[#allocation2 + $0xe0] sm:$0x7] %v1037
      %1054 = vst [vmem:[#allocation2 + $0xe8] sm:$0x7] %v1038
      %1055 = vst [vmem:[#allocation2 + $0xf0] sm:$0x7] %v1039
      %1056 = vst [vmem:[#allocation2 + $0xf8] sm:$0x7] %v1040
      %v1057 = vld [vmem:[%s381] sm:$0x77]
      %v1058 = vld [vmem:[%s381 + $0x8] sm:$0x77]
      %v1059 = vld [vmem:[%s381 + $0x10] sm:$0x77]
      %v1060 = vld [vmem:[%s381 + $0x18] sm:$0x77]
      %v1061 = vld [vmem:[%s381 + $0x20] sm:$0x7]
      %1067 = vst [vmem:[#allocation1] ss:$2 sm:$0xff] %v1057
      %s1068 = scalar_lea.vmem [#allocation1], 16
      %1069 = vst [vmem:[%s1068] ss:$2 sm:$0xff] %v1058
      %s1070 = scalar_lea.vmem [#allocation1], 32
      %1071 = vst [vmem:[%s1070] ss:$2 sm:$0xff] %v1059
      %s1072 = scalar_lea.vmem [#allocation1], 48
      %1073 = vst [vmem:[%s1072] ss:$2 sm:$0xff] %v1060
      %v1074 = vld.sshfl [vmem:[#allocation1] sm:$0xff pattern:$0x75316420]
      %v1075 = vld.sshfl [vmem:[#allocation1 + $0x8] sm:$0xff pattern:$0x75316420]
      %v1076 = vld.sshfl [vmem:[#allocation1 + $0x10] sm:$0xff pattern:$0x75316420]
      %v1077 = vld.sshfl [vmem:[#allocation1 + $0x18] sm:$0xff pattern:$0x75316420]
      %v1078 = vld.sshfl [vmem:[#allocation1 + $0x20] sm:$0xff pattern:$0x75316420]
      %v1079 = vld.sshfl [vmem:[#allocation1 + $0x28] sm:$0xff pattern:$0x75316420]
      %v1080 = vld.sshfl [vmem:[#allocation1 + $0x30] sm:$0xff pattern:$0x75316420]
      %v1081 = vld.sshfl [vmem:[#allocation1 + $0x38] sm:$0xff pattern:$0x75316420]
      %1082 = vst [vmem:[#allocation1] ss:$2 sm:$0xff] %v1061
      %v1083 = vld.sshfl [vmem:[#allocation1] sm:$0xff pattern:$0x75316420]
      %v1084 = vrot.slane %v1074, 5
      %v1085 = vrot.slane %v1075, 5
      %v1086 = vrot.slane %v1076, 5
      %v1087 = vrot.slane %v1077, 5
      %v1088 = vrot.slane %v1078, 5
      %v1089 = vrot.slane %v1079, 5
      %v1090 = vrot.slane %v1080, 5
      %v1091 = vrot.slane %v1081, 5
      %v1092 = vrot.slane %v1083, 5
      %1093 = vrot.lane.b32.xlu0 %v1084, 92
      %v1094 = vpop.permute.xlu0 %1093
      %1095 = vrot.lane.b32.xlu0 %v1085, 92
      %v1096 = vpop.permute.xlu0 %1095
      %1097 = vrot.lane.b32.xlu0 %v1086, 92
      %v1098 = vpop.permute.xlu0 %1097
      %1099 = vrot.lane.b32.xlu0 %v1087, 92
      %v1100 = vpop.permute.xlu0 %1099
      %1101 = vrot.lane.b32.xlu0 %v1088, 92
      %v1102 = vpop.permute.xlu0 %1101
      %1103 = vrot.lane.b32.xlu0 %v1089, 92
      %v1104 = vpop.permute.xlu0 %1103
      %1105 = vrot.lane.b32.xlu0 %v1090, 92
      %v1106 = vpop.permute.xlu0 %1105
      %1107 = vrot.lane.b32.xlu0 %v1091, 92
      %v1108 = vpop.permute.xlu0 %1107
      %1109 = vrot.lane.b32.xlu0 %v1092, 92
      %v1110 = vpop.permute.xlu0 %1109
      %vm1111 = vcmask 752640
      %v1112 = vsel %vm1111, %v1094, %v1096
      %v1113 = vsel %vm1111, %v1096, %v1098
      %v1114 = vsel %vm1111, %v1098, %v1100
      %v1115 = vsel %vm1111, %v1100, %v1102
      %v1116 = vsel %vm1111, %v1102, %v1104
      %v1117 = vsel %vm1111, %v1104, %v1106
      %v1118 = vsel %vm1111, %v1106, %v1108
      %v1119 = vsel %vm1111, %v1108, %v1110
      %1128 = vst [vmem:[#allocation2 + $0xc0] sm:$0x38] %v1112
      %1129 = vst [vmem:[#allocation2 + $0xc8] sm:$0x38] %v1113
      %1130 = vst [vmem:[#allocation2 + $0xd0] sm:$0x38] %v1114
      %1131 = vst [vmem:[#allocation2 + $0xd8] sm:$0x38] %v1115
      %1132 = vst [vmem:[#allocation2 + $0xe0] sm:$0x38] %v1116
      %1133 = vst [vmem:[#allocation2 + $0xe8] sm:$0x38] %v1117
      %1134 = vst [vmem:[#allocation2 + $0xf0] sm:$0x38] %v1118
      %1135 = vst [vmem:[#allocation2 + $0xf8] sm:$0x38] %v1119
      %v1136 = vld [vmem:[%s381] sm:$0x77]
      %v1137 = vld [vmem:[%s381 + $0x8] sm:$0x77]
      %v1138 = vld [vmem:[%s381 + $0x10] sm:$0x77]
      %v1139 = vld [vmem:[%s381 + $0x18] sm:$0x77]
      %v1140 = vld [vmem:[%s381 + $0x20] sm:$0x7]
      %1146 = vst [vmem:[#allocation1] ss:$2 sm:$0xff] %v1136
      %s1147 = scalar_lea.vmem [#allocation1], 16
      %1148 = vst [vmem:[%s1147] ss:$2 sm:$0xff] %v1137
      %s1149 = scalar_lea.vmem [#allocation1], 32
      %1150 = vst [vmem:[%s1149] ss:$2 sm:$0xff] %v1138
      %s1151 = scalar_lea.vmem [#allocation1], 48
      %1152 = vst [vmem:[%s1151] ss:$2 sm:$0xff] %v1139
      %v1153 = vld.sshfl [vmem:[#allocation1] sm:$0xff pattern:$0x75316420]
      %v1154 = vld.sshfl [vmem:[#allocation1 + $0x8] sm:$0xff pattern:$0x75316420]
      %v1155 = vld.sshfl [vmem:[#allocation1 + $0x10] sm:$0xff pattern:$0x75316420]
      %v1156 = vld.sshfl [vmem:[#allocation1 + $0x18] sm:$0xff pattern:$0x75316420]
      %v1157 = vld.sshfl [vmem:[#allocation1 + $0x20] sm:$0xff pattern:$0x75316420]
      %v1158 = vld.sshfl [vmem:[#allocation1 + $0x28] sm:$0xff pattern:$0x75316420]
      %v1159 = vld.sshfl [vmem:[#allocation1 + $0x30] sm:$0xff pattern:$0x75316420]
      %v1160 = vld.sshfl [vmem:[#allocation1 + $0x38] sm:$0xff pattern:$0x75316420]
      %1161 = vst [vmem:[#allocation1] ss:$2 sm:$0xff] %v1140
      %v1162 = vld.sshfl [vmem:[#allocation1] sm:$0xff pattern:$0x75316420]
      %v1163 = vrot.slane %v1153, 2
      %v1164 = vrot.slane %v1154, 2
      %v1165 = vrot.slane %v1155, 2
      %v1166 = vrot.slane %v1156, 2
      %v1167 = vrot.slane %v1157, 2
      %v1168 = vrot.slane %v1158, 2
      %v1169 = vrot.slane %v1159, 2
      %v1170 = vrot.slane %v1160, 2
      %v1171 = vrot.slane %v1162, 2
      %1172 = vrot.lane.b32.xlu0 %v1163, 64
      %v1173 = vpop.permute.xlu0 %1172
      %1174 = vrot.lane.b32.xlu0 %v1164, 64
      %v1175 = vpop.permute.xlu0 %1174
      %1176 = vrot.lane.b32.xlu0 %v1165, 64
      %v1177 = vpop.permute.xlu0 %1176
      %1178 = vrot.lane.b32.xlu0 %v1166, 64
      %v1179 = vpop.permute.xlu0 %1178
      %1180 = vrot.lane.b32.xlu0 %v1167, 64
      %v1181 = vpop.permute.xlu0 %1180
      %1182 = vrot.lane.b32.xlu0 %v1168, 64
      %v1183 = vpop.permute.xlu0 %1182
      %1184 = vrot.lane.b32.xlu0 %v1169, 64
      %v1185 = vpop.permute.xlu0 %1184
      %1186 = vrot.lane.b32.xlu0 %v1170, 64
      %v1187 = vpop.permute.xlu0 %1186
      %1188 = vrot.lane.b32.xlu0 %v1171, 64
      %v1189 = vpop.permute.xlu0 %1188
      %vm1190 = vcmask 523264
      %v1191 = vsel %vm1190, %v1173, %v1175
      %v1192 = vsel %vm1190, %v1175, %v1177
      %v1193 = vsel %vm1190, %v1177, %v1179
      %v1194 = vsel %vm1190, %v1179, %v1181
      %v1195 = vsel %vm1190, %v1181, %v1183
      %v1196 = vsel %vm1190, %v1183, %v1185
      %v1197 = vsel %vm1190, %v1185, %v1187
      %v1198 = vsel %vm1190, %v1187, %v1189
      %1207 = vst [vmem:[#allocation2 + $0xc0] sm:$0xc0] %v1191
      %1208 = vst [vmem:[#allocation2 + $0xc8] sm:$0xc0] %v1192
      %1209 = vst [vmem:[#allocation2 + $0xd0] sm:$0xc0] %v1193
      %1210 = vst [vmem:[#allocation2 + $0xd8] sm:$0xc0] %v1194
      %1211 = vst [vmem:[#allocation2 + $0xe0] sm:$0xc0] %v1195
      %1212 = vst [vmem:[#allocation2 + $0xe8] sm:$0xc0] %v1196
      %1213 = vst [vmem:[#allocation2 + $0xf0] sm:$0xc0] %v1197
      %1214 = vst [vmem:[#allocation2 + $0xf8] sm:$0xc0] %v1198
      %1215 = vst [vmem:[#allocation2 + $0x100] sm:$0x1] %v1191
      %1216 = vst [vmem:[#allocation2 + $0x108] sm:$0x1] %v1192
      %1217 = vst [vmem:[#allocation2 + $0x110] sm:$0x1] %v1193
      %1218 = vst [vmem:[#allocation2 + $0x118] sm:$0x1] %v1194
      %1219 = vst [vmem:[#allocation2 + $0x120] sm:$0x1] %v1195
      %1220 = vst [vmem:[#allocation2 + $0x128] sm:$0x1] %v1196
      %1221 = vst [vmem:[#allocation2 + $0x130] sm:$0x1] %v1197
      %1222 = vst [vmem:[#allocation2 + $0x138] sm:$0x1] %v1198
      %v1223 = vld [vmem:[%s381] sm:$0x77]
      %v1224 = vld [vmem:[%s381 + $0x8] sm:$0x77]
      %v1225 = vld [vmem:[%s381 + $0x10] sm:$0x77]
      %v1226 = vld [vmem:[%s381 + $0x18] sm:$0x77]
      %v1227 = vld [vmem:[%s381 + $0x20] sm:$0x7]
      %1233 = vst [vmem:[#allocation1] ss:$2 sm:$0xff] %v1223
      %s1234 = scalar_lea.vmem [#allocation1], 16
      %1235 = vst [vmem:[%s1234] ss:$2 sm:$0xff] %v1224
      %s1236 = scalar_lea.vmem [#allocation1], 32
      %1237 = vst [vmem:[%s1236] ss:$2 sm:$0xff] %v1225
      %s1238 = scalar_lea.vmem [#allocation1], 48
      %1239 = vst [vmem:[%s1238] ss:$2 sm:$0xff] %v1226
      %v1240 = vld.sshfl [vmem:[#allocation1] sm:$0xff pattern:$0x75316420]
      %v1241 = vld.sshfl [vmem:[#allocation1 + $0x8] sm:$0xff pattern:$0x75316420]
      %v1242 = vld.sshfl [vmem:[#allocation1 + $0x10] sm:$0xff pattern:$0x75316420]
      %v1243 = vld.sshfl [vmem:[#allocation1 + $0x18] sm:$0xff pattern:$0x75316420]
      %v1244 = vld.sshfl [vmem:[#allocation1 + $0x20] sm:$0xff pattern:$0x75316420]
      %v1245 = vld.sshfl [vmem:[#allocation1 + $0x28] sm:$0xff pattern:$0x75316420]
      %v1246 = vld.sshfl [vmem:[#allocation1 + $0x30] sm:$0xff pattern:$0x75316420]
      %v1247 = vld.sshfl [vmem:[#allocation1 + $0x38] sm:$0xff pattern:$0x75316420]
      %1248 = vst [vmem:[#allocation1] ss:$2 sm:$0xff] %v1227
      %v1249 = vld.sshfl [vmem:[#allocation1] sm:$0xff pattern:$0x75316420]
      %v1250 = vrot.slane %v1240, 7
      %v1251 = vrot.slane %v1241, 7
      %v1252 = vrot.slane %v1242, 7
      %v1253 = vrot.slane %v1243, 7
      %v1254 = vrot.slane %v1244, 7
      %v1255 = vrot.slane %v1245, 7
      %v1256 = vrot.slane %v1246, 7
      %v1257 = vrot.slane %v1247, 7
      %v1258 = vrot.slane %v1249, 7
      %1259 = vrot.lane.b32.xlu0 %v1250, 63
      %v1260 = vpop.permute.xlu0 %1259
      %1261 = vrot.lane.b32.xlu0 %v1251, 63
      %v1262 = vpop.permute.xlu0 %1261
      %1263 = vrot.lane.b32.xlu0 %v1252, 63
      %v1264 = vpop.permute.xlu0 %1263
      %1265 = vrot.lane.b32.xlu0 %v1253, 63
      %v1266 = vpop.permute.xlu0 %1265
      %1267 = vrot.lane.b32.xlu0 %v1254, 63
      %v1268 = vpop.permute.xlu0 %1267
      %1269 = vrot.lane.b32.xlu0 %v1255, 63
      %v1270 = vpop.permute.xlu0 %1269
      %1271 = vrot.lane.b32.xlu0 %v1256, 63
      %v1272 = vpop.permute.xlu0 %1271
      %1273 = vrot.lane.b32.xlu0 %v1257, 63
      %v1274 = vpop.permute.xlu0 %1273
      %1275 = vrot.lane.b32.xlu0 %v1258, 63
      %v1276 = vpop.permute.xlu0 %1275
      %vm1277 = vcmask 515072
      %v1278 = vsel %vm1277, %v1260, %v1262
      %v1279 = vsel %vm1277, %v1262, %v1264
      %v1280 = vsel %vm1277, %v1264, %v1266
      %v1281 = vsel %vm1277, %v1266, %v1268
      %v1282 = vsel %vm1277, %v1268, %v1270
      %v1283 = vsel %vm1277, %v1270, %v1272
      %v1284 = vsel %vm1277, %v1272, %v1274
      %v1285 = vsel %vm1277, %v1274, %v1276
      %1294 = vst [vmem:[#allocation2 + $0x100] sm:$0xe] %v1278
      %1295 = vst [vmem:[#allocation2 + $0x108] sm:$0xe] %v1279
      %1296 = vst [vmem:[#allocation2 + $0x110] sm:$0xe] %v1280
      %1297 = vst [vmem:[#allocation2 + $0x118] sm:$0xe] %v1281
      %1298 = vst [vmem:[#allocation2 + $0x120] sm:$0xe] %v1282
      %1299 = vst [vmem:[#allocation2 + $0x128] sm:$0xe] %v1283
      %1300 = vst [vmem:[#allocation2 + $0x130] sm:$0xe] %v1284
      %1301 = vst [vmem:[#allocation2 + $0x138] sm:$0xe] %v1285
      %v1302 = vld [vmem:[%s381] sm:$0x77]
      %v1303 = vld [vmem:[%s381 + $0x8] sm:$0x77]
      %v1304 = vld [vmem:[%s381 + $0x10] sm:$0x77]
      %v1305 = vld [vmem:[%s381 + $0x18] sm:$0x77]
      %v1306 = vld [vmem:[%s381 + $0x20] sm:$0x7]
      %s1312 = scalar_lea.vmem [#allocation1], 1
      %1313 = vst [vmem:[%s1312] ss:$2 sm:$0xff] %v1302
      %s1314 = scalar_lea.vmem [#allocation1], 17
      %1315 = vst [vmem:[%s1314] ss:$2 sm:$0xff] %v1303
      %s1316 = scalar_lea.vmem [#allocation1], 33
      %1317 = vst [vmem:[%s1316] ss:$2 sm:$0xff] %v1304
      %s1318 = scalar_lea.vmem [#allocation1], 49
      %1319 = vst [vmem:[%s1318] ss:$2 sm:$0xff] %v1305
      %v1320 = vld.sshfl [vmem:[#allocation1] sm:$0xff pattern:$0x75316420]
      %v1321 = vld.sshfl [vmem:[#allocation1 + $0x8] sm:$0xff pattern:$0x75316420]
      %v1322 = vld.sshfl [vmem:[#allocation1 + $0x10] sm:$0xff pattern:$0x75316420]
      %v1323 = vld.sshfl [vmem:[#allocation1 + $0x18] sm:$0xff pattern:$0x75316420]
      %v1324 = vld.sshfl [vmem:[#allocation1 + $0x20] sm:$0xff pattern:$0x75316420]
      %v1325 = vld.sshfl [vmem:[#allocation1 + $0x28] sm:$0xff pattern:$0x75316420]
      %v1326 = vld.sshfl [vmem:[#allocation1 + $0x30] sm:$0xff pattern:$0x75316420]
      %v1327 = vld.sshfl [vmem:[#allocation1 + $0x38] sm:$0xff pattern:$0x75316420]
      %1328 = vst [vmem:[%s1312] ss:$2 sm:$0xff] %v1306
      %v1329 = vld.sshfl [vmem:[#allocation1] sm:$0xff pattern:$0x75316420]
      %1330 = vrot.lane.b32.xlu0 %v1320, 62
      %v1331 = vpop.permute.xlu0 %1330
      %1332 = vrot.lane.b32.xlu0 %v1321, 62
      %v1333 = vpop.permute.xlu0 %1332
      %1334 = vrot.lane.b32.xlu0 %v1322, 62
      %v1335 = vpop.permute.xlu0 %1334
      %1336 = vrot.lane.b32.xlu0 %v1323, 62
      %v1337 = vpop.permute.xlu0 %1336
      %1338 = vrot.lane.b32.xlu0 %v1324, 62
      %v1339 = vpop.permute.xlu0 %1338
      %1340 = vrot.lane.b32.xlu0 %v1325, 62
      %v1341 = vpop.permute.xlu0 %1340
      %1342 = vrot.lane.b32.xlu0 %v1326, 62
      %v1343 = vpop.permute.xlu0 %1342
      %1344 = vrot.lane.b32.xlu0 %v1327, 62
      %v1345 = vpop.permute.xlu0 %1344
      %1346 = vrot.lane.b32.xlu0 %v1329, 62
      %v1347 = vpop.permute.xlu0 %1346
      %vm1348 = vcmask 506880
      %v1349 = vsel %vm1348, %v1331, %v1333
      %v1350 = vsel %vm1348, %v1333, %v1335
      %v1351 = vsel %vm1348, %v1335, %v1337
      %v1352 = vsel %vm1348, %v1337, %v1339
      %v1353 = vsel %vm1348, %v1339, %v1341
      %v1354 = vsel %vm1348, %v1341, %v1343
      %v1355 = vsel %vm1348, %v1343, %v1345
      %v1356 = vsel %vm1348, %v1345, %v1347
      %1365 = vst [vmem:[#allocation2 + $0x100] sm:$0x70] %v1349
      %1366 = vst [vmem:[#allocation2 + $0x108] sm:$0x70] %v1350
      %1367 = vst [vmem:[#allocation2 + $0x110] sm:$0x70] %v1351
      %1368 = vst [vmem:[#allocation2 + $0x118] sm:$0x70] %v1352
      %1369 = vst [vmem:[#allocation2 + $0x120] sm:$0x70] %v1353
      %1370 = vst [vmem:[#allocation2 + $0x128] sm:$0x70] %v1354
      %1371 = vst [vmem:[#allocation2 + $0x130] sm:$0x70] %v1355
      %1372 = vst [vmem:[#allocation2 + $0x138] sm:$0x70] %v1356
      %v1373 = vld [vmem:[%s381] sm:$0x77]
      %v1374 = vld [vmem:[%s381 + $0x8] sm:$0x77]
      %v1375 = vld [vmem:[%s381 + $0x10] sm:$0x77]
      %v1376 = vld [vmem:[%s381 + $0x18] sm:$0x77]
      %v1377 = vld [vmem:[%s381 + $0x20] sm:$0x7]
      %1383 = vst [vmem:[#allocation1] ss:$2 sm:$0xff] %v1373
      %s1384 = scalar_lea.vmem [#allocation1], 16
      %1385 = vst [vmem:[%s1384] ss:$2 sm:$0xff] %v1374
      %s1386 = scalar_lea.vmem [#allocation1], 32
      %1387 = vst [vmem:[%s1386] ss:$2 sm:$0xff] %v1375
      %s1388 = scalar_lea.vmem [#allocation1], 48
      %1389 = vst [vmem:[%s1388] ss:$2 sm:$0xff] %v1376
      %v1390 = vld.sshfl [vmem:[#allocation1] sm:$0xff pattern:$0x75316420]
      %v1391 = vld.sshfl [vmem:[#allocation1 + $0x8] sm:$0xff pattern:$0x75316420]
      %v1392 = vld.sshfl [vmem:[#allocation1 + $0x10] sm:$0xff pattern:$0x75316420]
      %v1393 = vld.sshfl [vmem:[#allocation1 + $0x18] sm:$0xff pattern:$0x75316420]
      %v1394 = vld.sshfl [vmem:[#allocation1 + $0x20] sm:$0xff pattern:$0x75316420]
      %v1395 = vld.sshfl [vmem:[#allocation1 + $0x28] sm:$0xff pattern:$0x75316420]
      %v1396 = vld.sshfl [vmem:[#allocation1 + $0x30] sm:$0xff pattern:$0x75316420]
      %v1397 = vld.sshfl [vmem:[#allocation1 + $0x38] sm:$0xff pattern:$0x75316420]
      %1398 = vst [vmem:[#allocation1] ss:$2 sm:$0xff] %v1377
      %v1399 = vld.sshfl [vmem:[#allocation1] sm:$0xff pattern:$0x75316420]
      %v1400 = vrot.slane %v1390, 1
      %v1401 = vrot.slane %v1391, 1
      %v1402 = vrot.slane %v1392, 1
      %v1403 = vrot.slane %v1393, 1
      %v1404 = vrot.slane %v1394, 1
      %v1405 = vrot.slane %v1395, 1
      %v1406 = vrot.slane %v1396, 1
      %v1407 = vrot.slane %v1397, 1
      %v1408 = vrot.slane %v1399, 1
      %1409 = vrot.lane.b32.xlu0 %v1400, 61
      %v1410 = vpop.permute.xlu0 %1409
      %1411 = vrot.lane.b32.xlu0 %v1401, 61
      %v1412 = vpop.permute.xlu0 %1411
      %1413 = vrot.lane.b32.xlu0 %v1402, 61
      %v1414 = vpop.permute.xlu0 %1413
      %1415 = vrot.lane.b32.xlu0 %v1403, 61
      %v1416 = vpop.permute.xlu0 %1415
      %1417 = vrot.lane.b32.xlu0 %v1404, 61
      %v1418 = vpop.permute.xlu0 %1417
      %1419 = vrot.lane.b32.xlu0 %v1405, 61
      %v1420 = vpop.permute.xlu0 %1419
      %1421 = vrot.lane.b32.xlu0 %v1406, 61
      %v1422 = vpop.permute.xlu0 %1421
      %1423 = vrot.lane.b32.xlu0 %v1407, 61
      %v1424 = vpop.permute.xlu0 %1423
      %1425 = vrot.lane.b32.xlu0 %v1408, 61
      %v1426 = vpop.permute.xlu0 %1425
      %vm1427 = vcmask 498688
      %v1428 = vsel %vm1427, %v1410, %v1412
      %v1429 = vsel %vm1427, %v1412, %v1414
      %v1430 = vsel %vm1427, %v1414, %v1416
      %v1431 = vsel %vm1427, %v1416, %v1418
      %v1432 = vsel %vm1427, %v1418, %v1420
      %v1433 = vsel %vm1427, %v1420, %v1422
      %v1434 = vsel %vm1427, %v1422, %v1424
      %v1435 = vsel %vm1427, %v1424, %v1426
      %1444 = vst [vmem:[#allocation2 + $0x100] sm:$0x80] %v1428
      %1445 = vst [vmem:[#allocation2 + $0x108] sm:$0x80] %v1429
      %1446 = vst [vmem:[#allocation2 + $0x110] sm:$0x80] %v1430
      %1447 = vst [vmem:[#allocation2 + $0x118] sm:$0x80] %v1431
      %1448 = vst [vmem:[#allocation2 + $0x120] sm:$0x80] %v1432
      %1449 = vst [vmem:[#allocation2 + $0x128] sm:$0x80] %v1433
      %1450 = vst [vmem:[#allocation2 + $0x130] sm:$0x80] %v1434
      %1451 = vst [vmem:[#allocation2 + $0x138] sm:$0x80] %v1435
      %1452 = vst [vmem:[#allocation2 + $0x140] sm:$0x3] %v1428
      %1453 = vst [vmem:[#allocation2 + $0x148] sm:$0x3] %v1429
      %1454 = vst [vmem:[#allocation2 + $0x150] sm:$0x3] %v1430
      %1455 = vst [vmem:[#allocation2 + $0x158] sm:$0x3] %v1431
      %1456 = vst [vmem:[#allocation2 + $0x160] sm:$0x3] %v1432
      %1457 = vst [vmem:[#allocation2 + $0x168] sm:$0x3] %v1433
      %1458 = vst [vmem:[#allocation2 + $0x170] sm:$0x3] %v1434
      %1459 = vst [vmem:[#allocation2 + $0x178] sm:$0x3] %v1435
      %v1460 = vld [vmem:[%s381] sm:$0x77]
      %v1461 = vld [vmem:[%s381 + $0x8] sm:$0x77]
      %v1462 = vld [vmem:[%s381 + $0x10] sm:$0x77]
      %v1463 = vld [vmem:[%s381 + $0x18] sm:$0x77]
      %v1464 = vld [vmem:[%s381 + $0x20] sm:$0x7]
      %1470 = vst [vmem:[#allocation1] ss:$2 sm:$0xff] %v1460
      %s1471 = scalar_lea.vmem [#allocation1], 16
      %1472 = vst [vmem:[%s1471] ss:$2 sm:$0xff] %v1461
      %s1473 = scalar_lea.vmem [#allocation1], 32
      %1474 = vst [vmem:[%s1473] ss:$2 sm:$0xff] %v1462
      %s1475 = scalar_lea.vmem [#allocation1], 48
      %1476 = vst [vmem:[%s1475] ss:$2 sm:$0xff] %v1463
      %v1477 = vld.sshfl [vmem:[#allocation1] sm:$0xff pattern:$0x75316420]
      %v1478 = vld.sshfl [vmem:[#allocation1 + $0x8] sm:$0xff pattern:$0x75316420]
      %v1479 = vld.sshfl [vmem:[#allocation1 + $0x10] sm:$0xff pattern:$0x75316420]
      %v1480 = vld.sshfl [vmem:[#allocation1 + $0x18] sm:$0xff pattern:$0x75316420]
      %v1481 = vld.sshfl [vmem:[#allocation1 + $0x20] sm:$0xff pattern:$0x75316420]
      %v1482 = vld.sshfl [vmem:[#allocation1 + $0x28] sm:$0xff pattern:$0x75316420]
      %v1483 = vld.sshfl [vmem:[#allocation1 + $0x30] sm:$0xff pattern:$0x75316420]
      %v1484 = vld.sshfl [vmem:[#allocation1 + $0x38] sm:$0xff pattern:$0x75316420]
      %1485 = vst [vmem:[#allocation1] ss:$2 sm:$0xff] %v1464
      %v1486 = vld.sshfl [vmem:[#allocation1] sm:$0xff pattern:$0x75316420]
      %v1487 = vrot.slane %v1477, 6
      %v1488 = vrot.slane %v1478, 6
      %v1489 = vrot.slane %v1479, 6
      %v1490 = vrot.slane %v1480, 6
      %v1491 = vrot.slane %v1481, 6
      %v1492 = vrot.slane %v1482, 6
      %v1493 = vrot.slane %v1483, 6
      %v1494 = vrot.slane %v1484, 6
      %v1495 = vrot.slane %v1486, 6
      %1496 = vrot.lane.b32.xlu0 %v1487, 60
      %v1497 = vpop.permute.xlu0 %1496
      %1498 = vrot.lane.b32.xlu0 %v1488, 60
      %v1499 = vpop.permute.xlu0 %1498
      %1500 = vrot.lane.b32.xlu0 %v1489, 60
      %v1501 = vpop.permute.xlu0 %1500
      %1502 = vrot.lane.b32.xlu0 %v1490, 60
      %v1503 = vpop.permute.xlu0 %1502
      %1504 = vrot.lane.b32.xlu0 %v1491, 60
      %v1505 = vpop.permute.xlu0 %1504
      %1506 = vrot.lane.b32.xlu0 %v1492, 60
      %v1507 = vpop.permute.xlu0 %1506
      %1508 = vrot.lane.b32.xlu0 %v1493, 60
      %v1509 = vpop.permute.xlu0 %1508
      %1510 = vrot.lane.b32.xlu0 %v1494, 60
      %v1511 = vpop.permute.xlu0 %1510
      %1512 = vrot.lane.b32.xlu0 %v1495, 60
      %v1513 = vpop.permute.xlu0 %1512
      %vm1514 = vcmask 490496
      %v1515 = vsel %vm1514, %v1497, %v1499
      %v1516 = vsel %vm1514, %v1499, %v1501
      %v1517 = vsel %vm1514, %v1501, %v1503
      %v1518 = vsel %vm1514, %v1503, %v1505
      %v1519 = vsel %vm1514, %v1505, %v1507
      %v1520 = vsel %vm1514, %v1507, %v1509
      %v1521 = vsel %vm1514, %v1509, %v1511
      %v1522 = vsel %vm1514, %v1511, %v1513
      %1531 = vst [vmem:[#allocation2 + $0x140] sm:$0x1c] %v1515
      %1532 = vst [vmem:[#allocation2 + $0x148] sm:$0x1c] %v1516
      %1533 = vst [vmem:[#allocation2 + $0x150] sm:$0x1c] %v1517
      %1534 = vst [vmem:[#allocation2 + $0x158] sm:$0x1c] %v1518
      %1535 = vst [vmem:[#allocation2 + $0x160] sm:$0x1c] %v1519
      %1536 = vst [vmem:[#allocation2 + $0x168] sm:$0x1c] %v1520
      %1537 = vst [vmem:[#allocation2 + $0x170] sm:$0x1c] %v1521
      %1538 = vst [vmem:[#allocation2 + $0x178] sm:$0x1c] %v1522
      %v1539 = vld [vmem:[%s381] sm:$0x77]
      %v1540 = vld [vmem:[%s381 + $0x8] sm:$0x77]
      %v1541 = vld [vmem:[%s381 + $0x10] sm:$0x77]
      %v1542 = vld [vmem:[%s381 + $0x18] sm:$0x77]
      %v1543 = vld [vmem:[%s381 + $0x20] sm:$0x7]
      %1549 = vst [vmem:[#allocation1] ss:$2 sm:$0xff] %v1539
      %s1550 = scalar_lea.vmem [#allocation1], 16
      %1551 = vst [vmem:[%s1550] ss:$2 sm:$0xff] %v1540
      %s1552 = scalar_lea.vmem [#allocation1], 32
      %1553 = vst [vmem:[%s1552] ss:$2 sm:$0xff] %v1541
      %s1554 = scalar_lea.vmem [#allocation1], 48
      %1555 = vst [vmem:[%s1554] ss:$2 sm:$0xff] %v1542
      %v1556 = vld.sshfl [vmem:[#allocation1] sm:$0xff pattern:$0x75316420]
      %v1557 = vld.sshfl [vmem:[#allocation1 + $0x8] sm:$0xff pattern:$0x75316420]
      %v1558 = vld.sshfl [vmem:[#allocation1 + $0x10] sm:$0xff pattern:$0x75316420]
      %v1559 = vld.sshfl [vmem:[#allocation1 + $0x18] sm:$0xff pattern:$0x75316420]
      %v1560 = vld.sshfl [vmem:[#allocation1 + $0x20] sm:$0xff pattern:$0x75316420]
      %v1561 = vld.sshfl [vmem:[#allocation1 + $0x28] sm:$0xff pattern:$0x75316420]
      %v1562 = vld.sshfl [vmem:[#allocation1 + $0x30] sm:$0xff pattern:$0x75316420]
      %v1563 = vld.sshfl [vmem:[#allocation1 + $0x38] sm:$0xff pattern:$0x75316420]
      %1564 = vst [vmem:[#allocation1] ss:$2 sm:$0xff] %v1543
      %v1565 = vld.sshfl [vmem:[#allocation1] sm:$0xff pattern:$0x75316420]
      %v1566 = vrot.slane %v1556, 3
      %v1567 = vrot.slane %v1557, 3
      %v1568 = vrot.slane %v1558, 3
      %v1569 = vrot.slane %v1559, 3
      %v1570 = vrot.slane %v1560, 3
      %v1571 = vrot.slane %v1561, 3
      %v1572 = vrot.slane %v1562, 3
      %v1573 = vrot.slane %v1563, 3
      %v1574 = vrot.slane %v1565, 3
      %1575 = vrot.lane.b32.xlu0 %v1566, 32
      %v1576 = vpop.permute.xlu0 %1575
      %1577 = vrot.lane.b32.xlu0 %v1567, 32
      %v1578 = vpop.permute.xlu0 %1577
      %1579 = vrot.lane.b32.xlu0 %v1568, 32
      %v1580 = vpop.permute.xlu0 %1579
      %1581 = vrot.lane.b32.xlu0 %v1569, 32
      %v1582 = vpop.permute.xlu0 %1581
      %1583 = vrot.lane.b32.xlu0 %v1570, 32
      %v1584 = vpop.permute.xlu0 %1583
      %1585 = vrot.lane.b32.xlu0 %v1571, 32
      %v1586 = vpop.permute.xlu0 %1585
      %1587 = vrot.lane.b32.xlu0 %v1572, 32
      %v1588 = vpop.permute.xlu0 %1587
      %1589 = vrot.lane.b32.xlu0 %v1573, 32
      %v1590 = vpop.permute.xlu0 %1589
      %1591 = vrot.lane.b32.xlu0 %v1574, 32
      %v1592 = vpop.permute.xlu0 %1591
      %vm1593 = vcmask 261120
      %v1594 = vsel %vm1593, %v1576, %v1578
      %v1595 = vsel %vm1593, %v1578, %v1580
      %v1596 = vsel %vm1593, %v1580, %v1582
      %v1597 = vsel %vm1593, %v1582, %v1584
      %v1598 = vsel %vm1593, %v1584, %v1586
      %v1599 = vsel %vm1593, %v1586, %v1588
      %v1600 = vsel %vm1593, %v1588, %v1590
      %v1601 = vsel %vm1593, %v1590, %v1592
      %1610 = vst [vmem:[#allocation2 + $0x140] sm:$0xe0] %v1594
      %1611 = vst [vmem:[#allocation2 + $0x148] sm:$0xe0] %v1595
      %1612 = vst [vmem:[#allocation2 + $0x150] sm:$0xe0] %v1596
      %1613 = vst [vmem:[#allocation2 + $0x158] sm:$0xe0] %v1597
      %1614 = vst [vmem:[#allocation2 + $0x160] sm:$0xe0] %v1598
      %1615 = vst [vmem:[#allocation2 + $0x168] sm:$0xe0] %v1599
      %1616 = vst [vmem:[#allocation2 + $0x170] sm:$0xe0] %v1600
      %1617 = vst [vmem:[#allocation2 + $0x178] sm:$0xe0] %v1601
      %v1618 = vld [vmem:[%s381] sm:$0x77]
      %v1619 = vld [vmem:[%s381 + $0x8] sm:$0x77]
      %v1620 = vld [vmem:[%s381 + $0x10] sm:$0x77]
      %v1621 = vld [vmem:[%s381 + $0x18] sm:$0x77]
      %v1622 = vld [vmem:[%s381 + $0x20] sm:$0x7]
      %1628 = vst [vmem:[#allocation1] ss:$2 sm:$0xff] %v1618
      %s1629 = scalar_lea.vmem [#allocation1], 16
      %1630 = vst [vmem:[%s1629] ss:$2 sm:$0xff] %v1619
      %s1631 = scalar_lea.vmem [#allocation1], 32
      %1632 = vst [vmem:[%s1631] ss:$2 sm:$0xff] %v1620
      %s1633 = scalar_lea.vmem [#allocation1], 48
      %1634 = vst [vmem:[%s1633] ss:$2 sm:$0xff] %v1621
      %v1635 = vld.sshfl [vmem:[#allocation1] sm:$0xff pattern:$0x75316420]
      %v1636 = vld.sshfl [vmem:[#allocation1 + $0x8] sm:$0xff pattern:$0x75316420]
      %v1637 = vld.sshfl [vmem:[#allocation1 + $0x10] sm:$0xff pattern:$0x75316420]
      %v1638 = vld.sshfl [vmem:[#allocation1 + $0x18] sm:$0xff pattern:$0x75316420]
      %v1639 = vld.sshfl [vmem:[#allocation1 + $0x20] sm:$0xff pattern:$0x75316420]
      %v1640 = vld.sshfl [vmem:[#allocation1 + $0x28] sm:$0xff pattern:$0x75316420]
      %v1641 = vld.sshfl [vmem:[#allocation1 + $0x30] sm:$0xff pattern:$0x75316420]
      %v1642 = vld.sshfl [vmem:[#allocation1 + $0x38] sm:$0xff pattern:$0x75316420]
      %1643 = vst [vmem:[#allocation1] ss:$2 sm:$0xff] %v1622
      %v1644 = vld.sshfl [vmem:[#allocation1] sm:$0xff pattern:$0x75316420]
      %1645 = vrot.lane.b32.xlu0 %v1635, 31
      %v1646 = vpop.permute.xlu0 %1645
      %1647 = vrot.lane.b32.xlu0 %v1636, 31
      %v1648 = vpop.permute.xlu0 %1647
      %1649 = vrot.lane.b32.xlu0 %v1637, 31
      %v1650 = vpop.permute.xlu0 %1649
      %1651 = vrot.lane.b32.xlu0 %v1638, 31
      %v1652 = vpop.permute.xlu0 %1651
      %1653 = vrot.lane.b32.xlu0 %v1639, 31
      %v1654 = vpop.permute.xlu0 %1653
      %1655 = vrot.lane.b32.xlu0 %v1640, 31
      %v1656 = vpop.permute.xlu0 %1655
      %1657 = vrot.lane.b32.xlu0 %v1641, 31
      %v1658 = vpop.permute.xlu0 %1657
      %1659 = vrot.lane.b32.xlu0 %v1642, 31
      %v1660 = vpop.permute.xlu0 %1659
      %1661 = vrot.lane.b32.xlu0 %v1644, 31
      %v1662 = vpop.permute.xlu0 %1661
      %vm1663 = vcmask 252928
      %v1664 = vsel %vm1663, %v1646, %v1648
      %v1665 = vsel %vm1663, %v1648, %v1650
      %v1666 = vsel %vm1663, %v1650, %v1652
      %v1667 = vsel %vm1663, %v1652, %v1654
      %v1668 = vsel %vm1663, %v1654, %v1656
      %v1669 = vsel %vm1663, %v1656, %v1658
      %v1670 = vsel %vm1663, %v1658, %v1660
      %v1671 = vsel %vm1663, %v1660, %v1662
      %1680 = vst [vmem:[#allocation2 + $0x180] sm:$0x7] %v1664
      %1681 = vst [vmem:[#allocation2 + $0x188] sm:$0x7] %v1665
      %1682 = vst [vmem:[#allocation2 + $0x190] sm:$0x7] %v1666
      %1683 = vst [vmem:[#allocation2 + $0x198] sm:$0x7] %v1667
      %1684 = vst [vmem:[#allocation2 + $0x1a0] sm:$0x7] %v1668
      %1685 = vst [vmem:[#allocation2 + $0x1a8] sm:$0x7] %v1669
      %1686 = vst [vmem:[#allocation2 + $0x1b0] sm:$0x7] %v1670
      %1687 = vst [vmem:[#allocation2 + $0x1b8] sm:$0x7] %v1671
      %v1688 = vld [vmem:[%s381] sm:$0x77]
      %v1689 = vld [vmem:[%s381 + $0x8] sm:$0x77]
      %v1690 = vld [vmem:[%s381 + $0x10] sm:$0x77]
      %v1691 = vld [vmem:[%s381 + $0x18] sm:$0x77]
      %v1692 = vld [vmem:[%s381 + $0x20] sm:$0x7]
      %1698 = vst [vmem:[#allocation1] ss:$2 sm:$0xff] %v1688
      %s1699 = scalar_lea.vmem [#allocation1], 16
      %1700 = vst [vmem:[%s1699] ss:$2 sm:$0xff] %v1689
      %s1701 = scalar_lea.vmem [#allocation1], 32
      %1702 = vst [vmem:[%s1701] ss:$2 sm:$0xff] %v1690
      %s1703 = scalar_lea.vmem [#allocation1], 48
      %1704 = vst [vmem:[%s1703] ss:$2 sm:$0xff] %v1691
      %v1705 = vld.sshfl [vmem:[#allocation1] sm:$0xff pattern:$0x75316420]
      %v1706 = vld.sshfl [vmem:[#allocation1 + $0x8] sm:$0xff pattern:$0x75316420]
      %v1707 = vld.sshfl [vmem:[#allocation1 + $0x10] sm:$0xff pattern:$0x75316420]
      %v1708 = vld.sshfl [vmem:[#allocation1 + $0x18] sm:$0xff pattern:$0x75316420]
      %v1709 = vld.sshfl [vmem:[#allocation1 + $0x20] sm:$0xff pattern:$0x75316420]
      %v1710 = vld.sshfl [vmem:[#allocation1 + $0x28] sm:$0xff pattern:$0x75316420]
      %v1711 = vld.sshfl [vmem:[#allocation1 + $0x30] sm:$0xff pattern:$0x75316420]
      %v1712 = vld.sshfl [vmem:[#allocation1 + $0x38] sm:$0xff pattern:$0x75316420]
      %1713 = vst [vmem:[#allocation1] ss:$2 sm:$0xff] %v1692
      %v1714 = vld.sshfl [vmem:[#allocation1] sm:$0xff pattern:$0x75316420]
      %v1715 = vrot.slane %v1705, 5
      %v1716 = vrot.slane %v1706, 5
      %v1717 = vrot.slane %v1707, 5
      %v1718 = vrot.slane %v1708, 5
      %v1719 = vrot.slane %v1709, 5
      %v1720 = vrot.slane %v1710, 5
      %v1721 = vrot.slane %v1711, 5
      %v1722 = vrot.slane %v1712, 5
      %v1723 = vrot.slane %v1714, 5
      %1724 = vrot.lane.b32.xlu0 %v1715, 30
      %v1725 = vpop.permute.xlu0 %1724
      %1726 = vrot.lane.b32.xlu0 %v1716, 30
      %v1727 = vpop.permute.xlu0 %1726
      %1728 = vrot.lane.b32.xlu0 %v1717, 30
      %v1729 = vpop.permute.xlu0 %1728
      %1730 = vrot.lane.b32.xlu0 %v1718, 30
      %v1731 = vpop.permute.xlu0 %1730
      %1732 = vrot.lane.b32.xlu0 %v1719, 30
      %v1733 = vpop.permute.xlu0 %1732
      %1734 = vrot.lane.b32.xlu0 %v1720, 30
      %v1735 = vpop.permute.xlu0 %1734
      %1736 = vrot.lane.b32.xlu0 %v1721, 30
      %v1737 = vpop.permute.xlu0 %1736
      %1738 = vrot.lane.b32.xlu0 %v1722, 30
      %v1739 = vpop.permute.xlu0 %1738
      %1740 = vrot.lane.b32.xlu0 %v1723, 30
      %v1741 = vpop.permute.xlu0 %1740
      %vm1742 = vcmask 244736
      %v1743 = vsel %vm1742, %v1725, %v1727
      %v1744 = vsel %vm1742, %v1727, %v1729
      %v1745 = vsel %vm1742, %v1729, %v1731
      %v1746 = vsel %vm1742, %v1731, %v1733
      %v1747 = vsel %vm1742, %v1733, %v1735
      %v1748 = vsel %vm1742, %v1735, %v1737
      %v1749 = vsel %vm1742, %v1737, %v1739
      %v1750 = vsel %vm1742, %v1739, %v1741
      %1759 = vst [vmem:[#allocation2 + $0x180] sm:$0x38] %v1743
      %1760 = vst [vmem:[#allocation2 + $0x188] sm:$0x38] %v1744
      %1761 = vst [vmem:[#allocation2 + $0x190] sm:$0x38] %v1745
      %1762 = vst [vmem:[#allocation2 + $0x198] sm:$0x38] %v1746
      %1763 = vst [vmem:[#allocation2 + $0x1a0] sm:$0x38] %v1747
      %1764 = vst [vmem:[#allocation2 + $0x1a8] sm:$0x38] %v1748
      %1765 = vst [vmem:[#allocation2 + $0x1b0] sm:$0x38] %v1749
      %1766 = vst [vmem:[#allocation2 + $0x1b8] sm:$0x38] %v1750
      %v1767 = vld [vmem:[%s381] sm:$0x77]
      %v1768 = vld [vmem:[%s381 + $0x8] sm:$0x77]
      %v1769 = vld [vmem:[%s381 + $0x10] sm:$0x77]
      %v1770 = vld [vmem:[%s381 + $0x18] sm:$0x77]
      %v1771 = vld [vmem:[%s381 + $0x20] sm:$0x7]
      %1777 = vst [vmem:[#allocation1] ss:$2 sm:$0xff] %v1767
      %s1778 = scalar_lea.vmem [#allocation1], 16
      %1779 = vst [vmem:[%s1778] ss:$2 sm:$0xff] %v1768
      %s1780 = scalar_lea.vmem [#allocation1], 32
      %1781 = vst [vmem:[%s1780] ss:$2 sm:$0xff] %v1769
      %s1782 = scalar_lea.vmem [#allocation1], 48
      %1783 = vst [vmem:[%s1782] ss:$2 sm:$0xff] %v1770
      %v1784 = vld.sshfl [vmem:[#allocation1] sm:$0xff pattern:$0x75316420]
      %v1785 = vld.sshfl [vmem:[#allocation1 + $0x8] sm:$0xff pattern:$0x75316420]
      %v1786 = vld.sshfl [vmem:[#allocation1 + $0x10] sm:$0xff pattern:$0x75316420]
      %v1787 = vld.sshfl [vmem:[#allocation1 + $0x18] sm:$0xff pattern:$0x75316420]
      %v1788 = vld.sshfl [vmem:[#allocation1 + $0x20] sm:$0xff pattern:$0x75316420]
      %v1789 = vld.sshfl [vmem:[#allocation1 + $0x28] sm:$0xff pattern:$0x75316420]
      %v1790 = vld.sshfl [vmem:[#allocation1 + $0x30] sm:$0xff pattern:$0x75316420]
      %v1791 = vld.sshfl [vmem:[#allocation1 + $0x38] sm:$0xff pattern:$0x75316420]
      %1792 = vst [vmem:[#allocation1] ss:$2 sm:$0xff] %v1771
      %v1793 = vld.sshfl [vmem:[#allocation1] sm:$0xff pattern:$0x75316420]
      %v1794 = vrot.slane %v1784, 2
      %v1795 = vrot.slane %v1785, 2
      %v1796 = vrot.slane %v1786, 2
      %v1797 = vrot.slane %v1787, 2
      %v1798 = vrot.slane %v1788, 2
      %v1799 = vrot.slane %v1789, 2
      %v1800 = vrot.slane %v1790, 2
      %v1801 = vrot.slane %v1791, 2
      %v1802 = vrot.slane %v1793, 2
      %1803 = vrot.lane.b32.xlu0 %v1794, 29
      %v1804 = vpop.permute.xlu0 %1803
      %1805 = vrot.lane.b32.xlu0 %v1795, 29
      %v1806 = vpop.permute.xlu0 %1805
      %1807 = vrot.lane.b32.xlu0 %v1796, 29
      %v1808 = vpop.permute.xlu0 %1807
      %1809 = vrot.lane.b32.xlu0 %v1797, 29
      %v1810 = vpop.permute.xlu0 %1809
      %1811 = vrot.lane.b32.xlu0 %v1798, 29
      %v1812 = vpop.permute.xlu0 %1811
      %1813 = vrot.lane.b32.xlu0 %v1799, 29
      %v1814 = vpop.permute.xlu0 %1813
      %1815 = vrot.lane.b32.xlu0 %v1800, 29
      %v1816 = vpop.permute.xlu0 %1815
      %1817 = vrot.lane.b32.xlu0 %v1801, 29
      %v1818 = vpop.permute.xlu0 %1817
      %1819 = vrot.lane.b32.xlu0 %v1802, 29
      %v1820 = vpop.permute.xlu0 %1819
      %vm1821 = vcmask 236544
      %v1822 = vsel %vm1821, %v1804, %v1806
      %v1823 = vsel %vm1821, %v1806, %v1808
      %v1824 = vsel %vm1821, %v1808, %v1810
      %v1825 = vsel %vm1821, %v1810, %v1812
      %v1826 = vsel %vm1821, %v1812, %v1814
      %v1827 = vsel %vm1821, %v1814, %v1816
      %v1828 = vsel %vm1821, %v1816, %v1818
      %v1829 = vsel %vm1821, %v1818, %v1820
      %1838 = vst [vmem:[#allocation2 + $0x180] sm:$0xc0] %v1822
      %1839 = vst [vmem:[#allocation2 + $0x188] sm:$0xc0] %v1823
      %1840 = vst [vmem:[#allocation2 + $0x190] sm:$0xc0] %v1824
      %1841 = vst [vmem:[#allocation2 + $0x198] sm:$0xc0] %v1825
      %1842 = vst [vmem:[#allocation2 + $0x1a0] sm:$0xc0] %v1826
      %1843 = vst [vmem:[#allocation2 + $0x1a8] sm:$0xc0] %v1827
      %1844 = vst [vmem:[#allocation2 + $0x1b0] sm:$0xc0] %v1828
      %1845 = vst [vmem:[#allocation2 + $0x1b8] sm:$0xc0] %v1829
      %1846 = vst [vmem:[#allocation2 + $0x1c0] sm:$0x1] %v1822
      %1847 = vst [vmem:[#allocation2 + $0x1c8] sm:$0x1] %v1823
      %1848 = vst [vmem:[#allocation2 + $0x1d0] sm:$0x1] %v1824
      %1849 = vst [vmem:[#allocation2 + $0x1d8] sm:$0x1] %v1825
      %1850 = vst [vmem:[#allocation2 + $0x1e0] sm:$0x1] %v1826
      %1851 = vst [vmem:[#allocation2 + $0x1e8] sm:$0x1] %v1827
      %1852 = vst [vmem:[#allocation2 + $0x1f0] sm:$0x1] %v1828
      %1853 = vst [vmem:[#allocation2 + $0x1f8] sm:$0x1] %v1829
      %v1854 = vld [vmem:[%s381] sm:$0x77]
      %v1855 = vld [vmem:[%s381 + $0x8] sm:$0x77]
      %v1856 = vld [vmem:[%s381 + $0x10] sm:$0x77]
      %v1857 = vld [vmem:[%s381 + $0x18] sm:$0x77]
      %v1858 = vld [vmem:[%s381 + $0x20] sm:$0x7]
      %1864 = vst [vmem:[#allocation1] ss:$2 sm:$0xff] %v1854
      %s1865 = scalar_lea.vmem [#allocation1], 16
      %1866 = vst [vmem:[%s1865] ss:$2 sm:$0xff] %v1855
      %s1867 = scalar_lea.vmem [#allocation1], 32
      %1868 = vst [vmem:[%s1867] ss:$2 sm:$0xff] %v1856
      %s1869 = scalar_lea.vmem [#allocation1], 48
      %1870 = vst [vmem:[%s1869] ss:$2 sm:$0xff] %v1857
      %v1871 = vld.sshfl [vmem:[#allocation1] sm:$0xff pattern:$0x75316420]
      %v1872 = vld.sshfl [vmem:[#allocation1 + $0x8] sm:$0xff pattern:$0x75316420]
      %v1873 = vld.sshfl [vmem:[#allocation1 + $0x10] sm:$0xff pattern:$0x75316420]
      %v1874 = vld.sshfl [vmem:[#allocation1 + $0x18] sm:$0xff pattern:$0x75316420]
      %v1875 = vld.sshfl [vmem:[#allocation1 + $0x20] sm:$0xff pattern:$0x75316420]
      %v1876 = vld.sshfl [vmem:[#allocation1 + $0x28] sm:$0xff pattern:$0x75316420]
      %v1877 = vld.sshfl [vmem:[#allocation1 + $0x30] sm:$0xff pattern:$0x75316420]
      %v1878 = vld.sshfl [vmem:[#allocation1 + $0x38] sm:$0xff pattern:$0x75316420]
      %1879 = vst [vmem:[#allocation1] ss:$2 sm:$0xff] %v1858
      %v1880 = vld.sshfl [vmem:[#allocation1] sm:$0xff pattern:$0x75316420]
      %v1881 = vrot.slane %v1871, 7
      %v1882 = vrot.slane %v1872, 7
      %v1883 = vrot.slane %v1873, 7
      %v1884 = vrot.slane %v1874, 7
      %v1885 = vrot.slane %v1875, 7
      %v1886 = vrot.slane %v1876, 7
      %v1887 = vrot.slane %v1877, 7
      %v1888 = vrot.slane %v1878, 7
      %v1889 = vrot.slane %v1880, 7
      %1890 = vrot.lane.b32.xlu0 %v1881, 28
      %v1891 = vpop.permute.xlu0 %1890
      %1892 = vrot.lane.b32.xlu0 %v1882, 28
      %v1893 = vpop.permute.xlu0 %1892
      %1894 = vrot.lane.b32.xlu0 %v1883, 28
      %v1895 = vpop.permute.xlu0 %1894
      %1896 = vrot.lane.b32.xlu0 %v1884, 28
      %v1897 = vpop.permute.xlu0 %1896
      %1898 = vrot.lane.b32.xlu0 %v1885, 28
      %v1899 = vpop.permute.xlu0 %1898
      %1900 = vrot.lane.b32.xlu0 %v1886, 28
      %v1901 = vpop.permute.xlu0 %1900
      %1902 = vrot.lane.b32.xlu0 %v1887, 28
      %v1903 = vpop.permute.xlu0 %1902
      %1904 = vrot.lane.b32.xlu0 %v1888, 28
      %v1905 = vpop.permute.xlu0 %1904
      %1906 = vrot.lane.b32.xlu0 %v1889, 28
      %v1907 = vpop.permute.xlu0 %1906
      %vm1908 = vcmask 228352
      %v1909 = vsel %vm1908, %v1891, %v1893
      %v1910 = vsel %vm1908, %v1893, %v1895
      %v1911 = vsel %vm1908, %v1895, %v1897
      %v1912 = vsel %vm1908, %v1897, %v1899
      %v1913 = vsel %vm1908, %v1899, %v1901
      %v1914 = vsel %vm1908, %v1901, %v1903
      %v1915 = vsel %vm1908, %v1903, %v1905
      %v1916 = vsel %vm1908, %v1905, %v1907
      %1925 = vst [vmem:[#allocation2 + $0x1c0] sm:$0xe] %v1909
      %1926 = vst [vmem:[#allocation2 + $0x1c8] sm:$0xe] %v1910
      %1927 = vst [vmem:[#allocation2 + $0x1d0] sm:$0xe] %v1911
      %1928 = vst [vmem:[#allocation2 + $0x1d8] sm:$0xe] %v1912
      %1929 = vst [vmem:[#allocation2 + $0x1e0] sm:$0xe] %v1913
      %1930 = vst [vmem:[#allocation2 + $0x1e8] sm:$0xe] %v1914
      %1931 = vst [vmem:[#allocation2 + $0x1f0] sm:$0xe] %v1915
      %1932 = vst [vmem:[#allocation2 + $0x1f8] sm:$0xe] %v1916
      %v1933 = vld [vmem:[%s381 + $0x4] sm:$0x77]
      %v1934 = vld [vmem:[%s381 + $0xc] sm:$0x77]
      %v1935 = vld [vmem:[%s381 + $0x14] sm:$0x77]
      %v1936 = vld [vmem:[%s381 + $0x1c] sm:$0x77]
      %s1941 = scalar_lea.vmem [#allocation1], 1
      %1942 = vst [vmem:[%s1941] ss:$2 sm:$0xff] %v1933
      %s1943 = scalar_lea.vmem [#allocation1], 17
      %1944 = vst [vmem:[%s1943] ss:$2 sm:$0xff] %v1934
      %s1945 = scalar_lea.vmem [#allocation1], 33
      %1946 = vst [vmem:[%s1945] ss:$2 sm:$0xff] %v1935
      %s1947 = scalar_lea.vmem [#allocation1], 49
      %1948 = vst [vmem:[%s1947] ss:$2 sm:$0xff] %v1936
      %v1949 = vld.sshfl [vmem:[#allocation1] sm:$0xff pattern:$0x75316420]
      %v1950 = vld.sshfl [vmem:[#allocation1 + $0x8] sm:$0xff pattern:$0x75316420]
      %v1951 = vld.sshfl [vmem:[#allocation1 + $0x10] sm:$0xff pattern:$0x75316420]
      %v1952 = vld.sshfl [vmem:[#allocation1 + $0x18] sm:$0xff pattern:$0x75316420]
      %v1953 = vld.sshfl [vmem:[#allocation1 + $0x20] sm:$0xff pattern:$0x75316420]
      %v1954 = vld.sshfl [vmem:[#allocation1 + $0x28] sm:$0xff pattern:$0x75316420]
      %v1955 = vld.sshfl [vmem:[#allocation1 + $0x30] sm:$0xff pattern:$0x75316420]
      %v1956 = vld.sshfl [vmem:[#allocation1 + $0x38] sm:$0xff pattern:$0x75316420]
      %1965 = vst [vmem:[#allocation2 + $0x1c0] sm:$0x70] %v1949
      %1966 = vst [vmem:[#allocation2 + $0x1c8] sm:$0x70] %v1950
      %1967 = vst [vmem:[#allocation2 + $0x1d0] sm:$0x70] %v1951
      %1968 = vst [vmem:[#allocation2 + $0x1d8] sm:$0x70] %v1952
      %1969 = vst [vmem:[#allocation2 + $0x1e0] sm:$0x70] %v1953
      %1970 = vst [vmem:[#allocation2 + $0x1e8] sm:$0x70] %v1954
      %1971 = vst [vmem:[#allocation2 + $0x1f0] sm:$0x70] %v1955
      %1972 = vst [vmem:[#allocation2 + $0x1f8] sm:$0x70] %v1956
      %v1973 = vld [vmem:[%s381 + $0x4] sm:$0x77]
      %v1974 = vld [vmem:[%s381 + $0xc] sm:$0x77]
      %v1975 = vld [vmem:[%s381 + $0x14] sm:$0x77]
      %v1976 = vld [vmem:[%s381 + $0x1c] sm:$0x77]
      %v1977 = vld [vmem:[%s381 + $0x24] sm:$0x7]
      %1983 = vst [vmem:[#allocation1] ss:$2 sm:$0xff] %v1973
      %s1984 = scalar_lea.vmem [#allocation1], 16
      %1985 = vst [vmem:[%s1984] ss:$2 sm:$0xff] %v1974
      %s1986 = scalar_lea.vmem [#allocation1], 32
      %1987 = vst [vmem:[%s1986] ss:$2 sm:$0xff] %v1975
      %s1988 = scalar_lea.vmem [#allocation1], 48
      %1989 = vst [vmem:[%s1988] ss:$2 sm:$0xff] %v1976
      %v1990 = vld.sshfl [vmem:[#allocation1] sm:$0xff pattern:$0x75316420]
      %v1991 = vld.sshfl [vmem:[#allocation1 + $0x8] sm:$0xff pattern:$0x75316420]
      %v1992 = vld.sshfl [vmem:[#allocation1 + $0x10] sm:$0xff pattern:$0x75316420]
      %v1993 = vld.sshfl [vmem:[#allocation1 + $0x18] sm:$0xff pattern:$0x75316420]
      %v1994 = vld.sshfl [vmem:[#allocation1 + $0x20] sm:$0xff pattern:$0x75316420]
      %v1995 = vld.sshfl [vmem:[#allocation1 + $0x28] sm:$0xff pattern:$0x75316420]
      %v1996 = vld.sshfl [vmem:[#allocation1 + $0x30] sm:$0xff pattern:$0x75316420]
      %v1997 = vld.sshfl [vmem:[#allocation1 + $0x38] sm:$0xff pattern:$0x75316420]
      %1998 = vst [vmem:[#allocation1] ss:$2 sm:$0xff] %v1977
      %v1999 = vld.sshfl [vmem:[#allocation1] sm:$0xff pattern:$0x75316420]
      %v2000 = vrot.slane %v1990, 1
      %v2001 = vrot.slane %v1991, 1
      %v2002 = vrot.slane %v1992, 1
      %v2003 = vrot.slane %v1993, 1
      %v2004 = vrot.slane %v1994, 1
      %v2005 = vrot.slane %v1995, 1
      %v2006 = vrot.slane %v1996, 1
      %v2007 = vrot.slane %v1997, 1
      %v2008 = vrot.slane %v1999, 1
      %2009 = vrot.lane.b32.xlu0 %v2000, 127
      %v2010 = vpop.permute.xlu0 %2009
      %2011 = vrot.lane.b32.xlu0 %v2001, 127
      %v2012 = vpop.permute.xlu0 %2011
      %2013 = vrot.lane.b32.xlu0 %v2002, 127
      %v2014 = vpop.permute.xlu0 %2013
      %2015 = vrot.lane.b32.xlu0 %v2003, 127
      %v2016 = vpop.permute.xlu0 %2015
      %2017 = vrot.lane.b32.xlu0 %v2004, 127
      %v2018 = vpop.permute.xlu0 %2017
      %2019 = vrot.lane.b32.xlu0 %v2005, 127
      %v2020 = vpop.permute.xlu0 %2019
      %2021 = vrot.lane.b32.xlu0 %v2006, 127
      %v2022 = vpop.permute.xlu0 %2021
      %2023 = vrot.lane.b32.xlu0 %v2007, 127
      %v2024 = vpop.permute.xlu0 %2023
      %2025 = vrot.lane.b32.xlu0 %v2008, 127
      %v2026 = vpop.permute.xlu0 %2025
      %v2027 = vsel %vm480, %v2010, %v2012
      %v2028 = vsel %vm480, %v2012, %v2014
      %v2029 = vsel %vm480, %v2014, %v2016
      %v2030 = vsel %vm480, %v2016, %v2018
      %v2031 = vsel %vm480, %v2018, %v2020
      %v2032 = vsel %vm480, %v2020, %v2022
      %v2033 = vsel %vm480, %v2022, %v2024
      %v2034 = vsel %vm480, %v2024, %v2026
      %2043 = vst [vmem:[#allocation2 + $0x1c0] sm:$0x80] %v2027
      %2044 = vst [vmem:[#allocation2 + $0x1c8] sm:$0x80] %v2028
      %2045 = vst [vmem:[#allocation2 + $0x1d0] sm:$0x80] %v2029
      %2046 = vst [vmem:[#allocation2 + $0x1d8] sm:$0x80] %v2030
      %2047 = vst [vmem:[#allocation2 + $0x1e0] sm:$0x80] %v2031
      %2048 = vst [vmem:[#allocation2 + $0x1e8] sm:$0x80] %v2032
      %2049 = vst [vmem:[#allocation2 + $0x1f0] sm:$0x80] %v2033
      %2050 = vst [vmem:[#allocation2 + $0x1f8] sm:$0x80] %v2034
      %2051 = vst [vmem:[#allocation2 + $0x200] sm:$0x3] %v2027
      %2052 = vst [vmem:[#allocation2 + $0x208] sm:$0x3] %v2028
      %2053 = vst [vmem:[#allocation2 + $0x210] sm:$0x3] %v2029
      %2054 = vst [vmem:[#allocation2 + $0x218] sm:$0x3] %v2030
      %2055 = vst [vmem:[#allocation2 + $0x220] sm:$0x3] %v2031
      %2056 = vst [vmem:[#allocation2 + $0x228] sm:$0x3] %v2032
      %2057 = vst [vmem:[#allocation2 + $0x230] sm:$0x3] %v2033
      %2058 = vst [vmem:[#allocation2 + $0x238] sm:$0x3] %v2034
      %v2059 = vld [vmem:[%s381 + $0x4] sm:$0x77]
      %v2060 = vld [vmem:[%s381 + $0xc] sm:$0x77]
      %v2061 = vld [vmem:[%s381 + $0x14] sm:$0x77]
      %v2062 = vld [vmem:[%s381 + $0x1c] sm:$0x77]
      %v2063 = vld [vmem:[%s381 + $0x24] sm:$0x7]
      %2069 = vst [vmem:[#allocation1] ss:$2 sm:$0xff] %v2059
      %s2070 = scalar_lea.vmem [#allocation1], 16
      %2071 = vst [vmem:[%s2070] ss:$2 sm:$0xff] %v2060
      %s2072 = scalar_lea.vmem [#allocation1], 32
      %2073 = vst [vmem:[%s2072] ss:$2 sm:$0xff] %v2061
      %s2074 = scalar_lea.vmem [#allocation1], 48
      %2075 = vst [vmem:[%s2074] ss:$2 sm:$0xff] %v2062
      %v2076 = vld.sshfl [vmem:[#allocation1] sm:$0xff pattern:$0x75316420]
      %v2077 = vld.sshfl [vmem:[#allocation1 + $0x8] sm:$0xff pattern:$0x75316420]
      %v2078 = vld.sshfl [vmem:[#allocation1 + $0x10] sm:$0xff pattern:$0x75316420]
      %v2079 = vld.sshfl [vmem:[#allocation1 + $0x18] sm:$0xff pattern:$0x75316420]
      %v2080 = vld.sshfl [vmem:[#allocation1 + $0x20] sm:$0xff pattern:$0x75316420]
      %v2081 = vld.sshfl [vmem:[#allocation1 + $0x28] sm:$0xff pattern:$0x75316420]
      %v2082 = vld.sshfl [vmem:[#allocation1 + $0x30] sm:$0xff pattern:$0x75316420]
      %v2083 = vld.sshfl [vmem:[#allocation1 + $0x38] sm:$0xff pattern:$0x75316420]
      %2084 = vst [vmem:[#allocation1] ss:$2 sm:$0xff] %v2063
      %v2085 = vld.sshfl [vmem:[#allocation1] sm:$0xff pattern:$0x75316420]
      %v2086 = vrot.slane %v2076, 6
      %v2087 = vrot.slane %v2077, 6
      %v2088 = vrot.slane %v2078, 6
      %v2089 = vrot.slane %v2079, 6
      %v2090 = vrot.slane %v2080, 6
      %v2091 = vrot.slane %v2081, 6
      %v2092 = vrot.slane %v2082, 6
      %v2093 = vrot.slane %v2083, 6
      %v2094 = vrot.slane %v2085, 6
      %2095 = vrot.lane.b32.xlu0 %v2086, 126
      %v2096 = vpop.permute.xlu0 %2095
      %2097 = vrot.lane.b32.xlu0 %v2087, 126
      %v2098 = vpop.permute.xlu0 %2097
      %2099 = vrot.lane.b32.xlu0 %v2088, 126
      %v2100 = vpop.permute.xlu0 %2099
      %2101 = vrot.lane.b32.xlu0 %v2089, 126
      %v2102 = vpop.permute.xlu0 %2101
      %2103 = vrot.lane.b32.xlu0 %v2090, 126
      %v2104 = vpop.permute.xlu0 %2103
      %2105 = vrot.lane.b32.xlu0 %v2091, 126
      %v2106 = vpop.permute.xlu0 %2105
      %2107 = vrot.lane.b32.xlu0 %v2092, 126
      %v2108 = vpop.permute.xlu0 %2107
      %2109 = vrot.lane.b32.xlu0 %v2093, 126
      %v2110 = vpop.permute.xlu0 %2109
      %2111 = vrot.lane.b32.xlu0 %v2094, 126
      %v2112 = vpop.permute.xlu0 %2111
      %v2113 = vsel %vm559, %v2096, %v2098
      %v2114 = vsel %vm559, %v2098, %v2100
      %v2115 = vsel %vm559, %v2100, %v2102
      %v2116 = vsel %vm559, %v2102, %v2104
      %v2117 = vsel %vm559, %v2104, %v2106
      %v2118 = vsel %vm559, %v2106, %v2108
      %v2119 = vsel %vm559, %v2108, %v2110
      %v2120 = vsel %vm559, %v2110, %v2112
      %2129 = vst [vmem:[#allocation2 + $0x200] sm:$0x1c] %v2113
      %2130 = vst [vmem:[#allocation2 + $0x208] sm:$0x1c] %v2114
      %2131 = vst [vmem:[#allocation2 + $0x210] sm:$0x1c] %v2115
      %2132 = vst [vmem:[#allocation2 + $0x218] sm:$0x1c] %v2116
      %2133 = vst [vmem:[#allocation2 + $0x220] sm:$0x1c] %v2117
      %2134 = vst [vmem:[#allocation2 + $0x228] sm:$0x1c] %v2118
      %2135 = vst [vmem:[#allocation2 + $0x230] sm:$0x1c] %v2119
      %2136 = vst [vmem:[#allocation2 + $0x238] sm:$0x1c] %v2120
      %v2137 = vld [vmem:[%s381 + $0x4] sm:$0x77]
      %v2138 = vld [vmem:[%s381 + $0xc] sm:$0x77]
      %v2139 = vld [vmem:[%s381 + $0x14] sm:$0x77]
      %v2140 = vld [vmem:[%s381 + $0x1c] sm:$0x77]
      %v2141 = vld [vmem:[%s381 + $0x24] sm:$0x7]
      %2147 = vst [vmem:[#allocation1] ss:$2 sm:$0xff] %v2137
      %s2148 = scalar_lea.vmem [#allocation1], 16
      %2149 = vst [vmem:[%s2148] ss:$2 sm:$0xff] %v2138
      %s2150 = scalar_lea.vmem [#allocation1], 32
      %2151 = vst [vmem:[%s2150] ss:$2 sm:$0xff] %v2139
      %s2152 = scalar_lea.vmem [#allocation1], 48
      %2153 = vst [vmem:[%s2152] ss:$2 sm:$0xff] %v2140
      %v2154 = vld.sshfl [vmem:[#allocation1] sm:$0xff pattern:$0x75316420]
      %v2155 = vld.sshfl [vmem:[#allocation1 + $0x8] sm:$0xff pattern:$0x75316420]
      %v2156 = vld.sshfl [vmem:[#allocation1 + $0x10] sm:$0xff pattern:$0x75316420]
      %v2157 = vld.sshfl [vmem:[#allocation1 + $0x18] sm:$0xff pattern:$0x75316420]
      %v2158 = vld.sshfl [vmem:[#allocation1 + $0x20] sm:$0xff pattern:$0x75316420]
      %v2159 = vld.sshfl [vmem:[#allocation1 + $0x28] sm:$0xff pattern:$0x75316420]
      %v2160 = vld.sshfl [vmem:[#allocation1 + $0x30] sm:$0xff pattern:$0x75316420]
      %v2161 = vld.sshfl [vmem:[#allocation1 + $0x38] sm:$0xff pattern:$0x75316420]
      %2162 = vst [vmem:[#allocation1] ss:$2 sm:$0xff] %v2141
      %v2163 = vld.sshfl [vmem:[#allocation1] sm:$0xff pattern:$0x75316420]
      %v2164 = vrot.slane %v2154, 3
      %v2165 = vrot.slane %v2155, 3
      %v2166 = vrot.slane %v2156, 3
      %v2167 = vrot.slane %v2157, 3
      %v2168 = vrot.slane %v2158, 3
      %v2169 = vrot.slane %v2159, 3
      %v2170 = vrot.slane %v2160, 3
      %v2171 = vrot.slane %v2161, 3
      %v2172 = vrot.slane %v2163, 3
      %2173 = vrot.lane.b32.xlu0 %v2164, 125
      %v2174 = vpop.permute.xlu0 %2173
      %2175 = vrot.lane.b32.xlu0 %v2165, 125
      %v2176 = vpop.permute.xlu0 %2175
      %2177 = vrot.lane.b32.xlu0 %v2166, 125
      %v2178 = vpop.permute.xlu0 %2177
      %2179 = vrot.lane.b32.xlu0 %v2167, 125
      %v2180 = vpop.permute.xlu0 %2179
      %2181 = vrot.lane.b32.xlu0 %v2168, 125
      %v2182 = vpop.permute.xlu0 %2181
      %2183 = vrot.lane.b32.xlu0 %v2169, 125
      %v2184 = vpop.permute.xlu0 %2183
      %2185 = vrot.lane.b32.xlu0 %v2170, 125
      %v2186 = vpop.permute.xlu0 %2185
      %2187 = vrot.lane.b32.xlu0 %v2171, 125
      %v2188 = vpop.permute.xlu0 %2187
      %2189 = vrot.lane.b32.xlu0 %v2172, 125
      %v2190 = vpop.permute.xlu0 %2189
      %v2191 = vsel %vm646, %v2174, %v2176
      %v2192 = vsel %vm646, %v2176, %v2178
      %v2193 = vsel %vm646, %v2178, %v2180
      %v2194 = vsel %vm646, %v2180, %v2182
      %v2195 = vsel %vm646, %v2182, %v2184
      %v2196 = vsel %vm646, %v2184, %v2186
      %v2197 = vsel %vm646, %v2186, %v2188
      %v2198 = vsel %vm646, %v2188, %v2190
      %2207 = vst [vmem:[#allocation2 + $0x200] sm:$0xe0] %v2191
      %2208 = vst [vmem:[#allocation2 + $0x208] sm:$0xe0] %v2192
      %2209 = vst [vmem:[#allocation2 + $0x210] sm:$0xe0] %v2193
      %2210 = vst [vmem:[#allocation2 + $0x218] sm:$0xe0] %v2194
      %2211 = vst [vmem:[#allocation2 + $0x220] sm:$0xe0] %v2195
      %2212 = vst [vmem:[#allocation2 + $0x228] sm:$0xe0] %v2196
      %2213 = vst [vmem:[#allocation2 + $0x230] sm:$0xe0] %v2197
      %2214 = vst [vmem:[#allocation2 + $0x238] sm:$0xe0] %v2198
      %v2215 = vld [vmem:[%s381 + $0x4] sm:$0x77]
      %v2216 = vld [vmem:[%s381 + $0xc] sm:$0x77]
      %v2217 = vld [vmem:[%s381 + $0x14] sm:$0x77]
      %v2218 = vld [vmem:[%s381 + $0x1c] sm:$0x77]
      %v2219 = vld [vmem:[%s381 + $0x24] sm:$0x7]
      %2225 = vst [vmem:[#allocation1] ss:$2 sm:$0xff] %v2215
      %s2226 = scalar_lea.vmem [#allocation1], 16
      %2227 = vst [vmem:[%s2226] ss:$2 sm:$0xff] %v2216
      %s2228 = scalar_lea.vmem [#allocation1], 32
      %2229 = vst [vmem:[%s2228] ss:$2 sm:$0xff] %v2217
      %s2230 = scalar_lea.vmem [#allocation1], 48
      %2231 = vst [vmem:[%s2230] ss:$2 sm:$0xff] %v2218
      %v2232 = vld.sshfl [vmem:[#allocation1] sm:$0xff pattern:$0x75316420]
      %v2233 = vld.sshfl [vmem:[#allocation1 + $0x8] sm:$0xff pattern:$0x75316420]
      %v2234 = vld.sshfl [vmem:[#allocation1 + $0x10] sm:$0xff pattern:$0x75316420]
      %v2235 = vld.sshfl [vmem:[#allocation1 + $0x18] sm:$0xff pattern:$0x75316420]
      %v2236 = vld.sshfl [vmem:[#allocation1 + $0x20] sm:$0xff pattern:$0x75316420]
      %v2237 = vld.sshfl [vmem:[#allocation1 + $0x28] sm:$0xff pattern:$0x75316420]
      %v2238 = vld.sshfl [vmem:[#allocation1 + $0x30] sm:$0xff pattern:$0x75316420]
      %v2239 = vld.sshfl [vmem:[#allocation1 + $0x38] sm:$0xff pattern:$0x75316420]
      %2240 = vst [vmem:[#allocation1] ss:$2 sm:$0xff] %v2219
      %v2241 = vld.sshfl [vmem:[#allocation1] sm:$0xff pattern:$0x75316420]
      %2242 = vrot.lane.b32.xlu0 %v2232, 124
      %v2243 = vpop.permute.xlu0 %2242
      %2244 = vrot.lane.b32.xlu0 %v2233, 124
      %v2245 = vpop.permute.xlu0 %2244
      %2246 = vrot.lane.b32.xlu0 %v2234, 124
      %v2247 = vpop.permute.xlu0 %2246
      %2248 = vrot.lane.b32.xlu0 %v2235, 124
      %v2249 = vpop.permute.xlu0 %2248
      %2250 = vrot.lane.b32.xlu0 %v2236, 124
      %v2251 = vpop.permute.xlu0 %2250
      %2252 = vrot.lane.b32.xlu0 %v2237, 124
      %v2253 = vpop.permute.xlu0 %2252
      %2254 = vrot.lane.b32.xlu0 %v2238, 124
      %v2255 = vpop.permute.xlu0 %2254
      %2256 = vrot.lane.b32.xlu0 %v2239, 124
      %v2257 = vpop.permute.xlu0 %2256
      %2258 = vrot.lane.b32.xlu0 %v2241, 124
      %v2259 = vpop.permute.xlu0 %2258
      %v2260 = vsel %vm717, %v2243, %v2245
      %v2261 = vsel %vm717, %v2245, %v2247
      %v2262 = vsel %vm717, %v2247, %v2249
      %v2263 = vsel %vm717, %v2249, %v2251
      %v2264 = vsel %vm717, %v2251, %v2253
      %v2265 = vsel %vm717, %v2253, %v2255
      %v2266 = vsel %vm717, %v2255, %v2257
      %v2267 = vsel %vm717, %v2257, %v2259
      %2276 = vst [vmem:[#allocation2 + $0x240] sm:$0x7] %v2260
      %2277 = vst [vmem:[#allocation2 + $0x248] sm:$0x7] %v2261
      %2278 = vst [vmem:[#allocation2 + $0x250] sm:$0x7] %v2262
      %2279 = vst [vmem:[#allocation2 + $0x258] sm:$0x7] %v2263
      %2280 = vst [vmem:[#allocation2 + $0x260] sm:$0x7] %v2264
      %2281 = vst [vmem:[#allocation2 + $0x268] sm:$0x7] %v2265
      %2282 = vst [vmem:[#allocation2 + $0x270] sm:$0x7] %v2266
      %2283 = vst [vmem:[#allocation2 + $0x278] sm:$0x7] %v2267
      %v2284 = vld [vmem:[%s1] sm:$0x3f]
      %v2285 = vld [vmem:[#allocation2] sm:$0xff]
      %v2286 = vld [vmem:[#allocation2 + $0x8] sm:$0xff]
      %v2287 = vld [vmem:[#allocation2 + $0x10] sm:$0xff]
      %v2288 = vld [vmem:[#allocation2 + $0x18] sm:$0xff]
      %v2289 = vld [vmem:[#allocation2 + $0x20] sm:$0xff]
      %v2290 = vld [vmem:[#allocation2 + $0x28] sm:$0xff]
      %v2291 = vld [vmem:[#allocation2 + $0x30] sm:$0xff]
      %v2292 = vld [vmem:[#allocation2 + $0x38] sm:$0xff]
      %v2293 = vld [vmem:[#allocation2 + $0x40] sm:$0xff]
      %v2294 = vld [vmem:[#allocation2 + $0x48] sm:$0xff]
      %v2295 = vld [vmem:[#allocation2 + $0x50] sm:$0xff]
      %v2296 = vld [vmem:[#allocation2 + $0x58] sm:$0xff]
      %v2297 = vld [vmem:[#allocation2 + $0x60] sm:$0xff]
      %v2298 = vld [vmem:[#allocation2 + $0x68] sm:$0xff]
      %v2299 = vld [vmem:[#allocation2 + $0x70] sm:$0xff]
      %v2300 = vld [vmem:[#allocation2 + $0x78] sm:$0xff]
      %v2301 = vld [vmem:[#allocation2 + $0x80] sm:$0xff]
      %v2302 = vld [vmem:[#allocation2 + $0x88] sm:$0xff]
      %v2303 = vld [vmem:[#allocation2 + $0x90] sm:$0xff]
      %v2304 = vld [vmem:[#allocation2 + $0x98] sm:$0xff]
      %v2305 = vld [vmem:[#allocation2 + $0xa0] sm:$0xff]
      %v2306 = vld [vmem:[#allocation2 + $0xa8] sm:$0xff]
      %v2307 = vld [vmem:[#allocation2 + $0xb0] sm:$0xff]
      %v2308 = vld [vmem:[#allocation2 + $0xb8] sm:$0xff]
      %v2309 = vld [vmem:[#allocation2 + $0xc0] sm:$0xff]
      %v2310 = vld [vmem:[#allocation2 + $0xc8] sm:$0xff]
      %v2311 = vld [vmem:[#allocation2 + $0xd0] sm:$0xff]
      %v2312 = vld [vmem:[#allocation2 + $0xd8] sm:$0xff]
      %v2313 = vld [vmem:[#allocation2 + $0xe0] sm:$0xff]
      %v2314 = vld [vmem:[#allocation2 + $0xe8] sm:$0xff]
      %v2315 = vld [vmem:[#allocation2 + $0xf0] sm:$0xff]
      %v2316 = vld [vmem:[#allocation2 + $0xf8] sm:$0xff]
      %v2317 = vld [vmem:[#allocation2 + $0x100] sm:$0xff]
      %v2318 = vld [vmem:[#allocation2 + $0x108] sm:$0xff]
      %v2319 = vld [vmem:[#allocation2 + $0x110] sm:$0xff]
      %v2320 = vld [vmem:[#allocation2 + $0x118] sm:$0xff]
      %v2321 = vld [vmem:[#allocation2 + $0x120] sm:$0xff]
      %v2322 = vld [vmem:[#allocation2 + $0x128] sm:$0xff]
      %v2323 = vld [vmem:[#allocation2 + $0x130] sm:$0xff]
      %v2324 = vld [vmem:[#allocation2 + $0x138] sm:$0xff]
      %v2325 = vld [vmem:[#allocation2 + $0x140] sm:$0xff]
      %v2326 = vld [vmem:[#allocation2 + $0x148] sm:$0xff]
      %v2327 = vld [vmem:[#allocation2 + $0x150] sm:$0xff]
      %v2328 = vld [vmem:[#allocation2 + $0x158] sm:$0xff]
      %v2329 = vld [vmem:[#allocation2 + $0x160] sm:$0xff]
      %v2330 = vld [vmem:[#allocation2 + $0x168] sm:$0xff]
      %v2331 = vld [vmem:[#allocation2 + $0x170] sm:$0xff]
      %v2332 = vld [vmem:[#allocation2 + $0x178] sm:$0xff]
      %v2333 = vld [vmem:[#allocation2 + $0x180] sm:$0xff]
      %v2334 = vld [vmem:[#allocation2 + $0x188] sm:$0xff]
      %v2335 = vld [vmem:[#allocation2 + $0x190] sm:$0xff]
      %v2336 = vld [vmem:[#allocation2 + $0x198] sm:$0xff]
      %v2337 = vld [vmem:[#allocation2 + $0x1a0] sm:$0xff]
      %v2338 = vld [vmem:[#allocation2 + $0x1a8] sm:$0xff]
      %v2339 = vld [vmem:[#allocation2 + $0x1b0] sm:$0xff]
      %v2340 = vld [vmem:[#allocation2 + $0x1b8] sm:$0xff]
      %v2341 = vld [vmem:[#allocation2 + $0x1c0] sm:$0xff]
      %v2342 = vld [vmem:[#allocation2 + $0x1c8] sm:$0xff]
      %v2343 = vld [vmem:[#allocation2 + $0x1d0] sm:$0xff]
      %v2344 = vld [vmem:[#allocation2 + $0x1d8] sm:$0xff]
      %v2345 = vld [vmem:[#allocation2 + $0x1e0] sm:$0xff]
      %v2346 = vld [vmem:[#allocation2 + $0x1e8] sm:$0xff]
      %v2347 = vld [vmem:[#allocation2 + $0x1f0] sm:$0xff]
      %v2348 = vld [vmem:[#allocation2 + $0x1f8] sm:$0xff]
      %v2349 = vld [vmem:[#allocation2 + $0x200] sm:$0xff]
      %v2350 = vld [vmem:[#allocation2 + $0x208] sm:$0xff]
      %v2351 = vld [vmem:[#allocation2 + $0x210] sm:$0xff]
      %v2352 = vld [vmem:[#allocation2 + $0x218] sm:$0xff]
      %v2353 = vld [vmem:[#allocation2 + $0x220] sm:$0xff]
      %v2354 = vld [vmem:[#allocation2 + $0x228] sm:$0xff]
      %v2355 = vld [vmem:[#allocation2 + $0x230] sm:$0xff]
      %v2356 = vld [vmem:[#allocation2 + $0x238] sm:$0xff]
      %v2357 = vld [vmem:[#allocation2 + $0x240] sm:$0x7]
      %v2358 = vld [vmem:[#allocation2 + $0x248] sm:$0x7]
      %v2359 = vld [vmem:[#allocation2 + $0x250] sm:$0x7]
      %v2360 = vld [vmem:[#allocation2 + $0x258] sm:$0x7]
      %v2361 = vld [vmem:[#allocation2 + $0x260] sm:$0x7]
      %v2362 = vld [vmem:[#allocation2 + $0x268] sm:$0x7]
      %v2363 = vld [vmem:[#allocation2 + $0x270] sm:$0x7]
      %v2364 = vld [vmem:[#allocation2 + $0x278] sm:$0x7]
      %v2365 = vld [vmem:[%s2] sm:$0x3f]
      %2367 = vset.pattern.permute.xlu0 0
      %2368 = vperm.xlu0 %2367, %v2365
      %v2369 = vpop.permute.xlu0 %2368
      %vm2371 = vcmask 613376
      %v2373 = vsel %vm2371, %v2284, 0
      %vm2375 = vcmask 1042432
      %v2377 = vsel %vm2375, %v2357, 0
      %v2380 = vsel %vm2375, %v2358, 0
      %v2383 = vsel %vm2375, %v2359, 0
      %v2386 = vsel %vm2375, %v2360, 0
      %v2389 = vsel %vm2375, %v2361, 0
      %v2392 = vsel %vm2375, %v2362, 0
      %v2395 = vsel %vm2375, %v2363, 0
      %v2398 = vsel %vm2375, %v2364, 0
      %2400 = vmatpush.msra.mxu0 0.0
      %2401 = vmatpush.msra.mxu0 0.0
      %2402 = vmatpush.msra.mxu0 0.0
      %2403 = vmatpush.msra.mxu0 0.0
      %2404 = vmatpush.msra.mxu0 0.0
      %2405 = vmatpush.msra.mxu0 0.0
      %2406 = vmatpush.msra.mxu0 %v2377
      %2407 = vmatpush.msra.mxu0 %v2349
      %2408 = vmatpush.msra.mxu0 %v2341
      %2409 = vmatpush.msra.mxu0 %v2333
      %2410 = vmatpush.msra.mxu0 %v2325
      %2411 = vmatpush.msra.mxu0 %v2317
      %2412 = vmatpush.msra.mxu0 %v2309
      %2413 = vmatpush.msra.mxu0 %v2301
      %2414 = vmatpush.msra.mxu0 %v2293
      %2415 = vmatpush.msra.mxu0 %v2285
      %2416 = vmatmul.f32.gmra.mxu0 %v2373
      %v2417 = vpop.f32.mrf.mxu0
      %v2418 = vadd.f32 %v2369, %v2417
      %2419 = vdwg.mxu0
      %2420 = vmatpush.msra.mxu0 0.0
      %2421 = vmatpush.msra.mxu0 0.0
      %2422 = vmatpush.msra.mxu0 0.0
      %2423 = vmatpush.msra.mxu0 0.0
      %2424 = vmatpush.msra.mxu0 0.0
      %2425 = vmatpush.msra.mxu0 0.0
      %2426 = vmatpush.msra.mxu0 %v2380
      %2427 = vmatpush.msra.mxu0 %v2350
      %2428 = vmatpush.msra.mxu0 %v2342
      %2429 = vmatpush.msra.mxu0 %v2334
      %2430 = vmatpush.msra.mxu0 %v2326
      %2431 = vmatpush.msra.mxu0 %v2318
      %2432 = vmatpush.msra.mxu0 %v2310
      %2433 = vmatpush.msra.mxu0 %v2302
      %2434 = vmatpush.msra.mxu0 %v2294
      %2435 = vmatpush.msra.mxu0 %v2286
      %2436 = vmatmul.f32.gmra.mxu0 %v2373
      %v2437 = vpop.f32.mrf.mxu0
      %v2438 = vadd.f32 %v2369, %v2437
      %2439 = vdwg.mxu0
      %2440 = vmatpush.msra.mxu0 0.0
      %2441 = vmatpush.msra.mxu0 0.0
      %2442 = vmatpush.msra.mxu0 0.0
      %2443 = vmatpush.msra.mxu0 0.0
      %2444 = vmatpush.msra.mxu0 0.0
      %2445 = vmatpush.msra.mxu0 0.0
      %2446 = vmatpush.msra.mxu0 %v2383
      %2447 = vmatpush.msra.mxu0 %v2351
      %2448 = vmatpush.msra.mxu0 %v2343
      %2449 = vmatpush.msra.mxu0 %v2335
      %2450 = vmatpush.msra.mxu0 %v2327
      %2451 = vmatpush.msra.mxu0 %v2319
      %2452 = vmatpush.msra.mxu0 %v2311
      %2453 = vmatpush.msra.mxu0 %v2303
      %2454 = vmatpush.msra.mxu0 %v2295
      %2455 = vmatpush.msra.mxu0 %v2287
      %2456 = vmatmul.f32.gmra.mxu0 %v2373
      %v2457 = vpop.f32.mrf.mxu0
      %v2458 = vadd.f32 %v2369, %v2457
      %2459 = vdwg.mxu0
      %2460 = vmatpush.msra.mxu0 0.0
      %2461 = vmatpush.msra.mxu0 0.0
      %2462 = vmatpush.msra.mxu0 0.0
      %2463 = vmatpush.msra.mxu0 0.0
      %2464 = vmatpush.msra.mxu0 0.0
      %2465 = vmatpush.msra.mxu0 0.0
      %2466 = vmatpush.msra.mxu0 %v2386
      %2467 = vmatpush.msra.mxu0 %v2352
      %2468 = vmatpush.msra.mxu0 %v2344
      %2469 = vmatpush.msra.mxu0 %v2336
      %2470 = vmatpush.msra.mxu0 %v2328
      %2471 = vmatpush.msra.mxu0 %v2320
      %2472 = vmatpush.msra.mxu0 %v2312
      %2473 = vmatpush.msra.mxu0 %v2304
      %2474 = vmatpush.msra.mxu0 %v2296
      %2475 = vmatpush.msra.mxu0 %v2288
      %2476 = vmatmul.f32.gmra.mxu0 %v2373
      %v2477 = vpop.f32.mrf.mxu0
      %v2478 = vadd.f32 %v2369, %v2477
      %2479 = vdwg.mxu0
      %2480 = vmatpush.msra.mxu0 0.0
      %2481 = vmatpush.msra.mxu0 0.0
      %2482 = vmatpush.msra.mxu0 0.0
      %2483 = vmatpush.msra.mxu0 0.0
      %2484 = vmatpush.msra.mxu0 0.0
      %2485 = vmatpush.msra.mxu0 0.0
      %2486 = vmatpush.msra.mxu0 %v2389
      %2487 = vmatpush.msra.mxu0 %v2353
      %2488 = vmatpush.msra.mxu0 %v2345
      %2489 = vmatpush.msra.mxu0 %v2337
      %2490 = vmatpush.msra.mxu0 %v2329
      %2491 = vmatpush.msra.mxu0 %v2321
      %2492 = vmatpush.msra.mxu0 %v2313
      %2493 = vmatpush.msra.mxu0 %v2305
      %2494 = vmatpush.msra.mxu0 %v2297
      %2495 = vmatpush.msra.mxu0 %v2289
      %2496 = vmatmul.f32.gmra.mxu0 %v2373
      %v2497 = vpop.f32.mrf.mxu0
      %v2498 = vadd.f32 %v2369, %v2497
      %2499 = vdwg.mxu0
      %2500 = vmatpush.msra.mxu0 0.0
      %2501 = vmatpush.msra.mxu0 0.0
      %2502 = vmatpush.msra.mxu0 0.0
      %2503 = vmatpush.msra.mxu0 0.0
      %2504 = vmatpush.msra.mxu0 0.0
      %2505 = vmatpush.msra.mxu0 0.0
      %2506 = vmatpush.msra.mxu0 %v2392
      %2507 = vmatpush.msra.mxu0 %v2354
      %2508 = vmatpush.msra.mxu0 %v2346
      %2509 = vmatpush.msra.mxu0 %v2338
      %2510 = vmatpush.msra.mxu0 %v2330
      %2511 = vmatpush.msra.mxu0 %v2322
      %2512 = vmatpush.msra.mxu0 %v2314
      %2513 = vmatpush.msra.mxu0 %v2306
      %2514 = vmatpush.msra.mxu0 %v2298
      %2515 = vmatpush.msra.mxu0 %v2290
      %2516 = vmatmul.f32.gmra.mxu0 %v2373
      %v2517 = vpop.f32.mrf.mxu0
      %v2518 = vadd.f32 %v2369, %v2517
      %2519 = vdwg.mxu0
      %2520 = vmatpush.msra.mxu0 0.0
      %2521 = vmatpush.msra.mxu0 0.0
      %2522 = vmatpush.msra.mxu0 0.0
      %2523 = vmatpush.msra.mxu0 0.0
      %2524 = vmatpush.msra.mxu0 0.0
      %2525 = vmatpush.msra.mxu0 0.0
      %2526 = vmatpush.msra.mxu0 %v2395
      %2527 = vmatpush.msra.mxu0 %v2355
      %2528 = vmatpush.msra.mxu0 %v2347
      %2529 = vmatpush.msra.mxu0 %v2339
      %2530 = vmatpush.msra.mxu0 %v2331
      %2531 = vmatpush.msra.mxu0 %v2323
      %2532 = vmatpush.msra.mxu0 %v2315
      %2533 = vmatpush.msra.mxu0 %v2307
      %2534 = vmatpush.msra.mxu0 %v2299
      %2535 = vmatpush.msra.mxu0 %v2291
      %2536 = vmatmul.f32.gmra.mxu0 %v2373
      %v2537 = vpop.f32.mrf.mxu0
      %v2538 = vadd.f32 %v2369, %v2537
      %2539 = vdwg.mxu0
      %2540 = vmatpush.msra.mxu0 0.0
      %2541 = vmatpush.msra.mxu0 0.0
      %2542 = vmatpush.msra.mxu0 0.0
      %2543 = vmatpush.msra.mxu0 0.0
      %2544 = vmatpush.msra.mxu0 0.0
      %2545 = vmatpush.msra.mxu0 0.0
      %2546 = vmatpush.msra.mxu0 %v2398
      %2547 = vmatpush.msra.mxu0 %v2356
      %2548 = vmatpush.msra.mxu0 %v2348
      %2549 = vmatpush.msra.mxu0 %v2340
      %2550 = vmatpush.msra.mxu0 %v2332
      %2551 = vmatpush.msra.mxu0 %v2324
      %2552 = vmatpush.msra.mxu0 %v2316
      %2553 = vmatpush.msra.mxu0 %v2308
      %2554 = vmatpush.msra.mxu0 %v2300
      %2555 = vmatpush.msra.mxu0 %v2292
      %2556 = vmatmul.f32.gmra.mxu0 %v2373
      %v2557 = vpop.f32.mrf.mxu0
      %v2558 = vadd.f32 %v2369, %v2557
      %2559 = vdwg.mxu0
      %v2560 = vtanh.pop %v2418
      %v2561 = vtanh.pop %v2438
      %v2562 = vtanh.pop %v2458
      %v2563 = vtanh.pop %v2478
      %v2564 = vtanh.pop %v2498
      %v2565 = vtanh.pop %v2518
      %v2566 = vtanh.pop %v2538
      %v2567 = vtanh.pop %v2558
      %2568 = vst [vmem:[#allocation3] sm:$0x3f] %v2560
      %2569 = vst [vmem:[#allocation3 + $0x8] sm:$0x3f] %v2561
      %2570 = vst [vmem:[#allocation3 + $0x10] sm:$0x3f] %v2562
      %2571 = vst [vmem:[#allocation3 + $0x18] sm:$0x3f] %v2563
      %2572 = vst [vmem:[#allocation3 + $0x20] sm:$0x3f] %v2564
      %2573 = vst [vmem:[#allocation3 + $0x28] sm:$0x3f] %v2565
      %2574 = vst [vmem:[#allocation3 + $0x30] sm:$0x3f] %v2566
      %2575 = vst [vmem:[#allocation3 + $0x38] sm:$0x3f] %v2567
      %2576 = vst [vmem:[#allocation3 + $0x40] sm:$0x3f] 0.0
      %2577 = vst [vmem:[#allocation3 + $0x48] sm:$0x3f] 0.0
      %2578 = vst [vmem:[#allocation3 + $0x50] sm:$0x3f] 0.0
      %v2579 = vld [vmem:[#allocation3] sm:$0x3f]
      %v2580 = vld [vmem:[#allocation3 + $0x8] sm:$0x3f]
      %v2581 = vld [vmem:[#allocation3 + $0x10] sm:$0x3f]
      %v2582 = vld [vmem:[#allocation3 + $0x18] sm:$0x3f]
      %v2583 = vld [vmem:[#allocation3 + $0x20] sm:$0x3f]
      %v2584 = vld [vmem:[#allocation3 + $0x28] sm:$0x3f]
      %v2585 = vld [vmem:[#allocation3 + $0x30] sm:$0x3f]
      %v2586 = vld [vmem:[#allocation3 + $0x38] sm:$0x3f]
      %v2587 = vld [vmem:[#allocation3 + $0x40] sm:$0x3f]
      %2597 = vrot.lane.b32.xlu0 %v2579, 127
      %v2598 = vpop.permute.xlu0 %2597
      %2599 = vrot.lane.b32.xlu0 %v2580, 127
      %v2600 = vpop.permute.xlu0 %2599
      %2601 = vrot.lane.b32.xlu0 %v2581, 127
      %v2602 = vpop.permute.xlu0 %2601
      %2603 = vrot.lane.b32.xlu0 %v2582, 127
      %v2604 = vpop.permute.xlu0 %2603
      %2605 = vrot.lane.b32.xlu0 %v2583, 127
      %v2606 = vpop.permute.xlu0 %2605
      %2607 = vrot.lane.b32.xlu0 %v2584, 127
      %v2608 = vpop.permute.xlu0 %2607
      %2609 = vrot.lane.b32.xlu0 %v2585, 127
      %v2610 = vpop.permute.xlu0 %2609
      %2611 = vrot.lane.b32.xlu0 %v2586, 127
      %v2612 = vpop.permute.xlu0 %2611
      %2613 = vrot.lane.b32.xlu0 %v2587, 127
      %v2614 = vpop.permute.xlu0 %2613
      %v2615 = vsel %vm480, %v2598, %v2600
      %v2616 = vsel %vm480, %v2600, %v2602
      %v2617 = vsel %vm480, %v2602, %v2604
      %v2618 = vsel %vm480, %v2604, %v2606
      %v2619 = vsel %vm480, %v2606, %v2608
      %v2620 = vsel %vm480, %v2608, %v2610
      %v2621 = vsel %vm480, %v2610, %v2612
      %v2622 = vsel %vm480, %v2612, %v2614
      %v2631 = vmax.f32 %v2579, %v2615
      %v2632 = vmax.f32 %v2580, %v2616
      %v2633 = vmax.f32 %v2581, %v2617
      %v2634 = vmax.f32 %v2582, %v2618
      %v2635 = vmax.f32 %v2583, %v2619
      %v2636 = vmax.f32 %v2584, %v2620
      %v2637 = vmax.f32 %v2585, %v2621
      %v2638 = vmax.f32 %v2586, %v2622
      %v2640 = vmax.f32 %v2587, %v2614
      %2650 = vrot.lane.b32.xlu0 %v2631, 96
      %v2651 = vpop.permute.xlu0 %2650
      %2652 = vrot.lane.b32.xlu0 %v2632, 96
      %v2653 = vpop.permute.xlu0 %2652
      %2654 = vrot.lane.b32.xlu0 %v2633, 96
      %v2655 = vpop.permute.xlu0 %2654
      %2656 = vrot.lane.b32.xlu0 %v2634, 96
      %v2657 = vpop.permute.xlu0 %2656
      %2658 = vrot.lane.b32.xlu0 %v2635, 96
      %v2659 = vpop.permute.xlu0 %2658
      %2660 = vrot.lane.b32.xlu0 %v2636, 96
      %v2661 = vpop.permute.xlu0 %2660
      %2662 = vrot.lane.b32.xlu0 %v2637, 96
      %v2663 = vpop.permute.xlu0 %2662
      %2664 = vrot.lane.b32.xlu0 %v2638, 96
      %v2665 = vpop.permute.xlu0 %2664
      %2666 = vrot.lane.b32.xlu0 %v2640, 96
      %v2667 = vpop.permute.xlu0 %2666
      %v2668 = vsel %vm796, %v2651, %v2653
      %v2669 = vsel %vm796, %v2653, %v2655
      %v2670 = vsel %vm796, %v2655, %v2657
      %v2671 = vsel %vm796, %v2657, %v2659
      %v2672 = vsel %vm796, %v2659, %v2661
      %v2673 = vsel %vm796, %v2661, %v2663
      %v2674 = vsel %vm796, %v2663, %v2665
      %v2675 = vsel %vm796, %v2665, %v2667
      %v2684 = vmax.f32 %v2631, %v2668
      %v2685 = vmax.f32 %v2632, %v2669
      %v2686 = vmax.f32 %v2633, %v2670
      %v2687 = vmax.f32 %v2634, %v2671
      %v2688 = vmax.f32 %v2635, %v2672
      %v2689 = vmax.f32 %v2636, %v2673
      %v2690 = vmax.f32 %v2637, %v2674
      %v2691 = vmax.f32 %v2638, %v2675
      %2692 = vst [vmem:[#allocation4] sm:$0x3f] %v2684
      %2693 = vst [vmem:[#allocation4 + $0x8] sm:$0x3f] %v2685
      %2694 = vst [vmem:[#allocation4 + $0x10] sm:$0x3f] %v2686
      %2695 = vst [vmem:[#allocation4 + $0x18] sm:$0x3f] %v2687
      %2696 = vst [vmem:[#allocation4 + $0x20] sm:$0x3f] %v2688
      %2697 = vst [vmem:[#allocation4 + $0x28] sm:$0x3f] %v2689
      %2698 = vst [vmem:[#allocation4 + $0x30] sm:$0x3f] %v2690
      %2699 = vst [vmem:[#allocation4 + $0x38] sm:$0x3f] %v2691
      %2700 = vst [vmem:[#allocation4 + $0x40] sm:$0x3f] 0.0
      %2701 = vst [vmem:[#allocation4 + $0x48] sm:$0x3f] 0.0
      %2702 = vst [vmem:[#allocation4 + $0x50] sm:$0x3f] 0.0
      %v2703 = vld [vmem:[#allocation4] sm:$0x3f]
      %v2704 = vld [vmem:[#allocation4 + $0x8] sm:$0x3f]
      %v2705 = vld [vmem:[#allocation4 + $0x10] sm:$0x3f]
      %v2706 = vld [vmem:[#allocation4 + $0x18] sm:$0x3f]
      %v2707 = vld [vmem:[#allocation4 + $0x20] sm:$0x3f]
      %v2708 = vld [vmem:[#allocation4 + $0x28] sm:$0x3f]
      %v2709 = vld [vmem:[#allocation4 + $0x30] sm:$0x3f]
      %v2710 = vld [vmem:[#allocation4 + $0x38] sm:$0x3f]
      %2711 = vst [vmem:[#allocation2] sm:$0x3f] %v2703
      %2712 = vst [vmem:[#allocation2 + $0x8] sm:$0x3f] %v2704
      %2713 = vst [vmem:[#allocation2 + $0x10] sm:$0x3f] %v2705
      %2714 = vst [vmem:[#allocation2 + $0x18] sm:$0x3f] %v2706
      %2715 = vst [vmem:[#allocation2 + $0x20] sm:$0x3f] %v2707
      %2716 = vst [vmem:[#allocation2 + $0x28] sm:$0x3f] %v2708
      %2717 = vst [vmem:[#allocation2 + $0x30] sm:$0x3f] %v2709
      %2718 = vst [vmem:[#allocation2 + $0x38] sm:$0x3f] %v2710
      %v2719 = vld [vmem:[#allocation4] sm:$0x3f]
      %v2720 = vld [vmem:[#allocation4 + $0x8] sm:$0x3f]
      %v2721 = vld [vmem:[#allocation4 + $0x10] sm:$0x3f]
      %v2722 = vld [vmem:[#allocation4 + $0x18] sm:$0x3f]
      %v2723 = vld [vmem:[#allocation4 + $0x20] sm:$0x3f]
      %v2724 = vld [vmem:[#allocation4 + $0x28] sm:$0x3f]
      %v2725 = vld [vmem:[#allocation4 + $0x30] sm:$0x3f]
      %v2726 = vld [vmem:[#allocation4 + $0x38] sm:$0x3f]
      %v2727 = vld [vmem:[#allocation4 + $0x40] sm:$0x3f]
      %v2737 = vrot.slane %v2719, 2
      %v2738 = vrot.slane %v2720, 2
      %v2739 = vrot.slane %v2721, 2
      %v2740 = vrot.slane %v2722, 2
      %v2741 = vrot.slane %v2723, 2
      %v2742 = vrot.slane %v2724, 2
      %v2743 = vrot.slane %v2725, 2
      %v2744 = vrot.slane %v2726, 2
      %v2745 = vrot.slane %v2727, 2
      %2746 = vrot.lane.b32.xlu0 %v2737, 126
      %v2747 = vpop.permute.xlu0 %2746
      %2748 = vrot.lane.b32.xlu0 %v2738, 126
      %v2749 = vpop.permute.xlu0 %2748
      %2750 = vrot.lane.b32.xlu0 %v2739, 126
      %v2751 = vpop.permute.xlu0 %2750
      %2752 = vrot.lane.b32.xlu0 %v2740, 126
      %v2753 = vpop.permute.xlu0 %2752
      %2754 = vrot.lane.b32.xlu0 %v2741, 126
      %v2755 = vpop.permute.xlu0 %2754
      %2756 = vrot.lane.b32.xlu0 %v2742, 126
      %v2757 = vpop.permute.xlu0 %2756
      %2758 = vrot.lane.b32.xlu0 %v2743, 126
      %v2759 = vpop.permute.xlu0 %2758
      %2760 = vrot.lane.b32.xlu0 %v2744, 126
      %v2761 = vpop.permute.xlu0 %2760
      %2762 = vrot.lane.b32.xlu0 %v2745, 126
      %v2763 = vpop.permute.xlu0 %2762
      %v2764 = vsel %vm559, %v2747, %v2749
      %v2765 = vsel %vm559, %v2749, %v2751
      %v2766 = vsel %vm559, %v2751, %v2753
      %v2767 = vsel %vm559, %v2753, %v2755
      %v2768 = vsel %vm559, %v2755, %v2757
      %v2769 = vsel %vm559, %v2757, %v2759
      %v2770 = vsel %vm559, %v2759, %v2761
      %v2771 = vsel %vm559, %v2761, %v2763
      %2780 = vst [vmem:[#allocation2] sm:$0xc0] %v2764
      %2781 = vst [vmem:[#allocation2 + $0x8] sm:$0xc0] %v2765
      %2782 = vst [vmem:[#allocation2 + $0x10] sm:$0xc0] %v2766
      %2783 = vst [vmem:[#allocation2 + $0x18] sm:$0xc0] %v2767
      %2784 = vst [vmem:[#allocation2 + $0x20] sm:$0xc0] %v2768
      %2785 = vst [vmem:[#allocation2 + $0x28] sm:$0xc0] %v2769
      %2786 = vst [vmem:[#allocation2 + $0x30] sm:$0xc0] %v2770
      %2787 = vst [vmem:[#allocation2 + $0x38] sm:$0xc0] %v2771
      %2788 = vst [vmem:[#allocation2 + $0x40] sm:$0xf] %v2764
      %2789 = vst [vmem:[#allocation2 + $0x48] sm:$0xf] %v2765
      %2790 = vst [vmem:[#allocation2 + $0x50] sm:$0xf] %v2766
      %2791 = vst [vmem:[#allocation2 + $0x58] sm:$0xf] %v2767
      %2792 = vst [vmem:[#allocation2 + $0x60] sm:$0xf] %v2768
      %2793 = vst [vmem:[#allocation2 + $0x68] sm:$0xf] %v2769
      %2794 = vst [vmem:[#allocation2 + $0x70] sm:$0xf] %v2770
      %2795 = vst [vmem:[#allocation2 + $0x78] sm:$0xf] %v2771
      %v2796 = vld [vmem:[#allocation4] sm:$0x3f]
      %v2797 = vld [vmem:[#allocation4 + $0x8] sm:$0x3f]
      %v2798 = vld [vmem:[#allocation4 + $0x10] sm:$0x3f]
      %v2799 = vld [vmem:[#allocation4 + $0x18] sm:$0x3f]
      %v2800 = vld [vmem:[#allocation4 + $0x20] sm:$0x3f]
      %v2801 = vld [vmem:[#allocation4 + $0x28] sm:$0x3f]
      %v2802 = vld [vmem:[#allocation4 + $0x30] sm:$0x3f]
      %v2803 = vld [vmem:[#allocation4 + $0x38] sm:$0x3f]
      %v2804 = vld [vmem:[#allocation4 + $0x40] sm:$0x3f]
      %v2814 = vrot.slane %v2796, 4
      %v2815 = vrot.slane %v2797, 4
      %v2816 = vrot.slane %v2798, 4
      %v2817 = vrot.slane %v2799, 4
      %v2818 = vrot.slane %v2800, 4
      %v2819 = vrot.slane %v2801, 4
      %v2820 = vrot.slane %v2802, 4
      %v2821 = vrot.slane %v2803, 4
      %v2822 = vrot.slane %v2804, 4
      %2823 = vrot.lane.b32.xlu0 %v2814, 124
      %v2824 = vpop.permute.xlu0 %2823
      %2825 = vrot.lane.b32.xlu0 %v2815, 124
      %v2826 = vpop.permute.xlu0 %2825
      %2827 = vrot.lane.b32.xlu0 %v2816, 124
      %v2828 = vpop.permute.xlu0 %2827
      %2829 = vrot.lane.b32.xlu0 %v2817, 124
      %v2830 = vpop.permute.xlu0 %2829
      %2831 = vrot.lane.b32.xlu0 %v2818, 124
      %v2832 = vpop.permute.xlu0 %2831
      %2833 = vrot.lane.b32.xlu0 %v2819, 124
      %v2834 = vpop.permute.xlu0 %2833
      %2835 = vrot.lane.b32.xlu0 %v2820, 124
      %v2836 = vpop.permute.xlu0 %2835
      %2837 = vrot.lane.b32.xlu0 %v2821, 124
      %v2838 = vpop.permute.xlu0 %2837
      %2839 = vrot.lane.b32.xlu0 %v2822, 124
      %v2840 = vpop.permute.xlu0 %2839
      %v2841 = vsel %vm717, %v2824, %v2826
      %v2842 = vsel %vm717, %v2826, %v2828
      %v2843 = vsel %vm717, %v2828, %v2830
      %v2844 = vsel %vm717, %v2830, %v2832
      %v2845 = vsel %vm717, %v2832, %v2834
      %v2846 = vsel %vm717, %v2834, %v2836
      %v2847 = vsel %vm717, %v2836, %v2838
      %v2848 = vsel %vm717, %v2838, %v2840
      %2857 = vst [vmem:[#allocation2 + $0x40] sm:$0xf0] %v2841
      %2858 = vst [vmem:[#allocation2 + $0x48] sm:$0xf0] %v2842
      %2859 = vst [vmem:[#allocation2 + $0x50] sm:$0xf0] %v2843
      %2860 = vst [vmem:[#allocation2 + $0x58] sm:$0xf0] %v2844
      %2861 = vst [vmem:[#allocation2 + $0x60] sm:$0xf0] %v2845
      %2862 = vst [vmem:[#allocation2 + $0x68] sm:$0xf0] %v2846
      %2863 = vst [vmem:[#allocation2 + $0x70] sm:$0xf0] %v2847
      %2864 = vst [vmem:[#allocation2 + $0x78] sm:$0xf0] %v2848
      %2865 = vst [vmem:[#allocation2 + $0x80] sm:$0x3] %v2841
      %2866 = vst [vmem:[#allocation2 + $0x88] sm:$0x3] %v2842
      %2867 = vst [vmem:[#allocation2 + $0x90] sm:$0x3] %v2843
      %2868 = vst [vmem:[#allocation2 + $0x98] sm:$0x3] %v2844
      %2869 = vst [vmem:[#allocation2 + $0xa0] sm:$0x3] %v2845
      %2870 = vst [vmem:[#allocation2 + $0xa8] sm:$0x3] %v2846
      %2871 = vst [vmem:[#allocation2 + $0xb0] sm:$0x3] %v2847
      %2872 = vst [vmem:[#allocation2 + $0xb8] sm:$0x3] %v2848
      %v2873 = vld [vmem:[#allocation4] sm:$0x3f]
      %v2874 = vld [vmem:[#allocation4 + $0x8] sm:$0x3f]
      %v2875 = vld [vmem:[#allocation4 + $0x10] sm:$0x3f]
      %v2876 = vld [vmem:[#allocation4 + $0x18] sm:$0x3f]
      %v2877 = vld [vmem:[#allocation4 + $0x20] sm:$0x3f]
      %v2878 = vld [vmem:[#allocation4 + $0x28] sm:$0x3f]
      %v2879 = vld [vmem:[#allocation4 + $0x30] sm:$0x3f]
      %v2880 = vld [vmem:[#allocation4 + $0x38] sm:$0x3f]
      %v2881 = vld [vmem:[#allocation4 + $0x40] sm:$0x3f]
      %v2891 = vrot.slane %v2873, 6
      %v2892 = vrot.slane %v2874, 6
      %v2893 = vrot.slane %v2875, 6
      %v2894 = vrot.slane %v2876, 6
      %v2895 = vrot.slane %v2877, 6
      %v2896 = vrot.slane %v2878, 6
      %v2897 = vrot.slane %v2879, 6
      %v2898 = vrot.slane %v2880, 6
      %v2899 = vrot.slane %v2881, 6
      %2900 = vrot.lane.b32.xlu0 %v2891, 122
      %v2901 = vpop.permute.xlu0 %2900
      %2902 = vrot.lane.b32.xlu0 %v2892, 122
      %v2903 = vpop.permute.xlu0 %2902
      %2904 = vrot.lane.b32.xlu0 %v2893, 122
      %v2905 = vpop.permute.xlu0 %2904
      %2906 = vrot.lane.b32.xlu0 %v2894, 122
      %v2907 = vpop.permute.xlu0 %2906
      %2908 = vrot.lane.b32.xlu0 %v2895, 122
      %v2909 = vpop.permute.xlu0 %2908
      %2910 = vrot.lane.b32.xlu0 %v2896, 122
      %v2911 = vpop.permute.xlu0 %2910
      %2912 = vrot.lane.b32.xlu0 %v2897, 122
      %v2913 = vpop.permute.xlu0 %2912
      %2914 = vrot.lane.b32.xlu0 %v2898, 122
      %v2915 = vpop.permute.xlu0 %2914
      %2916 = vrot.lane.b32.xlu0 %v2899, 122
      %v2917 = vpop.permute.xlu0 %2916
      %vm2918 = vcmask 998400
      %v2919 = vsel %vm2918, %v2901, %v2903
      %v2920 = vsel %vm2918, %v2903, %v2905
      %v2921 = vsel %vm2918, %v2905, %v2907
      %v2922 = vsel %vm2918, %v2907, %v2909
      %v2923 = vsel %vm2918, %v2909, %v2911
      %v2924 = vsel %vm2918, %v2911, %v2913
      %v2925 = vsel %vm2918, %v2913, %v2915
      %v2926 = vsel %vm2918, %v2915, %v2917
      %2935 = vst [vmem:[#allocation2 + $0x80] sm:$0xfc] %v2919
      %2936 = vst [vmem:[#allocation2 + $0x88] sm:$0xfc] %v2920
      %2937 = vst [vmem:[#allocation2 + $0x90] sm:$0xfc] %v2921
      %2938 = vst [vmem:[#allocation2 + $0x98] sm:$0xfc] %v2922
      %2939 = vst [vmem:[#allocation2 + $0xa0] sm:$0xfc] %v2923
      %2940 = vst [vmem:[#allocation2 + $0xa8] sm:$0xfc] %v2924
      %2941 = vst [vmem:[#allocation2 + $0xb0] sm:$0xfc] %v2925
      %2942 = vst [vmem:[#allocation2 + $0xb8] sm:$0xfc] %v2926
      %v2943 = vld [vmem:[#allocation4] sm:$0x3f]
      %v2944 = vld [vmem:[#allocation4 + $0x8] sm:$0x3f]
      %v2945 = vld [vmem:[#allocation4 + $0x10] sm:$0x3f]
      %v2946 = vld [vmem:[#allocation4 + $0x18] sm:$0x3f]
      %v2947 = vld [vmem:[#allocation4 + $0x20] sm:$0x3f]
      %v2948 = vld [vmem:[#allocation4 + $0x28] sm:$0x3f]
      %v2949 = vld [vmem:[#allocation4 + $0x30] sm:$0x3f]
      %v2950 = vld [vmem:[#allocation4 + $0x38] sm:$0x3f]
      %v2951 = vld [vmem:[#allocation4 + $0x40] sm:$0x3f]
      %2961 = vrot.lane.b32.xlu0 %v2943, 120
      %v2962 = vpop.permute.xlu0 %2961
      %2963 = vrot.lane.b32.xlu0 %v2944, 120
      %v2964 = vpop.permute.xlu0 %2963
      %2965 = vrot.lane.b32.xlu0 %v2945, 120
      %v2966 = vpop.permute.xlu0 %2965
      %2967 = vrot.lane.b32.xlu0 %v2946, 120
      %v2968 = vpop.permute.xlu0 %2967
      %2969 = vrot.lane.b32.xlu0 %v2947, 120
      %v2970 = vpop.permute.xlu0 %2969
      %2971 = vrot.lane.b32.xlu0 %v2948, 120
      %v2972 = vpop.permute.xlu0 %2971
      %2973 = vrot.lane.b32.xlu0 %v2949, 120
      %v2974 = vpop.permute.xlu0 %2973
      %2975 = vrot.lane.b32.xlu0 %v2950, 120
      %v2976 = vpop.permute.xlu0 %2975
      %2977 = vrot.lane.b32.xlu0 %v2951, 120
      %v2978 = vpop.permute.xlu0 %2977
      %vm2979 = vcmask 982016
      %v2980 = vsel %vm2979, %v2962, %v2964
      %v2981 = vsel %vm2979, %v2964, %v2966
      %v2982 = vsel %vm2979, %v2966, %v2968
      %v2983 = vsel %vm2979, %v2968, %v2970
      %v2984 = vsel %vm2979, %v2970, %v2972
      %v2985 = vsel %vm2979, %v2972, %v2974
      %v2986 = vsel %vm2979, %v2974, %v2976
      %v2987 = vsel %vm2979, %v2976, %v2978
      %2996 = vst [vmem:[#allocation2 + $0xc0] sm:$0x3f] %v2980
      %2997 = vst [vmem:[#allocation2 + $0xc8] sm:$0x3f] %v2981
      %2998 = vst [vmem:[#allocation2 + $0xd0] sm:$0x3f] %v2982
      %2999 = vst [vmem:[#allocation2 + $0xd8] sm:$0x3f] %v2983
      %3000 = vst [vmem:[#allocation2 + $0xe0] sm:$0x3f] %v2984
      %3001 = vst [vmem:[#allocation2 + $0xe8] sm:$0x3f] %v2985
      %3002 = vst [vmem:[#allocation2 + $0xf0] sm:$0x3f] %v2986
      %3003 = vst [vmem:[#allocation2 + $0xf8] sm:$0x3f] %v2987
      %v3004 = vld [vmem:[#allocation4] sm:$0x3f]
      %v3005 = vld [vmem:[#allocation4 + $0x8] sm:$0x3f]
      %v3006 = vld [vmem:[#allocation4 + $0x10] sm:$0x3f]
      %v3007 = vld [vmem:[#allocation4 + $0x18] sm:$0x3f]
      %v3008 = vld [vmem:[#allocation4 + $0x20] sm:$0x3f]
      %v3009 = vld [vmem:[#allocation4 + $0x28] sm:$0x3f]
      %v3010 = vld [vmem:[#allocation4 + $0x30] sm:$0x3f]
      %v3011 = vld [vmem:[#allocation4 + $0x38] sm:$0x3f]
      %v3012 = vld [vmem:[#allocation4 + $0x40] sm:$0x3f]
      %v3022 = vrot.slane %v3004, 2
      %v3023 = vrot.slane %v3005, 2
      %v3024 = vrot.slane %v3006, 2
      %v3025 = vrot.slane %v3007, 2
      %v3026 = vrot.slane %v3008, 2
      %v3027 = vrot.slane %v3009, 2
      %v3028 = vrot.slane %v3010, 2
      %v3029 = vrot.slane %v3011, 2
      %v3030 = vrot.slane %v3012, 2
      %3031 = vrot.lane.b32.xlu0 %v3022, 64
      %v3032 = vpop.permute.xlu0 %3031
      %3033 = vrot.lane.b32.xlu0 %v3023, 64
      %v3034 = vpop.permute.xlu0 %3033
      %3035 = vrot.lane.b32.xlu0 %v3024, 64
      %v3036 = vpop.permute.xlu0 %3035
      %3037 = vrot.lane.b32.xlu0 %v3025, 64
      %v3038 = vpop.permute.xlu0 %3037
      %3039 = vrot.lane.b32.xlu0 %v3026, 64
      %v3040 = vpop.permute.xlu0 %3039
      %3041 = vrot.lane.b32.xlu0 %v3027, 64
      %v3042 = vpop.permute.xlu0 %3041
      %3043 = vrot.lane.b32.xlu0 %v3028, 64
      %v3044 = vpop.permute.xlu0 %3043
      %3045 = vrot.lane.b32.xlu0 %v3029, 64
      %v3046 = vpop.permute.xlu0 %3045
      %3047 = vrot.lane.b32.xlu0 %v3030, 64
      %v3048 = vpop.permute.xlu0 %3047
      %v3049 = vsel %vm1190, %v3032, %v3034
      %v3050 = vsel %vm1190, %v3034, %v3036
      %v3051 = vsel %vm1190, %v3036, %v3038
      %v3052 = vsel %vm1190, %v3038, %v3040
      %v3053 = vsel %vm1190, %v3040, %v3042
      %v3054 = vsel %vm1190, %v3042, %v3044
      %v3055 = vsel %vm1190, %v3044, %v3046
      %v3056 = vsel %vm1190, %v3046, %v3048
      %3065 = vst [vmem:[#allocation2 + $0xc0] sm:$0xc0] %v3049
      %3066 = vst [vmem:[#allocation2 + $0xc8] sm:$0xc0] %v3050
      %3067 = vst [vmem:[#allocation2 + $0xd0] sm:$0xc0] %v3051
      %3068 = vst [vmem:[#allocation2 + $0xd8] sm:$0xc0] %v3052
      %3069 = vst [vmem:[#allocation2 + $0xe0] sm:$0xc0] %v3053
      %3070 = vst [vmem:[#allocation2 + $0xe8] sm:$0xc0] %v3054
      %3071 = vst [vmem:[#allocation2 + $0xf0] sm:$0xc0] %v3055
      %3072 = vst [vmem:[#allocation2 + $0xf8] sm:$0xc0] %v3056
      %3073 = vst [vmem:[#allocation2 + $0x100] sm:$0xf] %v3049
      %3074 = vst [vmem:[#allocation2 + $0x108] sm:$0xf] %v3050
      %3075 = vst [vmem:[#allocation2 + $0x110] sm:$0xf] %v3051
      %3076 = vst [vmem:[#allocation2 + $0x118] sm:$0xf] %v3052
      %3077 = vst [vmem:[#allocation2 + $0x120] sm:$0xf] %v3053
      %3078 = vst [vmem:[#allocation2 + $0x128] sm:$0xf] %v3054
      %3079 = vst [vmem:[#allocation2 + $0x130] sm:$0xf] %v3055
      %3080 = vst [vmem:[#allocation2 + $0x138] sm:$0xf] %v3056
      %v3081 = vld [vmem:[#allocation4] sm:$0x3f]
      %v3082 = vld [vmem:[#allocation4 + $0x8] sm:$0x3f]
      %v3083 = vld [vmem:[#allocation4 + $0x10] sm:$0x3f]
      %v3084 = vld [vmem:[#allocation4 + $0x18] sm:$0x3f]
      %v3085 = vld [vmem:[#allocation4 + $0x20] sm:$0x3f]
      %v3086 = vld [vmem:[#allocation4 + $0x28] sm:$0x3f]
      %v3087 = vld [vmem:[#allocation4 + $0x30] sm:$0x3f]
      %v3088 = vld [vmem:[#allocation4 + $0x38] sm:$0x3f]
      %v3089 = vld [vmem:[#allocation4 + $0x40] sm:$0x3f]
      %v3099 = vrot.slane %v3081, 4
      %v3100 = vrot.slane %v3082, 4
      %v3101 = vrot.slane %v3083, 4
      %v3102 = vrot.slane %v3084, 4
      %v3103 = vrot.slane %v3085, 4
      %v3104 = vrot.slane %v3086, 4
      %v3105 = vrot.slane %v3087, 4
      %v3106 = vrot.slane %v3088, 4
      %v3107 = vrot.slane %v3089, 4
      %3108 = vrot.lane.b32.xlu0 %v3099, 62
      %v3109 = vpop.permute.xlu0 %3108
      %3110 = vrot.lane.b32.xlu0 %v3100, 62
      %v3111 = vpop.permute.xlu0 %3110
      %3112 = vrot.lane.b32.xlu0 %v3101, 62
      %v3113 = vpop.permute.xlu0 %3112
      %3114 = vrot.lane.b32.xlu0 %v3102, 62
      %v3115 = vpop.permute.xlu0 %3114
      %3116 = vrot.lane.b32.xlu0 %v3103, 62
      %v3117 = vpop.permute.xlu0 %3116
      %3118 = vrot.lane.b32.xlu0 %v3104, 62
      %v3119 = vpop.permute.xlu0 %3118
      %3120 = vrot.lane.b32.xlu0 %v3105, 62
      %v3121 = vpop.permute.xlu0 %3120
      %3122 = vrot.lane.b32.xlu0 %v3106, 62
      %v3123 = vpop.permute.xlu0 %3122
      %3124 = vrot.lane.b32.xlu0 %v3107, 62
      %v3125 = vpop.permute.xlu0 %3124
      %v3126 = vsel %vm1348, %v3109, %v3111
      %v3127 = vsel %vm1348, %v3111, %v3113
      %v3128 = vsel %vm1348, %v3113, %v3115
      %v3129 = vsel %vm1348, %v3115, %v3117
      %v3130 = vsel %vm1348, %v3117, %v3119
      %v3131 = vsel %vm1348, %v3119, %v3121
      %v3132 = vsel %vm1348, %v3121, %v3123
      %v3133 = vsel %vm1348, %v3123, %v3125
      %3142 = vst [vmem:[#allocation2 + $0x100] sm:$0xf0] %v3126
      %3143 = vst [vmem:[#allocation2 + $0x108] sm:$0xf0] %v3127
      %3144 = vst [vmem:[#allocation2 + $0x110] sm:$0xf0] %v3128
      %3145 = vst [vmem:[#allocation2 + $0x118] sm:$0xf0] %v3129
      %3146 = vst [vmem:[#allocation2 + $0x120] sm:$0xf0] %v3130
      %3147 = vst [vmem:[#allocation2 + $0x128] sm:$0xf0] %v3131
      %3148 = vst [vmem:[#allocation2 + $0x130] sm:$0xf0] %v3132
      %3149 = vst [vmem:[#allocation2 + $0x138] sm:$0xf0] %v3133
      %3150 = vst [vmem:[#allocation2 + $0x140] sm:$0x3] %v3126
      %3151 = vst [vmem:[#allocation2 + $0x148] sm:$0x3] %v3127
      %3152 = vst [vmem:[#allocation2 + $0x150] sm:$0x3] %v3128
      %3153 = vst [vmem:[#allocation2 + $0x158] sm:$0x3] %v3129
      %3154 = vst [vmem:[#allocation2 + $0x160] sm:$0x3] %v3130
      %3155 = vst [vmem:[#allocation2 + $0x168] sm:$0x3] %v3131
      %3156 = vst [vmem:[#allocation2 + $0x170] sm:$0x3] %v3132
      %3157 = vst [vmem:[#allocation2 + $0x178] sm:$0x3] %v3133
      %v3158 = vld [vmem:[#allocation4] sm:$0x3f]
      %v3159 = vld [vmem:[#allocation4 + $0x8] sm:$0x3f]
      %v3160 = vld [vmem:[#allocation4 + $0x10] sm:$0x3f]
      %v3161 = vld [vmem:[#allocation4 + $0x18] sm:$0x3f]
      %v3162 = vld [vmem:[#allocation4 + $0x20] sm:$0x3f]
      %v3163 = vld [vmem:[#allocation4 + $0x28] sm:$0x3f]
      %v3164 = vld [vmem:[#allocation4 + $0x30] sm:$0x3f]
      %v3165 = vld [vmem:[#allocation4 + $0x38] sm:$0x3f]
      %v3166 = vld [vmem:[#allocation4 + $0x40] sm:$0x3f]
      %v3176 = vrot.slane %v3158, 6
      %v3177 = vrot.slane %v3159, 6
      %v3178 = vrot.slane %v3160, 6
      %v3179 = vrot.slane %v3161, 6
      %v3180 = vrot.slane %v3162, 6
      %v3181 = vrot.slane %v3163, 6
      %v3182 = vrot.slane %v3164, 6
      %v3183 = vrot.slane %v3165, 6
      %v3184 = vrot.slane %v3166, 6
      %3185 = vrot.lane.b32.xlu0 %v3176, 60
      %v3186 = vpop.permute.xlu0 %3185
      %3187 = vrot.lane.b32.xlu0 %v3177, 60
      %v3188 = vpop.permute.xlu0 %3187
      %3189 = vrot.lane.b32.xlu0 %v3178, 60
      %v3190 = vpop.permute.xlu0 %3189
      %3191 = vrot.lane.b32.xlu0 %v3179, 60
      %v3192 = vpop.permute.xlu0 %3191
      %3193 = vrot.lane.b32.xlu0 %v3180, 60
      %v3194 = vpop.permute.xlu0 %3193
      %3195 = vrot.lane.b32.xlu0 %v3181, 60
      %v3196 = vpop.permute.xlu0 %3195
      %3197 = vrot.lane.b32.xlu0 %v3182, 60
      %v3198 = vpop.permute.xlu0 %3197
      %3199 = vrot.lane.b32.xlu0 %v3183, 60
      %v3200 = vpop.permute.xlu0 %3199
      %3201 = vrot.lane.b32.xlu0 %v3184, 60
      %v3202 = vpop.permute.xlu0 %3201
      %v3203 = vsel %vm1514, %v3186, %v3188
      %v3204 = vsel %vm1514, %v3188, %v3190
      %v3205 = vsel %vm1514, %v3190, %v3192
      %v3206 = vsel %vm1514, %v3192, %v3194
      %v3207 = vsel %vm1514, %v3194, %v3196
      %v3208 = vsel %vm1514, %v3196, %v3198
      %v3209 = vsel %vm1514, %v3198, %v3200
      %v3210 = vsel %vm1514, %v3200, %v3202
      %3219 = vst [vmem:[#allocation2 + $0x140] sm:$0xfc] %v3203
      %3220 = vst [vmem:[#allocation2 + $0x148] sm:$0xfc] %v3204
      %3221 = vst [vmem:[#allocation2 + $0x150] sm:$0xfc] %v3205
      %3222 = vst [vmem:[#allocation2 + $0x158] sm:$0xfc] %v3206
      %3223 = vst [vmem:[#allocation2 + $0x160] sm:$0xfc] %v3207
      %3224 = vst [vmem:[#allocation2 + $0x168] sm:$0xfc] %v3208
      %3225 = vst [vmem:[#allocation2 + $0x170] sm:$0xfc] %v3209
      %3226 = vst [vmem:[#allocation2 + $0x178] sm:$0xfc] %v3210
      %v3227 = vld [vmem:[#allocation4] sm:$0x3f]
      %v3228 = vld [vmem:[#allocation4 + $0x8] sm:$0x3f]
      %v3229 = vld [vmem:[#allocation4 + $0x10] sm:$0x3f]
      %v3230 = vld [vmem:[#allocation4 + $0x18] sm:$0x3f]
      %v3231 = vld [vmem:[#allocation4 + $0x20] sm:$0x3f]
      %v3232 = vld [vmem:[#allocation4 + $0x28] sm:$0x3f]
      %v3233 = vld [vmem:[#allocation4 + $0x30] sm:$0x3f]
      %v3234 = vld [vmem:[#allocation4 + $0x38] sm:$0x3f]
      %v3235 = vld [vmem:[#allocation4 + $0x40] sm:$0x3f]
      %3245 = vrot.lane.b32.xlu0 %v3227, 58
      %v3246 = vpop.permute.xlu0 %3245
      %3247 = vrot.lane.b32.xlu0 %v3228, 58
      %v3248 = vpop.permute.xlu0 %3247
      %3249 = vrot.lane.b32.xlu0 %v3229, 58
      %v3250 = vpop.permute.xlu0 %3249
      %3251 = vrot.lane.b32.xlu0 %v3230, 58
      %v3252 = vpop.permute.xlu0 %3251
      %3253 = vrot.lane.b32.xlu0 %v3231, 58
      %v3254 = vpop.permute.xlu0 %3253
      %3255 = vrot.lane.b32.xlu0 %v3232, 58
      %v3256 = vpop.permute.xlu0 %3255
      %3257 = vrot.lane.b32.xlu0 %v3233, 58
      %v3258 = vpop.permute.xlu0 %3257
      %3259 = vrot.lane.b32.xlu0 %v3234, 58
      %v3260 = vpop.permute.xlu0 %3259
      %3261 = vrot.lane.b32.xlu0 %v3235, 58
      %v3262 = vpop.permute.xlu0 %3261
      %vm3263 = vcmask 474112
      %v3264 = vsel %vm3263, %v3246, %v3248
      %v3265 = vsel %vm3263, %v3248, %v3250
      %v3266 = vsel %vm3263, %v3250, %v3252
      %v3267 = vsel %vm3263, %v3252, %v3254
      %v3268 = vsel %vm3263, %v3254, %v3256
      %v3269 = vsel %vm3263, %v3256, %v3258
      %v3270 = vsel %vm3263, %v3258, %v3260
      %v3271 = vsel %vm3263, %v3260, %v3262
      %3280 = vst [vmem:[#allocation2 + $0x180] sm:$0x3f] %v3264
      %3281 = vst [vmem:[#allocation2 + $0x188] sm:$0x3f] %v3265
      %3282 = vst [vmem:[#allocation2 + $0x190] sm:$0x3f] %v3266
      %3283 = vst [vmem:[#allocation2 + $0x198] sm:$0x3f] %v3267
      %3284 = vst [vmem:[#allocation2 + $0x1a0] sm:$0x3f] %v3268
      %3285 = vst [vmem:[#allocation2 + $0x1a8] sm:$0x3f] %v3269
      %3286 = vst [vmem:[#allocation2 + $0x1b0] sm:$0x3f] %v3270
      %3287 = vst [vmem:[#allocation2 + $0x1b8] sm:$0x3f] %v3271
      %v3288 = vld [vmem:[#allocation4] sm:$0x3f]
      %v3289 = vld [vmem:[#allocation4 + $0x8] sm:$0x3f]
      %v3290 = vld [vmem:[#allocation4 + $0x10] sm:$0x3f]
      %v3291 = vld [vmem:[#allocation4 + $0x18] sm:$0x3f]
      %v3292 = vld [vmem:[#allocation4 + $0x20] sm:$0x3f]
      %v3293 = vld [vmem:[#allocation4 + $0x28] sm:$0x3f]
      %v3294 = vld [vmem:[#allocation4 + $0x30] sm:$0x3f]
      %v3295 = vld [vmem:[#allocation4 + $0x38] sm:$0x3f]
      %v3296 = vld [vmem:[#allocation4 + $0x40] sm:$0x3f]
      %v3306 = vrot.slane %v3288, 2
      %v3307 = vrot.slane %v3289, 2
      %v3308 = vrot.slane %v3290, 2
      %v3309 = vrot.slane %v3291, 2
      %v3310 = vrot.slane %v3292, 2
      %v3311 = vrot.slane %v3293, 2
      %v3312 = vrot.slane %v3294, 2
      %v3313 = vrot.slane %v3295, 2
      %v3314 = vrot.slane %v3296, 2
      %3315 = vrot.lane.b32.xlu0 %v3306, 56
      %v3316 = vpop.permute.xlu0 %3315
      %3317 = vrot.lane.b32.xlu0 %v3307, 56
      %v3318 = vpop.permute.xlu0 %3317
      %3319 = vrot.lane.b32.xlu0 %v3308, 56
      %v3320 = vpop.permute.xlu0 %3319
      %3321 = vrot.lane.b32.xlu0 %v3309, 56
      %v3322 = vpop.permute.xlu0 %3321
      %3323 = vrot.lane.b32.xlu0 %v3310, 56
      %v3324 = vpop.permute.xlu0 %3323
      %3325 = vrot.lane.b32.xlu0 %v3311, 56
      %v3326 = vpop.permute.xlu0 %3325
      %3327 = vrot.lane.b32.xlu0 %v3312, 56
      %v3328 = vpop.permute.xlu0 %3327
      %3329 = vrot.lane.b32.xlu0 %v3313, 56
      %v3330 = vpop.permute.xlu0 %3329
      %3331 = vrot.lane.b32.xlu0 %v3314, 56
      %v3332 = vpop.permute.xlu0 %3331
      %vm3333 = vcmask 457728
      %v3334 = vsel %vm3333, %v3316, %v3318
      %v3335 = vsel %vm3333, %v3318, %v3320
      %v3336 = vsel %vm3333, %v3320, %v3322
      %v3337 = vsel %vm3333, %v3322, %v3324
      %v3338 = vsel %vm3333, %v3324, %v3326
      %v3339 = vsel %vm3333, %v3326, %v3328
      %v3340 = vsel %vm3333, %v3328, %v3330
      %v3341 = vsel %vm3333, %v3330, %v3332
      %3350 = vst [vmem:[#allocation2 + $0x180] sm:$0xc0] %v3334
      %3351 = vst [vmem:[#allocation2 + $0x188] sm:$0xc0] %v3335
      %3352 = vst [vmem:[#allocation2 + $0x190] sm:$0xc0] %v3336
      %3353 = vst [vmem:[#allocation2 + $0x198] sm:$0xc0] %v3337
      %3354 = vst [vmem:[#allocation2 + $0x1a0] sm:$0xc0] %v3338
      %3355 = vst [vmem:[#allocation2 + $0x1a8] sm:$0xc0] %v3339
      %3356 = vst [vmem:[#allocation2 + $0x1b0] sm:$0xc0] %v3340
      %3357 = vst [vmem:[#allocation2 + $0x1b8] sm:$0xc0] %v3341
      %3358 = vst [vmem:[#allocation2 + $0x1c0] sm:$0xf] %v3334
      %3359 = vst [vmem:[#allocation2 + $0x1c8] sm:$0xf] %v3335
      %3360 = vst [vmem:[#allocation2 + $0x1d0] sm:$0xf] %v3336
      %3361 = vst [vmem:[#allocation2 + $0x1d8] sm:$0xf] %v3337
      %3362 = vst [vmem:[#allocation2 + $0x1e0] sm:$0xf] %v3338
      %3363 = vst [vmem:[#allocation2 + $0x1e8] sm:$0xf] %v3339
      %3364 = vst [vmem:[#allocation2 + $0x1f0] sm:$0xf] %v3340
      %3365 = vst [vmem:[#allocation2 + $0x1f8] sm:$0xf] %v3341
      %v3366 = vld [vmem:[#allocation4 + $0x8] sm:$0x3f]
      %v3367 = vld [vmem:[#allocation4 + $0x10] sm:$0x3f]
      %v3368 = vld [vmem:[#allocation4 + $0x18] sm:$0x3f]
      %v3369 = vld [vmem:[#allocation4 + $0x20] sm:$0x3f]
      %v3370 = vld [vmem:[#allocation4 + $0x28] sm:$0x3f]
      %v3371 = vld [vmem:[#allocation4 + $0x30] sm:$0x3f]
      %v3372 = vld [vmem:[#allocation4 + $0x38] sm:$0x3f]
      %v3373 = vld [vmem:[#allocation4 + $0x40] sm:$0x3f]
      %v3382 = vrot.slane %v3366, 4
      %v3383 = vrot.slane %v3367, 4
      %v3384 = vrot.slane %v3368, 4
      %v3385 = vrot.slane %v3369, 4
      %v3386 = vrot.slane %v3370, 4
      %v3387 = vrot.slane %v3371, 4
      %v3388 = vrot.slane %v3372, 4
      %v3389 = vrot.slane %v3373, 4
      %3398 = vst [vmem:[#allocation2 + $0x1c0] sm:$0xf0] %v3382
      %3399 = vst [vmem:[#allocation2 + $0x1c8] sm:$0xf0] %v3383
      %3400 = vst [vmem:[#allocation2 + $0x1d0] sm:$0xf0] %v3384
      %3401 = vst [vmem:[#allocation2 + $0x1d8] sm:$0xf0] %v3385
      %3402 = vst [vmem:[#allocation2 + $0x1e0] sm:$0xf0] %v3386
      %3403 = vst [vmem:[#allocation2 + $0x1e8] sm:$0xf0] %v3387
      %3404 = vst [vmem:[#allocation2 + $0x1f0] sm:$0xf0] %v3388
      %3405 = vst [vmem:[#allocation2 + $0x1f8] sm:$0xf0] %v3389
      %3406 = vst [vmem:[#allocation2 + $0x200] sm:$0x3] %v3382
      %3407 = vst [vmem:[#allocation2 + $0x208] sm:$0x3] %v3383
      %3408 = vst [vmem:[#allocation2 + $0x210] sm:$0x3] %v3384
      %3409 = vst [vmem:[#allocation2 + $0x218] sm:$0x3] %v3385
      %3410 = vst [vmem:[#allocation2 + $0x220] sm:$0x3] %v3386
      %3411 = vst [vmem:[#allocation2 + $0x228] sm:$0x3] %v3387
      %3412 = vst [vmem:[#allocation2 + $0x230] sm:$0x3] %v3388
      %3413 = vst [vmem:[#allocation2 + $0x238] sm:$0x3] %v3389
      %v3414 = vld [vmem:[#allocation4 + $0x8] sm:$0x3f]
      %v3415 = vld [vmem:[#allocation4 + $0x10] sm:$0x3f]
      %v3416 = vld [vmem:[#allocation4 + $0x18] sm:$0x3f]
      %v3417 = vld [vmem:[#allocation4 + $0x20] sm:$0x3f]
      %v3418 = vld [vmem:[#allocation4 + $0x28] sm:$0x3f]
      %v3419 = vld [vmem:[#allocation4 + $0x30] sm:$0x3f]
      %v3420 = vld [vmem:[#allocation4 + $0x38] sm:$0x3f]
      %v3421 = vld [vmem:[#allocation4 + $0x40] sm:$0x3f]
      %v3422 = vld [vmem:[#allocation4 + $0x48] sm:$0x3f]
      %v3432 = vrot.slane %v3414, 6
      %v3433 = vrot.slane %v3415, 6
      %v3434 = vrot.slane %v3416, 6
      %v3435 = vrot.slane %v3417, 6
      %v3436 = vrot.slane %v3418, 6
      %v3437 = vrot.slane %v3419, 6
      %v3438 = vrot.slane %v3420, 6
      %v3439 = vrot.slane %v3421, 6
      %v3440 = vrot.slane %v3422, 6
      %3441 = vrot.lane.b32.xlu0 %v3432, 126
      %v3442 = vpop.permute.xlu0 %3441
      %3443 = vrot.lane.b32.xlu0 %v3433, 126
      %v3444 = vpop.permute.xlu0 %3443
      %3445 = vrot.lane.b32.xlu0 %v3434, 126
      %v3446 = vpop.permute.xlu0 %3445
      %3447 = vrot.lane.b32.xlu0 %v3435, 126
      %v3448 = vpop.permute.xlu0 %3447
      %3449 = vrot.lane.b32.xlu0 %v3436, 126
      %v3450 = vpop.permute.xlu0 %3449
      %3451 = vrot.lane.b32.xlu0 %v3437, 126
      %v3452 = vpop.permute.xlu0 %3451
      %3453 = vrot.lane.b32.xlu0 %v3438, 126
      %v3454 = vpop.permute.xlu0 %3453
      %3455 = vrot.lane.b32.xlu0 %v3439, 126
      %v3456 = vpop.permute.xlu0 %3455
      %3457 = vrot.lane.b32.xlu0 %v3440, 126
      %v3458 = vpop.permute.xlu0 %3457
      %v3459 = vsel %vm559, %v3442, %v3444
      %v3460 = vsel %vm559, %v3444, %v3446
      %v3461 = vsel %vm559, %v3446, %v3448
      %v3462 = vsel %vm559, %v3448, %v3450
      %v3463 = vsel %vm559, %v3450, %v3452
      %v3464 = vsel %vm559, %v3452, %v3454
      %v3465 = vsel %vm559, %v3454, %v3456
      %v3466 = vsel %vm559, %v3456, %v3458
      %3475 = vst [vmem:[#allocation2 + $0x200] sm:$0xfc] %v3459
      %3476 = vst [vmem:[#allocation2 + $0x208] sm:$0xfc] %v3460
      %3477 = vst [vmem:[#allocation2 + $0x210] sm:$0xfc] %v3461
      %3478 = vst [vmem:[#allocation2 + $0x218] sm:$0xfc] %v3462
      %3479 = vst [vmem:[#allocation2 + $0x220] sm:$0xfc] %v3463
      %3480 = vst [vmem:[#allocation2 + $0x228] sm:$0xfc] %v3464
      %3481 = vst [vmem:[#allocation2 + $0x230] sm:$0xfc] %v3465
      %3482 = vst [vmem:[#allocation2 + $0x238] sm:$0xfc] %v3466
      %v3483 = vld [vmem:[#allocation4 + $0x8] sm:$0x3f]
      %v3484 = vld [vmem:[#allocation4 + $0x10] sm:$0x3f]
      %v3485 = vld [vmem:[#allocation4 + $0x18] sm:$0x3f]
      %v3486 = vld [vmem:[#allocation4 + $0x20] sm:$0x3f]
      %v3487 = vld [vmem:[#allocation4 + $0x28] sm:$0x3f]
      %v3488 = vld [vmem:[#allocation4 + $0x30] sm:$0x3f]
      %v3489 = vld [vmem:[#allocation4 + $0x38] sm:$0x3f]
      %v3490 = vld [vmem:[#allocation4 + $0x40] sm:$0x3f]
      %v3491 = vld [vmem:[#allocation4 + $0x48] sm:$0x3f]
      %3501 = vrot.lane.b32.xlu0 %v3483, 124
      %v3502 = vpop.permute.xlu0 %3501
      %3503 = vrot.lane.b32.xlu0 %v3484, 124
      %v3504 = vpop.permute.xlu0 %3503
      %3505 = vrot.lane.b32.xlu0 %v3485, 124
      %v3506 = vpop.permute.xlu0 %3505
      %3507 = vrot.lane.b32.xlu0 %v3486, 124
      %v3508 = vpop.permute.xlu0 %3507
      %3509 = vrot.lane.b32.xlu0 %v3487, 124
      %v3510 = vpop.permute.xlu0 %3509
      %3511 = vrot.lane.b32.xlu0 %v3488, 124
      %v3512 = vpop.permute.xlu0 %3511
      %3513 = vrot.lane.b32.xlu0 %v3489, 124
      %v3514 = vpop.permute.xlu0 %3513
      %3515 = vrot.lane.b32.xlu0 %v3490, 124
      %v3516 = vpop.permute.xlu0 %3515
      %3517 = vrot.lane.b32.xlu0 %v3491, 124
      %v3518 = vpop.permute.xlu0 %3517
      %v3519 = vsel %vm717, %v3502, %v3504
      %v3520 = vsel %vm717, %v3504, %v3506
      %v3521 = vsel %vm717, %v3506, %v3508
      %v3522 = vsel %vm717, %v3508, %v3510
      %v3523 = vsel %vm717, %v3510, %v3512
      %v3524 = vsel %vm717, %v3512, %v3514
      %v3525 = vsel %vm717, %v3514, %v3516
      %v3526 = vsel %vm717, %v3516, %v3518
      %3535 = vst [vmem:[#allocation2 + $0x240] sm:$0x3f] %v3519
      %3536 = vst [vmem:[#allocation2 + $0x248] sm:$0x3f] %v3520
      %3537 = vst [vmem:[#allocation2 + $0x250] sm:$0x3f] %v3521
      %3538 = vst [vmem:[#allocation2 + $0x258] sm:$0x3f] %v3522
      %3539 = vst [vmem:[#allocation2 + $0x260] sm:$0x3f] %v3523
      %3540 = vst [vmem:[#allocation2 + $0x268] sm:$0x3f] %v3524
      %3541 = vst [vmem:[#allocation2 + $0x270] sm:$0x3f] %v3525
      %3542 = vst [vmem:[#allocation2 + $0x278] sm:$0x3f] %v3526
      %v3543 = vld [vmem:[#allocation4 + $0x8] sm:$0x3f]
      %v3544 = vld [vmem:[#allocation4 + $0x10] sm:$0x3f]
      %v3545 = vld [vmem:[#allocation4 + $0x18] sm:$0x3f]
      %v3546 = vld [vmem:[#allocation4 + $0x20] sm:$0x3f]
      %v3547 = vld [vmem:[#allocation4 + $0x28] sm:$0x3f]
      %v3548 = vld [vmem:[#allocation4 + $0x30] sm:$0x3f]
      %v3549 = vld [vmem:[#allocation4 + $0x38] sm:$0x3f]
      %v3550 = vld [vmem:[#allocation4 + $0x40] sm:$0x3f]
      %v3551 = vld [vmem:[#allocation4 + $0x48] sm:$0x3f]
      %v3561 = vrot.slane %v3543, 2
      %v3562 = vrot.slane %v3544, 2
      %v3563 = vrot.slane %v3545, 2
      %v3564 = vrot.slane %v3546, 2
      %v3565 = vrot.slane %v3547, 2
      %v3566 = vrot.slane %v3548, 2
      %v3567 = vrot.slane %v3549, 2
      %v3568 = vrot.slane %v3550, 2
      %v3569 = vrot.slane %v3551, 2
      %3570 = vrot.lane.b32.xlu0 %v3561, 122
      %v3571 = vpop.permute.xlu0 %3570
      %3572 = vrot.lane.b32.xlu0 %v3562, 122
      %v3573 = vpop.permute.xlu0 %3572
      %3574 = vrot.lane.b32.xlu0 %v3563, 122
      %v3575 = vpop.permute.xlu0 %3574
      %3576 = vrot.lane.b32.xlu0 %v3564, 122
      %v3577 = vpop.permute.xlu0 %3576
      %3578 = vrot.lane.b32.xlu0 %v3565, 122
      %v3579 = vpop.permute.xlu0 %3578
      %3580 = vrot.lane.b32.xlu0 %v3566, 122
      %v3581 = vpop.permute.xlu0 %3580
      %3582 = vrot.lane.b32.xlu0 %v3567, 122
      %v3583 = vpop.permute.xlu0 %3582
      %3584 = vrot.lane.b32.xlu0 %v3568, 122
      %v3585 = vpop.permute.xlu0 %3584
      %3586 = vrot.lane.b32.xlu0 %v3569, 122
      %v3587 = vpop.permute.xlu0 %3586
      %v3588 = vsel %vm2918, %v3571, %v3573
      %v3589 = vsel %vm2918, %v3573, %v3575
      %v3590 = vsel %vm2918, %v3575, %v3577
      %v3591 = vsel %vm2918, %v3577, %v3579
      %v3592 = vsel %vm2918, %v3579, %v3581
      %v3593 = vsel %vm2918, %v3581, %v3583
      %v3594 = vsel %vm2918, %v3583, %v3585
      %v3595 = vsel %vm2918, %v3585, %v3587
      %3604 = vst [vmem:[#allocation2 + $0x240] sm:$0xc0] %v3588
      %3605 = vst [vmem:[#allocation2 + $0x248] sm:$0xc0] %v3589
      %3606 = vst [vmem:[#allocation2 + $0x250] sm:$0xc0] %v3590
      %3607 = vst [vmem:[#allocation2 + $0x258] sm:$0xc0] %v3591
      %3608 = vst [vmem:[#allocation2 + $0x260] sm:$0xc0] %v3592
      %3609 = vst [vmem:[#allocation2 + $0x268] sm:$0xc0] %v3593
      %3610 = vst [vmem:[#allocation2 + $0x270] sm:$0xc0] %v3594
      %3611 = vst [vmem:[#allocation2 + $0x278] sm:$0xc0] %v3595
      %3612 = vst [vmem:[#allocation2 + $0x280] sm:$0xf] %v3588
      %3613 = vst [vmem:[#allocation2 + $0x288] sm:$0xf] %v3589
      %3614 = vst [vmem:[#allocation2 + $0x290] sm:$0xf] %v3590
      %3615 = vst [vmem:[#allocation2 + $0x298] sm:$0xf] %v3591
      %3616 = vst [vmem:[#allocation2 + $0x2a0] sm:$0xf] %v3592
      %3617 = vst [vmem:[#allocation2 + $0x2a8] sm:$0xf] %v3593
      %3618 = vst [vmem:[#allocation2 + $0x2b0] sm:$0xf] %v3594
      %3619 = vst [vmem:[#allocation2 + $0x2b8] sm:$0xf] %v3595
      %v3620 = vld [vmem:[#allocation4 + $0x8] sm:$0x3f]
      %v3621 = vld [vmem:[#allocation4 + $0x10] sm:$0x3f]
      %v3622 = vld [vmem:[#allocation4 + $0x18] sm:$0x3f]
      %v3623 = vld [vmem:[#allocation4 + $0x20] sm:$0x3f]
      %v3624 = vld [vmem:[#allocation4 + $0x28] sm:$0x3f]
      %v3625 = vld [vmem:[#allocation4 + $0x30] sm:$0x3f]
      %v3626 = vld [vmem:[#allocation4 + $0x38] sm:$0x3f]
      %v3627 = vld [vmem:[#allocation4 + $0x40] sm:$0x3f]
      %v3628 = vld [vmem:[#allocation4 + $0x48] sm:$0x3f]
      %v3638 = vrot.slane %v3620, 4
      %v3639 = vrot.slane %v3621, 4
      %v3640 = vrot.slane %v3622, 4
      %v3641 = vrot.slane %v3623, 4
      %v3642 = vrot.slane %v3624, 4
      %v3643 = vrot.slane %v3625, 4
      %v3644 = vrot.slane %v3626, 4
      %v3645 = vrot.slane %v3627, 4
      %v3646 = vrot.slane %v3628, 4
      %3647 = vrot.lane.b32.xlu0 %v3638, 120
      %v3648 = vpop.permute.xlu0 %3647
      %3649 = vrot.lane.b32.xlu0 %v3639, 120
      %v3650 = vpop.permute.xlu0 %3649
      %3651 = vrot.lane.b32.xlu0 %v3640, 120
      %v3652 = vpop.permute.xlu0 %3651
      %3653 = vrot.lane.b32.xlu0 %v3641, 120
      %v3654 = vpop.permute.xlu0 %3653
      %3655 = vrot.lane.b32.xlu0 %v3642, 120
      %v3656 = vpop.permute.xlu0 %3655
      %3657 = vrot.lane.b32.xlu0 %v3643, 120
      %v3658 = vpop.permute.xlu0 %3657
      %3659 = vrot.lane.b32.xlu0 %v3644, 120
      %v3660 = vpop.permute.xlu0 %3659
      %3661 = vrot.lane.b32.xlu0 %v3645, 120
      %v3662 = vpop.permute.xlu0 %3661
      %3663 = vrot.lane.b32.xlu0 %v3646, 120
      %v3664 = vpop.permute.xlu0 %3663
      %v3665 = vsel %vm2979, %v3648, %v3650
      %v3666 = vsel %vm2979, %v3650, %v3652
      %v3667 = vsel %vm2979, %v3652, %v3654
      %v3668 = vsel %vm2979, %v3654, %v3656
      %v3669 = vsel %vm2979, %v3656, %v3658
      %v3670 = vsel %vm2979, %v3658, %v3660
      %v3671 = vsel %vm2979, %v3660, %v3662
      %v3672 = vsel %vm2979, %v3662, %v3664
      %3681 = vst [vmem:[#allocation2 + $0x280] sm:$0xf0] %v3665
      %3682 = vst [vmem:[#allocation2 + $0x288] sm:$0xf0] %v3666
      %3683 = vst [vmem:[#allocation2 + $0x290] sm:$0xf0] %v3667
      %3684 = vst [vmem:[#allocation2 + $0x298] sm:$0xf0] %v3668
      %3685 = vst [vmem:[#allocation2 + $0x2a0] sm:$0xf0] %v3669
      %3686 = vst [vmem:[#allocation2 + $0x2a8] sm:$0xf0] %v3670
      %3687 = vst [vmem:[#allocation2 + $0x2b0] sm:$0xf0] %v3671
      %3688 = vst [vmem:[#allocation2 + $0x2b8] sm:$0xf0] %v3672
      %3689 = vst [vmem:[#allocation2 + $0x2c0] sm:$0x3] %v3665
      %3690 = vst [vmem:[#allocation2 + $0x2c8] sm:$0x3] %v3666
      %3691 = vst [vmem:[#allocation2 + $0x2d0] sm:$0x3] %v3667
      %3692 = vst [vmem:[#allocation2 + $0x2d8] sm:$0x3] %v3668
      %3693 = vst [vmem:[#allocation2 + $0x2e0] sm:$0x3] %v3669
      %3694 = vst [vmem:[#allocation2 + $0x2e8] sm:$0x3] %v3670
      %3695 = vst [vmem:[#allocation2 + $0x2f0] sm:$0x3] %v3671
      %3696 = vst [vmem:[#allocation2 + $0x2f8] sm:$0x3] %v3672
      %v3697 = vld [vmem:[#allocation4 + $0x8] sm:$0x3f]
      %v3698 = vld [vmem:[#allocation4 + $0x10] sm:$0x3f]
      %v3699 = vld [vmem:[#allocation4 + $0x18] sm:$0x3f]
      %v3700 = vld [vmem:[#allocation4 + $0x20] sm:$0x3f]
      %v3701 = vld [vmem:[#allocation4 + $0x28] sm:$0x3f]
      %v3702 = vld [vmem:[#allocation4 + $0x30] sm:$0x3f]
      %v3703 = vld [vmem:[#allocation4 + $0x38] sm:$0x3f]
      %v3704 = vld [vmem:[#allocation4 + $0x40] sm:$0x3f]
      %v3705 = vld [vmem:[#allocation4 + $0x48] sm:$0x3f]
      %v3715 = vrot.slane %v3697, 6
      %v3716 = vrot.slane %v3698, 6
      %v3717 = vrot.slane %v3699, 6
      %v3718 = vrot.slane %v3700, 6
      %v3719 = vrot.slane %v3701, 6
      %v3720 = vrot.slane %v3702, 6
      %v3721 = vrot.slane %v3703, 6
      %v3722 = vrot.slane %v3704, 6
      %v3723 = vrot.slane %v3705, 6
      %3724 = vrot.lane.b32.xlu0 %v3715, 64
      %v3725 = vpop.permute.xlu0 %3724
      %3726 = vrot.lane.b32.xlu0 %v3716, 64
      %v3727 = vpop.permute.xlu0 %3726
      %3728 = vrot.lane.b32.xlu0 %v3717, 64
      %v3729 = vpop.permute.xlu0 %3728
      %3730 = vrot.lane.b32.xlu0 %v3718, 64
      %v3731 = vpop.permute.xlu0 %3730
      %3732 = vrot.lane.b32.xlu0 %v3719, 64
      %v3733 = vpop.permute.xlu0 %3732
      %3734 = vrot.lane.b32.xlu0 %v3720, 64
      %v3735 = vpop.permute.xlu0 %3734
      %3736 = vrot.lane.b32.xlu0 %v3721, 64
      %v3737 = vpop.permute.xlu0 %3736
      %3738 = vrot.lane.b32.xlu0 %v3722, 64
      %v3739 = vpop.permute.xlu0 %3738
      %3740 = vrot.lane.b32.xlu0 %v3723, 64
      %v3741 = vpop.permute.xlu0 %3740
      %v3742 = vsel %vm1190, %v3725, %v3727
      %v3743 = vsel %vm1190, %v3727, %v3729
      %v3744 = vsel %vm1190, %v3729, %v3731
      %v3745 = vsel %vm1190, %v3731, %v3733
      %v3746 = vsel %vm1190, %v3733, %v3735
      %v3747 = vsel %vm1190, %v3735, %v3737
      %v3748 = vsel %vm1190, %v3737, %v3739
      %v3749 = vsel %vm1190, %v3739, %v3741
      %3758 = vst [vmem:[#allocation2 + $0x2c0] sm:$0xfc] %v3742
      %3759 = vst [vmem:[#allocation2 + $0x2c8] sm:$0xfc] %v3743
      %3760 = vst [vmem:[#allocation2 + $0x2d0] sm:$0xfc] %v3744
      %3761 = vst [vmem:[#allocation2 + $0x2d8] sm:$0xfc] %v3745
      %3762 = vst [vmem:[#allocation2 + $0x2e0] sm:$0xfc] %v3746
      %3763 = vst [vmem:[#allocation2 + $0x2e8] sm:$0xfc] %v3747
      %3764 = vst [vmem:[#allocation2 + $0x2f0] sm:$0xfc] %v3748
      %3765 = vst [vmem:[#allocation2 + $0x2f8] sm:$0xfc] %v3749
      %v3766 = vld [vmem:[#allocation4 + $0x8] sm:$0x3f]
      %v3767 = vld [vmem:[#allocation4 + $0x10] sm:$0x3f]
      %v3768 = vld [vmem:[#allocation4 + $0x18] sm:$0x3f]
      %v3769 = vld [vmem:[#allocation4 + $0x20] sm:$0x3f]
      %v3770 = vld [vmem:[#allocation4 + $0x28] sm:$0x3f]
      %v3771 = vld [vmem:[#allocation4 + $0x30] sm:$0x3f]
      %v3772 = vld [vmem:[#allocation4 + $0x38] sm:$0x3f]
      %v3773 = vld [vmem:[#allocation4 + $0x40] sm:$0x3f]
      %v3774 = vld [vmem:[#allocation4 + $0x48] sm:$0x3f]
      %3784 = vrot.lane.b32.xlu0 %v3766, 62
      %v3785 = vpop.permute.xlu0 %3784
      %3786 = vrot.lane.b32.xlu0 %v3767, 62
      %v3787 = vpop.permute.xlu0 %3786
      %3788 = vrot.lane.b32.xlu0 %v3768, 62
      %v3789 = vpop.permute.xlu0 %3788
      %3790 = vrot.lane.b32.xlu0 %v3769, 62
      %v3791 = vpop.permute.xlu0 %3790
      %3792 = vrot.lane.b32.xlu0 %v3770, 62
      %v3793 = vpop.permute.xlu0 %3792
      %3794 = vrot.lane.b32.xlu0 %v3771, 62
      %v3795 = vpop.permute.xlu0 %3794
      %3796 = vrot.lane.b32.xlu0 %v3772, 62
      %v3797 = vpop.permute.xlu0 %3796
      %3798 = vrot.lane.b32.xlu0 %v3773, 62
      %v3799 = vpop.permute.xlu0 %3798
      %3800 = vrot.lane.b32.xlu0 %v3774, 62
      %v3801 = vpop.permute.xlu0 %3800
      %v3802 = vsel %vm1348, %v3785, %v3787
      %v3803 = vsel %vm1348, %v3787, %v3789
      %v3804 = vsel %vm1348, %v3789, %v3791
      %v3805 = vsel %vm1348, %v3791, %v3793
      %v3806 = vsel %vm1348, %v3793, %v3795
      %v3807 = vsel %vm1348, %v3795, %v3797
      %v3808 = vsel %vm1348, %v3797, %v3799
      %v3809 = vsel %vm1348, %v3799, %v3801
      %3818 = vst [vmem:[#allocation2 + $0x300] sm:$0x3f] %v3802
      %3819 = vst [vmem:[#allocation2 + $0x308] sm:$0x3f] %v3803
      %3820 = vst [vmem:[#allocation2 + $0x310] sm:$0x3f] %v3804
      %3821 = vst [vmem:[#allocation2 + $0x318] sm:$0x3f] %v3805
      %3822 = vst [vmem:[#allocation2 + $0x320] sm:$0x3f] %v3806
      %3823 = vst [vmem:[#allocation2 + $0x328] sm:$0x3f] %v3807
      %3824 = vst [vmem:[#allocation2 + $0x330] sm:$0x3f] %v3808
      %3825 = vst [vmem:[#allocation2 + $0x338] sm:$0x3f] %v3809
      %v3826 = vld [vmem:[#allocation4 + $0x8] sm:$0x3f]
      %v3827 = vld [vmem:[#allocation4 + $0x10] sm:$0x3f]
      %v3828 = vld [vmem:[#allocation4 + $0x18] sm:$0x3f]
      %v3829 = vld [vmem:[#allocation4 + $0x20] sm:$0x3f]
      %v3830 = vld [vmem:[#allocation4 + $0x28] sm:$0x3f]
      %v3831 = vld [vmem:[#allocation4 + $0x30] sm:$0x3f]
      %v3832 = vld [vmem:[#allocation4 + $0x38] sm:$0x3f]
      %v3833 = vld [vmem:[#allocation4 + $0x40] sm:$0x3f]
      %v3834 = vld [vmem:[#allocation4 + $0x48] sm:$0x3f]
      %v3844 = vrot.slane %v3826, 2
      %v3845 = vrot.slane %v3827, 2
      %v3846 = vrot.slane %v3828, 2
      %v3847 = vrot.slane %v3829, 2
      %v3848 = vrot.slane %v3830, 2
      %v3849 = vrot.slane %v3831, 2
      %v3850 = vrot.slane %v3832, 2
      %v3851 = vrot.slane %v3833, 2
      %v3852 = vrot.slane %v3834, 2
      %3853 = vrot.lane.b32.xlu0 %v3844, 60
      %v3854 = vpop.permute.xlu0 %3853
      %3855 = vrot.lane.b32.xlu0 %v3845, 60
      %v3856 = vpop.permute.xlu0 %3855
      %3857 = vrot.lane.b32.xlu0 %v3846, 60
      %v3858 = vpop.permute.xlu0 %3857
      %3859 = vrot.lane.b32.xlu0 %v3847, 60
      %v3860 = vpop.permute.xlu0 %3859
      %3861 = vrot.lane.b32.xlu0 %v3848, 60
      %v3862 = vpop.permute.xlu0 %3861
      %3863 = vrot.lane.b32.xlu0 %v3849, 60
      %v3864 = vpop.permute.xlu0 %3863
      %3865 = vrot.lane.b32.xlu0 %v3850, 60
      %v3866 = vpop.permute.xlu0 %3865
      %3867 = vrot.lane.b32.xlu0 %v3851, 60
      %v3868 = vpop.permute.xlu0 %3867
      %3869 = vrot.lane.b32.xlu0 %v3852, 60
      %v3870 = vpop.permute.xlu0 %3869
      %v3871 = vsel %vm1514, %v3854, %v3856
      %v3872 = vsel %vm1514, %v3856, %v3858
      %v3873 = vsel %vm1514, %v3858, %v3860
      %v3874 = vsel %vm1514, %v3860, %v3862
      %v3875 = vsel %vm1514, %v3862, %v3864
      %v3876 = vsel %vm1514, %v3864, %v3866
      %v3877 = vsel %vm1514, %v3866, %v3868
      %v3878 = vsel %vm1514, %v3868, %v3870
      %3887 = vst [vmem:[#allocation2 + $0x300] sm:$0xc0] %v3871
      %3888 = vst [vmem:[#allocation2 + $0x308] sm:$0xc0] %v3872
      %3889 = vst [vmem:[#allocation2 + $0x310] sm:$0xc0] %v3873
      %3890 = vst [vmem:[#allocation2 + $0x318] sm:$0xc0] %v3874
      %3891 = vst [vmem:[#allocation2 + $0x320] sm:$0xc0] %v3875
      %3892 = vst [vmem:[#allocation2 + $0x328] sm:$0xc0] %v3876
      %3893 = vst [vmem:[#allocation2 + $0x330] sm:$0xc0] %v3877
      %3894 = vst [vmem:[#allocation2 + $0x338] sm:$0xc0] %v3878
      %3895 = vst [vmem:[#allocation2 + $0x340] sm:$0xf] %v3871
      %3896 = vst [vmem:[#allocation2 + $0x348] sm:$0xf] %v3872
      %3897 = vst [vmem:[#allocation2 + $0x350] sm:$0xf] %v3873
      %3898 = vst [vmem:[#allocation2 + $0x358] sm:$0xf] %v3874
      %3899 = vst [vmem:[#allocation2 + $0x360] sm:$0xf] %v3875
      %3900 = vst [vmem:[#allocation2 + $0x368] sm:$0xf] %v3876
      %3901 = vst [vmem:[#allocation2 + $0x370] sm:$0xf] %v3877
      %3902 = vst [vmem:[#allocation2 + $0x378] sm:$0xf] %v3878
      %v3903 = vld [vmem:[#allocation4 + $0x8] sm:$0x3f]
      %v3904 = vld [vmem:[#allocation4 + $0x10] sm:$0x3f]
      %v3905 = vld [vmem:[#allocation4 + $0x18] sm:$0x3f]
      %v3906 = vld [vmem:[#allocation4 + $0x20] sm:$0x3f]
      %v3907 = vld [vmem:[#allocation4 + $0x28] sm:$0x3f]
      %v3908 = vld [vmem:[#allocation4 + $0x30] sm:$0x3f]
      %v3909 = vld [vmem:[#allocation4 + $0x38] sm:$0x3f]
      %v3910 = vld [vmem:[#allocation4 + $0x40] sm:$0x3f]
      %v3911 = vld [vmem:[#allocation4 + $0x48] sm:$0x3f]
      %v3921 = vrot.slane %v3903, 4
      %v3922 = vrot.slane %v3904, 4
      %v3923 = vrot.slane %v3905, 4
      %v3924 = vrot.slane %v3906, 4
      %v3925 = vrot.slane %v3907, 4
      %v3926 = vrot.slane %v3908, 4
      %v3927 = vrot.slane %v3909, 4
      %v3928 = vrot.slane %v3910, 4
      %v3929 = vrot.slane %v3911, 4
      %3930 = vrot.lane.b32.xlu0 %v3921, 58
      %v3931 = vpop.permute.xlu0 %3930
      %3932 = vrot.lane.b32.xlu0 %v3922, 58
      %v3933 = vpop.permute.xlu0 %3932
      %3934 = vrot.lane.b32.xlu0 %v3923, 58
      %v3935 = vpop.permute.xlu0 %3934
      %3936 = vrot.lane.b32.xlu0 %v3924, 58
      %v3937 = vpop.permute.xlu0 %3936
      %3938 = vrot.lane.b32.xlu0 %v3925, 58
      %v3939 = vpop.permute.xlu0 %3938
      %3940 = vrot.lane.b32.xlu0 %v3926, 58
      %v3941 = vpop.permute.xlu0 %3940
      %3942 = vrot.lane.b32.xlu0 %v3927, 58
      %v3943 = vpop.permute.xlu0 %3942
      %3944 = vrot.lane.b32.xlu0 %v3928, 58
      %v3945 = vpop.permute.xlu0 %3944
      %3946 = vrot.lane.b32.xlu0 %v3929, 58
      %v3947 = vpop.permute.xlu0 %3946
      %v3948 = vsel %vm3263, %v3931, %v3933
      %v3949 = vsel %vm3263, %v3933, %v3935
      %v3950 = vsel %vm3263, %v3935, %v3937
      %v3951 = vsel %vm3263, %v3937, %v3939
      %v3952 = vsel %vm3263, %v3939, %v3941
      %v3953 = vsel %vm3263, %v3941, %v3943
      %v3954 = vsel %vm3263, %v3943, %v3945
      %v3955 = vsel %vm3263, %v3945, %v3947
      %3964 = vst [vmem:[#allocation2 + $0x340] sm:$0xf0] %v3948
      %3965 = vst [vmem:[#allocation2 + $0x348] sm:$0xf0] %v3949
      %3966 = vst [vmem:[#allocation2 + $0x350] sm:$0xf0] %v3950
      %3967 = vst [vmem:[#allocation2 + $0x358] sm:$0xf0] %v3951
      %3968 = vst [vmem:[#allocation2 + $0x360] sm:$0xf0] %v3952
      %3969 = vst [vmem:[#allocation2 + $0x368] sm:$0xf0] %v3953
      %3970 = vst [vmem:[#allocation2 + $0x370] sm:$0xf0] %v3954
      %3971 = vst [vmem:[#allocation2 + $0x378] sm:$0xf0] %v3955
      %3972 = vst [vmem:[#allocation2 + $0x380] sm:$0x3] %v3948
      %3973 = vst [vmem:[#allocation2 + $0x388] sm:$0x3] %v3949
      %3974 = vst [vmem:[#allocation2 + $0x390] sm:$0x3] %v3950
      %3975 = vst [vmem:[#allocation2 + $0x398] sm:$0x3] %v3951
      %3976 = vst [vmem:[#allocation2 + $0x3a0] sm:$0x3] %v3952
      %3977 = vst [vmem:[#allocation2 + $0x3a8] sm:$0x3] %v3953
      %3978 = vst [vmem:[#allocation2 + $0x3b0] sm:$0x3] %v3954
      %3979 = vst [vmem:[#allocation2 + $0x3b8] sm:$0x3] %v3955
      %v3980 = vld [vmem:[#allocation4 + $0x8] sm:$0x3f]
      %v3981 = vld [vmem:[#allocation4 + $0x10] sm:$0x3f]
      %v3982 = vld [vmem:[#allocation4 + $0x18] sm:$0x3f]
      %v3983 = vld [vmem:[#allocation4 + $0x20] sm:$0x3f]
      %v3984 = vld [vmem:[#allocation4 + $0x28] sm:$0x3f]
      %v3985 = vld [vmem:[#allocation4 + $0x30] sm:$0x3f]
      %v3986 = vld [vmem:[#allocation4 + $0x38] sm:$0x3f]
      %v3987 = vld [vmem:[#allocation4 + $0x40] sm:$0x3f]
      %v3988 = vld [vmem:[#allocation4 + $0x48] sm:$0x3f]
      %v3998 = vrot.slane %v3980, 6
      %v3999 = vrot.slane %v3981, 6
      %v4000 = vrot.slane %v3982, 6
      %v4001 = vrot.slane %v3983, 6
      %v4002 = vrot.slane %v3984, 6
      %v4003 = vrot.slane %v3985, 6
      %v4004 = vrot.slane %v3986, 6
      %v4005 = vrot.slane %v3987, 6
      %v4006 = vrot.slane %v3988, 6
      %4007 = vrot.lane.b32.xlu0 %v3998, 56
      %v4008 = vpop.permute.xlu0 %4007
      %4009 = vrot.lane.b32.xlu0 %v3999, 56
      %v4010 = vpop.permute.xlu0 %4009
      %4011 = vrot.lane.b32.xlu0 %v4000, 56
      %v4012 = vpop.permute.xlu0 %4011
      %4013 = vrot.lane.b32.xlu0 %v4001, 56
      %v4014 = vpop.permute.xlu0 %4013
      %4015 = vrot.lane.b32.xlu0 %v4002, 56
      %v4016 = vpop.permute.xlu0 %4015
      %4017 = vrot.lane.b32.xlu0 %v4003, 56
      %v4018 = vpop.permute.xlu0 %4017
      %4019 = vrot.lane.b32.xlu0 %v4004, 56
      %v4020 = vpop.permute.xlu0 %4019
      %4021 = vrot.lane.b32.xlu0 %v4005, 56
      %v4022 = vpop.permute.xlu0 %4021
      %4023 = vrot.lane.b32.xlu0 %v4006, 56
      %v4024 = vpop.permute.xlu0 %4023
      %v4025 = vsel %vm3333, %v4008, %v4010
      %v4026 = vsel %vm3333, %v4010, %v4012
      %v4027 = vsel %vm3333, %v4012, %v4014
      %v4028 = vsel %vm3333, %v4014, %v4016
      %v4029 = vsel %vm3333, %v4016, %v4018
      %v4030 = vsel %vm3333, %v4018, %v4020
      %v4031 = vsel %vm3333, %v4020, %v4022
      %v4032 = vsel %vm3333, %v4022, %v4024
      %4041 = vst [vmem:[#allocation2 + $0x380] sm:$0xfc] %v4025
      %4042 = vst [vmem:[#allocation2 + $0x388] sm:$0xfc] %v4026
      %4043 = vst [vmem:[#allocation2 + $0x390] sm:$0xfc] %v4027
      %4044 = vst [vmem:[#allocation2 + $0x398] sm:$0xfc] %v4028
      %4045 = vst [vmem:[#allocation2 + $0x3a0] sm:$0xfc] %v4029
      %4046 = vst [vmem:[#allocation2 + $0x3a8] sm:$0xfc] %v4030
      %4047 = vst [vmem:[#allocation2 + $0x3b0] sm:$0xfc] %v4031
      %4048 = vst [vmem:[#allocation2 + $0x3b8] sm:$0xfc] %v4032
      %v4049 = vld [vmem:[#allocation4 + $0x10] sm:$0x3f]
      %v4050 = vld [vmem:[#allocation4 + $0x18] sm:$0x3f]
      %v4051 = vld [vmem:[#allocation4 + $0x20] sm:$0x3f]
      %v4052 = vld [vmem:[#allocation4 + $0x28] sm:$0x3f]
      %v4053 = vld [vmem:[#allocation4 + $0x30] sm:$0x3f]
      %v4054 = vld [vmem:[#allocation4 + $0x38] sm:$0x3f]
      %v4055 = vld [vmem:[#allocation4 + $0x40] sm:$0x3f]
      %v4056 = vld [vmem:[#allocation4 + $0x48] sm:$0x3f]
      %4057 = vst [vmem:[#allocation2 + $0x3c0] sm:$0x3f] %v4049
      %4058 = vst [vmem:[#allocation2 + $0x3c8] sm:$0x3f] %v4050
      %4059 = vst [vmem:[#allocation2 + $0x3d0] sm:$0x3f] %v4051
      %4060 = vst [vmem:[#allocation2 + $0x3d8] sm:$0x3f] %v4052
      %4061 = vst [vmem:[#allocation2 + $0x3e0] sm:$0x3f] %v4053
      %4062 = vst [vmem:[#allocation2 + $0x3e8] sm:$0x3f] %v4054
      %4063 = vst [vmem:[#allocation2 + $0x3f0] sm:$0x3f] %v4055
      %4064 = vst [vmem:[#allocation2 + $0x3f8] sm:$0x3f] %v4056
      %v4065 = vld [vmem:[#allocation4 + $0x10] sm:$0x3f]
      %v4066 = vld [vmem:[#allocation4 + $0x18] sm:$0x3f]
      %v4067 = vld [vmem:[#allocation4 + $0x20] sm:$0x3f]
      %v4068 = vld [vmem:[#allocation4 + $0x28] sm:$0x3f]
      %v4069 = vld [vmem:[#allocation4 + $0x30] sm:$0x3f]
      %v4070 = vld [vmem:[#allocation4 + $0x38] sm:$0x3f]
      %v4071 = vld [vmem:[#allocation4 + $0x40] sm:$0x3f]
      %v4072 = vld [vmem:[#allocation4 + $0x48] sm:$0x3f]
      %v4073 = vld [vmem:[#allocation4 + $0x50] sm:$0x3f]
      %v4083 = vrot.slane %v4065, 2
      %v4084 = vrot.slane %v4066, 2
      %v4085 = vrot.slane %v4067, 2
      %v4086 = vrot.slane %v4068, 2
      %v4087 = vrot.slane %v4069, 2
      %v4088 = vrot.slane %v4070, 2
      %v4089 = vrot.slane %v4071, 2
      %v4090 = vrot.slane %v4072, 2
      %v4091 = vrot.slane %v4073, 2
      %4092 = vrot.lane.b32.xlu0 %v4083, 126
      %v4093 = vpop.permute.xlu0 %4092
      %4094 = vrot.lane.b32.xlu0 %v4084, 126
      %v4095 = vpop.permute.xlu0 %4094
      %4096 = vrot.lane.b32.xlu0 %v4085, 126
      %v4097 = vpop.permute.xlu0 %4096
      %4098 = vrot.lane.b32.xlu0 %v4086, 126
      %v4099 = vpop.permute.xlu0 %4098
      %4100 = vrot.lane.b32.xlu0 %v4087, 126
      %v4101 = vpop.permute.xlu0 %4100
      %4102 = vrot.lane.b32.xlu0 %v4088, 126
      %v4103 = vpop.permute.xlu0 %4102
      %4104 = vrot.lane.b32.xlu0 %v4089, 126
      %v4105 = vpop.permute.xlu0 %4104
      %4106 = vrot.lane.b32.xlu0 %v4090, 126
      %v4107 = vpop.permute.xlu0 %4106
      %4108 = vrot.lane.b32.xlu0 %v4091, 126
      %v4109 = vpop.permute.xlu0 %4108
      %v4110 = vsel %vm559, %v4093, %v4095
      %v4111 = vsel %vm559, %v4095, %v4097
      %v4112 = vsel %vm559, %v4097, %v4099
      %v4113 = vsel %vm559, %v4099, %v4101
      %v4114 = vsel %vm559, %v4101, %v4103
      %v4115 = vsel %vm559, %v4103, %v4105
      %v4116 = vsel %vm559, %v4105, %v4107
      %v4117 = vsel %vm559, %v4107, %v4109
      %4126 = vst [vmem:[#allocation2 + $0x3c0] sm:$0xc0] %v4110
      %4127 = vst [vmem:[#allocation2 + $0x3c8] sm:$0xc0] %v4111
      %4128 = vst [vmem:[#allocation2 + $0x3d0] sm:$0xc0] %v4112
      %4129 = vst [vmem:[#allocation2 + $0x3d8] sm:$0xc0] %v4113
      %4130 = vst [vmem:[#allocation2 + $0x3e0] sm:$0xc0] %v4114
      %4131 = vst [vmem:[#allocation2 + $0x3e8] sm:$0xc0] %v4115
      %4132 = vst [vmem:[#allocation2 + $0x3f0] sm:$0xc0] %v4116
      %4133 = vst [vmem:[#allocation2 + $0x3f8] sm:$0xc0] %v4117
      %4134 = vst [vmem:[#allocation2 + $0x400] sm:$0xf] %v4110
      %4135 = vst [vmem:[#allocation2 + $0x408] sm:$0xf] %v4111
      %4136 = vst [vmem:[#allocation2 + $0x410] sm:$0xf] %v4112
      %4137 = vst [vmem:[#allocation2 + $0x418] sm:$0xf] %v4113
      %4138 = vst [vmem:[#allocation2 + $0x420] sm:$0xf] %v4114
      %4139 = vst [vmem:[#allocation2 + $0x428] sm:$0xf] %v4115
      %4140 = vst [vmem:[#allocation2 + $0x430] sm:$0xf] %v4116
      %4141 = vst [vmem:[#allocation2 + $0x438] sm:$0xf] %v4117
      %v4142 = vld [vmem:[#allocation4 + $0x10] sm:$0x3f]
      %v4143 = vld [vmem:[#allocation4 + $0x18] sm:$0x3f]
      %v4144 = vld [vmem:[#allocation4 + $0x20] sm:$0x3f]
      %v4145 = vld [vmem:[#allocation4 + $0x28] sm:$0x3f]
      %v4146 = vld [vmem:[#allocation4 + $0x30] sm:$0x3f]
      %v4147 = vld [vmem:[#allocation4 + $0x38] sm:$0x3f]
      %v4148 = vld [vmem:[#allocation4 + $0x40] sm:$0x3f]
      %v4149 = vld [vmem:[#allocation4 + $0x48] sm:$0x3f]
      %v4150 = vld [vmem:[#allocation4 + $0x50] sm:$0x3f]
      %v4160 = vrot.slane %v4142, 4
      %v4161 = vrot.slane %v4143, 4
      %v4162 = vrot.slane %v4144, 4
      %v4163 = vrot.slane %v4145, 4
      %v4164 = vrot.slane %v4146, 4
      %v4165 = vrot.slane %v4147, 4
      %v4166 = vrot.slane %v4148, 4
      %v4167 = vrot.slane %v4149, 4
      %v4168 = vrot.slane %v4150, 4
      %4169 = vrot.lane.b32.xlu0 %v4160, 124
      %v4170 = vpop.permute.xlu0 %4169
      %4171 = vrot.lane.b32.xlu0 %v4161, 124
      %v4172 = vpop.permute.xlu0 %4171
      %4173 = vrot.lane.b32.xlu0 %v4162, 124
      %v4174 = vpop.permute.xlu0 %4173
      %4175 = vrot.lane.b32.xlu0 %v4163, 124
      %v4176 = vpop.permute.xlu0 %4175
      %4177 = vrot.lane.b32.xlu0 %v4164, 124
      %v4178 = vpop.permute.xlu0 %4177
      %4179 = vrot.lane.b32.xlu0 %v4165, 124
      %v4180 = vpop.permute.xlu0 %4179
      %4181 = vrot.lane.b32.xlu0 %v4166, 124
      %v4182 = vpop.permute.xlu0 %4181
      %4183 = vrot.lane.b32.xlu0 %v4167, 124
      %v4184 = vpop.permute.xlu0 %4183
      %4185 = vrot.lane.b32.xlu0 %v4168, 124
      %v4186 = vpop.permute.xlu0 %4185
      %v4187 = vsel %vm717, %v4170, %v4172
      %v4188 = vsel %vm717, %v4172, %v4174
      %v4189 = vsel %vm717, %v4174, %v4176
      %v4190 = vsel %vm717, %v4176, %v4178
      %v4191 = vsel %vm717, %v4178, %v4180
      %v4192 = vsel %vm717, %v4180, %v4182
      %v4193 = vsel %vm717, %v4182, %v4184
      %v4194 = vsel %vm717, %v4184, %v4186
      %4203 = vst [vmem:[#allocation2 + $0x400] sm:$0xf0] %v4187
      %4204 = vst [vmem:[#allocation2 + $0x408] sm:$0xf0] %v4188
      %4205 = vst [vmem:[#allocation2 + $0x410] sm:$0xf0] %v4189
      %4206 = vst [vmem:[#allocation2 + $0x418] sm:$0xf0] %v4190
      %4207 = vst [vmem:[#allocation2 + $0x420] sm:$0xf0] %v4191
      %4208 = vst [vmem:[#allocation2 + $0x428] sm:$0xf0] %v4192
      %4209 = vst [vmem:[#allocation2 + $0x430] sm:$0xf0] %v4193
      %4210 = vst [vmem:[#allocation2 + $0x438] sm:$0xf0] %v4194
      %4211 = vst [vmem:[#allocation2 + $0x440] sm:$0x3] %v4187
      %4212 = vst [vmem:[#allocation2 + $0x448] sm:$0x3] %v4188
      %4213 = vst [vmem:[#allocation2 + $0x450] sm:$0x3] %v4189
      %4214 = vst [vmem:[#allocation2 + $0x458] sm:$0x3] %v4190
      %4215 = vst [vmem:[#allocation2 + $0x460] sm:$0x3] %v4191
      %4216 = vst [vmem:[#allocation2 + $0x468] sm:$0x3] %v4192
      %4217 = vst [vmem:[#allocation2 + $0x470] sm:$0x3] %v4193
      %4218 = vst [vmem:[#allocation2 + $0x478] sm:$0x3] %v4194
      %v4219 = vld [vmem:[#allocation4 + $0x10] sm:$0x3f]
      %v4220 = vld [vmem:[#allocation4 + $0x18] sm:$0x3f]
      %v4221 = vld [vmem:[#allocation4 + $0x20] sm:$0x3f]
      %v4222 = vld [vmem:[#allocation4 + $0x28] sm:$0x3f]
      %v4223 = vld [vmem:[#allocation4 + $0x30] sm:$0x3f]
      %v4224 = vld [vmem:[#allocation4 + $0x38] sm:$0x3f]
      %v4225 = vld [vmem:[#allocation4 + $0x40] sm:$0x3f]
      %v4226 = vld [vmem:[#allocation4 + $0x48] sm:$0x3f]
      %v4227 = vld [vmem:[#allocation4 + $0x50] sm:$0x3f]
      %v4237 = vrot.slane %v4219, 6
      %v4238 = vrot.slane %v4220, 6
      %v4239 = vrot.slane %v4221, 6
      %v4240 = vrot.slane %v4222, 6
      %v4241 = vrot.slane %v4223, 6
      %v4242 = vrot.slane %v4224, 6
      %v4243 = vrot.slane %v4225, 6
      %v4244 = vrot.slane %v4226, 6
      %v4245 = vrot.slane %v4227, 6
      %4246 = vrot.lane.b32.xlu0 %v4237, 122
      %v4247 = vpop.permute.xlu0 %4246
      %4248 = vrot.lane.b32.xlu0 %v4238, 122
      %v4249 = vpop.permute.xlu0 %4248
      %4250 = vrot.lane.b32.xlu0 %v4239, 122
      %v4251 = vpop.permute.xlu0 %4250
      %4252 = vrot.lane.b32.xlu0 %v4240, 122
      %v4253 = vpop.permute.xlu0 %4252
      %4254 = vrot.lane.b32.xlu0 %v4241, 122
      %v4255 = vpop.permute.xlu0 %4254
      %4256 = vrot.lane.b32.xlu0 %v4242, 122
      %v4257 = vpop.permute.xlu0 %4256
      %4258 = vrot.lane.b32.xlu0 %v4243, 122
      %v4259 = vpop.permute.xlu0 %4258
      %4260 = vrot.lane.b32.xlu0 %v4244, 122
      %v4261 = vpop.permute.xlu0 %4260
      %4262 = vrot.lane.b32.xlu0 %v4245, 122
      %v4263 = vpop.permute.xlu0 %4262
      %v4264 = vsel %vm2918, %v4247, %v4249
      %v4265 = vsel %vm2918, %v4249, %v4251
      %v4266 = vsel %vm2918, %v4251, %v4253
      %v4267 = vsel %vm2918, %v4253, %v4255
      %v4268 = vsel %vm2918, %v4255, %v4257
      %v4269 = vsel %vm2918, %v4257, %v4259
      %v4270 = vsel %vm2918, %v4259, %v4261
      %v4271 = vsel %vm2918, %v4261, %v4263
      %4280 = vst [vmem:[#allocation2 + $0x440] sm:$0xfc] %v4264
      %4281 = vst [vmem:[#allocation2 + $0x448] sm:$0xfc] %v4265
      %4282 = vst [vmem:[#allocation2 + $0x450] sm:$0xfc] %v4266
      %4283 = vst [vmem:[#allocation2 + $0x458] sm:$0xfc] %v4267
      %4284 = vst [vmem:[#allocation2 + $0x460] sm:$0xfc] %v4268
      %4285 = vst [vmem:[#allocation2 + $0x468] sm:$0xfc] %v4269
      %4286 = vst [vmem:[#allocation2 + $0x470] sm:$0xfc] %v4270
      %4287 = vst [vmem:[#allocation2 + $0x478] sm:$0xfc] %v4271
      %v4288 = vld [vmem:[#allocation4 + $0x10] sm:$0x3f]
      %v4289 = vld [vmem:[#allocation4 + $0x18] sm:$0x3f]
      %v4290 = vld [vmem:[#allocation4 + $0x20] sm:$0x3f]
      %v4291 = vld [vmem:[#allocation4 + $0x28] sm:$0x3f]
      %v4292 = vld [vmem:[#allocation4 + $0x30] sm:$0x3f]
      %v4293 = vld [vmem:[#allocation4 + $0x38] sm:$0x3f]
      %v4294 = vld [vmem:[#allocation4 + $0x40] sm:$0x3f]
      %v4295 = vld [vmem:[#allocation4 + $0x48] sm:$0x3f]
      %v4296 = vld [vmem:[#allocation4 + $0x50] sm:$0x3f]
      %4306 = vrot.lane.b32.xlu0 %v4288, 120
      %v4307 = vpop.permute.xlu0 %4306
      %4308 = vrot.lane.b32.xlu0 %v4289, 120
      %v4309 = vpop.permute.xlu0 %4308
      %4310 = vrot.lane.b32.xlu0 %v4290, 120
      %v4311 = vpop.permute.xlu0 %4310
      %4312 = vrot.lane.b32.xlu0 %v4291, 120
      %v4313 = vpop.permute.xlu0 %4312
      %4314 = vrot.lane.b32.xlu0 %v4292, 120
      %v4315 = vpop.permute.xlu0 %4314
      %4316 = vrot.lane.b32.xlu0 %v4293, 120
      %v4317 = vpop.permute.xlu0 %4316
      %4318 = vrot.lane.b32.xlu0 %v4294, 120
      %v4319 = vpop.permute.xlu0 %4318
      %4320 = vrot.lane.b32.xlu0 %v4295, 120
      %v4321 = vpop.permute.xlu0 %4320
      %4322 = vrot.lane.b32.xlu0 %v4296, 120
      %v4323 = vpop.permute.xlu0 %4322
      %v4324 = vsel %vm2979, %v4307, %v4309
      %v4325 = vsel %vm2979, %v4309, %v4311
      %v4326 = vsel %vm2979, %v4311, %v4313
      %v4327 = vsel %vm2979, %v4313, %v4315
      %v4328 = vsel %vm2979, %v4315, %v4317
      %v4329 = vsel %vm2979, %v4317, %v4319
      %v4330 = vsel %vm2979, %v4319, %v4321
      %v4331 = vsel %vm2979, %v4321, %v4323
      %4340 = vst [vmem:[#allocation2 + $0x480] sm:$0x3f] %v4324
      %4341 = vst [vmem:[#allocation2 + $0x488] sm:$0x3f] %v4325
      %4342 = vst [vmem:[#allocation2 + $0x490] sm:$0x3f] %v4326
      %4343 = vst [vmem:[#allocation2 + $0x498] sm:$0x3f] %v4327
      %4344 = vst [vmem:[#allocation2 + $0x4a0] sm:$0x3f] %v4328
      %4345 = vst [vmem:[#allocation2 + $0x4a8] sm:$0x3f] %v4329
      %4346 = vst [vmem:[#allocation2 + $0x4b0] sm:$0x3f] %v4330
      %4347 = vst [vmem:[#allocation2 + $0x4b8] sm:$0x3f] %v4331
      %v4348 = vld [vmem:[%s3] sm:$0xff]
      %v4349 = vld [vmem:[%s3 + $0x8] sm:$0xff]
      %v4350 = vld [vmem:[%s3 + $0x10] sm:$0xff]
      %v4351 = vld [vmem:[%s3 + $0x18] sm:$0xff]
      %v4352 = vld [vmem:[#allocation2] sm:$0xff]
      %v4353 = vld [vmem:[#allocation2 + $0x8] sm:$0xff]
      %v4354 = vld [vmem:[#allocation2 + $0x10] sm:$0xff]
      %v4355 = vld [vmem:[#allocation2 + $0x18] sm:$0xff]
      %v4356 = vld [vmem:[#allocation2 + $0x20] sm:$0xff]
      %v4357 = vld [vmem:[#allocation2 + $0x28] sm:$0xff]
      %v4358 = vld [vmem:[#allocation2 + $0x30] sm:$0xff]
      %v4359 = vld [vmem:[#allocation2 + $0x38] sm:$0xff]
      %v4360 = vld [vmem:[#allocation2 + $0x40] sm:$0xff]
      %v4361 = vld [vmem:[#allocation2 + $0x48] sm:$0xff]
      %v4362 = vld [vmem:[#allocation2 + $0x50] sm:$0xff]
      %v4363 = vld [vmem:[#allocation2 + $0x58] sm:$0xff]
      %v4364 = vld [vmem:[#allocation2 + $0x60] sm:$0xff]
      %v4365 = vld [vmem:[#allocation2 + $0x68] sm:$0xff]
      %v4366 = vld [vmem:[#allocation2 + $0x70] sm:$0xff]
      %v4367 = vld [vmem:[#allocation2 + $0x78] sm:$0xff]
      %v4368 = vld [vmem:[#allocation2 + $0x80] sm:$0xff]
      %v4369 = vld [vmem:[#allocation2 + $0x88] sm:$0xff]
      %v4370 = vld [vmem:[#allocation2 + $0x90] sm:$0xff]
      %v4371 = vld [vmem:[#allocation2 + $0x98] sm:$0xff]
      %v4372 = vld [vmem:[#allocation2 + $0xa0] sm:$0xff]
      %v4373 = vld [vmem:[#allocation2 + $0xa8] sm:$0xff]
      %v4374 = vld [vmem:[#allocation2 + $0xb0] sm:$0xff]
      %v4375 = vld [vmem:[#allocation2 + $0xb8] sm:$0xff]
      %v4376 = vld [vmem:[#allocation2 + $0xc0] sm:$0xff]
      %v4377 = vld [vmem:[#allocation2 + $0xc8] sm:$0xff]
      %v4378 = vld [vmem:[#allocation2 + $0xd0] sm:$0xff]
      %v4379 = vld [vmem:[#allocation2 + $0xd8] sm:$0xff]
      %v4380 = vld [vmem:[#allocation2 + $0xe0] sm:$0xff]
      %v4381 = vld [vmem:[#allocation2 + $0xe8] sm:$0xff]
      %v4382 = vld [vmem:[#allocation2 + $0xf0] sm:$0xff]
      %v4383 = vld [vmem:[#allocation2 + $0xf8] sm:$0xff]
      %v4384 = vld [vmem:[#allocation2 + $0x100] sm:$0xff]
      %v4385 = vld [vmem:[#allocation2 + $0x108] sm:$0xff]
      %v4386 = vld [vmem:[#allocation2 + $0x110] sm:$0xff]
      %v4387 = vld [vmem:[#allocation2 + $0x118] sm:$0xff]
      %v4388 = vld [vmem:[#allocation2 + $0x120] sm:$0xff]
      %v4389 = vld [vmem:[#allocation2 + $0x128] sm:$0xff]
      %v4390 = vld [vmem:[#allocation2 + $0x130] sm:$0xff]
      %v4391 = vld [vmem:[#allocation2 + $0x138] sm:$0xff]
      %v4392 = vld [vmem:[#allocation2 + $0x140] sm:$0xff]
      %v4393 = vld [vmem:[#allocation2 + $0x148] sm:$0xff]
      %v4394 = vld [vmem:[#allocation2 + $0x150] sm:$0xff]
      %v4395 = vld [vmem:[#allocation2 + $0x158] sm:$0xff]
      %v4396 = vld [vmem:[#allocation2 + $0x160] sm:$0xff]
      %v4397 = vld [vmem:[#allocation2 + $0x168] sm:$0xff]
      %v4398 = vld [vmem:[#allocation2 + $0x170] sm:$0xff]
      %v4399 = vld [vmem:[#allocation2 + $0x178] sm:$0xff]
      %v4400 = vld [vmem:[#allocation2 + $0x180] sm:$0xff]
      %v4401 = vld [vmem:[#allocation2 + $0x188] sm:$0xff]
      %v4402 = vld [vmem:[#allocation2 + $0x190] sm:$0xff]
      %v4403 = vld [vmem:[#allocation2 + $0x198] sm:$0xff]
      %v4404 = vld [vmem:[#allocation2 + $0x1a0] sm:$0xff]
      %v4405 = vld [vmem:[#allocation2 + $0x1a8] sm:$0xff]
      %v4406 = vld [vmem:[#allocation2 + $0x1b0] sm:$0xff]
      %v4407 = vld [vmem:[#allocation2 + $0x1b8] sm:$0xff]
      %v4408 = vld [vmem:[#allocation2 + $0x1c0] sm:$0xff]
      %v4409 = vld [vmem:[#allocation2 + $0x1c8] sm:$0xff]
      %v4410 = vld [vmem:[#allocation2 + $0x1d0] sm:$0xff]
      %v4411 = vld [vmem:[#allocation2 + $0x1d8] sm:$0xff]
      %v4412 = vld [vmem:[#allocation2 + $0x1e0] sm:$0xff]
      %v4413 = vld [vmem:[#allocation2 + $0x1e8] sm:$0xff]
      %v4414 = vld [vmem:[#allocation2 + $0x1f0] sm:$0xff]
      %v4415 = vld [vmem:[#allocation2 + $0x1f8] sm:$0xff]
      %v4416 = vld [vmem:[#allocation2 + $0x200] sm:$0xff]
      %v4417 = vld [vmem:[#allocation2 + $0x208] sm:$0xff]
      %v4418 = vld [vmem:[#allocation2 + $0x210] sm:$0xff]
      %v4419 = vld [vmem:[#allocation2 + $0x218] sm:$0xff]
      %v4420 = vld [vmem:[#allocation2 + $0x220] sm:$0xff]
      %v4421 = vld [vmem:[#allocation2 + $0x228] sm:$0xff]
      %v4422 = vld [vmem:[#allocation2 + $0x230] sm:$0xff]
      %v4423 = vld [vmem:[#allocation2 + $0x238] sm:$0xff]
      %v4424 = vld [vmem:[#allocation2 + $0x240] sm:$0xff]
      %v4425 = vld [vmem:[#allocation2 + $0x248] sm:$0xff]
      %v4426 = vld [vmem:[#allocation2 + $0x250] sm:$0xff]
      %v4427 = vld [vmem:[#allocation2 + $0x258] sm:$0xff]
      %v4428 = vld [vmem:[#allocation2 + $0x260] sm:$0xff]
      %v4429 = vld [vmem:[#allocation2 + $0x268] sm:$0xff]
      %v4430 = vld [vmem:[#allocation2 + $0x270] sm:$0xff]
      %v4431 = vld [vmem:[#allocation2 + $0x278] sm:$0xff]
      %v4432 = vld [vmem:[#allocation2 + $0x280] sm:$0xff]
      %v4433 = vld [vmem:[#allocation2 + $0x288] sm:$0xff]
      %v4434 = vld [vmem:[#allocation2 + $0x290] sm:$0xff]
      %v4435 = vld [vmem:[#allocation2 + $0x298] sm:$0xff]
      %v4436 = vld [vmem:[#allocation2 + $0x2a0] sm:$0xff]
      %v4437 = vld [vmem:[#allocation2 + $0x2a8] sm:$0xff]
      %v4438 = vld [vmem:[#allocation2 + $0x2b0] sm:$0xff]
      %v4439 = vld [vmem:[#allocation2 + $0x2b8] sm:$0xff]
      %v4440 = vld [vmem:[#allocation2 + $0x2c0] sm:$0xff]
      %v4441 = vld [vmem:[#allocation2 + $0x2c8] sm:$0xff]
      %v4442 = vld [vmem:[#allocation2 + $0x2d0] sm:$0xff]
      %v4443 = vld [vmem:[#allocation2 + $0x2d8] sm:$0xff]
      %v4444 = vld [vmem:[#allocation2 + $0x2e0] sm:$0xff]
      %v4445 = vld [vmem:[#allocation2 + $0x2e8] sm:$0xff]
      %v4446 = vld [vmem:[#allocation2 + $0x2f0] sm:$0xff]
      %v4447 = vld [vmem:[#allocation2 + $0x2f8] sm:$0xff]
      %v4448 = vld [vmem:[#allocation2 + $0x300] sm:$0xff]
      %v4449 = vld [vmem:[#allocation2 + $0x308] sm:$0xff]
      %v4450 = vld [vmem:[#allocation2 + $0x310] sm:$0xff]
      %v4451 = vld [vmem:[#allocation2 + $0x318] sm:$0xff]
      %v4452 = vld [vmem:[#allocation2 + $0x320] sm:$0xff]
      %v4453 = vld [vmem:[#allocation2 + $0x328] sm:$0xff]
      %v4454 = vld [vmem:[#allocation2 + $0x330] sm:$0xff]
      %v4455 = vld [vmem:[#allocation2 + $0x338] sm:$0xff]
      %v4456 = vld [vmem:[#allocation2 + $0x340] sm:$0xff]
      %v4457 = vld [vmem:[#allocation2 + $0x348] sm:$0xff]
      %v4458 = vld [vmem:[#allocation2 + $0x350] sm:$0xff]
      %v4459 = vld [vmem:[#allocation2 + $0x358] sm:$0xff]
      %v4460 = vld [vmem:[#allocation2 + $0x360] sm:$0xff]
      %v4461 = vld [vmem:[#allocation2 + $0x368] sm:$0xff]
      %v4462 = vld [vmem:[#allocation2 + $0x370] sm:$0xff]
      %v4463 = vld [vmem:[#allocation2 + $0x378] sm:$0xff]
      %v4464 = vld [vmem:[#allocation2 + $0x380] sm:$0xff]
      %v4465 = vld [vmem:[#allocation2 + $0x388] sm:$0xff]
      %v4466 = vld [vmem:[#allocation2 + $0x390] sm:$0xff]
      %v4467 = vld [vmem:[#allocation2 + $0x398] sm:$0xff]
      %v4468 = vld [vmem:[#allocation2 + $0x3a0] sm:$0xff]
      %v4469 = vld [vmem:[#allocation2 + $0x3a8] sm:$0xff]
      %v4470 = vld [vmem:[#allocation2 + $0x3b0] sm:$0xff]
      %v4471 = vld [vmem:[#allocation2 + $0x3b8] sm:$0xff]
      %v4472 = vld [vmem:[#allocation2 + $0x3c0] sm:$0xff]
      %v4473 = vld [vmem:[#allocation2 + $0x3c8] sm:$0xff]
      %v4474 = vld [vmem:[#allocation2 + $0x3d0] sm:$0xff]
      %v4475 = vld [vmem:[#allocation2 + $0x3d8] sm:$0xff]
      %v4476 = vld [vmem:[#allocation2 + $0x3e0] sm:$0xff]
      %v4477 = vld [vmem:[#allocation2 + $0x3e8] sm:$0xff]
      %v4478 = vld [vmem:[#allocation2 + $0x3f0] sm:$0xff]
      %v4479 = vld [vmem:[#allocation2 + $0x3f8] sm:$0xff]
      %v4480 = vld [vmem:[#allocation2 + $0x400] sm:$0xff]
      %v4481 = vld [vmem:[#allocation2 + $0x408] sm:$0xff]
      %v4482 = vld [vmem:[#allocation2 + $0x410] sm:$0xff]
      %v4483 = vld [vmem:[#allocation2 + $0x418] sm:$0xff]
      %v4484 = vld [vmem:[#allocation2 + $0x420] sm:$0xff]
      %v4485 = vld [vmem:[#allocation2 + $0x428] sm:$0xff]
      %v4486 = vld [vmem:[#allocation2 + $0x430] sm:$0xff]
      %v4487 = vld [vmem:[#allocation2 + $0x438] sm:$0xff]
      %v4488 = vld [vmem:[#allocation2 + $0x440] sm:$0xff]
      %v4489 = vld [vmem:[#allocation2 + $0x448] sm:$0xff]
      %v4490 = vld [vmem:[#allocation2 + $0x450] sm:$0xff]
      %v4491 = vld [vmem:[#allocation2 + $0x458] sm:$0xff]
      %v4492 = vld [vmem:[#allocation2 + $0x460] sm:$0xff]
      %v4493 = vld [vmem:[#allocation2 + $0x468] sm:$0xff]
      %v4494 = vld [vmem:[#allocation2 + $0x470] sm:$0xff]
      %v4495 = vld [vmem:[#allocation2 + $0x478] sm:$0xff]
      %v4496 = vld [vmem:[#allocation2 + $0x480] sm:$0x3f]
      %v4497 = vld [vmem:[#allocation2 + $0x488] sm:$0x3f]
      %v4498 = vld [vmem:[#allocation2 + $0x490] sm:$0x3f]
      %v4499 = vld [vmem:[#allocation2 + $0x498] sm:$0x3f]
      %v4500 = vld [vmem:[#allocation2 + $0x4a0] sm:$0x3f]
      %v4501 = vld [vmem:[#allocation2 + $0x4a8] sm:$0x3f]
      %v4502 = vld [vmem:[#allocation2 + $0x4b0] sm:$0x3f]
      %v4503 = vld [vmem:[#allocation2 + $0x4b8] sm:$0x3f]
      %v4504 = vld [vmem:[%s4] sm:$0xff]
      %v4505 = vld [vmem:[%s4 + $0x8] sm:$0xff]
      %4507 = vset.pattern.permute.xlu0 0
      %4508 = vperm.xlu0 %4507, %v4504
      %v4509 = vpop.permute.xlu0 %4508
      %4512 = vset.pattern.permute.xlu0 0
      %4513 = vperm.xlu0 %4512, %v4505
      %v4514 = vpop.permute.xlu0 %4513
      %vm4516 = vcmask 179200
      %v4518 = vsel %vm4516, %v4349, 0
      %v4521 = vsel %vm4516, %v4351, 0
      %vm4523 = vcmask 1045504
      %v4525 = vsel %vm4523, %v4496, 0
      %v4528 = vsel %vm4523, %v4497, 0
      %v4531 = vsel %vm4523, %v4498, 0
      %v4534 = vsel %vm4523, %v4499, 0
      %v4537 = vsel %vm4523, %v4500, 0
      %v4540 = vsel %vm4523, %v4501, 0
      %v4543 = vsel %vm4523, %v4502, 0
      %v4546 = vsel %vm4523, %v4503, 0
      %4548 = vmatpush.msra.mxu0 %v4472
      %4549 = vmatpush.msra.mxu0 %v4464
      %4550 = vmatpush.msra.mxu0 %v4456
      %4551 = vmatpush.msra.mxu0 %v4448
      %4552 = vmatpush.msra.mxu0 %v4440
      %4553 = vmatpush.msra.mxu0 %v4432
      %4554 = vmatpush.msra.mxu0 %v4424
      %4555 = vmatpush.msra.mxu0 %v4416
      %4556 = vmatpush.msra.mxu0 %v4408
      %4557 = vmatpush.msra.mxu0 %v4400
      %4558 = vmatpush.msra.mxu0 %v4392
      %4559 = vmatpush.msra.mxu0 %v4384
      %4560 = vmatpush.msra.mxu0 %v4376
      %4561 = vmatpush.msra.mxu0 %v4368
      %4562 = vmatpush.msra.mxu0 %v4360
      %4563 = vmatpush.msra.mxu0 %v4352
      %4564 = vmatmul.f32.gmra.mxu0 %v4348
      %v4565 = vpop.f32.mrf.mxu0
      %v4566 = vadd.f32 %v4509, %v4565
      %4567 = vmatmul.f32.gmra.mxu0 %v4350
      %v4568 = vpop.f32.mrf.mxu0
      %v4569 = vadd.f32 %v4514, %v4568
      %4570 = vdwg.mxu0
      %4571 = vmatpush.msra.mxu0 0.0
      %4572 = vmatpush.msra.mxu0 0.0
      %4573 = vmatpush.msra.mxu0 0.0
      %4574 = vmatpush.msra.mxu0 0.0
      %4575 = vmatpush.msra.mxu0 0.0
      %4576 = vmatpush.msra.mxu0 0.0
      %4577 = vmatpush.msra.mxu0 0.0
      %4578 = vmatpush.msra.mxu0 0.0
      %4579 = vmatpush.msra.mxu0 0.0
      %4580 = vmatpush.msra.mxu0 0.0
      %4581 = vmatpush.msra.mxu0 0.0
      %4582 = vmatpush.msra.mxu0 0.0
      %4583 = vmatpush.msra.mxu0 0.0
      %4584 = vmatpush.msra.mxu0 %v4525
      %4585 = vmatpush.msra.mxu0 %v4488
      %4586 = vmatpush.msra.mxu0 %v4480
      %4587 = vmatmul.f32.gmra.mxu0 %v4518
      %v4588 = vpop.f32.mrf.mxu0
      %v4589 = vadd.f32 %v4566, %v4588
      %4590 = vmatmul.f32.gmra.mxu0 %v4521
      %v4591 = vpop.f32.mrf.mxu0
      %v4592 = vadd.f32 %v4569, %v4591
      %4593 = vdwg.mxu0
      %4594 = vmatpush.msra.mxu0 %v4473
      %4595 = vmatpush.msra.mxu0 %v4465
      %4596 = vmatpush.msra.mxu0 %v4457
      %4597 = vmatpush.msra.mxu0 %v4449
      %4598 = vmatpush.msra.mxu0 %v4441
      %4599 = vmatpush.msra.mxu0 %v4433
      %4600 = vmatpush.msra.mxu0 %v4425
      %4601 = vmatpush.msra.mxu0 %v4417
      %4602 = vmatpush.msra.mxu0 %v4409
      %4603 = vmatpush.msra.mxu0 %v4401
      %4604 = vmatpush.msra.mxu0 %v4393
      %4605 = vmatpush.msra.mxu0 %v4385
      %4606 = vmatpush.msra.mxu0 %v4377
      %4607 = vmatpush.msra.mxu0 %v4369
      %4608 = vmatpush.msra.mxu0 %v4361
      %4609 = vmatpush.msra.mxu0 %v4353
      %4610 = vmatmul.f32.gmra.mxu0 %v4348
      %v4611 = vpop.f32.mrf.mxu0
      %v4612 = vadd.f32 %v4509, %v4611
      %4613 = vmatmul.f32.gmra.mxu0 %v4350
      %v4614 = vpop.f32.mrf.mxu0
      %v4615 = vadd.f32 %v4514, %v4614
      %4616 = vdwg.mxu0
      %4617 = vmatpush.msra.mxu0 0.0
      %4618 = vmatpush.msra.mxu0 0.0
      %4619 = vmatpush.msra.mxu0 0.0
      %4620 = vmatpush.msra.mxu0 0.0
      %4621 = vmatpush.msra.mxu0 0.0
      %4622 = vmatpush.msra.mxu0 0.0
      %4623 = vmatpush.msra.mxu0 0.0
      %4624 = vmatpush.msra.mxu0 0.0
      %4625 = vmatpush.msra.mxu0 0.0
      %4626 = vmatpush.msra.mxu0 0.0
      %4627 = vmatpush.msra.mxu0 0.0
      %4628 = vmatpush.msra.mxu0 0.0
      %4629 = vmatpush.msra.mxu0 0.0
      %4630 = vmatpush.msra.mxu0 %v4528
      %4631 = vmatpush.msra.mxu0 %v4489
      %4632 = vmatpush.msra.mxu0 %v4481
      %4633 = vmatmul.f32.gmra.mxu0 %v4518
      %v4634 = vpop.f32.mrf.mxu0
      %v4635 = vadd.f32 %v4612, %v4634
      %4636 = vmatmul.f32.gmra.mxu0 %v4521
      %v4637 = vpop.f32.mrf.mxu0
      %v4638 = vadd.f32 %v4615, %v4637
      %4639 = vdwg.mxu0
      %4640 = vmatpush.msra.mxu0 %v4474
      %4641 = vmatpush.msra.mxu0 %v4466
      %4642 = vmatpush.msra.mxu0 %v4458
      %4643 = vmatpush.msra.mxu0 %v4450
      %4644 = vmatpush.msra.mxu0 %v4442
      %4645 = vmatpush.msra.mxu0 %v4434
      %4646 = vmatpush.msra.mxu0 %v4426
      %4647 = vmatpush.msra.mxu0 %v4418
      %4648 = vmatpush.msra.mxu0 %v4410
      %4649 = vmatpush.msra.mxu0 %v4402
      %4650 = vmatpush.msra.mxu0 %v4394
      %4651 = vmatpush.msra.mxu0 %v4386
      %4652 = vmatpush.msra.mxu0 %v4378
      %4653 = vmatpush.msra.mxu0 %v4370
      %4654 = vmatpush.msra.mxu0 %v4362
      %4655 = vmatpush.msra.mxu0 %v4354
      %4656 = vmatmul.f32.gmra.mxu0 %v4348
      %v4657 = vpop.f32.mrf.mxu0
      %v4658 = vadd.f32 %v4509, %v4657
      %4659 = vmatmul.f32.gmra.mxu0 %v4350
      %v4660 = vpop.f32.mrf.mxu0
      %v4661 = vadd.f32 %v4514, %v4660
      %4662 = vdwg.mxu0
      %4663 = vmatpush.msra.mxu0 0.0
      %4664 = vmatpush.msra.mxu0 0.0
      %4665 = vmatpush.msra.mxu0 0.0
      %4666 = vmatpush.msra.mxu0 0.0
      %4667 = vmatpush.msra.mxu0 0.0
      %4668 = vmatpush.msra.mxu0 0.0
      %4669 = vmatpush.msra.mxu0 0.0
      %4670 = vmatpush.msra.mxu0 0.0
      %4671 = vmatpush.msra.mxu0 0.0
      %4672 = vmatpush.msra.mxu0 0.0
      %4673 = vmatpush.msra.mxu0 0.0
      %4674 = vmatpush.msra.mxu0 0.0
      %4675 = vmatpush.msra.mxu0 0.0
      %4676 = vmatpush.msra.mxu0 %v4531
      %4677 = vmatpush.msra.mxu0 %v4490
      %4678 = vmatpush.msra.mxu0 %v4482
      %4679 = vmatmul.f32.gmra.mxu0 %v4518
      %v4680 = vpop.f32.mrf.mxu0
      %v4681 = vadd.f32 %v4658, %v4680
      %4682 = vmatmul.f32.gmra.mxu0 %v4521
      %v4683 = vpop.f32.mrf.mxu0
      %v4684 = vadd.f32 %v4661, %v4683
      %4685 = vdwg.mxu0
      %4686 = vmatpush.msra.mxu0 %v4475
      %4687 = vmatpush.msra.mxu0 %v4467
      %4688 = vmatpush.msra.mxu0 %v4459
      %4689 = vmatpush.msra.mxu0 %v4451
      %4690 = vmatpush.msra.mxu0 %v4443
      %4691 = vmatpush.msra.mxu0 %v4435
      %4692 = vmatpush.msra.mxu0 %v4427
      %4693 = vmatpush.msra.mxu0 %v4419
      %4694 = vmatpush.msra.mxu0 %v4411
      %4695 = vmatpush.msra.mxu0 %v4403
      %4696 = vmatpush.msra.mxu0 %v4395
      %4697 = vmatpush.msra.mxu0 %v4387
      %4698 = vmatpush.msra.mxu0 %v4379
      %4699 = vmatpush.msra.mxu0 %v4371
      %4700 = vmatpush.msra.mxu0 %v4363
      %4701 = vmatpush.msra.mxu0 %v4355
      %4702 = vmatmul.f32.gmra.mxu0 %v4348
      %v4703 = vpop.f32.mrf.mxu0
      %v4704 = vadd.f32 %v4509, %v4703
      %4705 = vmatmul.f32.gmra.mxu0 %v4350
      %v4706 = vpop.f32.mrf.mxu0
      %v4707 = vadd.f32 %v4514, %v4706
      %4708 = vdwg.mxu0
      %4709 = vmatpush.msra.mxu0 0.0
      %4710 = vmatpush.msra.mxu0 0.0
      %4711 = vmatpush.msra.mxu0 0.0
      %4712 = vmatpush.msra.mxu0 0.0
      %4713 = vmatpush.msra.mxu0 0.0
      %4714 = vmatpush.msra.mxu0 0.0
      %4715 = vmatpush.msra.mxu0 0.0
      %4716 = vmatpush.msra.mxu0 0.0
      %4717 = vmatpush.msra.mxu0 0.0
      %4718 = vmatpush.msra.mxu0 0.0
      %4719 = vmatpush.msra.mxu0 0.0
      %4720 = vmatpush.msra.mxu0 0.0
      %4721 = vmatpush.msra.mxu0 0.0
      %4722 = vmatpush.msra.mxu0 %v4534
      %4723 = vmatpush.msra.mxu0 %v4491
      %4724 = vmatpush.msra.mxu0 %v4483
      %4725 = vmatmul.f32.gmra.mxu0 %v4518
      %v4726 = vpop.f32.mrf.mxu0
      %v4727 = vadd.f32 %v4704, %v4726
      %4728 = vmatmul.f32.gmra.mxu0 %v4521
      %v4729 = vpop.f32.mrf.mxu0
      %v4730 = vadd.f32 %v4707, %v4729
      %4731 = vdwg.mxu0
      %4732 = vmatpush.msra.mxu0 %v4476
      %4733 = vmatpush.msra.mxu0 %v4468
      %4734 = vmatpush.msra.mxu0 %v4460
      %4735 = vmatpush.msra.mxu0 %v4452
      %4736 = vmatpush.msra.mxu0 %v4444
      %4737 = vmatpush.msra.mxu0 %v4436
      %4738 = vmatpush.msra.mxu0 %v4428
      %4739 = vmatpush.msra.mxu0 %v4420
      %4740 = vmatpush.msra.mxu0 %v4412
      %4741 = vmatpush.msra.mxu0 %v4404
      %4742 = vmatpush.msra.mxu0 %v4396
      %4743 = vmatpush.msra.mxu0 %v4388
      %4744 = vmatpush.msra.mxu0 %v4380
      %4745 = vmatpush.msra.mxu0 %v4372
      %4746 = vmatpush.msra.mxu0 %v4364
      %4747 = vmatpush.msra.mxu0 %v4356
      %4748 = vmatmul.f32.gmra.mxu0 %v4348
      %v4749 = vpop.f32.mrf.mxu0
      %v4750 = vadd.f32 %v4509, %v4749
      %4751 = vmatmul.f32.gmra.mxu0 %v4350
      %v4752 = vpop.f32.mrf.mxu0
      %v4753 = vadd.f32 %v4514, %v4752
      %4754 = vdwg.mxu0
      %4755 = vmatpush.msra.mxu0 0.0
      %4756 = vmatpush.msra.mxu0 0.0
      %4757 = vmatpush.msra.mxu0 0.0
      %4758 = vmatpush.msra.mxu0 0.0
      %4759 = vmatpush.msra.mxu0 0.0
      %4760 = vmatpush.msra.mxu0 0.0
      %4761 = vmatpush.msra.mxu0 0.0
      %4762 = vmatpush.msra.mxu0 0.0
      %4763 = vmatpush.msra.mxu0 0.0
      %4764 = vmatpush.msra.mxu0 0.0
      %4765 = vmatpush.msra.mxu0 0.0
      %4766 = vmatpush.msra.mxu0 0.0
      %4767 = vmatpush.msra.mxu0 0.0
      %4768 = vmatpush.msra.mxu0 %v4537
      %4769 = vmatpush.msra.mxu0 %v4492
      %4770 = vmatpush.msra.mxu0 %v4484
      %4771 = vmatmul.f32.gmra.mxu0 %v4518
      %v4772 = vpop.f32.mrf.mxu0
      %v4773 = vadd.f32 %v4750, %v4772
      %4774 = vmatmul.f32.gmra.mxu0 %v4521
      %v4775 = vpop.f32.mrf.mxu0
      %v4776 = vadd.f32 %v4753, %v4775
      %4777 = vdwg.mxu0
      %4778 = vmatpush.msra.mxu0 %v4477
      %4779 = vmatpush.msra.mxu0 %v4469
      %4780 = vmatpush.msra.mxu0 %v4461
      %4781 = vmatpush.msra.mxu0 %v4453
      %4782 = vmatpush.msra.mxu0 %v4445
      %4783 = vmatpush.msra.mxu0 %v4437
      %4784 = vmatpush.msra.mxu0 %v4429
      %4785 = vmatpush.msra.mxu0 %v4421
      %4786 = vmatpush.msra.mxu0 %v4413
      %4787 = vmatpush.msra.mxu0 %v4405
      %4788 = vmatpush.msra.mxu0 %v4397
      %4789 = vmatpush.msra.mxu0 %v4389
      %4790 = vmatpush.msra.mxu0 %v4381
      %4791 = vmatpush.msra.mxu0 %v4373
      %4792 = vmatpush.msra.mxu0 %v4365
      %4793 = vmatpush.msra.mxu0 %v4357
      %4794 = vmatmul.f32.gmra.mxu0 %v4348
      %v4795 = vpop.f32.mrf.mxu0
      %v4796 = vadd.f32 %v4509, %v4795
      %4797 = vmatmul.f32.gmra.mxu0 %v4350
      %v4798 = vpop.f32.mrf.mxu0
      %v4799 = vadd.f32 %v4514, %v4798
      %4800 = vdwg.mxu0
      %4801 = vmatpush.msra.mxu0 0.0
      %4802 = vmatpush.msra.mxu0 0.0
      %4803 = vmatpush.msra.mxu0 0.0
      %4804 = vmatpush.msra.mxu0 0.0
      %4805 = vmatpush.msra.mxu0 0.0
      %4806 = vmatpush.msra.mxu0 0.0
      %4807 = vmatpush.msra.mxu0 0.0
      %4808 = vmatpush.msra.mxu0 0.0
      %4809 = vmatpush.msra.mxu0 0.0
      %4810 = vmatpush.msra.mxu0 0.0
      %4811 = vmatpush.msra.mxu0 0.0
      %4812 = vmatpush.msra.mxu0 0.0
      %4813 = vmatpush.msra.mxu0 0.0
      %4814 = vmatpush.msra.mxu0 %v4540
      %4815 = vmatpush.msra.mxu0 %v4493
      %4816 = vmatpush.msra.mxu0 %v4485
      %4817 = vmatmul.f32.gmra.mxu0 %v4518
      %v4818 = vpop.f32.mrf.mxu0
      %v4819 = vadd.f32 %v4796, %v4818
      %4820 = vmatmul.f32.gmra.mxu0 %v4521
      %v4821 = vpop.f32.mrf.mxu0
      %v4822 = vadd.f32 %v4799, %v4821
      %4823 = vdwg.mxu0
      %4824 = vmatpush.msra.mxu0 %v4478
      %4825 = vmatpush.msra.mxu0 %v4470
      %4826 = vmatpush.msra.mxu0 %v4462
      %4827 = vmatpush.msra.mxu0 %v4454
      %4828 = vmatpush.msra.mxu0 %v4446
      %4829 = vmatpush.msra.mxu0 %v4438
      %4830 = vmatpush.msra.mxu0 %v4430
      %4831 = vmatpush.msra.mxu0 %v4422
      %4832 = vmatpush.msra.mxu0 %v4414
      %4833 = vmatpush.msra.mxu0 %v4406
      %4834 = vmatpush.msra.mxu0 %v4398
      %4835 = vmatpush.msra.mxu0 %v4390
      %4836 = vmatpush.msra.mxu0 %v4382
      %4837 = vmatpush.msra.mxu0 %v4374
      %4838 = vmatpush.msra.mxu0 %v4366
      %4839 = vmatpush.msra.mxu0 %v4358
      %4840 = vmatmul.f32.gmra.mxu0 %v4348
      %v4841 = vpop.f32.mrf.mxu0
      %v4842 = vadd.f32 %v4509, %v4841
      %4843 = vmatmul.f32.gmra.mxu0 %v4350
      %v4844 = vpop.f32.mrf.mxu0
      %v4845 = vadd.f32 %v4514, %v4844
      %4846 = vdwg.mxu0
      %4847 = vmatpush.msra.mxu0 0.0
      %4848 = vmatpush.msra.mxu0 0.0
      %4849 = vmatpush.msra.mxu0 0.0
      %4850 = vmatpush.msra.mxu0 0.0
      %4851 = vmatpush.msra.mxu0 0.0
      %4852 = vmatpush.msra.mxu0 0.0
      %4853 = vmatpush.msra.mxu0 0.0
      %4854 = vmatpush.msra.mxu0 0.0
      %4855 = vmatpush.msra.mxu0 0.0
      %4856 = vmatpush.msra.mxu0 0.0
      %4857 = vmatpush.msra.mxu0 0.0
      %4858 = vmatpush.msra.mxu0 0.0
      %4859 = vmatpush.msra.mxu0 0.0
      %4860 = vmatpush.msra.mxu0 %v4543
      %4861 = vmatpush.msra.mxu0 %v4494
      %4862 = vmatpush.msra.mxu0 %v4486
      %4863 = vmatmul.f32.gmra.mxu0 %v4518
      %v4864 = vpop.f32.mrf.mxu0
      %v4865 = vadd.f32 %v4842, %v4864
      %4866 = vmatmul.f32.gmra.mxu0 %v4521
      %v4867 = vpop.f32.mrf.mxu0
      %v4868 = vadd.f32 %v4845, %v4867
      %4869 = vdwg.mxu0
      %4870 = vmatpush.msra.mxu0 %v4479
      %4871 = vmatpush.msra.mxu0 %v4471
      %4872 = vmatpush.msra.mxu0 %v4463
      %4873 = vmatpush.msra.mxu0 %v4455
      %4874 = vmatpush.msra.mxu0 %v4447
      %4875 = vmatpush.msra.mxu0 %v4439
      %4876 = vmatpush.msra.mxu0 %v4431
      %4877 = vmatpush.msra.mxu0 %v4423
      %4878 = vmatpush.msra.mxu0 %v4415
      %4879 = vmatpush.msra.mxu0 %v4407
      %4880 = vmatpush.msra.mxu0 %v4399
      %4881 = vmatpush.msra.mxu0 %v4391
      %4882 = vmatpush.msra.mxu0 %v4383
      %4883 = vmatpush.msra.mxu0 %v4375
      %4884 = vmatpush.msra.mxu0 %v4367
      %4885 = vmatpush.msra.mxu0 %v4359
      %4886 = vmatmul.f32.gmra.mxu0 %v4348
      %v4887 = vpop.f32.mrf.mxu0
      %v4888 = vadd.f32 %v4509, %v4887
      %4889 = vmatmul.f32.gmra.mxu0 %v4350
      %v4890 = vpop.f32.mrf.mxu0
      %v4891 = vadd.f32 %v4514, %v4890
      %4892 = vdwg.mxu0
      %4893 = vmatpush.msra.mxu0 0.0
      %4894 = vmatpush.msra.mxu0 0.0
      %4895 = vmatpush.msra.mxu0 0.0
      %4896 = vmatpush.msra.mxu0 0.0
      %4897 = vmatpush.msra.mxu0 0.0
      %4898 = vmatpush.msra.mxu0 0.0
      %4899 = vmatpush.msra.mxu0 0.0
      %4900 = vmatpush.msra.mxu0 0.0
      %4901 = vmatpush.msra.mxu0 0.0
      %4902 = vmatpush.msra.mxu0 0.0
      %4903 = vmatpush.msra.mxu0 0.0
      %4904 = vmatpush.msra.mxu0 0.0
      %4905 = vmatpush.msra.mxu0 0.0
      %4906 = vmatpush.msra.mxu0 %v4546
      %4907 = vmatpush.msra.mxu0 %v4495
      %4908 = vmatpush.msra.mxu0 %v4487
      %4909 = vmatmul.f32.gmra.mxu0 %v4518
      %v4910 = vpop.f32.mrf.mxu0
      %v4911 = vadd.f32 %v4888, %v4910
      %4912 = vmatmul.f32.gmra.mxu0 %v4521
      %v4913 = vpop.f32.mrf.mxu0
      %v4914 = vadd.f32 %v4891, %v4913
      %4915 = vdwg.mxu0
      %v4916 = vtanh.pop %v4589
      %v4917 = vtanh.pop %v4635
      %v4918 = vtanh.pop %v4681
      %v4919 = vtanh.pop %v4727
      %v4920 = vtanh.pop %v4773
      %v4921 = vtanh.pop %v4819
      %v4922 = vtanh.pop %v4865
      %v4923 = vtanh.pop %v4911
      %v4924 = vtanh.pop %v4592
      %v4925 = vtanh.pop %v4638
      %v4926 = vtanh.pop %v4684
      %v4927 = vtanh.pop %v4730
      %v4928 = vtanh.pop %v4776
      %v4929 = vtanh.pop %v4822
      %v4930 = vtanh.pop %v4868
      %v4931 = vtanh.pop %v4914
      %4932 = vst [vmem:[#allocation5] sm:$0xff] %v4916
      %4933 = vst [vmem:[#allocation5 + $0x8] sm:$0xff] %v4917
      %4934 = vst [vmem:[#allocation5 + $0x10] sm:$0xff] %v4918
      %4935 = vst [vmem:[#allocation5 + $0x18] sm:$0xff] %v4919
      %4936 = vst [vmem:[#allocation5 + $0x20] sm:$0xff] %v4920
      %4937 = vst [vmem:[#allocation5 + $0x28] sm:$0xff] %v4921
      %4938 = vst [vmem:[#allocation5 + $0x30] sm:$0xff] %v4922
      %4939 = vst [vmem:[#allocation5 + $0x38] sm:$0xff] %v4923
      %4940 = vst [vmem:[#allocation5 + $0x58] sm:$0xff] %v4924
      %4941 = vst [vmem:[#allocation5 + $0x60] sm:$0xff] %v4925
      %4942 = vst [vmem:[#allocation5 + $0x68] sm:$0xff] %v4926
      %4943 = vst [vmem:[#allocation5 + $0x70] sm:$0xff] %v4927
      %4944 = vst [vmem:[#allocation5 + $0x78] sm:$0xff] %v4928
      %4945 = vst [vmem:[#allocation5 + $0x80] sm:$0xff] %v4929
      %4946 = vst [vmem:[#allocation5 + $0x88] sm:$0xff] %v4930
      %4947 = vst [vmem:[#allocation5 + $0x90] sm:$0xff] %v4931
      %4948 = vst [vmem:[#allocation5 + $0x40] sm:$0xff] 0.0
      %4949 = vst [vmem:[#allocation5 + $0x48] sm:$0xff] 0.0
      %4950 = vst [vmem:[#allocation5 + $0x50] sm:$0xff] 0.0
      %4951 = vst [vmem:[#allocation5 + $0x98] sm:$0xff] 0.0
      %4952 = vst [vmem:[#allocation5 + $0xa0] sm:$0xff] 0.0
      %4953 = vst [vmem:[#allocation5 + $0xa8] sm:$0xff] 0.0
      %v4954 = vld [vmem:[#allocation5] sm:$0xff]
      %v4955 = vld [vmem:[#allocation5 + $0x8] sm:$0xff]
      %v4956 = vld [vmem:[#allocation5 + $0x10] sm:$0xff]
      %v4957 = vld [vmem:[#allocation5 + $0x18] sm:$0xff]
      %v4958 = vld [vmem:[#allocation5 + $0x20] sm:$0xff]
      %v4959 = vld [vmem:[#allocation5 + $0x28] sm:$0xff]
      %v4960 = vld [vmem:[#allocation5 + $0x30] sm:$0xff]
      %v4961 = vld [vmem:[#allocation5 + $0x38] sm:$0xff]
      %v4962 = vld [vmem:[#allocation5 + $0x58] sm:$0xff]
      %v4963 = vld [vmem:[#allocation5 + $0x60] sm:$0xff]
      %v4964 = vld [vmem:[#allocation5 + $0x68] sm:$0xff]
      %v4965 = vld [vmem:[#allocation5 + $0x70] sm:$0xff]
      %v4966 = vld [vmem:[#allocation5 + $0x78] sm:$0xff]
      %v4967 = vld [vmem:[#allocation5 + $0x80] sm:$0xff]
      %v4968 = vld [vmem:[#allocation5 + $0x88] sm:$0xff]
      %v4969 = vld [vmem:[#allocation5 + $0x90] sm:$0xff]
      %v4970 = vld [vmem:[#allocation5 + $0x40] sm:$0xff]
      %v4971 = vld [vmem:[#allocation5 + $0x98] sm:$0xff]
      %4990 = vrot.lane.b32.xlu0 %v4954, 126
      %v4991 = vpop.permute.xlu0 %4990
      %4992 = vrot.lane.b32.xlu0 %v4955, 126
      %v4993 = vpop.permute.xlu0 %4992
      %4994 = vrot.lane.b32.xlu0 %v4956, 126
      %v4995 = vpop.permute.xlu0 %4994
      %4996 = vrot.lane.b32.xlu0 %v4957, 126
      %v4997 = vpop.permute.xlu0 %4996
      %4998 = vrot.lane.b32.xlu0 %v4958, 126
      %v4999 = vpop.permute.xlu0 %4998
      %5000 = vrot.lane.b32.xlu0 %v4959, 126
      %v5001 = vpop.permute.xlu0 %5000
      %5002 = vrot.lane.b32.xlu0 %v4960, 126
      %v5003 = vpop.permute.xlu0 %5002
      %5004 = vrot.lane.b32.xlu0 %v4961, 126
      %v5005 = vpop.permute.xlu0 %5004
      %5006 = vrot.lane.b32.xlu0 %v4970, 126
      %v5007 = vpop.permute.xlu0 %5006
      %5008 = vrot.lane.b32.xlu0 %v4962, 126
      %v5009 = vpop.permute.xlu0 %5008
      %5010 = vrot.lane.b32.xlu0 %v4963, 126
      %v5011 = vpop.permute.xlu0 %5010
      %5012 = vrot.lane.b32.xlu0 %v4964, 126
      %v5013 = vpop.permute.xlu0 %5012
      %5014 = vrot.lane.b32.xlu0 %v4965, 126
      %v5015 = vpop.permute.xlu0 %5014
      %5016 = vrot.lane.b32.xlu0 %v4966, 126
      %v5017 = vpop.permute.xlu0 %5016
      %5018 = vrot.lane.b32.xlu0 %v4967, 126
      %v5019 = vpop.permute.xlu0 %5018
      %5020 = vrot.lane.b32.xlu0 %v4968, 126
      %v5021 = vpop.permute.xlu0 %5020
      %5022 = vrot.lane.b32.xlu0 %v4969, 126
      %v5023 = vpop.permute.xlu0 %5022
      %5024 = vrot.lane.b32.xlu0 %v4971, 126
      %v5025 = vpop.permute.xlu0 %5024
      %v5026 = vsel %vm559, %v4991, %v4993
      %v5027 = vsel %vm559, %v4993, %v4995
      %v5028 = vsel %vm559, %v4995, %v4997
      %v5029 = vsel %vm559, %v4997, %v4999
      %v5030 = vsel %vm559, %v4999, %v5001
      %v5031 = vsel %vm559, %v5001, %v5003
      %v5032 = vsel %vm559, %v5003, %v5005
      %v5033 = vsel %vm559, %v5005, %v5007
      %v5034 = vsel %vm559, %v5009, %v5011
      %v5035 = vsel %vm559, %v5011, %v5013
      %v5036 = vsel %vm559, %v5013, %v5015
      %v5037 = vsel %vm559, %v5015, %v5017
      %v5038 = vsel %vm559, %v5017, %v5019
      %v5039 = vsel %vm559, %v5019, %v5021
      %v5040 = vsel %vm559, %v5021, %v5023
      %v5041 = vsel %vm559, %v5023, %v5025
      %v5058 = vmax.f32 %v4954, %v5026
      %v5059 = vmax.f32 %v4955, %v5027
      %v5060 = vmax.f32 %v4956, %v5028
      %v5061 = vmax.f32 %v4957, %v5029
      %v5062 = vmax.f32 %v4958, %v5030
      %v5063 = vmax.f32 %v4959, %v5031
      %v5064 = vmax.f32 %v4960, %v5032
      %v5065 = vmax.f32 %v4961, %v5033
      %v5066 = vmax.f32 %v4962, %v5034
      %v5067 = vmax.f32 %v4963, %v5035
      %v5068 = vmax.f32 %v4964, %v5036
      %v5069 = vmax.f32 %v4965, %v5037
      %v5070 = vmax.f32 %v4966, %v5038
      %v5071 = vmax.f32 %v4967, %v5039
      %v5072 = vmax.f32 %v4968, %v5040
      %v5073 = vmax.f32 %v4969, %v5041
      %v5076 = vmax.f32 %v4970, %v5007
      %v5077 = vmax.f32 %v4971, %v5025
      %5096 = vrot.lane.b32.xlu0 %v5058, 64
      %v5097 = vpop.permute.xlu0 %5096
      %5098 = vrot.lane.b32.xlu0 %v5059, 64
      %v5099 = vpop.permute.xlu0 %5098
      %5100 = vrot.lane.b32.xlu0 %v5060, 64
      %v5101 = vpop.permute.xlu0 %5100
      %5102 = vrot.lane.b32.xlu0 %v5061, 64
      %v5103 = vpop.permute.xlu0 %5102
      %5104 = vrot.lane.b32.xlu0 %v5062, 64
      %v5105 = vpop.permute.xlu0 %5104
      %5106 = vrot.lane.b32.xlu0 %v5063, 64
      %v5107 = vpop.permute.xlu0 %5106
      %5108 = vrot.lane.b32.xlu0 %v5064, 64
      %v5109 = vpop.permute.xlu0 %5108
      %5110 = vrot.lane.b32.xlu0 %v5065, 64
      %v5111 = vpop.permute.xlu0 %5110
      %5112 = vrot.lane.b32.xlu0 %v5076, 64
      %v5113 = vpop.permute.xlu0 %5112
      %5114 = vrot.lane.b32.xlu0 %v5066, 64
      %v5115 = vpop.permute.xlu0 %5114
      %5116 = vrot.lane.b32.xlu0 %v5067, 64
      %v5117 = vpop.permute.xlu0 %5116
      %5118 = vrot.lane.b32.xlu0 %v5068, 64
      %v5119 = vpop.permute.xlu0 %5118
      %5120 = vrot.lane.b32.xlu0 %v5069, 64
      %v5121 = vpop.permute.xlu0 %5120
      %5122 = vrot.lane.b32.xlu0 %v5070, 64
      %v5123 = vpop.permute.xlu0 %5122
      %5124 = vrot.lane.b32.xlu0 %v5071, 64
      %v5125 = vpop.permute.xlu0 %5124
      %5126 = vrot.lane.b32.xlu0 %v5072, 64
      %v5127 = vpop.permute.xlu0 %5126
      %5128 = vrot.lane.b32.xlu0 %v5073, 64
      %v5129 = vpop.permute.xlu0 %5128
      %5130 = vrot.lane.b32.xlu0 %v5077, 64
      %v5131 = vpop.permute.xlu0 %5130
      %v5132 = vsel %vm1190, %v5097, %v5099
      %v5133 = vsel %vm1190, %v5099, %v5101
      %v5134 = vsel %vm1190, %v5101, %v5103
      %v5135 = vsel %vm1190, %v5103, %v5105
      %v5136 = vsel %vm1190, %v5105, %v5107
      %v5137 = vsel %vm1190, %v5107, %v5109
      %v5138 = vsel %vm1190, %v5109, %v5111
      %v5139 = vsel %vm1190, %v5111, %v5113
      %v5140 = vsel %vm1190, %v5115, %v5117
      %v5141 = vsel %vm1190, %v5117, %v5119
      %v5142 = vsel %vm1190, %v5119, %v5121
      %v5143 = vsel %vm1190, %v5121, %v5123
      %v5144 = vsel %vm1190, %v5123, %v5125
      %v5145 = vsel %vm1190, %v5125, %v5127
      %v5146 = vsel %vm1190, %v5127, %v5129
      %v5147 = vsel %vm1190, %v5129, %v5131
      %v5164 = vmax.f32 %v5058, %v5132
      %v5165 = vmax.f32 %v5059, %v5133
      %v5166 = vmax.f32 %v5060, %v5134
      %v5167 = vmax.f32 %v5061, %v5135
      %v5168 = vmax.f32 %v5062, %v5136
      %v5169 = vmax.f32 %v5063, %v5137
      %v5170 = vmax.f32 %v5064, %v5138
      %v5171 = vmax.f32 %v5065, %v5139
      %v5172 = vmax.f32 %v5066, %v5140
      %v5173 = vmax.f32 %v5067, %v5141
      %v5174 = vmax.f32 %v5068, %v5142
      %v5175 = vmax.f32 %v5069, %v5143
      %v5176 = vmax.f32 %v5070, %v5144
      %v5177 = vmax.f32 %v5071, %v5145
      %v5178 = vmax.f32 %v5072, %v5146
      %v5179 = vmax.f32 %v5073, %v5147
      %5180 = vst [vmem:[#allocation6] sm:$0xff] %v5164
      %5181 = vst [vmem:[#allocation6 + $0x8] sm:$0xff] %v5165
      %5182 = vst [vmem:[#allocation6 + $0x10] sm:$0xff] %v5166
      %5183 = vst [vmem:[#allocation6 + $0x18] sm:$0xff] %v5167
      %5184 = vst [vmem:[#allocation6 + $0x20] sm:$0xff] %v5168
      %5185 = vst [vmem:[#allocation6 + $0x28] sm:$0xff] %v5169
      %5186 = vst [vmem:[#allocation6 + $0x30] sm:$0xff] %v5170
      %5187 = vst [vmem:[#allocation6 + $0x38] sm:$0xff] %v5171
      %5188 = vst [vmem:[#allocation6 + $0x40] sm:$0xff] %v5172
      %5189 = vst [vmem:[#allocation6 + $0x48] sm:$0xff] %v5173
      %5190 = vst [vmem:[#allocation6 + $0x50] sm:$0xff] %v5174
      %5191 = vst [vmem:[#allocation6 + $0x58] sm:$0xff] %v5175
      %5192 = vst [vmem:[#allocation6 + $0x60] sm:$0xff] %v5176
      %5193 = vst [vmem:[#allocation6 + $0x68] sm:$0xff] %v5177
      %5194 = vst [vmem:[#allocation6 + $0x70] sm:$0xff] %v5178
      %5195 = vst [vmem:[#allocation6 + $0x78] sm:$0xff] %v5179
      %5196 = vst [vmem:[#allocation7] sm:$0xff] 0.0
      %5197 = vst [vmem:[#allocation7 + $0x8] sm:$0xff] 0.0
      %5198 = vst [vmem:[#allocation7 + $0x10] sm:$0xff] 0.0
      %5199 = vst [vmem:[#allocation7 + $0x18] sm:$0xff] 0.0
      %5200 = vst [vmem:[#allocation7 + $0x20] sm:$0xff] 0.0
      %5201 = vst [vmem:[#allocation7 + $0x28] sm:$0xff] 0.0
      %5202 = vst [vmem:[#allocation7 + $0x30] sm:$0xff] 0.0
      %5203 = vst [vmem:[#allocation7 + $0x38] sm:$0xff] 0.0
      %5204 = vst [vmem:[#allocation7 + $0x40] sm:$0xff] 0.0
      %5205 = vst [vmem:[#allocation7 + $0x48] sm:$0xff] 0.0
      %5206 = vst [vmem:[#allocation7 + $0x50] sm:$0xff] 0.0
      %5207 = vst [vmem:[#allocation7 + $0x58] sm:$0xff] 0.0
      %5208 = vst [vmem:[#allocation7 + $0x60] sm:$0xff] 0.0
      %5209 = vst [vmem:[#allocation7 + $0x68] sm:$0xff] 0.0
      %5210 = vst [vmem:[#allocation7 + $0x70] sm:$0xff] 0.0
      %5211 = vst [vmem:[#allocation7 + $0x78] sm:$0xff] 0.0
      %5212 = vst [vmem:[#allocation7 + $0x80] sm:$0xff] 0.0
      %5213 = vst [vmem:[#allocation7 + $0x88] sm:$0xff] 0.0
      %5214 = vst [vmem:[#allocation7 + $0x90] sm:$0xff] 0.0
      %5215 = vst [vmem:[#allocation7 + $0x98] sm:$0xff] 0.0
      %5216 = vst [vmem:[#allocation7 + $0xa0] sm:$0xff] 0.0
      %5217 = vst [vmem:[#allocation7 + $0xa8] sm:$0xff] 0.0
      %5218 = vst [vmem:[#allocation7 + $0xb0] sm:$0xff] 0.0
      %5219 = vst [vmem:[#allocation7 + $0xb8] sm:$0xff] 0.0
      %5220 = vst [vmem:[#allocation7 + $0xc0] sm:$0xff] 0.0
      %5221 = vst [vmem:[#allocation7 + $0xc8] sm:$0xff] 0.0
      %5222 = vst [vmem:[#allocation7 + $0xd0] sm:$0xff] 0.0
      %5223 = vst [vmem:[#allocation7 + $0xd8] sm:$0xff] 0.0
      %5224 = vst [vmem:[#allocation7 + $0xe0] sm:$0xff] 0.0
      %5225 = vst [vmem:[#allocation7 + $0xe8] sm:$0xff] 0.0
      %5226 = vst [vmem:[#allocation7 + $0xf0] sm:$0xff] 0.0
      %5227 = vst [vmem:[#allocation7 + $0xf8] sm:$0xff] 0.0
      %5228 = vst [vmem:[#allocation7 + $0x100] sm:$0xff] 0.0
      %5229 = vst [vmem:[#allocation7 + $0x108] sm:$0xff] 0.0
      %5230 = vst [vmem:[#allocation7 + $0x110] sm:$0xff] 0.0
      %5231 = vst [vmem:[#allocation7 + $0x118] sm:$0xff] 0.0
      %5232 = vst [vmem:[#allocation7 + $0x120] sm:$0xff] 0.0
      %5233 = vst [vmem:[#allocation7 + $0x128] sm:$0xff] 0.0
      %5234 = vst [vmem:[#allocation7 + $0x130] sm:$0xff] 0.0
      %5235 = vst [vmem:[#allocation7 + $0x138] sm:$0xff] 0.0
      %5236 = vst [vmem:[#allocation7 + $0x140] sm:$0xff] 0.0
      %5237 = vst [vmem:[#allocation7 + $0x148] sm:$0xff] 0.0
      %5238 = vst [vmem:[#allocation7 + $0x150] sm:$0xff] 0.0
      %5239 = vst [vmem:[#allocation7 + $0x158] sm:$0xff] 0.0
      %5240 = vst [vmem:[#allocation7 + $0x160] sm:$0xff] 0.0
      %5241 = vst [vmem:[#allocation7 + $0x168] sm:$0xff] 0.0
      %5242 = vst [vmem:[#allocation7 + $0x170] sm:$0xff] 0.0
      %5243 = vst [vmem:[#allocation7 + $0x178] sm:$0xff] 0.0
      %5244 = vst [vmem:[#allocation7 + $0x180] sm:$0xff] 0.0
      %5245 = vst [vmem:[#allocation7 + $0x188] sm:$0xff] 0.0
      %v5246 = vld [vmem:[#allocation6] sm:$0xff]
      %v5247 = vld [vmem:[#allocation6 + $0x40] sm:$0xff]
      %vm5248 = vcmask 7168
      %5249 = vst.msk [vmem:[#allocation7] sm:$0xff] %vm5248, %v5246
      %5250 = vst.msk [vmem:[#allocation7 + $0x8] sm:$0xff] %vm5248, %v5247
      %v5251 = vld [vmem:[#allocation6] sm:$0xff]
      %v5252 = vld [vmem:[#allocation6 + $0x40] sm:$0xff]
      %5255 = vrot.lane.b32.xlu0 %v5251, 124
      %v5256 = vpop.permute.xlu0 %5255
      %5257 = vrot.lane.b32.xlu0 %v5252, 124
      %v5258 = vpop.permute.xlu0 %5257
      %5261 = vst.msk [vmem:[#allocation7 + $0x10] sm:$0xff] %vm5248, %v5256
      %5262 = vst.msk [vmem:[#allocation7 + $0x18] sm:$0xff] %vm5248, %v5258
      %v5263 = vld [vmem:[#allocation6] sm:$0xff]
      %v5264 = vld [vmem:[#allocation6 + $0x40] sm:$0xff]
      %5267 = vrot.lane.b32.xlu0 %v5263, 120
      %v5268 = vpop.permute.xlu0 %5267
      %5269 = vrot.lane.b32.xlu0 %v5264, 120
      %v5270 = vpop.permute.xlu0 %5269
      %5273 = vst.msk [vmem:[#allocation7 + $0x20] sm:$0xff] %vm5248, %v5268
      %5274 = vst.msk [vmem:[#allocation7 + $0x28] sm:$0xff] %vm5248, %v5270
      %v5275 = vld [vmem:[#allocation6] sm:$0xff]
      %v5276 = vld [vmem:[#allocation6 + $0x40] sm:$0xff]
      %5279 = vrot.lane.b32.xlu0 %v5275, 116
      %v5280 = vpop.permute.xlu0 %5279
      %5281 = vrot.lane.b32.xlu0 %v5276, 116
      %v5282 = vpop.permute.xlu0 %5281
      %5285 = vst.msk [vmem:[#allocation7 + $0x30] sm:$0xff] %vm5248, %v5280
      %5286 = vst.msk [vmem:[#allocation7 + $0x38] sm:$0xff] %vm5248, %v5282
      %v5287 = vld [vmem:[#allocation6] sm:$0xff]
      %v5288 = vld [vmem:[#allocation6 + $0x40] sm:$0xff]
      %5291 = vrot.lane.b32.xlu0 %v5287, 112
      %v5292 = vpop.permute.xlu0 %5291
      %5293 = vrot.lane.b32.xlu0 %v5288, 112
      %v5294 = vpop.permute.xlu0 %5293
      %5297 = vst.msk [vmem:[#allocation7 + $0x40] sm:$0xff] %vm5248, %v5292
      %5298 = vst.msk [vmem:[#allocation7 + $0x48] sm:$0xff] %vm5248, %v5294
      %v5299 = vld [vmem:[#allocation6 + $0x8] sm:$0xff]
      %v5300 = vld [vmem:[#allocation6 + $0x48] sm:$0xff]
      %5301 = vst.msk [vmem:[#allocation7 + $0x50] sm:$0xff] %vm5248, %v5299
      %5302 = vst.msk [vmem:[#allocation7 + $0x58] sm:$0xff] %vm5248, %v5300
      %v5303 = vld [vmem:[#allocation6 + $0x8] sm:$0xff]
      %v5304 = vld [vmem:[#allocation6 + $0x48] sm:$0xff]
      %5307 = vrot.lane.b32.xlu0 %v5303, 124
      %v5308 = vpop.permute.xlu0 %5307
      %5309 = vrot.lane.b32.xlu0 %v5304, 124
      %v5310 = vpop.permute.xlu0 %5309
      %5313 = vst.msk [vmem:[#allocation7 + $0x60] sm:$0xff] %vm5248, %v5308
      %5314 = vst.msk [vmem:[#allocation7 + $0x68] sm:$0xff] %vm5248, %v5310
      %v5315 = vld [vmem:[#allocation6 + $0x8] sm:$0xff]
      %v5316 = vld [vmem:[#allocation6 + $0x48] sm:$0xff]
      %5319 = vrot.lane.b32.xlu0 %v5315, 120
      %v5320 = vpop.permute.xlu0 %5319
      %5321 = vrot.lane.b32.xlu0 %v5316, 120
      %v5322 = vpop.permute.xlu0 %5321
      %5325 = vst.msk [vmem:[#allocation7 + $0x70] sm:$0xff] %vm5248, %v5320
      %5326 = vst.msk [vmem:[#allocation7 + $0x78] sm:$0xff] %vm5248, %v5322
      %v5327 = vld [vmem:[#allocation6 + $0x8] sm:$0xff]
      %v5328 = vld [vmem:[#allocation6 + $0x48] sm:$0xff]
      %5331 = vrot.lane.b32.xlu0 %v5327, 116
      %v5332 = vpop.permute.xlu0 %5331
      %5333 = vrot.lane.b32.xlu0 %v5328, 116
      %v5334 = vpop.permute.xlu0 %5333
      %5337 = vst.msk [vmem:[#allocation7 + $0x80] sm:$0xff] %vm5248, %v5332
      %5338 = vst.msk [vmem:[#allocation7 + $0x88] sm:$0xff] %vm5248, %v5334
      %v5339 = vld [vmem:[#allocation6 + $0x8] sm:$0xff]
      %v5340 = vld [vmem:[#allocation6 + $0x48] sm:$0xff]
      %5343 = vrot.lane.b32.xlu0 %v5339, 112
      %v5344 = vpop.permute.xlu0 %5343
      %5345 = vrot.lane.b32.xlu0 %v5340, 112
      %v5346 = vpop.permute.xlu0 %5345
      %5349 = vst.msk [vmem:[#allocation7 + $0x90] sm:$0xff] %vm5248, %v5344
      %5350 = vst.msk [vmem:[#allocation7 + $0x98] sm:$0xff] %vm5248, %v5346
      %v5351 = vld [vmem:[#allocation6 + $0x10] sm:$0xff]
      %v5352 = vld [vmem:[#allocation6 + $0x50] sm:$0xff]
      %5353 = vst.msk [vmem:[#allocation7 + $0xa0] sm:$0xff] %vm5248, %v5351
      %5354 = vst.msk [vmem:[#allocation7 + $0xa8] sm:$0xff] %vm5248, %v5352
      %v5355 = vld [vmem:[#allocation6 + $0x10] sm:$0xff]
      %v5356 = vld [vmem:[#allocation6 + $0x50] sm:$0xff]
      %5359 = vrot.lane.b32.xlu0 %v5355, 124
      %v5360 = vpop.permute.xlu0 %5359
      %5361 = vrot.lane.b32.xlu0 %v5356, 124
      %v5362 = vpop.permute.xlu0 %5361
      %5365 = vst.msk [vmem:[#allocation7 + $0xb0] sm:$0xff] %vm5248, %v5360
      %5366 = vst.msk [vmem:[#allocation7 + $0xb8] sm:$0xff] %vm5248, %v5362
      %v5367 = vld [vmem:[#allocation6 + $0x10] sm:$0xff]
      %v5368 = vld [vmem:[#allocation6 + $0x50] sm:$0xff]
      %5371 = vrot.lane.b32.xlu0 %v5367, 120
      %v5372 = vpop.permute.xlu0 %5371
      %5373 = vrot.lane.b32.xlu0 %v5368, 120
      %v5374 = vpop.permute.xlu0 %5373
      %5377 = vst.msk [vmem:[#allocation7 + $0xc0] sm:$0xff] %vm5248, %v5372
      %5378 = vst.msk [vmem:[#allocation7 + $0xc8] sm:$0xff] %vm5248, %v5374
      %v5379 = vld [vmem:[#allocation6 + $0x10] sm:$0xff]
      %v5380 = vld [vmem:[#allocation6 + $0x50] sm:$0xff]
      %5383 = vrot.lane.b32.xlu0 %v5379, 116
      %v5384 = vpop.permute.xlu0 %5383
      %5385 = vrot.lane.b32.xlu0 %v5380, 116
      %v5386 = vpop.permute.xlu0 %5385
      %5389 = vst.msk [vmem:[#allocation7 + $0xd0] sm:$0xff] %vm5248, %v5384
      %5390 = vst.msk [vmem:[#allocation7 + $0xd8] sm:$0xff] %vm5248, %v5386
      %v5391 = vld [vmem:[#allocation6 + $0x10] sm:$0xff]
      %v5392 = vld [vmem:[#allocation6 + $0x50] sm:$0xff]
      %5395 = vrot.lane.b32.xlu0 %v5391, 112
      %v5396 = vpop.permute.xlu0 %5395
      %5397 = vrot.lane.b32.xlu0 %v5392, 112
      %v5398 = vpop.permute.xlu0 %5397
      %5401 = vst.msk [vmem:[#allocation7 + $0xe0] sm:$0xff] %vm5248, %v5396
      %5402 = vst.msk [vmem:[#allocation7 + $0xe8] sm:$0xff] %vm5248, %v5398
      %v5403 = vld [vmem:[#allocation6 + $0x18] sm:$0xff]
      %v5404 = vld [vmem:[#allocation6 + $0x58] sm:$0xff]
      %5405 = vst.msk [vmem:[#allocation7 + $0xf0] sm:$0xff] %vm5248, %v5403
      %5406 = vst.msk [vmem:[#allocation7 + $0xf8] sm:$0xff] %vm5248, %v5404
      %v5407 = vld [vmem:[#allocation6 + $0x18] sm:$0xff]
      %v5408 = vld [vmem:[#allocation6 + $0x58] sm:$0xff]
      %5411 = vrot.lane.b32.xlu0 %v5407, 124
      %v5412 = vpop.permute.xlu0 %5411
      %5413 = vrot.lane.b32.xlu0 %v5408, 124
      %v5414 = vpop.permute.xlu0 %5413
      %5417 = vst.msk [vmem:[#allocation7 + $0x100] sm:$0xff] %vm5248, %v5412
      %5418 = vst.msk [vmem:[#allocation7 + $0x108] sm:$0xff] %vm5248, %v5414
      %v5419 = vld [vmem:[#allocation6 + $0x18] sm:$0xff]
      %v5420 = vld [vmem:[#allocation6 + $0x58] sm:$0xff]
      %5423 = vrot.lane.b32.xlu0 %v5419, 120
      %v5424 = vpop.permute.xlu0 %5423
      %5425 = vrot.lane.b32.xlu0 %v5420, 120
      %v5426 = vpop.permute.xlu0 %5425
      %5429 = vst.msk [vmem:[#allocation7 + $0x110] sm:$0xff] %vm5248, %v5424
      %5430 = vst.msk [vmem:[#allocation7 + $0x118] sm:$0xff] %vm5248, %v5426
      %v5431 = vld [vmem:[#allocation6 + $0x18] sm:$0xff]
      %v5432 = vld [vmem:[#allocation6 + $0x58] sm:$0xff]
      %5435 = vrot.lane.b32.xlu0 %v5431, 116
      %v5436 = vpop.permute.xlu0 %5435
      %5437 = vrot.lane.b32.xlu0 %v5432, 116
      %v5438 = vpop.permute.xlu0 %5437
      %5441 = vst.msk [vmem:[#allocation7 + $0x120] sm:$0xff] %vm5248, %v5436
      %5442 = vst.msk [vmem:[#allocation7 + $0x128] sm:$0xff] %vm5248, %v5438
      %v5443 = vld [vmem:[#allocation6 + $0x18] sm:$0xff]
      %v5444 = vld [vmem:[#allocation6 + $0x58] sm:$0xff]
      %5447 = vrot.lane.b32.xlu0 %v5443, 112
      %v5448 = vpop.permute.xlu0 %5447
      %5449 = vrot.lane.b32.xlu0 %v5444, 112
      %v5450 = vpop.permute.xlu0 %5449
      %5453 = vst.msk [vmem:[#allocation7 + $0x130] sm:$0xff] %vm5248, %v5448
      %5454 = vst.msk [vmem:[#allocation7 + $0x138] sm:$0xff] %vm5248, %v5450
      %v5455 = vld [vmem:[#allocation6 + $0x20] sm:$0xff]
      %v5456 = vld [vmem:[#allocation6 + $0x60] sm:$0xff]
      %5457 = vst.msk [vmem:[#allocation7 + $0x140] sm:$0xff] %vm5248, %v5455
      %5458 = vst.msk [vmem:[#allocation7 + $0x148] sm:$0xff] %vm5248, %v5456
      %v5459 = vld [vmem:[#allocation6 + $0x20] sm:$0xff]
      %v5460 = vld [vmem:[#allocation6 + $0x60] sm:$0xff]
      %5463 = vrot.lane.b32.xlu0 %v5459, 124
      %v5464 = vpop.permute.xlu0 %5463
      %5465 = vrot.lane.b32.xlu0 %v5460, 124
      %v5466 = vpop.permute.xlu0 %5465
      %5469 = vst.msk [vmem:[#allocation7 + $0x150] sm:$0xff] %vm5248, %v5464
      %5470 = vst.msk [vmem:[#allocation7 + $0x158] sm:$0xff] %vm5248, %v5466
      %v5471 = vld [vmem:[#allocation6 + $0x20] sm:$0xff]
      %v5472 = vld [vmem:[#allocation6 + $0x60] sm:$0xff]
      %5475 = vrot.lane.b32.xlu0 %v5471, 120
      %v5476 = vpop.permute.xlu0 %5475
      %5477 = vrot.lane.b32.xlu0 %v5472, 120
      %v5478 = vpop.permute.xlu0 %5477
      %5481 = vst.msk [vmem:[#allocation7 + $0x160] sm:$0xff] %vm5248, %v5476
      %5482 = vst.msk [vmem:[#allocation7 + $0x168] sm:$0xff] %vm5248, %v5478
      %v5483 = vld [vmem:[#allocation6 + $0x20] sm:$0xff]
      %v5484 = vld [vmem:[#allocation6 + $0x60] sm:$0xff]
      %5487 = vrot.lane.b32.xlu0 %v5483, 116
      %v5488 = vpop.permute.xlu0 %5487
      %5489 = vrot.lane.b32.xlu0 %v5484, 116
      %v5490 = vpop.permute.xlu0 %5489
      %5493 = vst.msk [vmem:[#allocation7 + $0x170] sm:$0xff] %vm5248, %v5488
      %5494 = vst.msk [vmem:[#allocation7 + $0x178] sm:$0xff] %vm5248, %v5490
      %v5495 = vld [vmem:[#allocation6 + $0x20] sm:$0xff]
      %v5496 = vld [vmem:[#allocation6 + $0x60] sm:$0xff]
      %5499 = vrot.lane.b32.xlu0 %v5495, 112
      %v5500 = vpop.permute.xlu0 %5499
      %5501 = vrot.lane.b32.xlu0 %v5496, 112
      %v5502 = vpop.permute.xlu0 %5501
      %5505 = vst.msk [vmem:[#allocation7 + $0x180] sm:$0xff] %vm5248, %v5500
      %5506 = vst.msk [vmem:[#allocation7 + $0x188] sm:$0xff] %vm5248, %v5502
      %v5507 = vld [vmem:[%s5] sm:$0xff]
      %v5508 = vld [vmem:[%s5 + $0x8] sm:$0xff]
      %v5509 = vld [vmem:[%s5 + $0x10] sm:$0xff]
      %v5510 = vld [vmem:[%s5 + $0x18] sm:$0xff]
      %v5511 = vld [vmem:[%s5 + $0x20] sm:$0xff]
      %v5512 = vld [vmem:[%s5 + $0x28] sm:$0xff]
      %v5513 = vld [vmem:[%s5 + $0x30] sm:$0xff]
      %v5514 = vld [vmem:[%s5 + $0x38] sm:$0xff]
      %v5515 = vld [vmem:[%s5 + $0x40] sm:$0xff]
      %v5516 = vld [vmem:[%s5 + $0x48] sm:$0xff]
      %v5517 = vld [vmem:[%s5 + $0x50] sm:$0xff]
      %v5518 = vld [vmem:[%s5 + $0x58] sm:$0xff]
      %v5519 = vld [vmem:[%s5 + $0x60] sm:$0xff]
      %v5520 = vld [vmem:[%s5 + $0x68] sm:$0xff]
      %v5521 = vld [vmem:[%s5 + $0x70] sm:$0xff]
      %v5522 = vld [vmem:[%s5 + $0x78] sm:$0xff]
      %v5523 = vld [vmem:[%s5 + $0x80] sm:$0xff]
      %v5524 = vld [vmem:[%s5 + $0x88] sm:$0xff]
      %v5525 = vld [vmem:[%s5 + $0x90] sm:$0xff]
      %v5526 = vld [vmem:[%s5 + $0x98] sm:$0xff]
      %v5527 = vld [vmem:[%s5 + $0xa0] sm:$0xff]
      %v5528 = vld [vmem:[%s5 + $0xa8] sm:$0xff]
      %v5529 = vld [vmem:[%s5 + $0xb0] sm:$0xff]
      %v5530 = vld [vmem:[%s5 + $0xb8] sm:$0xff]
      %v5531 = vld [vmem:[%s5 + $0xc0] sm:$0xff]
      %v5532 = vld [vmem:[%s5 + $0xc8] sm:$0xff]
      %v5533 = vld [vmem:[%s5 + $0xd0] sm:$0xff]
      %v5534 = vld [vmem:[%s5 + $0xd8] sm:$0xff]
      %v5535 = vld [vmem:[%s5 + $0xe0] sm:$0xff]
      %v5536 = vld [vmem:[%s5 + $0xe8] sm:$0xff]
      %v5537 = vld [vmem:[%s5 + $0xf0] sm:$0xff]
      %v5538 = vld [vmem:[%s5 + $0xf8] sm:$0xff]
      %v5539 = vld [vmem:[%s5 + $0x100] sm:$0xff]
      %v5540 = vld [vmem:[%s5 + $0x108] sm:$0xff]
      %v5541 = vld [vmem:[%s5 + $0x110] sm:$0xff]
      %v5542 = vld [vmem:[%s5 + $0x118] sm:$0xff]
      %v5543 = vld [vmem:[%s5 + $0x120] sm:$0xff]
      %v5544 = vld [vmem:[%s5 + $0x128] sm:$0xff]
      %v5545 = vld [vmem:[%s5 + $0x130] sm:$0xff]
      %v5546 = vld [vmem:[%s5 + $0x138] sm:$0xff]
      %v5547 = vld [vmem:[%s5 + $0x140] sm:$0xff]
      %v5548 = vld [vmem:[%s5 + $0x148] sm:$0xff]
      %v5549 = vld [vmem:[%s5 + $0x150] sm:$0xff]
      %v5550 = vld [vmem:[%s5 + $0x158] sm:$0xff]
      %v5551 = vld [vmem:[%s5 + $0x160] sm:$0xff]
      %v5552 = vld [vmem:[%s5 + $0x168] sm:$0xff]
      %v5553 = vld [vmem:[%s5 + $0x170] sm:$0xff]
      %v5554 = vld [vmem:[%s5 + $0x178] sm:$0xff]
      %v5555 = vld [vmem:[%s5 + $0x180] sm:$0xff]
      %v5556 = vld [vmem:[%s5 + $0x188] sm:$0xff]
      %v5557 = vld [vmem:[%s5 + $0x190] sm:$0xff]
      %v5558 = vld [vmem:[%s5 + $0x198] sm:$0xff]
      %v5559 = vld [vmem:[%s5 + $0x1a0] sm:$0xff]
      %v5560 = vld [vmem:[%s5 + $0x1a8] sm:$0xff]
      %v5561 = vld [vmem:[%s5 + $0x1b0] sm:$0xff]
      %v5562 = vld [vmem:[%s5 + $0x1b8] sm:$0xff]
      %v5563 = vld [vmem:[%s5 + $0x1c0] sm:$0xff]
      %v5564 = vld [vmem:[%s5 + $0x1c8] sm:$0xff]
      %v5565 = vld [vmem:[%s5 + $0x1d0] sm:$0xff]
      %v5566 = vld [vmem:[%s5 + $0x1d8] sm:$0xff]
      %v5567 = vld [vmem:[#allocation7] sm:$0xff]
      %v5568 = vld [vmem:[#allocation7 + $0x8] sm:$0xff]
      %v5569 = vld [vmem:[#allocation7 + $0x10] sm:$0xff]
      %v5570 = vld [vmem:[#allocation7 + $0x18] sm:$0xff]
      %v5571 = vld [vmem:[#allocation7 + $0x20] sm:$0xff]
      %v5572 = vld [vmem:[#allocation7 + $0x28] sm:$0xff]
      %v5573 = vld [vmem:[#allocation7 + $0x30] sm:$0xff]
      %v5574 = vld [vmem:[#allocation7 + $0x38] sm:$0xff]
      %v5575 = vld [vmem:[#allocation7 + $0x40] sm:$0xff]
      %v5576 = vld [vmem:[#allocation7 + $0x48] sm:$0xff]
      %v5577 = vld [vmem:[#allocation7 + $0x50] sm:$0xff]
      %v5578 = vld [vmem:[#allocation7 + $0x58] sm:$0xff]
      %v5579 = vld [vmem:[#allocation7 + $0x60] sm:$0xff]
      %v5580 = vld [vmem:[#allocation7 + $0x68] sm:$0xff]
      %v5581 = vld [vmem:[#allocation7 + $0x70] sm:$0xff]
      %v5582 = vld [vmem:[#allocation7 + $0x78] sm:$0xff]
      %v5583 = vld [vmem:[#allocation7 + $0x80] sm:$0xff]
      %v5584 = vld [vmem:[#allocation7 + $0x88] sm:$0xff]
      %v5585 = vld [vmem:[#allocation7 + $0x90] sm:$0xff]
      %v5586 = vld [vmem:[#allocation7 + $0x98] sm:$0xff]
      %v5587 = vld [vmem:[#allocation7 + $0xa0] sm:$0xff]
      %v5588 = vld [vmem:[#allocation7 + $0xa8] sm:$0xff]
      %v5589 = vld [vmem:[#allocation7 + $0xb0] sm:$0xff]
      %v5590 = vld [vmem:[#allocation7 + $0xb8] sm:$0xff]
      %v5591 = vld [vmem:[#allocation7 + $0xc0] sm:$0xff]
      %v5592 = vld [vmem:[#allocation7 + $0xc8] sm:$0xff]
      %v5593 = vld [vmem:[#allocation7 + $0xd0] sm:$0xff]
      %v5594 = vld [vmem:[#allocation7 + $0xd8] sm:$0xff]
      %v5595 = vld [vmem:[#allocation7 + $0xe0] sm:$0xff]
      %v5596 = vld [vmem:[#allocation7 + $0xe8] sm:$0xff]
      %v5597 = vld [vmem:[#allocation7 + $0xf0] sm:$0xff]
      %v5598 = vld [vmem:[#allocation7 + $0xf8] sm:$0xff]
      %v5599 = vld [vmem:[#allocation7 + $0x100] sm:$0xff]
      %v5600 = vld [vmem:[#allocation7 + $0x108] sm:$0xff]
      %v5601 = vld [vmem:[#allocation7 + $0x110] sm:$0xff]
      %v5602 = vld [vmem:[#allocation7 + $0x118] sm:$0xff]
      %v5603 = vld [vmem:[#allocation7 + $0x120] sm:$0xff]
      %v5604 = vld [vmem:[#allocation7 + $0x128] sm:$0xff]
      %v5605 = vld [vmem:[#allocation7 + $0x130] sm:$0xff]
      %v5606 = vld [vmem:[#allocation7 + $0x138] sm:$0xff]
      %v5607 = vld [vmem:[#allocation7 + $0x140] sm:$0xff]
      %v5608 = vld [vmem:[#allocation7 + $0x148] sm:$0xff]
      %v5609 = vld [vmem:[#allocation7 + $0x150] sm:$0xff]
      %v5610 = vld [vmem:[#allocation7 + $0x158] sm:$0xff]
      %v5611 = vld [vmem:[#allocation7 + $0x160] sm:$0xff]
      %v5612 = vld [vmem:[#allocation7 + $0x168] sm:$0xff]
      %v5613 = vld [vmem:[#allocation7 + $0x170] sm:$0xff]
      %v5614 = vld [vmem:[#allocation7 + $0x178] sm:$0xff]
      %v5615 = vld [vmem:[#allocation7 + $0x180] sm:$0xff]
      %v5616 = vld [vmem:[#allocation7 + $0x188] sm:$0xff]
      %v5617 = vld [vmem:[%s6] sm:$0xff]
      %v5618 = vld [vmem:[%s6 + $0x8] sm:$0xff]
      %v5619 = vld [vmem:[%s6 + $0x10] sm:$0xff]
      %v5620 = vld [vmem:[%s6 + $0x18] sm:$0xff]
      %v5621 = vld [vmem:[%s6 + $0x20] sm:$0xff]
      %v5622 = vld [vmem:[%s6 + $0x28] sm:$0xff]
      %v5623 = vld [vmem:[%s6 + $0x30] sm:$0xff]
      %v5624 = vld [vmem:[%s6 + $0x38] sm:$0xff]
      %v5625 = vld [vmem:[%s6 + $0x40] sm:$0xff]
      %v5626 = vld [vmem:[%s6 + $0x48] sm:$0xff]
      %v5627 = vld [vmem:[%s6 + $0x50] sm:$0xff]
      %v5628 = vld [vmem:[%s6 + $0x58] sm:$0xff]
      %v5629 = vld [vmem:[%s6 + $0x60] sm:$0xff]
      %v5630 = vld [vmem:[%s6 + $0x68] sm:$0xff]
      %v5631 = vld [vmem:[%s6 + $0x70] sm:$0xff]
      %5633 = vset.pattern.permute.xlu0 0
      %5634 = vperm.xlu0 %5633, %v5617
      %v5635 = vpop.permute.xlu0 %5634
      %5638 = vset.pattern.permute.xlu0 0
      %5639 = vperm.xlu0 %5638, %v5618
      %v5640 = vpop.permute.xlu0 %5639
      %5643 = vset.pattern.permute.xlu0 0
      %5644 = vperm.xlu0 %5643, %v5619
      %v5645 = vpop.permute.xlu0 %5644
      %5648 = vset.pattern.permute.xlu0 0
      %5649 = vperm.xlu0 %5648, %v5620
      %v5650 = vpop.permute.xlu0 %5649
      %5653 = vset.pattern.permute.xlu0 0
      %5654 = vperm.xlu0 %5653, %v5621
      %v5655 = vpop.permute.xlu0 %5654
      %5658 = vset.pattern.permute.xlu0 0
      %5659 = vperm.xlu0 %5658, %v5622
      %v5660 = vpop.permute.xlu0 %5659
      %5663 = vset.pattern.permute.xlu0 0
      %5664 = vperm.xlu0 %5663, %v5623
      %v5665 = vpop.permute.xlu0 %5664
      %5668 = vset.pattern.permute.xlu0 0
      %5669 = vperm.xlu0 %5668, %v5624
      %v5670 = vpop.permute.xlu0 %5669
      %5673 = vset.pattern.permute.xlu0 0
      %5674 = vperm.xlu0 %5673, %v5625
      %v5675 = vpop.permute.xlu0 %5674
      %5678 = vset.pattern.permute.xlu0 0
      %5679 = vperm.xlu0 %5678, %v5626
      %v5680 = vpop.permute.xlu0 %5679
      %5683 = vset.pattern.permute.xlu0 0
      %5684 = vperm.xlu0 %5683, %v5627
      %v5685 = vpop.permute.xlu0 %5684
      %5688 = vset.pattern.permute.xlu0 0
      %5689 = vperm.xlu0 %5688, %v5628
      %v5690 = vpop.permute.xlu0 %5689
      %5693 = vset.pattern.permute.xlu0 0
      %5694 = vperm.xlu0 %5693, %v5629
      %v5695 = vpop.permute.xlu0 %5694
      %5698 = vset.pattern.permute.xlu0 0
      %5699 = vperm.xlu0 %5698, %v5630
      %v5700 = vpop.permute.xlu0 %5699
      %5703 = vset.pattern.permute.xlu0 0
      %5704 = vperm.xlu0 %5703, %v5631
      %v5705 = vpop.permute.xlu0 %5704
      %vm5707 = vcmask 130048
      %v5709 = vsel %vm5707, %v5510, 0
      %v5712 = vsel %vm5707, %v5514, 0
      %v5715 = vsel %vm5707, %v5518, 0
      %v5718 = vsel %vm5707, %v5522, 0
      %v5721 = vsel %vm5707, %v5526, 0
      %v5724 = vsel %vm5707, %v5530, 0
      %v5727 = vsel %vm5707, %v5534, 0
      %v5730 = vsel %vm5707, %v5538, 0
      %v5733 = vsel %vm5707, %v5542, 0
      %v5736 = vsel %vm5707, %v5546, 0
      %v5739 = vsel %vm5707, %v5550, 0
      %v5742 = vsel %vm5707, %v5554, 0
      %v5745 = vsel %vm5707, %v5558, 0
      %v5748 = vsel %vm5707, %v5562, 0
      %v5751 = vsel %vm5707, %v5566, 0
      %5753 = vmatpush.msra.mxu0 %v5582
      %5754 = vmatpush.msra.mxu0 %v5581
      %5755 = vmatpush.msra.mxu0 %v5580
      %5756 = vmatpush.msra.mxu0 %v5579
      %5757 = vmatpush.msra.mxu0 %v5578
      %5758 = vmatpush.msra.mxu0 %v5577
      %5759 = vmatpush.msra.mxu0 %v5576
      %5760 = vmatpush.msra.mxu0 %v5575
      %5761 = vmatpush.msra.mxu0 %v5574
      %5762 = vmatpush.msra.mxu0 %v5573
      %5763 = vmatpush.msra.mxu0 %v5572
      %5764 = vmatpush.msra.mxu0 %v5571
      %5765 = vmatpush.msra.mxu0 %v5570
      %5766 = vmatpush.msra.mxu0 %v5569
      %5767 = vmatpush.msra.mxu0 %v5568
      %5768 = vmatpush.msra.mxu0 %v5567
      %5769 = vmatmul.f32.gmra.mxu0 %v5507
      %v5770 = vpop.f32.mrf.mxu0
      %v5771 = vadd.f32 %v5635, %v5770
      %5772 = vmatmul.f32.gmra.mxu0 %v5511
      %v5773 = vpop.f32.mrf.mxu0
      %v5774 = vadd.f32 %v5640, %v5773
      %5775 = vmatmul.f32.gmra.mxu0 %v5515
      %v5776 = vpop.f32.mrf.mxu0
      %v5777 = vadd.f32 %v5645, %v5776
      %5778 = vmatmul.f32.gmra.mxu0 %v5519
      %v5779 = vpop.f32.mrf.mxu0
      %v5780 = vadd.f32 %v5650, %v5779
      %5781 = vmatmul.f32.gmra.mxu0 %v5523
      %v5782 = vpop.f32.mrf.mxu0
      %v5783 = vadd.f32 %v5655, %v5782
      %5784 = vmatmul.f32.gmra.mxu0 %v5527
      %v5785 = vpop.f32.mrf.mxu0
      %v5786 = vadd.f32 %v5660, %v5785
      %5787 = vmatmul.f32.gmra.mxu0 %v5531
      %v5788 = vpop.f32.mrf.mxu0
      %v5789 = vadd.f32 %v5665, %v5788
      %5790 = vmatmul.f32.gmra.mxu0 %v5535
      %v5791 = vpop.f32.mrf.mxu0
      %v5792 = vadd.f32 %v5670, %v5791
      %5793 = vmatmul.f32.gmra.mxu0 %v5539
      %v5794 = vpop.f32.mrf.mxu0
      %v5795 = vadd.f32 %v5675, %v5794
      %5796 = vmatmul.f32.gmra.mxu0 %v5543
      %v5797 = vpop.f32.mrf.mxu0
      %v5798 = vadd.f32 %v5680, %v5797
      %5799 = vmatmul.f32.gmra.mxu0 %v5547
      %v5800 = vpop.f32.mrf.mxu0
      %v5801 = vadd.f32 %v5685, %v5800
      %5802 = vmatmul.f32.gmra.mxu0 %v5551
      %v5803 = vpop.f32.mrf.mxu0
      %v5804 = vadd.f32 %v5690, %v5803
      %5805 = vmatmul.f32.gmra.mxu0 %v5555
      %v5806 = vpop.f32.mrf.mxu0
      %v5807 = vadd.f32 %v5695, %v5806
      %5808 = vmatmul.f32.gmra.mxu0 %v5559
      %v5809 = vpop.f32.mrf.mxu0
      %v5810 = vadd.f32 %v5700, %v5809
      %5811 = vmatmul.f32.gmra.mxu0 %v5563
      %v5812 = vpop.f32.mrf.mxu0
      %v5813 = vadd.f32 %v5705, %v5812
      %5814 = vdwg.mxu0
      %5815 = vmatpush.msra.mxu0 %v5598
      %5816 = vmatpush.msra.mxu0 %v5597
      %5817 = vmatpush.msra.mxu0 %v5596
      %5818 = vmatpush.msra.mxu0 %v5595
      %5819 = vmatpush.msra.mxu0 %v5594
      %5820 = vmatpush.msra.mxu0 %v5593
      %5821 = vmatpush.msra.mxu0 %v5592
      %5822 = vmatpush.msra.mxu0 %v5591
      %5823 = vmatpush.msra.mxu0 %v5590
      %5824 = vmatpush.msra.mxu0 %v5589
      %5825 = vmatpush.msra.mxu0 %v5588
      %5826 = vmatpush.msra.mxu0 %v5587
      %5827 = vmatpush.msra.mxu0 %v5586
      %5828 = vmatpush.msra.mxu0 %v5585
      %5829 = vmatpush.msra.mxu0 %v5584
      %5830 = vmatpush.msra.mxu0 %v5583
      %5831 = vmatmul.f32.gmra.mxu0 %v5508
      %v5832 = vpop.f32.mrf.mxu0
      %v5833 = vadd.f32 %v5771, %v5832
      %5834 = vmatmul.f32.gmra.mxu0 %v5512
      %v5835 = vpop.f32.mrf.mxu0
      %v5836 = vadd.f32 %v5774, %v5835
      %5837 = vmatmul.f32.gmra.mxu0 %v5516
      %v5838 = vpop.f32.mrf.mxu0
      %v5839 = vadd.f32 %v5777, %v5838
      %5840 = vmatmul.f32.gmra.mxu0 %v5520
      %v5841 = vpop.f32.mrf.mxu0
      %v5842 = vadd.f32 %v5780, %v5841
      %5843 = vmatmul.f32.gmra.mxu0 %v5524
      %v5844 = vpop.f32.mrf.mxu0
      %v5845 = vadd.f32 %v5783, %v5844
      %5846 = vmatmul.f32.gmra.mxu0 %v5528
      %v5847 = vpop.f32.mrf.mxu0
      %v5848 = vadd.f32 %v5786, %v5847
      %5849 = vmatmul.f32.gmra.mxu0 %v5532
      %v5850 = vpop.f32.mrf.mxu0
      %v5851 = vadd.f32 %v5789, %v5850
      %5852 = vmatmul.f32.gmra.mxu0 %v5536
      %v5853 = vpop.f32.mrf.mxu0
      %v5854 = vadd.f32 %v5792, %v5853
      %5855 = vmatmul.f32.gmra.mxu0 %v5540
      %v5856 = vpop.f32.mrf.mxu0
      %v5857 = vadd.f32 %v5795, %v5856
      %5858 = vmatmul.f32.gmra.mxu0 %v5544
      %v5859 = vpop.f32.mrf.mxu0
      %v5860 = vadd.f32 %v5798, %v5859
      %5861 = vmatmul.f32.gmra.mxu0 %v5548
      %v5862 = vpop.f32.mrf.mxu0
      %v5863 = vadd.f32 %v5801, %v5862
      %5864 = vmatmul.f32.gmra.mxu0 %v5552
      %v5865 = vpop.f32.mrf.mxu0
      %v5866 = vadd.f32 %v5804, %v5865
      %5867 = vmatmul.f32.gmra.mxu0 %v5556
      %v5868 = vpop.f32.mrf.mxu0
      %v5869 = vadd.f32 %v5807, %v5868
      %5870 = vmatmul.f32.gmra.mxu0 %v5560
      %v5871 = vpop.f32.mrf.mxu0
      %v5872 = vadd.f32 %v5810, %v5871
      %5873 = vmatmul.f32.gmra.mxu0 %v5564
      %v5874 = vpop.f32.mrf.mxu0
      %v5875 = vadd.f32 %v5813, %v5874
      %5876 = vdwg.mxu0
      %5877 = vmatpush.msra.mxu0 %v5614
      %5878 = vmatpush.msra.mxu0 %v5613
      %5879 = vmatpush.msra.mxu0 %v5612
      %5880 = vmatpush.msra.mxu0 %v5611
      %5881 = vmatpush.msra.mxu0 %v5610
      %5882 = vmatpush.msra.mxu0 %v5609
      %5883 = vmatpush.msra.mxu0 %v5608
      %5884 = vmatpush.msra.mxu0 %v5607
      %5885 = vmatpush.msra.mxu0 %v5606
      %5886 = vmatpush.msra.mxu0 %v5605
      %5887 = vmatpush.msra.mxu0 %v5604
      %5888 = vmatpush.msra.mxu0 %v5603
      %5889 = vmatpush.msra.mxu0 %v5602
      %5890 = vmatpush.msra.mxu0 %v5601
      %5891 = vmatpush.msra.mxu0 %v5600
      %5892 = vmatpush.msra.mxu0 %v5599
      %5893 = vmatmul.f32.gmra.mxu0 %v5509
      %v5894 = vpop.f32.mrf.mxu0
      %v5895 = vadd.f32 %v5833, %v5894
      %5896 = vmatmul.f32.gmra.mxu0 %v5513
      %v5897 = vpop.f32.mrf.mxu0
      %v5898 = vadd.f32 %v5836, %v5897
      %5899 = vmatmul.f32.gmra.mxu0 %v5517
      %v5900 = vpop.f32.mrf.mxu0
      %v5901 = vadd.f32 %v5839, %v5900
      %5902 = vmatmul.f32.gmra.mxu0 %v5521
      %v5903 = vpop.f32.mrf.mxu0
      %v5904 = vadd.f32 %v5842, %v5903
      %5905 = vmatmul.f32.gmra.mxu0 %v5525
      %v5906 = vpop.f32.mrf.mxu0
      %v5907 = vadd.f32 %v5845, %v5906
      %5908 = vmatmul.f32.gmra.mxu0 %v5529
      %v5909 = vpop.f32.mrf.mxu0
      %v5910 = vadd.f32 %v5848, %v5909
      %5911 = vmatmul.f32.gmra.mxu0 %v5533
      %v5912 = vpop.f32.mrf.mxu0
      %v5913 = vadd.f32 %v5851, %v5912
      %5914 = vmatmul.f32.gmra.mxu0 %v5537
      %v5915 = vpop.f32.mrf.mxu0
      %v5916 = vadd.f32 %v5854, %v5915
      %5917 = vmatmul.f32.gmra.mxu0 %v5541
      %v5918 = vpop.f32.mrf.mxu0
      %v5919 = vadd.f32 %v5857, %v5918
      %5920 = vmatmul.f32.gmra.mxu0 %v5545
      %v5921 = vpop.f32.mrf.mxu0
      %v5922 = vadd.f32 %v5860, %v5921
      %5923 = vmatmul.f32.gmra.mxu0 %v5549
      %v5924 = vpop.f32.mrf.mxu0
      %v5925 = vadd.f32 %v5863, %v5924
      %5926 = vmatmul.f32.gmra.mxu0 %v5553
      %v5927 = vpop.f32.mrf.mxu0
      %v5928 = vadd.f32 %v5866, %v5927
      %5929 = vmatmul.f32.gmra.mxu0 %v5557
      %v5930 = vpop.f32.mrf.mxu0
      %v5931 = vadd.f32 %v5869, %v5930
      %5932 = vmatmul.f32.gmra.mxu0 %v5561
      %v5933 = vpop.f32.mrf.mxu0
      %v5934 = vadd.f32 %v5872, %v5933
      %5935 = vmatmul.f32.gmra.mxu0 %v5565
      %v5936 = vpop.f32.mrf.mxu0
      %v5937 = vadd.f32 %v5875, %v5936
      %5938 = vdwg.mxu0
      %5939 = vmatpush.msra.mxu0 0.0
      %5940 = vmatpush.msra.mxu0 0.0
      %5941 = vmatpush.msra.mxu0 0.0
      %5942 = vmatpush.msra.mxu0 0.0
      %5943 = vmatpush.msra.mxu0 0.0
      %5944 = vmatpush.msra.mxu0 0.0
      %5945 = vmatpush.msra.mxu0 0.0
      %5946 = vmatpush.msra.mxu0 0.0
      %5947 = vmatpush.msra.mxu0 0.0
      %5948 = vmatpush.msra.mxu0 0.0
      %5949 = vmatpush.msra.mxu0 0.0
      %5950 = vmatpush.msra.mxu0 0.0
      %5951 = vmatpush.msra.mxu0 0.0
      %5952 = vmatpush.msra.mxu0 0.0
      %5953 = vmatpush.msra.mxu0 %v5616
      %5954 = vmatpush.msra.mxu0 %v5615
      %5955 = vmatmul.f32.gmra.mxu0 %v5709
      %v5956 = vpop.f32.mrf.mxu0
      %v5957 = vadd.f32 %v5895, %v5956
      %5958 = vmatmul.f32.gmra.mxu0 %v5712
      %v5959 = vpop.f32.mrf.mxu0
      %v5960 = vadd.f32 %v5898, %v5959
      %5961 = vmatmul.f32.gmra.mxu0 %v5715
      %v5962 = vpop.f32.mrf.mxu0
      %v5963 = vadd.f32 %v5901, %v5962
      %5964 = vmatmul.f32.gmra.mxu0 %v5718
      %v5965 = vpop.f32.mrf.mxu0
      %v5966 = vadd.f32 %v5904, %v5965
      %5967 = vmatmul.f32.gmra.mxu0 %v5721
      %v5968 = vpop.f32.mrf.mxu0
      %v5969 = vadd.f32 %v5907, %v5968
      %5970 = vmatmul.f32.gmra.mxu0 %v5724
      %v5971 = vpop.f32.mrf.mxu0
      %v5972 = vadd.f32 %v5910, %v5971
      %5973 = vmatmul.f32.gmra.mxu0 %v5727
      %v5974 = vpop.f32.mrf.mxu0
      %v5975 = vadd.f32 %v5913, %v5974
      %5976 = vmatmul.f32.gmra.mxu0 %v5730
      %v5977 = vpop.f32.mrf.mxu0
      %v5978 = vadd.f32 %v5916, %v5977
      %5979 = vmatmul.f32.gmra.mxu0 %v5733
      %v5980 = vpop.f32.mrf.mxu0
      %v5981 = vadd.f32 %v5919, %v5980
      %5982 = vmatmul.f32.gmra.mxu0 %v5736
      %v5983 = vpop.f32.mrf.mxu0
      %v5984 = vadd.f32 %v5922, %v5983
      %5985 = vmatmul.f32.gmra.mxu0 %v5739
      %v5986 = vpop.f32.mrf.mxu0
      %v5987 = vadd.f32 %v5925, %v5986
      %5988 = vmatmul.f32.gmra.mxu0 %v5742
      %v5989 = vpop.f32.mrf.mxu0
      %v5990 = vadd.f32 %v5928, %v5989
      %5991 = vmatmul.f32.gmra.mxu0 %v5745
      %v5992 = vpop.f32.mrf.mxu0
      %v5993 = vadd.f32 %v5931, %v5992
      %5994 = vmatmul.f32.gmra.mxu0 %v5748
      %v5995 = vpop.f32.mrf.mxu0
      %v5996 = vadd.f32 %v5934, %v5995
      %5997 = vmatmul.f32.gmra.mxu0 %v5751
      %v5998 = vpop.f32.mrf.mxu0
      %v5999 = vadd.f32 %v5937, %v5998
      %6000 = vdwg.mxu0
      %v6001 = vtanh.pop %v5957
      %v6002 = vtanh.pop %v5960
      %v6003 = vtanh.pop %v5963
      %v6004 = vtanh.pop %v5966
      %v6005 = vtanh.pop %v5969
      %v6006 = vtanh.pop %v5972
      %v6007 = vtanh.pop %v5975
      %v6008 = vtanh.pop %v5978
      %v6009 = vtanh.pop %v5981
      %v6010 = vtanh.pop %v5984
      %v6011 = vtanh.pop %v5987
      %v6012 = vtanh.pop %v5990
      %v6013 = vtanh.pop %v5993
      %v6014 = vtanh.pop %v5996
      %v6015 = vtanh.pop %v5999
      %v6016 = vld [vmem:[%s7] sm:$0xff]
      %v6017 = vld [vmem:[%s7 + $0x8] sm:$0xff]
      %v6018 = vld [vmem:[%s7 + $0x10] sm:$0xff]
      %v6019 = vld [vmem:[%s7 + $0x18] sm:$0xff]
      %v6020 = vld [vmem:[%s7 + $0x20] sm:$0xff]
      %v6021 = vld [vmem:[%s7 + $0x28] sm:$0xff]
      %v6022 = vld [vmem:[%s7 + $0x30] sm:$0xff]
      %v6023 = vld [vmem:[%s7 + $0x38] sm:$0xff]
      %v6024 = vld [vmem:[%s7 + $0x40] sm:$0xff]
      %v6025 = vld [vmem:[%s7 + $0x48] sm:$0xff]
      %v6026 = vld [vmem:[%s7 + $0x50] sm:$0xf]
      %v6027 = vld [vmem:[%s8] sm:$0xff]
      %v6028 = vld [vmem:[%s8 + $0x8] sm:$0xff]
      %v6029 = vld [vmem:[%s8 + $0x10] sm:$0xff]
      %v6030 = vld [vmem:[%s8 + $0x18] sm:$0xff]
      %v6031 = vld [vmem:[%s8 + $0x20] sm:$0xff]
      %v6032 = vld [vmem:[%s8 + $0x28] sm:$0xff]
      %v6033 = vld [vmem:[%s8 + $0x30] sm:$0xff]
      %v6034 = vld [vmem:[%s8 + $0x38] sm:$0xff]
      %v6035 = vld [vmem:[%s8 + $0x40] sm:$0xff]
      %v6036 = vld [vmem:[%s8 + $0x48] sm:$0xff]
      %v6037 = vld [vmem:[%s8 + $0x50] sm:$0xf]
      %6039 = vset.pattern.permute.xlu0 0
      %6040 = vperm.xlu0 %6039, %v6027
      %v6041 = vpop.permute.xlu0 %6040
      %6044 = vset.pattern.permute.xlu0 0
      %6045 = vperm.xlu0 %6044, %v6028
      %v6046 = vpop.permute.xlu0 %6045
      %6049 = vset.pattern.permute.xlu0 0
      %6050 = vperm.xlu0 %6049, %v6029
      %v6051 = vpop.permute.xlu0 %6050
      %6054 = vset.pattern.permute.xlu0 0
      %6055 = vperm.xlu0 %6054, %v6030
      %v6056 = vpop.permute.xlu0 %6055
      %6059 = vset.pattern.permute.xlu0 0
      %6060 = vperm.xlu0 %6059, %v6031
      %v6061 = vpop.permute.xlu0 %6060
      %6064 = vset.pattern.permute.xlu0 0
      %6065 = vperm.xlu0 %6064, %v6032
      %v6066 = vpop.permute.xlu0 %6065
      %6069 = vset.pattern.permute.xlu0 0
      %6070 = vperm.xlu0 %6069, %v6033
      %v6071 = vpop.permute.xlu0 %6070
      %6074 = vset.pattern.permute.xlu0 0
      %6075 = vperm.xlu0 %6074, %v6034
      %v6076 = vpop.permute.xlu0 %6075
      %6079 = vset.pattern.permute.xlu0 0
      %6080 = vperm.xlu0 %6079, %v6035
      %v6081 = vpop.permute.xlu0 %6080
      %6084 = vset.pattern.permute.xlu0 0
      %6085 = vperm.xlu0 %6084, %v6036
      %v6086 = vpop.permute.xlu0 %6085
      %6089 = vset.pattern.permute.xlu0 0
      %6090 = vperm.xlu0 %6089, %v6037
      %v6091 = vpop.permute.xlu0 %6090
      %v6094 = vsel %vm2979, %v6016, 0
      %v6097 = vsel %vm2979, %v6017, 0
      %v6100 = vsel %vm2979, %v6018, 0
      %v6103 = vsel %vm2979, %v6019, 0
      %v6106 = vsel %vm2979, %v6020, 0
      %v6109 = vsel %vm2979, %v6021, 0
      %v6112 = vsel %vm2979, %v6022, 0
      %v6115 = vsel %vm2979, %v6023, 0
      %v6118 = vsel %vm2979, %v6024, 0
      %v6121 = vsel %vm2979, %v6025, 0
      %v6124 = vsel %vm2979, %v6026, 0
      %6126 = vmatpush.msra.mxu0 0.0
      %6127 = vmatpush.msra.mxu0 %v6015
      %6128 = vmatpush.msra.mxu0 %v6014
      %6129 = vmatpush.msra.mxu0 %v6013
      %6130 = vmatpush.msra.mxu0 %v6012
      %6131 = vmatpush.msra.mxu0 %v6011
      %6132 = vmatpush.msra.mxu0 %v6010
      %6133 = vmatpush.msra.mxu0 %v6009
      %6134 = vmatpush.msra.mxu0 %v6008
      %6135 = vmatpush.msra.mxu0 %v6007
      %6136 = vmatpush.msra.mxu0 %v6006
      %6137 = vmatpush.msra.mxu0 %v6005
      %6138 = vmatpush.msra.mxu0 %v6004
      %6139 = vmatpush.msra.mxu0 %v6003
      %6140 = vmatpush.msra.mxu0 %v6002
      %6141 = vmatpush.msra.mxu0 %v6001
      %6142 = vmatmul.f32.gmra.mxu0 %v6094
      %v6143 = vpop.f32.mrf.mxu0
      %v6144 = vadd.f32 %v6041, %v6143
      %6145 = vmatmul.f32.gmra.mxu0 %v6097
      %v6146 = vpop.f32.mrf.mxu0
      %v6147 = vadd.f32 %v6046, %v6146
      %6148 = vmatmul.f32.gmra.mxu0 %v6100
      %v6149 = vpop.f32.mrf.mxu0
      %v6150 = vadd.f32 %v6051, %v6149
      %6151 = vmatmul.f32.gmra.mxu0 %v6103
      %v6152 = vpop.f32.mrf.mxu0
      %v6153 = vadd.f32 %v6056, %v6152
      %6154 = vmatmul.f32.gmra.mxu0 %v6106
      %v6155 = vpop.f32.mrf.mxu0
      %v6156 = vadd.f32 %v6061, %v6155
      %6157 = vmatmul.f32.gmra.mxu0 %v6109
      %v6158 = vpop.f32.mrf.mxu0
      %v6159 = vadd.f32 %v6066, %v6158
      %6160 = vmatmul.f32.gmra.mxu0 %v6112
      %v6161 = vpop.f32.mrf.mxu0
      %v6162 = vadd.f32 %v6071, %v6161
      %6163 = vmatmul.f32.gmra.mxu0 %v6115
      %v6164 = vpop.f32.mrf.mxu0
      %v6165 = vadd.f32 %v6076, %v6164
      %6166 = vmatmul.f32.gmra.mxu0 %v6118
      %v6167 = vpop.f32.mrf.mxu0
      %v6168 = vadd.f32 %v6081, %v6167
      %6169 = vmatmul.f32.gmra.mxu0 %v6121
      %v6170 = vpop.f32.mrf.mxu0
      %v6171 = vadd.f32 %v6086, %v6170
      %6172 = vmatmul.f32.gmra.mxu0 %v6124
      %v6173 = vpop.f32.mrf.mxu0
      %v6174 = vadd.f32 %v6091, %v6173
      %6175 = vdwg.mxu0
      %v6176 = vtanh.pop %v6144
      %v6177 = vtanh.pop %v6147
      %v6178 = vtanh.pop %v6150
      %v6179 = vtanh.pop %v6153
      %v6180 = vtanh.pop %v6156
      %v6181 = vtanh.pop %v6159
      %v6182 = vtanh.pop %v6162
      %v6183 = vtanh.pop %v6165
      %v6184 = vtanh.pop %v6168
      %v6185 = vtanh.pop %v6171
      %v6186 = vtanh.pop %v6174
      %v6187 = vld [vmem:[%s9] sm:$0xff]
      %v6188 = vld [vmem:[%s9 + $0x8] sm:$0x3]
      %v6189 = vld [vmem:[%s10] sm:$0xff]
      %v6190 = vld [vmem:[%s10 + $0x8] sm:$0x3]
      %6192 = vset.pattern.permute.xlu0 0
      %6193 = vperm.xlu0 %6192, %v6189
      %v6194 = vpop.permute.xlu0 %6193
      %6197 = vset.pattern.permute.xlu0 0
      %6198 = vperm.xlu0 %6197, %v6190
      %v6199 = vpop.permute.xlu0 %6198
      %vm6201 = vcmask 687104
      %v6203 = vsel %vm6201, %v6187, 0
      %v6206 = vsel %vm6201, %v6188, 0
      %vm6208 = vcmask 1043456
      %v6210 = vsel %vm6208, %v6186, 0
      %6212 = vmatpush.msra.mxu0 0.0
      %6213 = vmatpush.msra.mxu0 0.0
      %6214 = vmatpush.msra.mxu0 0.0
      %6215 = vmatpush.msra.mxu0 0.0
      %6216 = vmatpush.msra.mxu0 0.0
      %6217 = vmatpush.msra.mxu0 %v6210
      %6218 = vmatpush.msra.mxu0 %v6185
      %6219 = vmatpush.msra.mxu0 %v6184
      %6220 = vmatpush.msra.mxu0 %v6183
      %6221 = vmatpush.msra.mxu0 %v6182
      %6222 = vmatpush.msra.mxu0 %v6181
      %6223 = vmatpush.msra.mxu0 %v6180
      %6224 = vmatpush.msra.mxu0 %v6179
      %6225 = vmatpush.msra.mxu0 %v6178
      %6226 = vmatpush.msra.mxu0 %v6177
      %6227 = vmatpush.msra.mxu0 %v6176
      %6228 = vmatmul.f32.gmra.mxu0 %v6203
      %v6229 = vpop.f32.mrf.mxu0
      %v6230 = vadd.f32 %v6194, %v6229
      %6231 = vmatmul.f32.gmra.mxu0 %v6206
      %v6232 = vpop.f32.mrf.mxu0
      %v6233 = vadd.f32 %v6199, %v6232
      %6234 = vdwg.mxu0
      %6235 = vst.msk [vmem:[%s386] sm:$0xff] %vm5248, %v6230
      %vm6236 = vcmask 1024
      %6237 = vst.msk [vmem:[%s386 + $0x8] sm:$0x3] %vm6236, %v6233
      %p6238 = scmp.lt.s32.totalorder %s22, 1
      %s6239 = scalar_select %p6238, %s22, 1
      %s6240 = smul.addr %s6239, 2
      %s6241 = smul.addr %s6240, 8
      %s6242 = scalar_lea.vmem %s11, %s6241
      // Predicated region
      $region65: #{lenet5_forward.1} parent=63 // pred_check
        %p6243 = pneg %p276
      $region66: #{lenet5_forward.1} parent=63 // pred_check_branch
        %6245 = sbr.rel (%p6243) target = $region68
      $region67: #{lenet5_forward.1} parent=63 // pred_region
        _
      $region68: #{lenet5_forward.1} parent=63 // pred_fallthru
        _
    $region64: #{lenet5_forward.1} parent=5 // pred_fallthru
      _
    %p6246 = scmp.le.s32.totalorder 2, %s17
    // Predicated region
    $region69: #{lenet5_forward.1} parent=5 // pred_check
      %p6247 = pneg %p6246
    $region70: #{lenet5_forward.1} parent=5 // pred_check_branch
      %6249 = sbr.rel (%p6247) target = $region72
    $region71: #{lenet5_forward.1} parent=5 // pred_region
      %s6250 = ssub.s32 %s17, 2
      // Predicated region
      $region73: #{lenet5_forward.1} parent=71 // pred_check
        %p6251 = pneg %p282
      $region74: #{lenet5_forward.1} parent=71 // pred_check_branch
        %6253 = sbr.rel (%p6251) target = $region76
      $region75: #{lenet5_forward.1} parent=71 // pred_region
        %p6254 = scmp.lt.s32.totalorder %s23, 1
        %s6255 = scalar_select %p6254, %s23, 1
        %s6256 = smul.addr %s6255, 2
        %s6257 = smul.addr %s6256, 8
        %s6258 = scalar_lea.vmem %s11, %s6257
      $region76: #{lenet5_forward.1} parent=71 // pred_fallthru
        _
    $region72: #{lenet5_forward.1} parent=5 // pred_fallthru
      _
  $region6: #{lenet5_forward.1} parent=0 // loop_footer
    %s21 = sadd.s32 1, %s17
  $region7: #{lenet5_forward.1} parent=0 // loop_footer_branch
    %16 = sbr.rel target = $region3
  $region8: #{lenet5_forward.1} parent=0 // loop_exit
    _

</llo_original>
